<compile_context>
chip_gen: v7x
topology: tpu7x:2x2x1
jax: 0.10.0
libtpu: 0.0.40
codegen_flags: <defaults>
</compile_context>

<pallas_src>
import math
from functools import partial

import jax
import jax.numpy as jnp
from jax.experimental import pallas as pl
from jax.experimental.pallas import tpu as pltpu


# ----------------------------- in-kernel helpers -----------------------------

def _layernorm(x, g, b, eps=1e-5):
    mu = jnp.mean(x, axis=-1, keepdims=True)
    xc = x - mu
    var = jnp.mean(xc * xc, axis=-1, keepdims=True)
    return xc * jax.lax.rsqrt(var + eps) * g + b


def _softmax_rows(logits):
    # max-subtraction guarantees denom >= 1 (even for fully padded rows),
    # so the approximate EUP reciprocal cannot produce inf/NaN.
    m = jnp.max(logits, axis=-1, keepdims=True)
    p = jnp.exp(logits - m)
    denom = jnp.sum(p, axis=-1, keepdims=True)
    return p * pl.reciprocal(denom, approx=True)


def _mha(q_in, k_in, v_in, wqkv, bqkv, wo, bo, bias, batch, num_heads,
         fuse_qk, ctx_ref):
    """Multi-head attention on batch-folded row activations, all in VMEM.

    q_in: [B*Sq, C]; k_in / v_in: [B*Sk, C] (any float dtype; cast to bf16 for
    the MXU).  wqkv: bf16 [C, 3C] with 1/sqrt(hd) pre-folded into the Q
    columns; bqkv: f32 [1, 3C]; wo: bf16 [C, C]; bo: f32 [1, C].
    bias: f32 [B, 1, Sk] additive key-padding bias or None (trace-time skip).
    ctx_ref: f32 VMEM scratch [B*Sq, C] used to assemble the per-head context
    without lane concatenates.
    """
    C = wqkv.shape[0]
    hd = C // num_heads
    Sq = q_in.shape[0] // batch
    Sk = k_in.shape[0] // batch

    q_bf = q_in.astype(jnp.bfloat16)
    k_bf = k_in.astype(jnp.bfloat16)
    v_bf = v_in.astype(jnp.bfloat16)

    if fuse_qk:  # self-attention: q_in == k_in -> one wide [C, 2C] matmul
        qk = jnp.dot(q_bf, wqkv[:, :2 * C],
                     preferred_element_type=jnp.float32) + bqkv[:, :2 * C]
        q, k = qk[:, :C], qk[:, C:]
    else:
        q = jnp.dot(q_bf, wqkv[:, :C],
                    preferred_element_type=jnp.float32) + bqkv[:, :C]
        k = jnp.dot(k_bf, wqkv[:, C:2 * C],
                    preferred_element_type=jnp.float32) + bqkv[:, C:2 * C]
    v = jnp.dot(v_bf, wqkv[:, 2 * C:],
                preferred_element_type=jnp.float32) + bqkv[:, 2 * C:]

    q = q.astype(jnp.bfloat16)
    k = k.astype(jnp.bfloat16)
    v = v.astype(jnp.bfloat16)

    for b in range(batch):                       # static unroll (tiny batch)
        qb = q[b * Sq:(b + 1) * Sq]
        kb = k[b * Sk:(b + 1) * Sk]
        vb = v[b * Sk:(b + 1) * Sk]
        if bias is not None:
            # hoist the key-padding broadcast out of the head loop
            bias_b = jnp.broadcast_to(bias[b], (Sq, Sk))
        for h in range(num_heads):               # static unroll, lane slices
            s = h * hd
            logits = jax.lax.dot_general(
                qb[:, s:s + hd], kb[:, s:s + hd],
                (((1,), (1,)), ((), ())),
                preferred_element_type=jnp.float32)          # [Sq, Sk]
            if bias is not None:
                logits = logits + bias_b
            p = _softmax_rows(logits).astype(jnp.bfloat16)
            ctx_ref[b * Sq:(b + 1) * Sq, s:s + hd] = jnp.dot(
                p, vb[:, s:s + hd], preferred_element_type=jnp.float32)

    ctx = ctx_ref[...].astype(jnp.bfloat16)                  # [B*Sq, C]
    return jnp.dot(ctx, wo, preferred_element_type=jnp.float32) + bo


# ------------------------------ fused stack kernels ------------------------------

def _encoder_stack_kernel(x_ref, pos_ref, bias_ref,
                          wqkv_ref, bqkv_ref, wo_ref, bo_ref,
                          w1_ref, b1_ref, w2_ref, b2_ref, ln_ref,
                          mem_ref, ctx_ref, *, num_heads):
    B, S, C = mem_ref.shape

    @pl.when(pl.program_id(0) == 0)
    def _():
        mem_ref[...] = x_ref[...]          # seed the VMEM-resident carry

    x = mem_ref[...].reshape(B * S, C)     # f32 residual stream
    pos = pos_ref[...].reshape(B * S, C)
    bias = bias_ref[...]                   # [B, 1, S]
    ln = ln_ref[0]                         # [4, C] = [g1, b1, g2, b2]

    qk = x + pos
    sa = _mha(qk, qk, x, wqkv_ref[0], bqkv_ref[0], wo_ref[0], bo_ref[0],
              bias, B, num_heads, fuse_qk=True, ctx_ref=ctx_ref)
    x = _layernorm(x + sa, ln[0:1], ln[1:2])

    h = jnp.maximum(
        jnp.dot(x.astype(jnp.bfloat16), w1_ref[0],
                preferred_element_type=jnp.float32) + b1_ref[0], 0.0)
    h = jnp.dot(h.astype(jnp.bfloat16), w2_ref[0],
                preferred_element_type=jnp.float32) + b2_ref[0]
    x = _layernorm(x + h, ln[2:3], ln[3:4])

    mem_ref[...] = x.reshape(B, S, C)


def _decoder_stack_kernel(mem_in_ref, qpos_ref, pos_ref, bias_ref,
                          sa_wqkv_ref, sa_bqkv_ref, sa_wo_ref, sa_bo_ref,
                          ca_wqkv_ref, ca_bqkv_ref, ca_wo_ref, ca_bo_ref,
                          w1_ref, b1_ref, w2_ref, b2_ref, ln_ref, dn_ref,
                          hid_ref,
                          tgt_ref, ctx_ref, memk_ref, memv_ref, *, num_heads):
    B, Nq, C = qpos_ref.shape
    S = mem_in_ref.shape[1]

    @pl.when(pl.program_id(0) == 0)
    def _():
        tgt_ref[...] = jnp.zeros_like(tgt_ref)       # torch.zeros_like(query_embed)
        m = mem_in_ref[...].reshape(B * S, C)
        p = pos_ref[...].reshape(B * S, C)
        memk_ref[...] = (m + p).astype(jnp.bfloat16)  # cross-attn K input (reused all layers)
        memv_ref[...] = m.astype(jnp.bfloat16)        # cross-attn V input

    tgt = tgt_ref[...]                        # [B*Nq, C] f32 VMEM-resident carry
    qpos = qpos_ref[...].reshape(B * Nq, C)
    bias = bias_ref[...]                      # [B, 1, S]
    ln = ln_ref[0]                            # [6, C]
    dn = dn_ref[...]                          # [2, C] shared decoder norm

    # self-attention (no key padding mask -> bias skipped at trace time)
    qk = tgt + qpos
    sa = _mha(qk, qk, tgt, sa_wqkv_ref[0], sa_bqkv_ref[0], sa_wo_ref[0],
              sa_bo_ref[0], None, B, num_heads, fuse_qk=True, ctx_ref=ctx_ref)
    tgt = _layernorm(tgt + sa, ln[0:1], ln[1:2])

    # TODO(synk): ConditionalDETR's query_scale MLP modulation and per-head
    # concatenation of sine-embedded reference points are simplified to
    # vanilla DETR cross-attention (q = tgt + query_pos, k = memory + pos).
    ca = _mha(tgt + qpos, memk_ref[...], memv_ref[...],
              ca_wqkv_ref[0], ca_bqkv_ref[0], ca_wo_ref[0], ca_bo_ref[0],
              bias, B, num_heads, fuse_qk=False, ctx_ref=ctx_ref)
    tgt = _layernorm(tgt + ca, ln[2:3], ln[3:4])

    h = jnp.maximum(
        jnp.dot(tgt.astype(jnp.bfloat16), w1_ref[0],
                preferred_element_type=jnp.float32) + b1_ref[0], 0.0)
    h = jnp.dot(h.astype(jnp.bfloat16), w2_ref[0],
                preferred_element_type=jnp.float32) + b2_ref[0]
    tgt = _layernorm(tgt + h, ln[4:5], ln[5:6])

    tgt_ref[...] = tgt
    # shared decoder output LayerNorm, written straight to this layer's slab
    hid_ref[0] = _layernorm(tgt, dn[0:1], dn[1:2]).reshape(B, Nq, C)


# ------------------------------- stack wrappers -------------------------------

def encoder_stack(x, pos, key_bias, p, num_heads):
    B, S, C = x.shape
    L, _, F = p['ffn_w1'].shape

    flops = L * B * (8 * S * C * C + 4 * S * S * C + 4 * S * C * F)
    trans = L * B * num_heads * (S * S + S)
    w_bytes = 2 * (4 * C * C + 2 * C * F) + 4 * (5 * C + F + 4 * C)
    bytes_acc = 4 * B * (3 * S * C + S) + L * w_bytes

    wspec = lambda shape: pl.BlockSpec((1,) + shape, lambda l: (l, 0, 0))
    full3 = lambda shape: pl.BlockSpec(shape, lambda l: (0, 0, 0))

    return pl.pallas_call(
        partial(_encoder_stack_kernel, num_heads=num_heads),
        out_shape=jax.ShapeDtypeStruct((B, S, C), jnp.float32),
        grid=(L,),
        in_specs=[
            full3((B, S, C)),              # x (read once at layer 0)
            full3((B, S, C)),              # pos
            full3((B, 1, S)),              # key-padding bias
            wspec((C, 3 * C)),             # wqkv (per-layer)
            wspec((1, 3 * C)),             # bqkv
            wspec((C, C)),                 # wo
            wspec((1, C)),                 # bo
            wspec((C, F)),                 # ffn w1
            wspec((1, F)),                 # ffn b1
            wspec((F, C)),                 # ffn w2
            wspec((1, C)),                 # ffn b2
            wspec((4, C)),                 # ln gammas / betas
        ],
        out_specs=full3((B, S, C)),        # constant block -> VMEM-resident carry
        scratch_shapes=[pltpu.VMEM((B * S, C), jnp.float32)],   # per-head ctx
        compiler_params=pltpu.CompilerParams(
            dimension_semantics=("arbitrary",)),
        cost_estimate=pl.CostEstimate(flops=flops, transcendentals=trans,
                                      bytes_accessed=bytes_acc),
    )(x, pos, key_bias,
      p['wqkv'], p['bqkv'], p['wo'], p['bo'],
      p['ffn_w1'], p['ffn_b1'], p['ffn_w2'], p['ffn_b2'], p['ln'])


def decoder_stack(memory, query_pos, pos, key_bias, p, dec_norm, num_heads):
    B, S, C = memory.shape
    Nq = query_pos.shape[1]
    L, _, F = p['ffn_w1'].shape

    flops = L * B * (12 * Nq * C * C + 4 * S * C * C + 4 * Nq * Nq * C
                     + 4 * Nq * S * C + 4 * Nq * C * F)
    trans = L * B * num_heads * (Nq * Nq + Nq * S + 2 * Nq)
    w_bytes = 2 * (8 * C * C + 2 * C * F) + 4 * (10 * C + F + 8 * C)
    bytes_acc = 4 * B * (2 * S * C + Nq * C + S) + 4 * L * B * Nq * C + L * w_bytes

    wspec = lambda shape: pl.BlockSpec((1,) + shape, lambda l: (l, 0, 0))
    full3 = lambda shape: pl.BlockSpec(shape, lambda l: (0, 0, 0))

    hid = pl.pallas_call(
        partial(_decoder_stack_kernel, num_heads=num_heads),
        out_shape=jax.ShapeDtypeStruct((L, B, Nq, C), jnp.float32),
        grid=(L,),
        in_specs=[
            full3((B, S, C)),              # memory
            full3((B, Nq, C)),             # query pos
            full3((B, S, C)),              # pos
            full3((B, 1, S)),              # key-padding bias
            wspec((C, 3 * C)), wspec((1, 3 * C)), wspec((C, C)), wspec((1, C)),  # self-attn
            wspec((C, 3 * C)), wspec((1, 3 * C)), wspec((C, C)), wspec((1, C)),  # cross-attn
            wspec((C, F)), wspec((1, F)), wspec((F, C)), wspec((1, C)),          # ffn
            wspec((6, C)),                                                        # per-layer LNs
            pl.BlockSpec((2, C), lambda l: (0, 0)),                               # shared decoder norm
        ],
        out_specs=pl.BlockSpec((1, B, Nq, C), lambda l: (l, 0, 0, 0)),
        scratch_shapes=[
            pltpu.VMEM((B * Nq, C), jnp.float32),   # tgt carry (resident across layers)
            pltpu.VMEM((B * Nq, C), jnp.float32),   # per-head ctx assembly
            pltpu.VMEM((B * S, C), jnp.bfloat16),   # memory + pos (cross-attn K input)
            pltpu.VMEM((B * S, C), jnp.bfloat16),   # memory (cross-attn V input)
        ],
        compiler_params=pltpu.CompilerParams(
            dimension_semantics=("arbitrary",)),
        cost_estimate=pl.CostEstimate(flops=flops, transcendentals=trans,
                                      bytes_accessed=bytes_acc),
    )(memory, query_pos, pos, key_bias,
      p['sa_wqkv'], p['sa_bqkv'], p['sa_wo'], p['sa_bo'],
      p['ca_wqkv'], p['ca_bqkv'], p['ca_wo'], p['ca_bo'],
      p['ffn_w1'], p['ffn_b1'], p['ffn_w2'], p['ffn_b2'], p['ln'], dec_norm)

    # [L, B, Nq, C] -> [L, Nq, B, C]: one tiny XLA transpose of the whole stack
    return jnp.transpose(hid, (0, 2, 1, 3))


# --------------------------------- transformer ---------------------------------

def conditional_detr_transformer(params, x, mask, query_embed, pos_embed,
                                 num_heads):
    bs, c, h, w = x.shape
    S = h * w
    # x.view(bs, c, -1).permute(2, 0, 1) -> kept batch-first [bs, S, c]
    xt = x.reshape(bs, c, S).transpose(0, 2, 1)
    post = pos_embed.reshape(bs, c, S).transpose(0, 2, 1)
    key_bias = jnp.where(mask.reshape(bs, S), -1e9, 0.0).astype(jnp.float32)
    key_bias = key_bias.reshape(bs, 1, S)

    memory = encoder_stack(xt, post, key_bias, params['encoder'], num_heads)

    nq = query_embed.shape[0]
    query_pos = jnp.broadcast_to(query_embed[None], (bs, nq, c))

    # reference points: sigmoid(MLP(query_pos)) — tiny, output width 2, so
    # plain JAX (XLA fuses it; a lane-padded pallas_call would be slower).
    r = jnp.maximum(query_pos.reshape(bs * nq, c) @ params['ref_w1']
                    + params['ref_b1'], 0.0)
    r = r @ params['ref_w2'] + params['ref_b2']
    references = jax.nn.sigmoid(r).reshape(bs, nq, 2)

    hidden_state = decoder_stack(memory, query_pos, post, key_bias,
                                 params['decoder'], params['dec_norm'],
                                 num_heads)
    return hidden_state, references


# --------------------------------- init weights ---------------------------------

def _xavier(key, shape):
    fan_in, fan_out = shape[-2], shape[-1]
    limit = math.sqrt(6.0 / (fan_in + fan_out))
    return jax.random.uniform(key, shape, jnp.float32, -limit, limit)


def _ln_stack(L, n_norms, C):
    ln = jnp.zeros((L, 2 * n_norms, C), jnp.float32)
    return ln.at[:, 0::2, :].set(1.0)           # [gamma, beta] interleaved


def _attn_stack(key, L, C, q_scale, prefix=''):
    kq, kk, kv, ko = jax.random.split(key, 4)
    # 1/sqrt(head_dim) is pre-folded into the Q columns (zero runtime cost).
    wqkv = jnp.concatenate([_xavier(kq, (L, C, C)) * q_scale,
                            _xavier(kk, (L, C, C)),
                            _xavier(kv, (L, C, C))], axis=-1)
    return {prefix + 'wqkv': wqkv.astype(jnp.bfloat16),
            prefix + 'bqkv': jnp.zeros((L, 1, 3 * C), jnp.float32),
            prefix + 'wo': _xavier(ko, (L, C, C)).astype(jnp.bfloat16),
            prefix + 'bo': jnp.zeros((L, 1, C), jnp.float32)}


def _ffn_stack(key, L, C, F):
    k1, k2 = jax.random.split(key)
    return {'ffn_w1': _xavier(k1, (L, C, F)).astype(jnp.bfloat16),
            'ffn_b1': jnp.zeros((L, 1, F), jnp.float32),
            'ffn_w2': _xavier(k2, (L, F, C)).astype(jnp.bfloat16),
            'ffn_b2': jnp.zeros((L, 1, C), jnp.float32)}


def init_params(key, C, F, num_enc, num_dec, num_heads):
    q_scale = 1.0 / math.sqrt(C // num_heads)
    k_ea, k_ef, k_sa, k_ca, k_df, k_r1, k_r2 = jax.random.split(key, 7)

    encoder = {**_attn_stack(k_ea, num_enc, C, q_scale),
               **_ffn_stack(k_ef, num_enc, C, F),
               'ln': _ln_stack(num_enc, 2, C)}
    decoder = {**_attn_stack(k_sa, num_dec, C, q_scale, 'sa_'),
               **_attn_stack(k_ca, num_dec, C, q_scale, 'ca_'),
               **_ffn_stack(k_df, num_dec, C, F),
               'ln': _ln_stack(num_dec, 3, C)}

    return {'encoder': encoder, 'decoder': decoder,
            'dec_norm': _ln_stack(1, 1, C)[0],           # [2, C]
            'ref_w1': _xavier(k_r1, (C, C)),
            'ref_b1': jnp.zeros((C,), jnp.float32),
            'ref_w2': _xavier(k_r2, (C, 2)),
            'ref_b2': jnp.zeros((2,), jnp.float32)}


# -------------------------------------- main --------------------------------------

if __name__ == "__main__":
    bs, c, h, w = 2, 32, 8, 8          # embed_dim = c = 32, S = 64
    num_heads, nq, ffn = 4, 8, 64
    num_enc, num_dec = 1, 2

    key = jax.random.PRNGKey(0)
    k_param, k_x, k_pos, k_q = jax.random.split(key, 4)

    params = init_params(k_param, c, ffn, num_enc, num_dec, num_heads)
    x = jax.random.normal(k_x, (bs, c, h, w), jnp.float32)
    pos_embed = jax.random.normal(k_pos, (bs, c, h, w), jnp.float32)
    query_embed = jax.random.normal(k_q, (nq, c), jnp.float32)

    # padding mask: batch 0 unpadded, batch 1 has rightmost 2 columns padded
    col = jnp.arange(w)
    mask = jnp.stack([jnp.zeros((h, w), bool),
                      jnp.broadcast_to(col >= 6, (h, w))], axis=0)   # [bs,h,w]

    fwd = jax.jit(partial(conditional_detr_transformer, num_heads=num_heads))
    hidden_state, references = fwd(params, x, mask, query_embed, pos_embed)
    jax.block_until_ready((hidden_state, references))

    assert hidden_state.shape == (num_dec, nq, bs, c), hidden_state.shape
    assert references.shape == (bs, nq, 2), references.shape
    assert jnp.all(jnp.isfinite(hidden_state)) and jnp.all(jnp.isfinite(references))
    print("KERNEL_OK")
</pallas_src>

<mosaic_0001>
module attributes {stable_mosaic.version = 11 : i64} {
  func.func @_encoder_stack_kernel(%arg0: i32, %arg1: memref<2x64x32xf32, #tpu.memory_space<vmem>>, %arg2: memref<2x64x32xf32, #tpu.memory_space<vmem>>, %arg3: memref<2x1x64xf32, #tpu.memory_space<vmem>>, %arg4: memref<1x32x96xbf16, #tpu.memory_space<vmem>>, %arg5: memref<1x1x96xf32, #tpu.memory_space<vmem>>, %arg6: memref<1x32x32xbf16, #tpu.memory_space<vmem>>, %arg7: memref<1x1x32xf32, #tpu.memory_space<vmem>>, %arg8: memref<1x32x64xbf16, #tpu.memory_space<vmem>>, %arg9: memref<1x1x64xf32, #tpu.memory_space<vmem>>, %arg10: memref<1x64x32xbf16, #tpu.memory_space<vmem>>, %arg11: memref<1x1x32xf32, #tpu.memory_space<vmem>>, %arg12: memref<1x4x32xf32, #tpu.memory_space<vmem>>, %arg13: memref<2x64x32xf32, #tpu.memory_space<vmem>>, %arg14: memref<128x32xf32, #tpu.memory_space<vmem>>) attributes {dimension_semantics = [#tpu.dimension_semantics<arbitrary>], iteration_bounds = array<i64: 1>, scalar_prefetch = 0 : i64, scratch_operands = 1 : i64, tpu.core_type = #tpu.core_type<tc>, window_params = [{pipeline_mode = #tpu.pipeline_mode<synchronous>, transform_indices = @transform_0, window_bounds = array<i64: 2, 64, 32>}, {pipeline_mode = #tpu.pipeline_mode<synchronous>, transform_indices = @transform_1, window_bounds = array<i64: 2, 64, 32>}, {pipeline_mode = #tpu.pipeline_mode<synchronous>, transform_indices = @transform_2, window_bounds = array<i64: 2, 1, 64>}, {transform_indices = @transform_3, window_bounds = array<i64: 1, 32, 96>}, {transform_indices = @transform_4, window_bounds = array<i64: 1, 1, 96>}, {transform_indices = @transform_5, window_bounds = array<i64: 1, 32, 32>}, {transform_indices = @transform_6, window_bounds = array<i64: 1, 1, 32>}, {transform_indices = @transform_7, window_bounds = array<i64: 1, 32, 64>}, {transform_indices = @transform_8, window_bounds = array<i64: 1, 1, 64>}, {transform_indices = @transform_9, window_bounds = array<i64: 1, 64, 32>}, {transform_indices = @transform_10, window_bounds = array<i64: 1, 1, 32>}, {transform_indices = @transform_11, window_bounds = array<i64: 1, 4, 32>}, {pipeline_mode = #tpu.pipeline_mode<synchronous>, transform_indices = @transform_12, window_bounds = array<i64: 2, 64, 32>}]} {
    %c0_i32 = arith.constant 0 : i32
    %0 = arith.cmpi eq, %arg0, %c0_i32 : i32
    %1 = arith.extui %0 : i1 to i32
    %c0_i32_0 = arith.constant 0 : i32
    %2 = arith.cmpi ne, %1, %c0_i32_0 : i32
    scf.if %2 {
      %c0_100 = arith.constant 0 : index
      %c0_101 = arith.constant 0 : index
      %c0_102 = arith.constant 0 : index
      %265 = vector.load %arg1[%c0_100, %c0_101, %c0_102] : memref<2x64x32xf32, #tpu.memory_space<vmem>>, vector<2x64x32xf32>
      %c0_103 = arith.constant 0 : index
      %c0_104 = arith.constant 0 : index
      %c0_105 = arith.constant 0 : index
      %266 = vector.load %arg13[%c0_103, %c0_104, %c0_105] : memref<2x64x32xf32, #tpu.memory_space<vmem>>, vector<2x64x32xf32>
      tpu.vector_store %arg13[%c0_103, %c0_104, %c0_105], %265 {strides = array<i32>} : memref<2x64x32xf32, #tpu.memory_space<vmem>>, vector<2x64x32xf32>,
    } else {
    }
    %c0 = arith.constant 0 : index
    %c0_1 = arith.constant 0 : index
    %c0_2 = arith.constant 0 : index
    %3 = vector.load %arg13[%c0, %c0_1, %c0_2] : memref<2x64x32xf32, #tpu.memory_space<vmem>>, vector<2x64x32xf32>
    %4 = vector.shape_cast %3 : vector<2x64x32xf32> to vector<128x32xf32>
    %c0_3 = arith.constant 0 : index
    %c0_4 = arith.constant 0 : index
    %c0_5 = arith.constant 0 : index
    %5 = vector.load %arg2[%c0_3, %c0_4, %c0_5] : memref<2x64x32xf32, #tpu.memory_space<vmem>>, vector<2x64x32xf32>
    %6 = vector.shape_cast %5 : vector<2x64x32xf32> to vector<128x32xf32>
    %c0_6 = arith.constant 0 : index
    %c0_7 = arith.constant 0 : index
    %c0_8 = arith.constant 0 : index
    %7 = vector.load %arg3[%c0_6, %c0_7, %c0_8] : memref<2x1x64xf32, #tpu.memory_space<vmem>>, vector<2x1x64xf32>
    %c0_9 = arith.constant 0 : index
    %c0_10 = arith.constant 0 : index
    %c0_11 = arith.constant 0 : index
    %8 = vector.load %arg12[%c0_9, %c0_10, %c0_11] : memref<1x4x32xf32, #tpu.memory_space<vmem>>, vector<1x4x32xf32>
    %9 = vector.shape_cast %8 : vector<1x4x32xf32> to vector<4x32xf32>
    %10 = arith.addf %4, %6 : vector<128x32xf32>
    %c0_12 = arith.constant 0 : index
    %c0_13 = arith.constant 0 : index
    %c0_14 = arith.constant 0 : index
    %11 = vector.load %arg4[%c0_12, %c0_13, %c0_14] : memref<1x32x96xbf16, #tpu.memory_space<vmem>>, vector<1x32x96xbf16>
    %12 = vector.shape_cast %11 : vector<1x32x96xbf16> to vector<32x96xbf16>
    %c0_15 = arith.constant 0 : index
    %c0_16 = arith.constant 0 : index
    %c0_17 = arith.constant 0 : index
    %13 = vector.load %arg5[%c0_15, %c0_16, %c0_17] : memref<1x1x96xf32, #tpu.memory_space<vmem>>, vector<1x1x96xf32>
    %14 = vector.shape_cast %13 : vector<1x1x96xf32> to vector<1x96xf32>
    %c0_18 = arith.constant 0 : index
    %c0_19 = arith.constant 0 : index
    %c0_20 = arith.constant 0 : index
    %15 = vector.load %arg6[%c0_18, %c0_19, %c0_20] : memref<1x32x32xbf16, #tpu.memory_space<vmem>>, vector<1x32x32xbf16>
    %16 = vector.shape_cast %15 : vector<1x32x32xbf16> to vector<32x32xbf16>
    %c0_21 = arith.constant 0 : index
    %c0_22 = arith.constant 0 : index
    %c0_23 = arith.constant 0 : index
    %17 = vector.load %arg7[%c0_21, %c0_22, %c0_23] : memref<1x1x32xf32, #tpu.memory_space<vmem>>, vector<1x1x32xf32>
    %18 = vector.shape_cast %17 : vector<1x1x32xf32> to vector<1x32xf32>
    %19 = arith.truncf %10 : vector<128x32xf32> to vector<128x32xbf16>
    %20 = arith.truncf %4 : vector<128x32xf32> to vector<128x32xbf16>
    %21 = vector.extract_strided_slice %12 {offsets = [0, 0], sizes = [32, 64], strides = [1, 1]} : vector<32x96xbf16> to vector<32x64xbf16>
    %cst = arith.constant dense<0.000000e+00> : vector<128x64xf32>
    %22 = tpu.matmul %19, %21, %cst {dimension_numbers = #tpu.dot_dimension_numbers<[1], [0], [0], [1], [0, 0, 1, 1], [], []>} : vector<128x32xbf16>, vector<32x64xbf16>, vector<128x64xf32> -> vector<128x64xf32>
    %23 = vector.extract_strided_slice %14 {offsets = [0, 0], sizes = [1, 64], strides = [1, 1]} : vector<1x96xf32> to vector<1x64xf32>
    %24 = vector.broadcast %23 : vector<1x64xf32> to vector<128x64xf32>
    %25 = arith.addf %22, %24 : vector<128x64xf32>
    %26 = vector.extract_strided_slice %25 {offsets = [0, 0], sizes = [128, 32], strides = [1, 1]} : vector<128x64xf32> to vector<128x32xf32>
    %27 = vector.extract_strided_slice %25 {offsets = [0, 32], sizes = [128, 32], strides = [1, 1]} : vector<128x64xf32> to vector<128x32xf32>
    %28 = vector.extract_strided_slice %12 {offsets = [0, 64], sizes = [32, 32], strides = [1, 1]} : vector<32x96xbf16> to vector<32x32xbf16>
    %cst_24 = arith.constant dense<0.000000e+00> : vector<128x32xf32>
    %29 = tpu.matmul %20, %28, %cst_24 {dimension_numbers = #tpu.dot_dimension_numbers<[1], [0], [0], [1], [0, 0, 1, 1], [], []>} : vector<128x32xbf16>, vector<32x32xbf16>, vector<128x32xf32> -> vector<128x32xf32>
    %30 = vector.extract_strided_slice %14 {offsets = [0, 64], sizes = [1, 32], strides = [1, 1]} : vector<1x96xf32> to vector<1x32xf32>
    %31 = vector.broadcast %30 : vector<1x32xf32> to vector<128x32xf32>
    %32 = arith.addf %29, %31 : vector<128x32xf32>
    %33 = arith.truncf %26 : vector<128x32xf32> to vector<128x32xbf16>
    %34 = arith.truncf %27 : vector<128x32xf32> to vector<128x32xbf16>
    %35 = arith.truncf %32 : vector<128x32xf32> to vector<128x32xbf16>
    %36 = vector.extract_strided_slice %33 {offsets = [0, 0], sizes = [64, 32], strides = [1, 1]} : vector<128x32xbf16> to vector<64x32xbf16>
    %37 = vector.extract_strided_slice %34 {offsets = [0, 0], sizes = [64, 32], strides = [1, 1]} : vector<128x32xbf16> to vector<64x32xbf16>
    %38 = vector.extract_strided_slice %35 {offsets = [0, 0], sizes = [64, 32], strides = [1, 1]} : vector<128x32xbf16> to vector<64x32xbf16>
    %39 = vector.extract_strided_slice %7 {offsets = [0, 0, 0], sizes = [1, 1, 64], strides = [1, 1, 1]} : vector<2x1x64xf32> to vector<1x1x64xf32>
    %40 = vector.shape_cast %39 : vector<1x1x64xf32> to vector<1x64xf32>
    %41 = vector.shape_cast %40 : vector<1x64xf32> to vector<1x64xf32>
    %42 = vector.broadcast %41 : vector<1x64xf32> to vector<64x64xf32>
    %43 = vector.extract_strided_slice %36 {offsets = [0, 0], sizes = [64, 8], strides = [1, 1]} : vector<64x32xbf16> to vector<64x8xbf16>
    %44 = vector.extract_strided_slice %37 {offsets = [0, 0], sizes = [64, 8], strides = [1, 1]} : vector<64x32xbf16> to vector<64x8xbf16>
    %cst_25 = arith.constant dense<0.000000e+00> : vector<64x64xf32>
    %45 = tpu.matmul %43, %44, %cst_25 {dimension_numbers = #tpu.dot_dimension_numbers<[1], [1], [0], [0], [0, 0, 1, 0], [], []>} : vector<64x8xbf16>, vector<64x8xbf16>, vector<64x64xf32> -> vector<64x64xf32>
    %46 = arith.addf %45, %42 : vector<64x64xf32>
    %cst_26 = arith.constant dense<0xFF800000> : vector<64xf32>
    %47 = vector.multi_reduction <maximumf>, %46, %cst_26 [1] : vector<64x64xf32> to vector<64xf32>
    %48 = vector.shape_cast %47 : vector<64xf32> to vector<64x1xf32>
    %49 = vector.broadcast %48 : vector<64x1xf32> to vector<64x64xf32>
    %50 = arith.subf %46, %49 : vector<64x64xf32>
    %51 = math.exp %50 : vector<64x64xf32>
    %cst_27 = arith.constant dense<0.000000e+00> : vector<64xf32>
    %52 = vector.multi_reduction <add>, %51, %cst_27 [1] : vector<64x64xf32> to vector<64xf32>
    %53 = vector.shape_cast %52 : vector<64xf32> to vector<64x1xf32>
    %54 = tpu.reciprocal %53 {approx = true} : vector<64x1xf32> -> vector<64x1xf32>
    %55 = vector.broadcast %54 : vector<64x1xf32> to vector<64x64xf32>
    %56 = arith.mulf %51, %55 : vector<64x64xf32>
    %57 = arith.truncf %56 : vector<64x64xf32> to vector<64x64xbf16>
    %58 = vector.extract_strided_slice %38 {offsets = [0, 0], sizes = [64, 8], strides = [1, 1]} : vector<64x32xbf16> to vector<64x8xbf16>
    %cst_28 = arith.constant dense<0.000000e+00> : vector<64x8xf32>
    %59 = tpu.matmul %57, %58, %cst_28 {dimension_numbers = #tpu.dot_dimension_numbers<[1], [0], [0], [1], [0, 0, 1, 1], [], []>} : vector<64x64xbf16>, vector<64x8xbf16>, vector<64x8xf32> -> vector<64x8xf32>
    %c0_29 = arith.constant 0 : index
    %c0_30 = arith.constant 0 : index
    %60 = vector.load %arg14[%c0_29, %c0_30] : memref<128x32xf32, #tpu.memory_space<vmem>>, vector<64x8xf32>
    tpu.vector_store %arg14[%c0_29, %c0_30], %59 {strides = array<i32>} : memref<128x32xf32, #tpu.memory_space<vmem>>, vector<64x8xf32>,
    %61 = vector.extract_strided_slice %36 {offsets = [0, 8], sizes = [64, 8], strides = [1, 1]} : vector<64x32xbf16> to vector<64x8xbf16>
    %62 = vector.extract_strided_slice %37 {offsets = [0, 8], sizes = [64, 8], strides = [1, 1]} : vector<64x32xbf16> to vector<64x8xbf16>
    %cst_31 = arith.constant dense<0.000000e+00> : vector<64x64xf32>
    %63 = tpu.matmul %61, %62, %cst_31 {dimension_numbers = #tpu.dot_dimension_numbers<[1], [1], [0], [0], [0, 0, 1, 0], [], []>} : vector<64x8xbf16>, vector<64x8xbf16>, vector<64x64xf32> -> vector<64x64xf32>
    %64 = arith.addf %63, %42 : vector<64x64xf32>
    %cst_32 = arith.constant dense<0xFF800000> : vector<64xf32>
    %65 = vector.multi_reduction <maximumf>, %64, %cst_32 [1] : vector<64x64xf32> to vector<64xf32>
    %66 = vector.shape_cast %65 : vector<64xf32> to vector<64x1xf32>
    %67 = vector.broadcast %66 : vector<64x1xf32> to vector<64x64xf32>
    %68 = arith.subf %64, %67 : vector<64x64xf32>
    %69 = math.exp %68 : vector<64x64xf32>
    %cst_33 = arith.constant dense<0.000000e+00> : vector<64xf32>
    %70 = vector.multi_reduction <add>, %69, %cst_33 [1] : vector<64x64xf32> to vector<64xf32>
    %71 = vector.shape_cast %70 : vector<64xf32> to vector<64x1xf32>
    %72 = tpu.reciprocal %71 {approx = true} : vector<64x1xf32> -> vector<64x1xf32>
    %73 = vector.broadcast %72 : vector<64x1xf32> to vector<64x64xf32>
    %74 = arith.mulf %69, %73 : vector<64x64xf32>
    %75 = arith.truncf %74 : vector<64x64xf32> to vector<64x64xbf16>
    %76 = vector.extract_strided_slice %38 {offsets = [0, 8], sizes = [64, 8], strides = [1, 1]} : vector<64x32xbf16> to vector<64x8xbf16>
    %cst_34 = arith.constant dense<0.000000e+00> : vector<64x8xf32>
    %77 = tpu.matmul %75, %76, %cst_34 {dimension_numbers = #tpu.dot_dimension_numbers<[1], [0], [0], [1], [0, 0, 1, 1], [], []>} : vector<64x64xbf16>, vector<64x8xbf16>, vector<64x8xf32> -> vector<64x8xf32>
    %c0_35 = arith.constant 0 : index
    %c8 = arith.constant 8 : index
    %78 = vector.load %arg14[%c0_35, %c8] : memref<128x32xf32, #tpu.memory_space<vmem>>, vector<64x8xf32>
    tpu.vector_store %arg14[%c0_35, %c8], %77 {strides = array<i32>} : memref<128x32xf32, #tpu.memory_space<vmem>>, vector<64x8xf32>,
    %79 = vector.extract_strided_slice %36 {offsets = [0, 16], sizes = [64, 8], strides = [1, 1]} : vector<64x32xbf16> to vector<64x8xbf16>
    %80 = vector.extract_strided_slice %37 {offsets = [0, 16], sizes = [64, 8], strides = [1, 1]} : vector<64x32xbf16> to vector<64x8xbf16>
    %cst_36 = arith.constant dense<0.000000e+00> : vector<64x64xf32>
    %81 = tpu.matmul %79, %80, %cst_36 {dimension_numbers = #tpu.dot_dimension_numbers<[1], [1], [0], [0], [0, 0, 1, 0], [], []>} : vector<64x8xbf16>, vector<64x8xbf16>, vector<64x64xf32> -> vector<64x64xf32>
    %82 = arith.addf %81, %42 : vector<64x64xf32>
    %cst_37 = arith.constant dense<0xFF800000> : vector<64xf32>
    %83 = vector.multi_reduction <maximumf>, %82, %cst_37 [1] : vector<64x64xf32> to vector<64xf32>
    %84 = vector.shape_cast %83 : vector<64xf32> to vector<64x1xf32>
    %85 = vector.broadcast %84 : vector<64x1xf32> to vector<64x64xf32>
    %86 = arith.subf %82, %85 : vector<64x64xf32>
    %87 = math.exp %86 : vector<64x64xf32>
    %cst_38 = arith.constant dense<0.000000e+00> : vector<64xf32>
    %88 = vector.multi_reduction <add>, %87, %cst_38 [1] : vector<64x64xf32> to vector<64xf32>
    %89 = vector.shape_cast %88 : vector<64xf32> to vector<64x1xf32>
    %90 = tpu.reciprocal %89 {approx = true} : vector<64x1xf32> -> vector<64x1xf32>
    %91 = vector.broadcast %90 : vector<64x1xf32> to vector<64x64xf32>
    %92 = arith.mulf %87, %91 : vector<64x64xf32>
    %93 = arith.truncf %92 : vector<64x64xf32> to vector<64x64xbf16>
    %94 = vector.extract_strided_slice %38 {offsets = [0, 16], sizes = [64, 8], strides = [1, 1]} : vector<64x32xbf16> to vector<64x8xbf16>
    %cst_39 = arith.constant dense<0.000000e+00> : vector<64x8xf32>
    %95 = tpu.matmul %93, %94, %cst_39 {dimension_numbers = #tpu.dot_dimension_numbers<[1], [0], [0], [1], [0, 0, 1, 1], [], []>} : vector<64x64xbf16>, vector<64x8xbf16>, vector<64x8xf32> -> vector<64x8xf32>
    %c0_40 = arith.constant 0 : index
    %c16 = arith.constant 16 : index
    %96 = vector.load %arg14[%c0_40, %c16] : memref<128x32xf32, #tpu.memory_space<vmem>>, vector<64x8xf32>
    tpu.vector_store %arg14[%c0_40, %c16], %95 {strides = array<i32>} : memref<128x32xf32, #tpu.memory_space<vmem>>, vector<64x8xf32>,
    %97 = vector.extract_strided_slice %36 {offsets = [0, 24], sizes = [64, 8], strides = [1, 1]} : vector<64x32xbf16> to vector<64x8xbf16>
    %98 = vector.extract_strided_slice %37 {offsets = [0, 24], sizes = [64, 8], strides = [1, 1]} : vector<64x32xbf16> to vector<64x8xbf16>
    %cst_41 = arith.constant dense<0.000000e+00> : vector<64x64xf32>
    %99 = tpu.matmul %97, %98, %cst_41 {dimension_numbers = #tpu.dot_dimension_numbers<[1], [1], [0], [0], [0, 0, 1, 0], [], []>} : vector<64x8xbf16>, vector<64x8xbf16>, vector<64x64xf32> -> vector<64x64xf32>
    %100 = arith.addf %99, %42 : vector<64x64xf32>
    %cst_42 = arith.constant dense<0xFF800000> : vector<64xf32>
    %101 = vector.multi_reduction <maximumf>, %100, %cst_42 [1] : vector<64x64xf32> to vector<64xf32>
    %102 = vector.shape_cast %101 : vector<64xf32> to vector<64x1xf32>
    %103 = vector.broadcast %102 : vector<64x1xf32> to vector<64x64xf32>
    %104 = arith.subf %100, %103 : vector<64x64xf32>
    %105 = math.exp %104 : vector<64x64xf32>
    %cst_43 = arith.constant dense<0.000000e+00> : vector<64xf32>
    %106 = vector.multi_reduction <add>, %105, %cst_43 [1] : vector<64x64xf32> to vector<64xf32>
    %107 = vector.shape_cast %106 : vector<64xf32> to vector<64x1xf32>
    %108 = tpu.reciprocal %107 {approx = true} : vector<64x1xf32> -> vector<64x1xf32>
    %109 = vector.broadcast %108 : vector<64x1xf32> to vector<64x64xf32>
    %110 = arith.mulf %105, %109 : vector<64x64xf32>
    %111 = arith.truncf %110 : vector<64x64xf32> to vector<64x64xbf16>
    %112 = vector.extract_strided_slice %38 {offsets = [0, 24], sizes = [64, 8], strides = [1, 1]} : vector<64x32xbf16> to vector<64x8xbf16>
    %cst_44 = arith.constant dense<0.000000e+00> : vector<64x8xf32>
    %113 = tpu.matmul %111, %112, %cst_44 {dimension_numbers = #tpu.dot_dimension_numbers<[1], [0], [0], [1], [0, 0, 1, 1], [], []>} : vector<64x64xbf16>, vector<64x8xbf16>, vector<64x8xf32> -> vector<64x8xf32>
    %c0_45 = arith.constant 0 : index
    %c24 = arith.constant 24 : index
    %114 = vector.load %arg14[%c0_45, %c24] : memref<128x32xf32, #tpu.memory_space<vmem>>, vector<64x8xf32>
    tpu.vector_store %arg14[%c0_45, %c24], %113 {strides = array<i32>} : memref<128x32xf32, #tpu.memory_space<vmem>>, vector<64x8xf32>,
    %115 = vector.extract_strided_slice %33 {offsets = [64, 0], sizes = [64, 32], strides = [1, 1]} : vector<128x32xbf16> to vector<64x32xbf16>
    %116 = vector.extract_strided_slice %34 {offsets = [64, 0], sizes = [64, 32], strides = [1, 1]} : vector<128x32xbf16> to vector<64x32xbf16>
    %117 = vector.extract_strided_slice %35 {offsets = [64, 0], sizes = [64, 32], strides = [1, 1]} : vector<128x32xbf16> to vector<64x32xbf16>
    %118 = vector.extract_strided_slice %7 {offsets = [1, 0, 0], sizes = [1, 1, 64], strides = [1, 1, 1]} : vector<2x1x64xf32> to vector<1x1x64xf32>
    %119 = vector.shape_cast %118 : vector<1x1x64xf32> to vector<1x64xf32>
    %120 = vector.shape_cast %119 : vector<1x64xf32> to vector<1x64xf32>
    %121 = vector.broadcast %120 : vector<1x64xf32> to vector<64x64xf32>
    %122 = vector.extract_strided_slice %115 {offsets = [0, 0], sizes = [64, 8], strides = [1, 1]} : vector<64x32xbf16> to vector<64x8xbf16>
    %123 = vector.extract_strided_slice %116 {offsets = [0, 0], sizes = [64, 8], strides = [1, 1]} : vector<64x32xbf16> to vector<64x8xbf16>
    %cst_46 = arith.constant dense<0.000000e+00> : vector<64x64xf32>
    %124 = tpu.matmul %122, %123, %cst_46 {dimension_numbers = #tpu.dot_dimension_numbers<[1], [1], [0], [0], [0, 0, 1, 0], [], []>} : vector<64x8xbf16>, vector<64x8xbf16>, vector<64x64xf32> -> vector<64x64xf32>
    %125 = arith.addf %124, %121 : vector<64x64xf32>
    %cst_47 = arith.constant dense<0xFF800000> : vector<64xf32>
    %126 = vector.multi_reduction <maximumf>, %125, %cst_47 [1] : vector<64x64xf32> to vector<64xf32>
    %127 = vector.shape_cast %126 : vector<64xf32> to vector<64x1xf32>
    %128 = vector.broadcast %127 : vector<64x1xf32> to vector<64x64xf32>
    %129 = arith.subf %125, %128 : vector<64x64xf32>
    %130 = math.exp %129 : vector<64x64xf32>
    %cst_48 = arith.constant dense<0.000000e+00> : vector<64xf32>
    %131 = vector.multi_reduction <add>, %130, %cst_48 [1] : vector<64x64xf32> to vector<64xf32>
    %132 = vector.shape_cast %131 : vector<64xf32> to vector<64x1xf32>
    %133 = tpu.reciprocal %132 {approx = true} : vector<64x1xf32> -> vector<64x1xf32>
    %134 = vector.broadcast %133 : vector<64x1xf32> to vector<64x64xf32>
    %135 = arith.mulf %130, %134 : vector<64x64xf32>
    %136 = arith.truncf %135 : vector<64x64xf32> to vector<64x64xbf16>
    %137 = vector.extract_strided_slice %117 {offsets = [0, 0], sizes = [64, 8], strides = [1, 1]} : vector<64x32xbf16> to vector<64x8xbf16>
    %cst_49 = arith.constant dense<0.000000e+00> : vector<64x8xf32>
    %138 = tpu.matmul %136, %137, %cst_49 {dimension_numbers = #tpu.dot_dimension_numbers<[1], [0], [0], [1], [0, 0, 1, 1], [], []>} : vector<64x64xbf16>, vector<64x8xbf16>, vector<64x8xf32> -> vector<64x8xf32>
    %c64 = arith.constant 64 : index
    %c0_50 = arith.constant 0 : index
    %139 = vector.load %arg14[%c64, %c0_50] : memref<128x32xf32, #tpu.memory_space<vmem>>, vector<64x8xf32>
    tpu.vector_store %arg14[%c64, %c0_50], %138 {strides = array<i32>} : memref<128x32xf32, #tpu.memory_space<vmem>>, vector<64x8xf32>,
    %140 = vector.extract_strided_slice %115 {offsets = [0, 8], sizes = [64, 8], strides = [1, 1]} : vector<64x32xbf16> to vector<64x8xbf16>
    %141 = vector.extract_strided_slice %116 {offsets = [0, 8], sizes = [64, 8], strides = [1, 1]} : vector<64x32xbf16> to vector<64x8xbf16>
    %cst_51 = arith.constant dense<0.000000e+00> : vector<64x64xf32>
    %142 = tpu.matmul %140, %141, %cst_51 {dimension_numbers = #tpu.dot_dimension_numbers<[1], [1], [0], [0], [0, 0, 1, 0], [], []>} : vector<64x8xbf16>, vector<64x8xbf16>, vector<64x64xf32> -> vector<64x64xf32>
    %143 = arith.addf %142, %121 : vector<64x64xf32>
    %cst_52 = arith.constant dense<0xFF800000> : vector<64xf32>
    %144 = vector.multi_reduction <maximumf>, %143, %cst_52 [1] : vector<64x64xf32> to vector<64xf32>
    %145 = vector.shape_cast %144 : vector<64xf32> to vector<64x1xf32>
    %146 = vector.broadcast %145 : vector<64x1xf32> to vector<64x64xf32>
    %147 = arith.subf %143, %146 : vector<64x64xf32>
    %148 = math.exp %147 : vector<64x64xf32>
    %cst_53 = arith.constant dense<0.000000e+00> : vector<64xf32>
    %149 = vector.multi_reduction <add>, %148, %cst_53 [1] : vector<64x64xf32> to vector<64xf32>
    %150 = vector.shape_cast %149 : vector<64xf32> to vector<64x1xf32>
    %151 = tpu.reciprocal %150 {approx = true} : vector<64x1xf32> -> vector<64x1xf32>
    %152 = vector.broadcast %151 : vector<64x1xf32> to vector<64x64xf32>
    %153 = arith.mulf %148, %152 : vector<64x64xf32>
    %154 = arith.truncf %153 : vector<64x64xf32> to vector<64x64xbf16>
    %155 = vector.extract_strided_slice %117 {offsets = [0, 8], sizes = [64, 8], strides = [1, 1]} : vector<64x32xbf16> to vector<64x8xbf16>
    %cst_54 = arith.constant dense<0.000000e+00> : vector<64x8xf32>
    %156 = tpu.matmul %154, %155, %cst_54 {dimension_numbers = #tpu.dot_dimension_numbers<[1], [0], [0], [1], [0, 0, 1, 1], [], []>} : vector<64x64xbf16>, vector<64x8xbf16>, vector<64x8xf32> -> vector<64x8xf32>
    %c64_55 = arith.constant 64 : index
    %c8_56 = arith.constant 8 : index
    %157 = vector.load %arg14[%c64_55, %c8_56] : memref<128x32xf32, #tpu.memory_space<vmem>>, vector<64x8xf32>
    tpu.vector_store %arg14[%c64_55, %c8_56], %156 {strides = array<i32>} : memref<128x32xf32, #tpu.memory_space<vmem>>, vector<64x8xf32>,
    %158 = vector.extract_strided_slice %115 {offsets = [0, 16], sizes = [64, 8], strides = [1, 1]} : vector<64x32xbf16> to vector<64x8xbf16>
    %159 = vector.extract_strided_slice %116 {offsets = [0, 16], sizes = [64, 8], strides = [1, 1]} : vector<64x32xbf16> to vector<64x8xbf16>
    %cst_57 = arith.constant dense<0.000000e+00> : vector<64x64xf32>
    %160 = tpu.matmul %158, %159, %cst_57 {dimension_numbers = #tpu.dot_dimension_numbers<[1], [1], [0], [0], [0, 0, 1, 0], [], []>} : vector<64x8xbf16>, vector<64x8xbf16>, vector<64x64xf32> -> vector<64x64xf32>
    %161 = arith.addf %160, %121 : vector<64x64xf32>
    %cst_58 = arith.constant dense<0xFF800000> : vector<64xf32>
    %162 = vector.multi_reduction <maximumf>, %161, %cst_58 [1] : vector<64x64xf32> to vector<64xf32>
    %163 = vector.shape_cast %162 : vector<64xf32> to vector<64x1xf32>
    %164 = vector.broadcast %163 : vector<64x1xf32> to vector<64x64xf32>
    %165 = arith.subf %161, %164 : vector<64x64xf32>
    %166 = math.exp %165 : vector<64x64xf32>
    %cst_59 = arith.constant dense<0.000000e+00> : vector<64xf32>
    %167 = vector.multi_reduction <add>, %166, %cst_59 [1] : vector<64x64xf32> to vector<64xf32>
    %168 = vector.shape_cast %167 : vector<64xf32> to vector<64x1xf32>
    %169 = tpu.reciprocal %168 {approx = true} : vector<64x1xf32> -> vector<64x1xf32>
    %170 = vector.broadcast %169 : vector<64x1xf32> to vector<64x64xf32>
    %171 = arith.mulf %166, %170 : vector<64x64xf32>
    %172 = arith.truncf %171 : vector<64x64xf32> to vector<64x64xbf16>
    %173 = vector.extract_strided_slice %117 {offsets = [0, 16], sizes = [64, 8], strides = [1, 1]} : vector<64x32xbf16> to vector<64x8xbf16>
    %cst_60 = arith.constant dense<0.000000e+00> : vector<64x8xf32>
    %174 = tpu.matmul %172, %173, %cst_60 {dimension_numbers = #tpu.dot_dimension_numbers<[1], [0], [0], [1], [0, 0, 1, 1], [], []>} : vector<64x64xbf16>, vector<64x8xbf16>, vector<64x8xf32> -> vector<64x8xf32>
    %c64_61 = arith.constant 64 : index
    %c16_62 = arith.constant 16 : index
    %175 = vector.load %arg14[%c64_61, %c16_62] : memref<128x32xf32, #tpu.memory_space<vmem>>, vector<64x8xf32>
    tpu.vector_store %arg14[%c64_61, %c16_62], %174 {strides = array<i32>} : memref<128x32xf32, #tpu.memory_space<vmem>>, vector<64x8xf32>,
    %176 = vector.extract_strided_slice %115 {offsets = [0, 24], sizes = [64, 8], strides = [1, 1]} : vector<64x32xbf16> to vector<64x8xbf16>
    %177 = vector.extract_strided_slice %116 {offsets = [0, 24], sizes = [64, 8], strides = [1, 1]} : vector<64x32xbf16> to vector<64x8xbf16>
    %cst_63 = arith.constant dense<0.000000e+00> : vector<64x64xf32>
    %178 = tpu.matmul %176, %177, %cst_63 {dimension_numbers = #tpu.dot_dimension_numbers<[1], [1], [0], [0], [0, 0, 1, 0], [], []>} : vector<64x8xbf16>, vector<64x8xbf16>, vector<64x64xf32> -> vector<64x64xf32>
    %179 = arith.addf %178, %121 : vector<64x64xf32>
    %cst_64 = arith.constant dense<0xFF800000> : vector<64xf32>
    %180 = vector.multi_reduction <maximumf>, %179, %cst_64 [1] : vector<64x64xf32> to vector<64xf32>
    %181 = vector.shape_cast %180 : vector<64xf32> to vector<64x1xf32>
    %182 = vector.broadcast %181 : vector<64x1xf32> to vector<64x64xf32>
    %183 = arith.subf %179, %182 : vector<64x64xf32>
    %184 = math.exp %183 : vector<64x64xf32>
    %cst_65 = arith.constant dense<0.000000e+00> : vector<64xf32>
    %185 = vector.multi_reduction <add>, %184, %cst_65 [1] : vector<64x64xf32> to vector<64xf32>
    %186 = vector.shape_cast %185 : vector<64xf32> to vector<64x1xf32>
    %187 = tpu.reciprocal %186 {approx = true} : vector<64x1xf32> -> vector<64x1xf32>
    %188 = vector.broadcast %187 : vector<64x1xf32> to vector<64x64xf32>
    %189 = arith.mulf %184, %188 : vector<64x64xf32>
    %190 = arith.truncf %189 : vector<64x64xf32> to vector<64x64xbf16>
    %191 = vector.extract_strided_slice %117 {offsets = [0, 24], sizes = [64, 8], strides = [1, 1]} : vector<64x32xbf16> to vector<64x8xbf16>
    %cst_66 = arith.constant dense<0.000000e+00> : vector<64x8xf32>
    %192 = tpu.matmul %190, %191, %cst_66 {dimension_numbers = #tpu.dot_dimension_numbers<[1], [0], [0], [1], [0, 0, 1, 1], [], []>} : vector<64x64xbf16>, vector<64x8xbf16>, vector<64x8xf32> -> vector<64x8xf32>
    %c64_67 = arith.constant 64 : index
    %c24_68 = arith.constant 24 : index
    %193 = vector.load %arg14[%c64_67, %c24_68] : memref<128x32xf32, #tpu.memory_space<vmem>>, vector<64x8xf32>
    tpu.vector_store %arg14[%c64_67, %c24_68], %192 {strides = array<i32>} : memref<128x32xf32, #tpu.memory_space<vmem>>, vector<64x8xf32>,
    %c0_69 = arith.constant 0 : index
    %c0_70 = arith.constant 0 : index
    %194 = vector.load %arg14[%c0_69, %c0_70] : memref<128x32xf32, #tpu.memory_space<vmem>>, vector<128x32xf32>
    %195 = arith.truncf %194 : vector<128x32xf32> to vector<128x32xbf16>
    %cst_71 = arith.constant dense<0.000000e+00> : vector<128x32xf32>
    %196 = tpu.matmul %195, %16, %cst_71 {dimension_numbers = #tpu.dot_dimension_numbers<[1], [0], [0], [1], [0, 0, 1, 1], [], []>} : vector<128x32xbf16>, vector<32x32xbf16>, vector<128x32xf32> -> vector<128x32xf32>
    %197 = vector.broadcast %18 : vector<1x32xf32> to vector<128x32xf32>
    %198 = arith.addf %196, %197 : vector<128x32xf32>
    %199 = arith.addf %4, %198 : vector<128x32xf32>
    %200 = vector.extract_strided_slice %9 {offsets = [0, 0], sizes = [1, 32], strides = [1, 1]} : vector<4x32xf32> to vector<1x32xf32>
    %201 = vector.extract_strided_slice %9 {offsets = [1, 0], sizes = [1, 32], strides = [1, 1]} : vector<4x32xf32> to vector<1x32xf32>
    %cst_72 = arith.constant dense<0.000000e+00> : vector<128xf32>
    %202 = vector.multi_reduction <add>, %199, %cst_72 [1] : vector<128x32xf32> to vector<128xf32>
    %203 = vector.shape_cast %202 : vector<128xf32> to vector<128x1xf32>
    %cst_73 = arith.constant 3.200000e+01 : f32
    %204 = vector.broadcast %cst_73 : f32 to vector<128x1xf32>
    %205 = arith.divf %203, %204 : vector<128x1xf32>
    %206 = vector.broadcast %205 : vector<128x1xf32> to vector<128x32xf32>
    %207 = arith.subf %199, %206 : vector<128x32xf32>
    %208 = arith.mulf %207, %207 : vector<128x32xf32>
    %cst_74 = arith.constant dense<0.000000e+00> : vector<128xf32>
    %209 = vector.multi_reduction <add>, %208, %cst_74 [1] : vector<128x32xf32> to vector<128xf32>
    %210 = vector.shape_cast %209 : vector<128xf32> to vector<128x1xf32>
    %cst_75 = arith.constant 3.200000e+01 : f32
    %211 = vector.broadcast %cst_75 : f32 to vector<128x1xf32>
    %212 = arith.divf %210, %211 : vector<128x1xf32>
    %cst_76 = arith.constant 9.99999974E-6 : f32
    %213 = vector.broadcast %cst_76 : f32 to vector<128x1xf32>
    %214 = arith.addf %212, %213 : vector<128x1xf32>
    %215 = math.rsqrt %214 : vector<128x1xf32>
    %216 = vector.broadcast %215 : vector<128x1xf32> to vector<128x32xf32>
    %217 = arith.mulf %207, %216 : vector<128x32xf32>
    %218 = vector.broadcast %200 : vector<1x32xf32> to vector<128x32xf32>
    %219 = arith.mulf %217, %218 : vector<128x32xf32>
    %220 = vector.broadcast %201 : vector<1x32xf32> to vector<128x32xf32>
    %221 = arith.addf %219, %220 : vector<128x32xf32>
    %222 = arith.truncf %221 : vector<128x32xf32> to vector<128x32xbf16>
    %c0_77 = arith.constant 0 : index
    %c0_78 = arith.constant 0 : index
    %c0_79 = arith.constant 0 : index
    %223 = vector.load %arg8[%c0_77, %c0_78, %c0_79] : memref<1x32x64xbf16, #tpu.memory_space<vmem>>, vector<1x32x64xbf16>
    %224 = vector.shape_cast %223 : vector<1x32x64xbf16> to vector<32x64xbf16>
    %cst_80 = arith.constant dense<0.000000e+00> : vector<128x64xf32>
    %225 = tpu.matmul %222, %224, %cst_80 {dimension_numbers = #tpu.dot_dimension_numbers<[1], [0], [0], [1], [0, 0, 1, 1], [], []>} : vector<128x32xbf16>, vector<32x64xbf16>, vector<128x64xf32> -> vector<128x64xf32>
    %c0_81 = arith.constant 0 : index
    %c0_82 = arith.constant 0 : index
    %c0_83 = arith.constant 0 : index
    %226 = vector.load %arg9[%c0_81, %c0_82, %c0_83] : memref<1x1x64xf32, #tpu.memory_space<vmem>>, vector<1x1x64xf32>
    %227 = vector.shape_cast %226 : vector<1x1x64xf32> to vector<1x64xf32>
    %228 = vector.broadcast %227 : vector<1x64xf32> to vector<128x64xf32>
    %229 = arith.addf %225, %228 : vector<128x64xf32>
    %cst_84 = arith.constant 0.000000e+00 : f32
    %230 = vector.broadcast %cst_84 : f32 to vector<128x64xf32>
    %231 = arith.maximumf %229, %230 : vector<128x64xf32>
    %232 = arith.truncf %231 : vector<128x64xf32> to vector<128x64xbf16>
    %c0_85 = arith.constant 0 : index
    %c0_86 = arith.constant 0 : index
    %c0_87 = arith.constant 0 : index
    %233 = vector.load %arg10[%c0_85, %c0_86, %c0_87] : memref<1x64x32xbf16, #tpu.memory_space<vmem>>, vector<1x64x32xbf16>
    %234 = vector.shape_cast %233 : vector<1x64x32xbf16> to vector<64x32xbf16>
    %cst_88 = arith.constant dense<0.000000e+00> : vector<128x32xf32>
    %235 = tpu.matmul %232, %234, %cst_88 {dimension_numbers = #tpu.dot_dimension_numbers<[1], [0], [0], [1], [0, 0, 1, 1], [], []>} : vector<128x64xbf16>, vector<64x32xbf16>, vector<128x32xf32> -> vector<128x32xf32>
    %c0_89 = arith.constant 0 : index
    %c0_90 = arith.constant 0 : index
    %c0_91 = arith.constant 0 : index
    %236 = vector.load %arg11[%c0_89, %c0_90, %c0_91] : memref<1x1x32xf32, #tpu.memory_space<vmem>>, vector<1x1x32xf32>
    %237 = vector.shape_cast %236 : vector<1x1x32xf32> to vector<1x32xf32>
    %238 = vector.broadcast %237 : vector<1x32xf32> to vector<128x32xf32>
    %239 = arith.addf %235, %238 : vector<128x32xf32>
    %240 = arith.addf %221, %239 : vector<128x32xf32>
    %241 = vector.extract_strided_slice %9 {offsets = [2, 0], sizes = [1, 32], strides = [1, 1]} : vector<4x32xf32> to vector<1x32xf32>
    %242 = vector.extract_strided_slice %9 {offsets = [3, 0], sizes = [1, 32], strides = [1, 1]} : vector<4x32xf32> to vector<1x32xf32>
    %cst_92 = arith.constant dense<0.000000e+00> : vector<128xf32>
    %243 = vector.multi_reduction <add>, %240, %cst_92 [1] : vector<128x32xf32> to vector<128xf32>
    %244 = vector.shape_cast %243 : vector<128xf32> to vector<128x1xf32>
    %cst_93 = arith.constant 3.200000e+01 : f32
    %245 = vector.broadcast %cst_93 : f32 to vector<128x1xf32>
    %246 = arith.divf %244, %245 : vector<128x1xf32>
    %247 = vector.broadcast %246 : vector<128x1xf32> to vector<128x32xf32>
    %248 = arith.subf %240, %247 : vector<128x32xf32>
    %249 = arith.mulf %248, %248 : vector<128x32xf32>
    %cst_94 = arith.constant dense<0.000000e+00> : vector<128xf32>
    %250 = vector.multi_reduction <add>, %249, %cst_94 [1] : vector<128x32xf32> to vector<128xf32>
    %251 = vector.shape_cast %250 : vector<128xf32> to vector<128x1xf32>
    %cst_95 = arith.constant 3.200000e+01 : f32
    %252 = vector.broadcast %cst_95 : f32 to vector<128x1xf32>
    %253 = arith.divf %251, %252 : vector<128x1xf32>
    %cst_96 = arith.constant 9.99999974E-6 : f32
    %254 = vector.broadcast %cst_96 : f32 to vector<128x1xf32>
    %255 = arith.addf %253, %254 : vector<128x1xf32>
    %256 = math.rsqrt %255 : vector<128x1xf32>
    %257 = vector.broadcast %256 : vector<128x1xf32> to vector<128x32xf32>
    %258 = arith.mulf %248, %257 : vector<128x32xf32>
    %259 = vector.broadcast %241 : vector<1x32xf32> to vector<128x32xf32>
    %260 = arith.mulf %258, %259 : vector<128x32xf32>
    %261 = vector.broadcast %242 : vector<1x32xf32> to vector<128x32xf32>
    %262 = arith.addf %260, %261 : vector<128x32xf32>
    %263 = vector.shape_cast %262 : vector<128x32xf32> to vector<2x64x32xf32>
    %c0_97 = arith.constant 0 : index
    %c0_98 = arith.constant 0 : index
    %c0_99 = arith.constant 0 : index
    %264 = vector.load %arg13[%c0_97, %c0_98, %c0_99] : memref<2x64x32xf32, #tpu.memory_space<vmem>>, vector<2x64x32xf32>
    tpu.vector_store %arg13[%c0_97, %c0_98, %c0_99], %263 {strides = array<i32>} : memref<2x64x32xf32, #tpu.memory_space<vmem>>, vector<2x64x32xf32>,
    return
  }
  func.func @transform_0(%arg0: i32) -> (i32, i32, i32) {
    %c0_i32 = arith.constant 0 : i32
    %c0_i32_0 = arith.constant 0 : i32
    %c0_i32_1 = arith.constant 0 : i32
    %c0_i32_2 = arith.constant 0 : i32
    return %c0_i32, %c0_i32_0, %c0_i32_1 : i32, i32, i32
  }
  func.func @transform_1(%arg0: i32) -> (i32, i32, i32) {
    %c0_i32 = arith.constant 0 : i32
    %c0_i32_0 = arith.constant 0 : i32
    %c0_i32_1 = arith.constant 0 : i32
    %c0_i32_2 = arith.constant 0 : i32
    return %c0_i32, %c0_i32_0, %c0_i32_1 : i32, i32, i32
  }
  func.func @transform_2(%arg0: i32) -> (i32, i32, i32) {
    %c0_i32 = arith.constant 0 : i32
    %c0_i32_0 = arith.constant 0 : i32
    %c0_i32_1 = arith.constant 0 : i32
    %c0_i32_2 = arith.constant 0 : i32
    return %c0_i32, %c0_i32_0, %c0_i32_1 : i32, i32, i32
  }
  func.func @transform_3(%arg0: i32) -> (i32, i32, i32) {
    %c0_i32 = arith.constant 0 : i32
    %c0_i32_0 = arith.constant 0 : i32
    %c0_i32_1 = arith.constant 0 : i32
    return %arg0, %c0_i32, %c0_i32_0 : i32, i32, i32
  }
  func.func @transform_4(%arg0: i32) -> (i32, i32, i32) {
    %c0_i32 = arith.constant 0 : i32
    %c0_i32_0 = arith.constant 0 : i32
    %c0_i32_1 = arith.constant 0 : i32
    return %arg0, %c0_i32, %c0_i32_0 : i32, i32, i32
  }
  func.func @transform_5(%arg0: i32) -> (i32, i32, i32) {
    %c0_i32 = arith.constant 0 : i32
    %c0_i32_0 = arith.constant 0 : i32
    %c0_i32_1 = arith.constant 0 : i32
    return %arg0, %c0_i32, %c0_i32_0 : i32, i32, i32
  }
  func.func @transform_6(%arg0: i32) -> (i32, i32, i32) {
    %c0_i32 = arith.constant 0 : i32
    %c0_i32_0 = arith.constant 0 : i32
    %c0_i32_1 = arith.constant 0 : i32
    return %arg0, %c0_i32, %c0_i32_0 : i32, i32, i32
  }
  func.func @transform_7(%arg0: i32) -> (i32, i32, i32) {
    %c0_i32 = arith.constant 0 : i32
    %c0_i32_0 = arith.constant 0 : i32
    %c0_i32_1 = arith.constant 0 : i32
    return %arg0, %c0_i32, %c0_i32_0 : i32, i32, i32
  }
  func.func @transform_8(%arg0: i32) -> (i32, i32, i32) {
    %c0_i32 = arith.constant 0 : i32
    %c0_i32_0 = arith.constant 0 : i32
    %c0_i32_1 = arith.constant 0 : i32
    return %arg0, %c0_i32, %c0_i32_0 : i32, i32, i32
  }
  func.func @transform_9(%arg0: i32) -> (i32, i32, i32) {
    %c0_i32 = arith.constant 0 : i32
    %c0_i32_0 = arith.constant 0 : i32
    %c0_i32_1 = arith.constant 0 : i32
    return %arg0, %c0_i32, %c0_i32_0 : i32, i32, i32
  }
  func.func @transform_10(%arg0: i32) -> (i32, i32, i32) {
    %c0_i32 = arith.constant 0 : i32
    %c0_i32_0 = arith.constant 0 : i32
    %c0_i32_1 = arith.constant 0 : i32
    return %arg0, %c0_i32, %c0_i32_0 : i32, i32, i32
  }
  func.func @transform_11(%arg0: i32) -> (i32, i32, i32) {
    %c0_i32 = arith.constant 0 : i32
    %c0_i32_0 = arith.constant 0 : i32
    %c0_i32_1 = arith.constant 0 : i32
    return %arg0, %c0_i32, %c0_i32_0 : i32, i32, i32
  }
  func.func @transform_12(%arg0: i32) -> (i32, i32, i32) {
    %c0_i32 = arith.constant 0 : i32
    %c0_i32_0 = arith.constant 0 : i32
    %c0_i32_1 = arith.constant 0 : i32
    %c0_i32_2 = arith.constant 0 : i32
    return %c0_i32, %c0_i32_0, %c0_i32_1 : i32, i32, i32
  }
}

module attributes {stable_mosaic.version = 11 : i64} {
  func.func @_decoder_stack_kernel(%arg0: i32, %arg1: memref<2x64x32xf32, #tpu.memory_space<vmem>>, %arg2: memref<2x8x32xf32, #tpu.memory_space<vmem>>, %arg3: memref<2x64x32xf32, #tpu.memory_space<vmem>>, %arg4: memref<2x1x64xf32, #tpu.memory_space<vmem>>, %arg5: memref<1x32x96xbf16, #tpu.memory_space<vmem>>, %arg6: memref<1x1x96xf32, #tpu.memory_space<vmem>>, %arg7: memref<1x32x32xbf16, #tpu.memory_space<vmem>>, %arg8: memref<1x1x32xf32, #tpu.memory_space<vmem>>, %arg9: memref<1x32x96xbf16, #tpu.memory_space<vmem>>, %arg10: memref<1x1x96xf32, #tpu.memory_space<vmem>>, %arg11: memref<1x32x32xbf16, #tpu.memory_space<vmem>>, %arg12: memref<1x1x32xf32, #tpu.memory_space<vmem>>, %arg13: memref<1x32x64xbf16, #tpu.memory_space<vmem>>, %arg14: memref<1x1x64xf32, #tpu.memory_space<vmem>>, %arg15: memref<1x64x32xbf16, #tpu.memory_space<vmem>>, %arg16: memref<1x1x32xf32, #tpu.memory_space<vmem>>, %arg17: memref<1x6x32xf32, #tpu.memory_space<vmem>>, %arg18: memref<2x32xf32, #tpu.memory_space<vmem>>, %arg19: memref<1x2x8x32xf32, #tpu.memory_space<vmem>>, %arg20: memref<16x32xf32, #tpu.memory_space<vmem>>, %arg21: memref<16x32xf32, #tpu.memory_space<vmem>>, %arg22: memref<128x32xbf16, #tpu.memory_space<vmem>>, %arg23: memref<128x32xbf16, #tpu.memory_space<vmem>>) attributes {dimension_semantics = [#tpu.dimension_semantics<arbitrary>], iteration_bounds = array<i64: 2>, scalar_prefetch = 0 : i64, scratch_operands = 4 : i64, tpu.core_type = #tpu.core_type<tc>, window_params = [{pipeline_mode = #tpu.pipeline_mode<synchronous>, transform_indices = @transform_0, window_bounds = array<i64: 2, 64, 32>}, {pipeline_mode = #tpu.pipeline_mode<synchronous>, transform_indices = @transform_1, window_bounds = array<i64: 2, 8, 32>}, {pipeline_mode = #tpu.pipeline_mode<synchronous>, transform_indices = @transform_2, window_bounds = array<i64: 2, 64, 32>}, {pipeline_mode = #tpu.pipeline_mode<synchronous>, transform_indices = @transform_3, window_bounds = array<i64: 2, 1, 64>}, {transform_indices = @transform_4, window_bounds = array<i64: 1, 32, 96>}, {transform_indices = @transform_5, window_bounds = array<i64: 1, 1, 96>}, {transform_indices = @transform_6, window_bounds = array<i64: 1, 32, 32>}, {transform_indices = @transform_7, window_bounds = array<i64: 1, 1, 32>}, {transform_indices = @transform_8, window_bounds = array<i64: 1, 32, 96>}, {transform_indices = @transform_9, window_bounds = array<i64: 1, 1, 96>}, {transform_indices = @transform_10, window_bounds = array<i64: 1, 32, 32>}, {transform_indices = @transform_11, window_bounds = array<i64: 1, 1, 32>}, {transform_indices = @transform_12, window_bounds = array<i64: 1, 32, 64>}, {transform_indices = @transform_13, window_bounds = array<i64: 1, 1, 64>}, {transform_indices = @transform_14, window_bounds = array<i64: 1, 64, 32>}, {transform_indices = @transform_15, window_bounds = array<i64: 1, 1, 32>}, {transform_indices = @transform_16, window_bounds = array<i64: 1, 6, 32>}, {pipeline_mode = #tpu.pipeline_mode<synchronous>, transform_indices = @transform_17, window_bounds = array<i64: 2, 32>}, {transform_indices = @transform_18, window_bounds = array<i64: 1, 2, 8, 32>}]} {
    %c0_i32 = arith.constant 0 : i32
    %0 = arith.cmpi eq, %arg0, %c0_i32 : i32
    %1 = arith.extui %0 : i1 to i32
    %c0_i32_0 = arith.constant 0 : i32
    %2 = arith.cmpi ne, %1, %c0_i32_0 : i32
    scf.if %2 {
      %cst_185 = arith.constant 0.000000e+00 : f32
      %490 = vector.broadcast %cst_185 : f32 to vector<16x32xf32>
      %c0_186 = arith.constant 0 : index
      %c0_187 = arith.constant 0 : index
      %491 = vector.load %arg20[%c0_186, %c0_187] : memref<16x32xf32, #tpu.memory_space<vmem>>, vector<16x32xf32>
      tpu.vector_store %arg20[%c0_186, %c0_187], %490 {strides = array<i32>} : memref<16x32xf32, #tpu.memory_space<vmem>>, vector<16x32xf32>,
      %c0_188 = arith.constant 0 : index
      %c0_189 = arith.constant 0 : index
      %c0_190 = arith.constant 0 : index
      %492 = vector.load %arg1[%c0_188, %c0_189, %c0_190] : memref<2x64x32xf32, #tpu.memory_space<vmem>>, vector<2x64x32xf32>
      %493 = vector.shape_cast %492 : vector<2x64x32xf32> to vector<128x32xf32>
      %c0_191 = arith.constant 0 : index
      %c0_192 = arith.constant 0 : index
      %c0_193 = arith.constant 0 : index
      %494 = vector.load %arg3[%c0_191, %c0_192, %c0_193] : memref<2x64x32xf32, #tpu.memory_space<vmem>>, vector<2x64x32xf32>
      %495 = vector.shape_cast %494 : vector<2x64x32xf32> to vector<128x32xf32>
      %496 = arith.addf %493, %495 : vector<128x32xf32>
      %497 = arith.truncf %496 : vector<128x32xf32> to vector<128x32xbf16>
      %c0_194 = arith.constant 0 : index
      %c0_195 = arith.constant 0 : index
      %498 = vector.load %arg22[%c0_194, %c0_195] : memref<128x32xbf16, #tpu.memory_space<vmem>>, vector<128x32xbf16>
      tpu.vector_store %arg22[%c0_194, %c0_195], %497 {strides = array<i32>} : memref<128x32xbf16, #tpu.memory_space<vmem>>, vector<128x32xbf16>,
      %499 = arith.truncf %493 : vector<128x32xf32> to vector<128x32xbf16>
      %c0_196 = arith.constant 0 : index
      %c0_197 = arith.constant 0 : index
      %500 = vector.load %arg23[%c0_196, %c0_197] : memref<128x32xbf16, #tpu.memory_space<vmem>>, vector<128x32xbf16>
      tpu.vector_store %arg23[%c0_196, %c0_197], %499 {strides = array<i32>} : memref<128x32xbf16, #tpu.memory_space<vmem>>, vector<128x32xbf16>,
    } else {
    }
    %c0 = arith.constant 0 : index
    %c0_1 = arith.constant 0 : index
    %3 = vector.load %arg20[%c0, %c0_1] : memref<16x32xf32, #tpu.memory_space<vmem>>, vector<16x32xf32>
    %c0_2 = arith.constant 0 : index
    %c0_3 = arith.constant 0 : index
    %c0_4 = arith.constant 0 : index
    %4 = vector.load %arg2[%c0_2, %c0_3, %c0_4] : memref<2x8x32xf32, #tpu.memory_space<vmem>>, vector<2x8x32xf32>
    %5 = vector.shape_cast %4 : vector<2x8x32xf32> to vector<16x32xf32>
    %c0_5 = arith.constant 0 : index
    %c0_6 = arith.constant 0 : index
    %c0_7 = arith.constant 0 : index
    %6 = vector.load %arg4[%c0_5, %c0_6, %c0_7] : memref<2x1x64xf32, #tpu.memory_space<vmem>>, vector<2x1x64xf32>
    %c0_8 = arith.constant 0 : index
    %c0_9 = arith.constant 0 : index
    %c0_10 = arith.constant 0 : index
    %7 = vector.load %arg17[%c0_8, %c0_9, %c0_10] : memref<1x6x32xf32, #tpu.memory_space<vmem>>, vector<1x6x32xf32>
    %8 = vector.shape_cast %7 : vector<1x6x32xf32> to vector<6x32xf32>
    %c0_11 = arith.constant 0 : index
    %c0_12 = arith.constant 0 : index
    %9 = vector.load %arg18[%c0_11, %c0_12] : memref<2x32xf32, #tpu.memory_space<vmem>>, vector<2x32xf32>
    %10 = arith.addf %3, %5 : vector<16x32xf32>
    %c0_13 = arith.constant 0 : index
    %c0_14 = arith.constant 0 : index
    %c0_15 = arith.constant 0 : index
    %11 = vector.load %arg5[%c0_13, %c0_14, %c0_15] : memref<1x32x96xbf16, #tpu.memory_space<vmem>>, vector<1x32x96xbf16>
    %12 = vector.shape_cast %11 : vector<1x32x96xbf16> to vector<32x96xbf16>
    %c0_16 = arith.constant 0 : index
    %c0_17 = arith.constant 0 : index
    %c0_18 = arith.constant 0 : index
    %13 = vector.load %arg6[%c0_16, %c0_17, %c0_18] : memref<1x1x96xf32, #tpu.memory_space<vmem>>, vector<1x1x96xf32>
    %14 = vector.shape_cast %13 : vector<1x1x96xf32> to vector<1x96xf32>
    %c0_19 = arith.constant 0 : index
    %c0_20 = arith.constant 0 : index
    %c0_21 = arith.constant 0 : index
    %15 = vector.load %arg7[%c0_19, %c0_20, %c0_21] : memref<1x32x32xbf16, #tpu.memory_space<vmem>>, vector<1x32x32xbf16>
    %16 = vector.shape_cast %15 : vector<1x32x32xbf16> to vector<32x32xbf16>
    %c0_22 = arith.constant 0 : index
    %c0_23 = arith.constant 0 : index
    %c0_24 = arith.constant 0 : index
    %17 = vector.load %arg8[%c0_22, %c0_23, %c0_24] : memref<1x1x32xf32, #tpu.memory_space<vmem>>, vector<1x1x32xf32>
    %18 = vector.shape_cast %17 : vector<1x1x32xf32> to vector<1x32xf32>
    %19 = arith.truncf %10 : vector<16x32xf32> to vector<16x32xbf16>
    %20 = arith.truncf %3 : vector<16x32xf32> to vector<16x32xbf16>
    %21 = vector.extract_strided_slice %12 {offsets = [0, 0], sizes = [32, 64], strides = [1, 1]} : vector<32x96xbf16> to vector<32x64xbf16>
    %cst = arith.constant dense<0.000000e+00> : vector<16x64xf32>
    %22 = tpu.matmul %19, %21, %cst {dimension_numbers = #tpu.dot_dimension_numbers<[1], [0], [0], [1], [0, 0, 1, 1], [], []>} : vector<16x32xbf16>, vector<32x64xbf16>, vector<16x64xf32> -> vector<16x64xf32>
    %23 = vector.extract_strided_slice %14 {offsets = [0, 0], sizes = [1, 64], strides = [1, 1]} : vector<1x96xf32> to vector<1x64xf32>
    %24 = vector.broadcast %23 : vector<1x64xf32> to vector<16x64xf32>
    %25 = arith.addf %22, %24 : vector<16x64xf32>
    %26 = vector.extract_strided_slice %25 {offsets = [0, 0], sizes = [16, 32], strides = [1, 1]} : vector<16x64xf32> to vector<16x32xf32>
    %27 = vector.extract_strided_slice %25 {offsets = [0, 32], sizes = [16, 32], strides = [1, 1]} : vector<16x64xf32> to vector<16x32xf32>
    %28 = vector.extract_strided_slice %12 {offsets = [0, 64], sizes = [32, 32], strides = [1, 1]} : vector<32x96xbf16> to vector<32x32xbf16>
    %cst_25 = arith.constant dense<0.000000e+00> : vector<16x32xf32>
    %29 = tpu.matmul %20, %28, %cst_25 {dimension_numbers = #tpu.dot_dimension_numbers<[1], [0], [0], [1], [0, 0, 1, 1], [], []>} : vector<16x32xbf16>, vector<32x32xbf16>, vector<16x32xf32> -> vector<16x32xf32>
    %30 = vector.extract_strided_slice %14 {offsets = [0, 64], sizes = [1, 32], strides = [1, 1]} : vector<1x96xf32> to vector<1x32xf32>
    %31 = vector.broadcast %30 : vector<1x32xf32> to vector<16x32xf32>
    %32 = arith.addf %29, %31 : vector<16x32xf32>
    %33 = arith.truncf %26 : vector<16x32xf32> to vector<16x32xbf16>
    %34 = arith.truncf %27 : vector<16x32xf32> to vector<16x32xbf16>
    %35 = arith.truncf %32 : vector<16x32xf32> to vector<16x32xbf16>
    %36 = vector.extract_strided_slice %33 {offsets = [0, 0], sizes = [8, 32], strides = [1, 1]} : vector<16x32xbf16> to vector<8x32xbf16>
    %37 = vector.extract_strided_slice %34 {offsets = [0, 0], sizes = [8, 32], strides = [1, 1]} : vector<16x32xbf16> to vector<8x32xbf16>
    %38 = vector.extract_strided_slice %35 {offsets = [0, 0], sizes = [8, 32], strides = [1, 1]} : vector<16x32xbf16> to vector<8x32xbf16>
    %39 = vector.extract_strided_slice %36 {offsets = [0, 0], sizes = [8, 8], strides = [1, 1]} : vector<8x32xbf16> to vector<8x8xbf16>
    %40 = vector.extract_strided_slice %37 {offsets = [0, 0], sizes = [8, 8], strides = [1, 1]} : vector<8x32xbf16> to vector<8x8xbf16>
    %cst_26 = arith.constant dense<0.000000e+00> : vector<8x8xf32>
    %41 = tpu.matmul %39, %40, %cst_26 {dimension_numbers = #tpu.dot_dimension_numbers<[1], [1], [0], [0], [0, 0, 1, 0], [], []>} : vector<8x8xbf16>, vector<8x8xbf16>, vector<8x8xf32> -> vector<8x8xf32>
    %cst_27 = arith.constant dense<0xFF800000> : vector<8xf32>
    %42 = vector.multi_reduction <maximumf>, %41, %cst_27 [1] : vector<8x8xf32> to vector<8xf32>
    %43 = vector.shape_cast %42 : vector<8xf32> to vector<8x1xf32>
    %44 = vector.broadcast %43 : vector<8x1xf32> to vector<8x8xf32>
    %45 = arith.subf %41, %44 : vector<8x8xf32>
    %46 = math.exp %45 : vector<8x8xf32>
    %cst_28 = arith.constant dense<0.000000e+00> : vector<8xf32>
    %47 = vector.multi_reduction <add>, %46, %cst_28 [1] : vector<8x8xf32> to vector<8xf32>
    %48 = vector.shape_cast %47 : vector<8xf32> to vector<8x1xf32>
    %49 = tpu.reciprocal %48 {approx = true} : vector<8x1xf32> -> vector<8x1xf32>
    %50 = vector.broadcast %49 : vector<8x1xf32> to vector<8x8xf32>
    %51 = arith.mulf %46, %50 : vector<8x8xf32>
    %52 = arith.truncf %51 : vector<8x8xf32> to vector<8x8xbf16>
    %53 = vector.extract_strided_slice %38 {offsets = [0, 0], sizes = [8, 8], strides = [1, 1]} : vector<8x32xbf16> to vector<8x8xbf16>
    %cst_29 = arith.constant dense<0.000000e+00> : vector<8x8xf32>
    %54 = tpu.matmul %52, %53, %cst_29 {dimension_numbers = #tpu.dot_dimension_numbers<[1], [0], [0], [1], [0, 0, 1, 1], [], []>} : vector<8x8xbf16>, vector<8x8xbf16>, vector<8x8xf32> -> vector<8x8xf32>
    %c0_30 = arith.constant 0 : index
    %c0_31 = arith.constant 0 : index
    %55 = vector.load %arg21[%c0_30, %c0_31] : memref<16x32xf32, #tpu.memory_space<vmem>>, vector<8x8xf32>
    tpu.vector_store %arg21[%c0_30, %c0_31], %54 {strides = array<i32>} : memref<16x32xf32, #tpu.memory_space<vmem>>, vector<8x8xf32>,
    %56 = vector.extract_strided_slice %36 {offsets = [0, 8], sizes = [8, 8], strides = [1, 1]} : vector<8x32xbf16> to vector<8x8xbf16>
    %57 = vector.extract_strided_slice %37 {offsets = [0, 8], sizes = [8, 8], strides = [1, 1]} : vector<8x32xbf16> to vector<8x8xbf16>
    %cst_32 = arith.constant dense<0.000000e+00> : vector<8x8xf32>
    %58 = tpu.matmul %56, %57, %cst_32 {dimension_numbers = #tpu.dot_dimension_numbers<[1], [1], [0], [0], [0, 0, 1, 0], [], []>} : vector<8x8xbf16>, vector<8x8xbf16>, vector<8x8xf32> -> vector<8x8xf32>
    %cst_33 = arith.constant dense<0xFF800000> : vector<8xf32>
    %59 = vector.multi_reduction <maximumf>, %58, %cst_33 [1] : vector<8x8xf32> to vector<8xf32>
    %60 = vector.shape_cast %59 : vector<8xf32> to vector<8x1xf32>
    %61 = vector.broadcast %60 : vector<8x1xf32> to vector<8x8xf32>
    %62 = arith.subf %58, %61 : vector<8x8xf32>
    %63 = math.exp %62 : vector<8x8xf32>
    %cst_34 = arith.constant dense<0.000000e+00> : vector<8xf32>
    %64 = vector.multi_reduction <add>, %63, %cst_34 [1] : vector<8x8xf32> to vector<8xf32>
    %65 = vector.shape_cast %64 : vector<8xf32> to vector<8x1xf32>
    %66 = tpu.reciprocal %65 {approx = true} : vector<8x1xf32> -> vector<8x1xf32>
    %67 = vector.broadcast %66 : vector<8x1xf32> to vector<8x8xf32>
    %68 = arith.mulf %63, %67 : vector<8x8xf32>
    %69 = arith.truncf %68 : vector<8x8xf32> to vector<8x8xbf16>
    %70 = vector.extract_strided_slice %38 {offsets = [0, 8], sizes = [8, 8], strides = [1, 1]} : vector<8x32xbf16> to vector<8x8xbf16>
    %cst_35 = arith.constant dense<0.000000e+00> : vector<8x8xf32>
    %71 = tpu.matmul %69, %70, %cst_35 {dimension_numbers = #tpu.dot_dimension_numbers<[1], [0], [0], [1], [0, 0, 1, 1], [], []>} : vector<8x8xbf16>, vector<8x8xbf16>, vector<8x8xf32> -> vector<8x8xf32>
    %c0_36 = arith.constant 0 : index
    %c8 = arith.constant 8 : index
    %72 = vector.load %arg21[%c0_36, %c8] : memref<16x32xf32, #tpu.memory_space<vmem>>, vector<8x8xf32>
    tpu.vector_store %arg21[%c0_36, %c8], %71 {strides = array<i32>} : memref<16x32xf32, #tpu.memory_space<vmem>>, vector<8x8xf32>,
    %73 = vector.extract_strided_slice %36 {offsets = [0, 16], sizes = [8, 8], strides = [1, 1]} : vector<8x32xbf16> to vector<8x8xbf16>
    %74 = vector.extract_strided_slice %37 {offsets = [0, 16], sizes = [8, 8], strides = [1, 1]} : vector<8x32xbf16> to vector<8x8xbf16>
    %cst_37 = arith.constant dense<0.000000e+00> : vector<8x8xf32>
    %75 = tpu.matmul %73, %74, %cst_37 {dimension_numbers = #tpu.dot_dimension_numbers<[1], [1], [0], [0], [0, 0, 1, 0], [], []>} : vector<8x8xbf16>, vector<8x8xbf16>, vector<8x8xf32> -> vector<8x8xf32>
    %cst_38 = arith.constant dense<0xFF800000> : vector<8xf32>
    %76 = vector.multi_reduction <maximumf>, %75, %cst_38 [1] : vector<8x8xf32> to vector<8xf32>
    %77 = vector.shape_cast %76 : vector<8xf32> to vector<8x1xf32>
    %78 = vector.broadcast %77 : vector<8x1xf32> to vector<8x8xf32>
    %79 = arith.subf %75, %78 : vector<8x8xf32>
    %80 = math.exp %79 : vector<8x8xf32>
    %cst_39 = arith.constant dense<0.000000e+00> : vector<8xf32>
    %81 = vector.multi_reduction <add>, %80, %cst_39 [1] : vector<8x8xf32> to vector<8xf32>
    %82 = vector.shape_cast %81 : vector<8xf32> to vector<8x1xf32>
    %83 = tpu.reciprocal %82 {approx = true} : vector<8x1xf32> -> vector<8x1xf32>
    %84 = vector.broadcast %83 : vector<8x1xf32> to vector<8x8xf32>
    %85 = arith.mulf %80, %84 : vector<8x8xf32>
    %86 = arith.truncf %85 : vector<8x8xf32> to vector<8x8xbf16>
    %87 = vector.extract_strided_slice %38 {offsets = [0, 16], sizes = [8, 8], strides = [1, 1]} : vector<8x32xbf16> to vector<8x8xbf16>
    %cst_40 = arith.constant dense<0.000000e+00> : vector<8x8xf32>
    %88 = tpu.matmul %86, %87, %cst_40 {dimension_numbers = #tpu.dot_dimension_numbers<[1], [0], [0], [1], [0, 0, 1, 1], [], []>} : vector<8x8xbf16>, vector<8x8xbf16>, vector<8x8xf32> -> vector<8x8xf32>
    %c0_41 = arith.constant 0 : index
    %c16 = arith.constant 16 : index
    %89 = vector.load %arg21[%c0_41, %c16] : memref<16x32xf32, #tpu.memory_space<vmem>>, vector<8x8xf32>
    tpu.vector_store %arg21[%c0_41, %c16], %88 {strides = array<i32>} : memref<16x32xf32, #tpu.memory_space<vmem>>, vector<8x8xf32>,
    %90 = vector.extract_strided_slice %36 {offsets = [0, 24], sizes = [8, 8], strides = [1, 1]} : vector<8x32xbf16> to vector<8x8xbf16>
    %91 = vector.extract_strided_slice %37 {offsets = [0, 24], sizes = [8, 8], strides = [1, 1]} : vector<8x32xbf16> to vector<8x8xbf16>
    %cst_42 = arith.constant dense<0.000000e+00> : vector<8x8xf32>
    %92 = tpu.matmul %90, %91, %cst_42 {dimension_numbers = #tpu.dot_dimension_numbers<[1], [1], [0], [0], [0, 0, 1, 0], [], []>} : vector<8x8xbf16>, vector<8x8xbf16>, vector<8x8xf32> -> vector<8x8xf32>
    %cst_43 = arith.constant dense<0xFF800000> : vector<8xf32>
    %93 = vector.multi_reduction <maximumf>, %92, %cst_43 [1] : vector<8x8xf32> to vector<8xf32>
    %94 = vector.shape_cast %93 : vector<8xf32> to vector<8x1xf32>
    %95 = vector.broadcast %94 : vector<8x1xf32> to vector<8x8xf32>
    %96 = arith.subf %92, %95 : vector<8x8xf32>
    %97 = math.exp %96 : vector<8x8xf32>
    %cst_44 = arith.constant dense<0.000000e+00> : vector<8xf32>
    %98 = vector.multi_reduction <add>, %97, %cst_44 [1] : vector<8x8xf32> to vector<8xf32>
    %99 = vector.shape_cast %98 : vector<8xf32> to vector<8x1xf32>
    %100 = tpu.reciprocal %99 {approx = true} : vector<8x1xf32> -> vector<8x1xf32>
    %101 = vector.broadcast %100 : vector<8x1xf32> to vector<8x8xf32>
    %102 = arith.mulf %97, %101 : vector<8x8xf32>
    %103 = arith.truncf %102 : vector<8x8xf32> to vector<8x8xbf16>
    %104 = vector.extract_strided_slice %38 {offsets = [0, 24], sizes = [8, 8], strides = [1, 1]} : vector<8x32xbf16> to vector<8x8xbf16>
    %cst_45 = arith.constant dense<0.000000e+00> : vector<8x8xf32>
    %105 = tpu.matmul %103, %104, %cst_45 {dimension_numbers = #tpu.dot_dimension_numbers<[1], [0], [0], [1], [0, 0, 1, 1], [], []>} : vector<8x8xbf16>, vector<8x8xbf16>, vector<8x8xf32> -> vector<8x8xf32>
    %c0_46 = arith.constant 0 : index
    %c24 = arith.constant 24 : index
    %106 = vector.load %arg21[%c0_46, %c24] : memref<16x32xf32, #tpu.memory_space<vmem>>, vector<8x8xf32>
    tpu.vector_store %arg21[%c0_46, %c24], %105 {strides = array<i32>} : memref<16x32xf32, #tpu.memory_space<vmem>>, vector<8x8xf32>,
    %107 = vector.extract_strided_slice %33 {offsets = [8, 0], sizes = [8, 32], strides = [1, 1]} : vector<16x32xbf16> to vector<8x32xbf16>
    %108 = vector.extract_strided_slice %34 {offsets = [8, 0], sizes = [8, 32], strides = [1, 1]} : vector<16x32xbf16> to vector<8x32xbf16>
    %109 = vector.extract_strided_slice %35 {offsets = [8, 0], sizes = [8, 32], strides = [1, 1]} : vector<16x32xbf16> to vector<8x32xbf16>
    %110 = vector.extract_strided_slice %107 {offsets = [0, 0], sizes = [8, 8], strides = [1, 1]} : vector<8x32xbf16> to vector<8x8xbf16>
    %111 = vector.extract_strided_slice %108 {offsets = [0, 0], sizes = [8, 8], strides = [1, 1]} : vector<8x32xbf16> to vector<8x8xbf16>
    %cst_47 = arith.constant dense<0.000000e+00> : vector<8x8xf32>
    %112 = tpu.matmul %110, %111, %cst_47 {dimension_numbers = #tpu.dot_dimension_numbers<[1], [1], [0], [0], [0, 0, 1, 0], [], []>} : vector<8x8xbf16>, vector<8x8xbf16>, vector<8x8xf32> -> vector<8x8xf32>
    %cst_48 = arith.constant dense<0xFF800000> : vector<8xf32>
    %113 = vector.multi_reduction <maximumf>, %112, %cst_48 [1] : vector<8x8xf32> to vector<8xf32>
    %114 = vector.shape_cast %113 : vector<8xf32> to vector<8x1xf32>
    %115 = vector.broadcast %114 : vector<8x1xf32> to vector<8x8xf32>
    %116 = arith.subf %112, %115 : vector<8x8xf32>
    %117 = math.exp %116 : vector<8x8xf32>
    %cst_49 = arith.constant dense<0.000000e+00> : vector<8xf32>
    %118 = vector.multi_reduction <add>, %117, %cst_49 [1] : vector<8x8xf32> to vector<8xf32>
    %119 = vector.shape_cast %118 : vector<8xf32> to vector<8x1xf32>
    %120 = tpu.reciprocal %119 {approx = true} : vector<8x1xf32> -> vector<8x1xf32>
    %121 = vector.broadcast %120 : vector<8x1xf32> to vector<8x8xf32>
    %122 = arith.mulf %117, %121 : vector<8x8xf32>
    %123 = arith.truncf %122 : vector<8x8xf32> to vector<8x8xbf16>
    %124 = vector.extract_strided_slice %109 {offsets = [0, 0], sizes = [8, 8], strides = [1, 1]} : vector<8x32xbf16> to vector<8x8xbf16>
    %cst_50 = arith.constant dense<0.000000e+00> : vector<8x8xf32>
    %125 = tpu.matmul %123, %124, %cst_50 {dimension_numbers = #tpu.dot_dimension_numbers<[1], [0], [0], [1], [0, 0, 1, 1], [], []>} : vector<8x8xbf16>, vector<8x8xbf16>, vector<8x8xf32> -> vector<8x8xf32>
    %c8_51 = arith.constant 8 : index
    %c0_52 = arith.constant 0 : index
    %126 = vector.load %arg21[%c8_51, %c0_52] : memref<16x32xf32, #tpu.memory_space<vmem>>, vector<8x8xf32>
    tpu.vector_store %arg21[%c8_51, %c0_52], %125 {strides = array<i32>} : memref<16x32xf32, #tpu.memory_space<vmem>>, vector<8x8xf32>,
    %127 = vector.extract_strided_slice %107 {offsets = [0, 8], sizes = [8, 8], strides = [1, 1]} : vector<8x32xbf16> to vector<8x8xbf16>
    %128 = vector.extract_strided_slice %108 {offsets = [0, 8], sizes = [8, 8], strides = [1, 1]} : vector<8x32xbf16> to vector<8x8xbf16>
    %cst_53 = arith.constant dense<0.000000e+00> : vector<8x8xf32>
    %129 = tpu.matmul %127, %128, %cst_53 {dimension_numbers = #tpu.dot_dimension_numbers<[1], [1], [0], [0], [0, 0, 1, 0], [], []>} : vector<8x8xbf16>, vector<8x8xbf16>, vector<8x8xf32> -> vector<8x8xf32>
    %cst_54 = arith.constant dense<0xFF800000> : vector<8xf32>
    %130 = vector.multi_reduction <maximumf>, %129, %cst_54 [1] : vector<8x8xf32> to vector<8xf32>
    %131 = vector.shape_cast %130 : vector<8xf32> to vector<8x1xf32>
    %132 = vector.broadcast %131 : vector<8x1xf32> to vector<8x8xf32>
    %133 = arith.subf %129, %132 : vector<8x8xf32>
    %134 = math.exp %133 : vector<8x8xf32>
    %cst_55 = arith.constant dense<0.000000e+00> : vector<8xf32>
    %135 = vector.multi_reduction <add>, %134, %cst_55 [1] : vector<8x8xf32> to vector<8xf32>
    %136 = vector.shape_cast %135 : vector<8xf32> to vector<8x1xf32>
    %137 = tpu.reciprocal %136 {approx = true} : vector<8x1xf32> -> vector<8x1xf32>
    %138 = vector.broadcast %137 : vector<8x1xf32> to vector<8x8xf32>
    %139 = arith.mulf %134, %138 : vector<8x8xf32>
    %140 = arith.truncf %139 : vector<8x8xf32> to vector<8x8xbf16>
    %141 = vector.extract_strided_slice %109 {offsets = [0, 8], sizes = [8, 8], strides = [1, 1]} : vector<8x32xbf16> to vector<8x8xbf16>
    %cst_56 = arith.constant dense<0.000000e+00> : vector<8x8xf32>
    %142 = tpu.matmul %140, %141, %cst_56 {dimension_numbers = #tpu.dot_dimension_numbers<[1], [0], [0], [1], [0, 0, 1, 1], [], []>} : vector<8x8xbf16>, vector<8x8xbf16>, vector<8x8xf32> -> vector<8x8xf32>
    %c8_57 = arith.constant 8 : index
    %c8_58 = arith.constant 8 : index
    %143 = vector.load %arg21[%c8_57, %c8_58] : memref<16x32xf32, #tpu.memory_space<vmem>>, vector<8x8xf32>
    tpu.vector_store %arg21[%c8_57, %c8_58], %142 {strides = array<i32>} : memref<16x32xf32, #tpu.memory_space<vmem>>, vector<8x8xf32>,
    %144 = vector.extract_strided_slice %107 {offsets = [0, 16], sizes = [8, 8], strides = [1, 1]} : vector<8x32xbf16> to vector<8x8xbf16>
    %145 = vector.extract_strided_slice %108 {offsets = [0, 16], sizes = [8, 8], strides = [1, 1]} : vector<8x32xbf16> to vector<8x8xbf16>
    %cst_59 = arith.constant dense<0.000000e+00> : vector<8x8xf32>
    %146 = tpu.matmul %144, %145, %cst_59 {dimension_numbers = #tpu.dot_dimension_numbers<[1], [1], [0], [0], [0, 0, 1, 0], [], []>} : vector<8x8xbf16>, vector<8x8xbf16>, vector<8x8xf32> -> vector<8x8xf32>
    %cst_60 = arith.constant dense<0xFF800000> : vector<8xf32>
    %147 = vector.multi_reduction <maximumf>, %146, %cst_60 [1] : vector<8x8xf32> to vector<8xf32>
    %148 = vector.shape_cast %147 : vector<8xf32> to vector<8x1xf32>
    %149 = vector.broadcast %148 : vector<8x1xf32> to vector<8x8xf32>
    %150 = arith.subf %146, %149 : vector<8x8xf32>
    %151 = math.exp %150 : vector<8x8xf32>
    %cst_61 = arith.constant dense<0.000000e+00> : vector<8xf32>
    %152 = vector.multi_reduction <add>, %151, %cst_61 [1] : vector<8x8xf32> to vector<8xf32>
    %153 = vector.shape_cast %152 : vector<8xf32> to vector<8x1xf32>
    %154 = tpu.reciprocal %153 {approx = true} : vector<8x1xf32> -> vector<8x1xf32>
    %155 = vector.broadcast %154 : vector<8x1xf32> to vector<8x8xf32>
    %156 = arith.mulf %151, %155 : vector<8x8xf32>
    %157 = arith.truncf %156 : vector<8x8xf32> to vector<8x8xbf16>
    %158 = vector.extract_strided_slice %109 {offsets = [0, 16], sizes = [8, 8], strides = [1, 1]} : vector<8x32xbf16> to vector<8x8xbf16>
    %cst_62 = arith.constant dense<0.000000e+00> : vector<8x8xf32>
    %159 = tpu.matmul %157, %158, %cst_62 {dimension_numbers = #tpu.dot_dimension_numbers<[1], [0], [0], [1], [0, 0, 1, 1], [], []>} : vector<8x8xbf16>, vector<8x8xbf16>, vector<8x8xf32> -> vector<8x8xf32>
    %c8_63 = arith.constant 8 : index
    %c16_64 = arith.constant 16 : index
    %160 = vector.load %arg21[%c8_63, %c16_64] : memref<16x32xf32, #tpu.memory_space<vmem>>, vector<8x8xf32>
    tpu.vector_store %arg21[%c8_63, %c16_64], %159 {strides = array<i32>} : memref<16x32xf32, #tpu.memory_space<vmem>>, vector<8x8xf32>,
    %161 = vector.extract_strided_slice %107 {offsets = [0, 24], sizes = [8, 8], strides = [1, 1]} : vector<8x32xbf16> to vector<8x8xbf16>
    %162 = vector.extract_strided_slice %108 {offsets = [0, 24], sizes = [8, 8], strides = [1, 1]} : vector<8x32xbf16> to vector<8x8xbf16>
    %cst_65 = arith.constant dense<0.000000e+00> : vector<8x8xf32>
    %163 = tpu.matmul %161, %162, %cst_65 {dimension_numbers = #tpu.dot_dimension_numbers<[1], [1], [0], [0], [0, 0, 1, 0], [], []>} : vector<8x8xbf16>, vector<8x8xbf16>, vector<8x8xf32> -> vector<8x8xf32>
    %cst_66 = arith.constant dense<0xFF800000> : vector<8xf32>
    %164 = vector.multi_reduction <maximumf>, %163, %cst_66 [1] : vector<8x8xf32> to vector<8xf32>
    %165 = vector.shape_cast %164 : vector<8xf32> to vector<8x1xf32>
    %166 = vector.broadcast %165 : vector<8x1xf32> to vector<8x8xf32>
    %167 = arith.subf %163, %166 : vector<8x8xf32>
    %168 = math.exp %167 : vector<8x8xf32>
    %cst_67 = arith.constant dense<0.000000e+00> : vector<8xf32>
    %169 = vector.multi_reduction <add>, %168, %cst_67 [1] : vector<8x8xf32> to vector<8xf32>
    %170 = vector.shape_cast %169 : vector<8xf32> to vector<8x1xf32>
    %171 = tpu.reciprocal %170 {approx = true} : vector<8x1xf32> -> vector<8x1xf32>
    %172 = vector.broadcast %171 : vector<8x1xf32> to vector<8x8xf32>
    %173 = arith.mulf %168, %172 : vector<8x8xf32>
    %174 = arith.truncf %173 : vector<8x8xf32> to vector<8x8xbf16>
    %175 = vector.extract_strided_slice %109 {offsets = [0, 24], sizes = [8, 8], strides = [1, 1]} : vector<8x32xbf16> to vector<8x8xbf16>
    %cst_68 = arith.constant dense<0.000000e+00> : vector<8x8xf32>
    %176 = tpu.matmul %174, %175, %cst_68 {dimension_numbers = #tpu.dot_dimension_numbers<[1], [0], [0], [1], [0, 0, 1, 1], [], []>} : vector<8x8xbf16>, vector<8x8xbf16>, vector<8x8xf32> -> vector<8x8xf32>
    %c8_69 = arith.constant 8 : index
    %c24_70 = arith.constant 24 : index
    %177 = vector.load %arg21[%c8_69, %c24_70] : memref<16x32xf32, #tpu.memory_space<vmem>>, vector<8x8xf32>
    tpu.vector_store %arg21[%c8_69, %c24_70], %176 {strides = array<i32>} : memref<16x32xf32, #tpu.memory_space<vmem>>, vector<8x8xf32>,
    %c0_71 = arith.constant 0 : index
    %c0_72 = arith.constant 0 : index
    %178 = vector.load %arg21[%c0_71, %c0_72] : memref<16x32xf32, #tpu.memory_space<vmem>>, vector<16x32xf32>
    %179 = arith.truncf %178 : vector<16x32xf32> to vector<16x32xbf16>
    %cst_73 = arith.constant dense<0.000000e+00> : vector<16x32xf32>
    %180 = tpu.matmul %179, %16, %cst_73 {dimension_numbers = #tpu.dot_dimension_numbers<[1], [0], [0], [1], [0, 0, 1, 1], [], []>} : vector<16x32xbf16>, vector<32x32xbf16>, vector<16x32xf32> -> vector<16x32xf32>
    %181 = vector.broadcast %18 : vector<1x32xf32> to vector<16x32xf32>
    %182 = arith.addf %180, %181 : vector<16x32xf32>
    %183 = arith.addf %3, %182 : vector<16x32xf32>
    %184 = vector.extract_strided_slice %8 {offsets = [0, 0], sizes = [1, 32], strides = [1, 1]} : vector<6x32xf32> to vector<1x32xf32>
    %185 = vector.extract_strided_slice %8 {offsets = [1, 0], sizes = [1, 32], strides = [1, 1]} : vector<6x32xf32> to vector<1x32xf32>
    %cst_74 = arith.constant dense<0.000000e+00> : vector<16xf32>
    %186 = vector.multi_reduction <add>, %183, %cst_74 [1] : vector<16x32xf32> to vector<16xf32>
    %187 = vector.shape_cast %186 : vector<16xf32> to vector<16x1xf32>
    %cst_75 = arith.constant 3.200000e+01 : f32
    %188 = vector.broadcast %cst_75 : f32 to vector<16x1xf32>
    %189 = arith.divf %187, %188 : vector<16x1xf32>
    %190 = vector.broadcast %189 : vector<16x1xf32> to vector<16x32xf32>
    %191 = arith.subf %183, %190 : vector<16x32xf32>
    %192 = arith.mulf %191, %191 : vector<16x32xf32>
    %cst_76 = arith.constant dense<0.000000e+00> : vector<16xf32>
    %193 = vector.multi_reduction <add>, %192, %cst_76 [1] : vector<16x32xf32> to vector<16xf32>
    %194 = vector.shape_cast %193 : vector<16xf32> to vector<16x1xf32>
    %cst_77 = arith.constant 3.200000e+01 : f32
    %195 = vector.broadcast %cst_77 : f32 to vector<16x1xf32>
    %196 = arith.divf %194, %195 : vector<16x1xf32>
    %cst_78 = arith.constant 9.99999974E-6 : f32
    %197 = vector.broadcast %cst_78 : f32 to vector<16x1xf32>
    %198 = arith.addf %196, %197 : vector<16x1xf32>
    %199 = math.rsqrt %198 : vector<16x1xf32>
    %200 = vector.broadcast %199 : vector<16x1xf32> to vector<16x32xf32>
    %201 = arith.mulf %191, %200 : vector<16x32xf32>
    %202 = vector.broadcast %184 : vector<1x32xf32> to vector<16x32xf32>
    %203 = arith.mulf %201, %202 : vector<16x32xf32>
    %204 = vector.broadcast %185 : vector<1x32xf32> to vector<16x32xf32>
    %205 = arith.addf %203, %204 : vector<16x32xf32>
    %206 = arith.addf %205, %5 : vector<16x32xf32>
    %c0_79 = arith.constant 0 : index
    %c0_80 = arith.constant 0 : index
    %207 = vector.load %arg22[%c0_79, %c0_80] : memref<128x32xbf16, #tpu.memory_space<vmem>>, vector<128x32xbf16>
    %c0_81 = arith.constant 0 : index
    %c0_82 = arith.constant 0 : index
    %208 = vector.load %arg23[%c0_81, %c0_82] : memref<128x32xbf16, #tpu.memory_space<vmem>>, vector<128x32xbf16>
    %c0_83 = arith.constant 0 : index
    %c0_84 = arith.constant 0 : index
    %c0_85 = arith.constant 0 : index
    %209 = vector.load %arg9[%c0_83, %c0_84, %c0_85] : memref<1x32x96xbf16, #tpu.memory_space<vmem>>, vector<1x32x96xbf16>
    %210 = vector.shape_cast %209 : vector<1x32x96xbf16> to vector<32x96xbf16>
    %c0_86 = arith.constant 0 : index
    %c0_87 = arith.constant 0 : index
    %c0_88 = arith.constant 0 : index
    %211 = vector.load %arg10[%c0_86, %c0_87, %c0_88] : memref<1x1x96xf32, #tpu.memory_space<vmem>>, vector<1x1x96xf32>
    %212 = vector.shape_cast %211 : vector<1x1x96xf32> to vector<1x96xf32>
    %c0_89 = arith.constant 0 : index
    %c0_90 = arith.constant 0 : index
    %c0_91 = arith.constant 0 : index
    %213 = vector.load %arg11[%c0_89, %c0_90, %c0_91] : memref<1x32x32xbf16, #tpu.memory_space<vmem>>, vector<1x32x32xbf16>
    %214 = vector.shape_cast %213 : vector<1x32x32xbf16> to vector<32x32xbf16>
    %c0_92 = arith.constant 0 : index
    %c0_93 = arith.constant 0 : index
    %c0_94 = arith.constant 0 : index
    %215 = vector.load %arg12[%c0_92, %c0_93, %c0_94] : memref<1x1x32xf32, #tpu.memory_space<vmem>>, vector<1x1x32xf32>
    %216 = vector.shape_cast %215 : vector<1x1x32xf32> to vector<1x32xf32>
    %217 = arith.truncf %206 : vector<16x32xf32> to vector<16x32xbf16>
    %218 = vector.extract_strided_slice %210 {offsets = [0, 0], sizes = [32, 32], strides = [1, 1]} : vector<32x96xbf16> to vector<32x32xbf16>
    %cst_95 = arith.constant dense<0.000000e+00> : vector<16x32xf32>
    %219 = tpu.matmul %217, %218, %cst_95 {dimension_numbers = #tpu.dot_dimension_numbers<[1], [0], [0], [1], [0, 0, 1, 1], [], []>} : vector<16x32xbf16>, vector<32x32xbf16>, vector<16x32xf32> -> vector<16x32xf32>
    %220 = vector.extract_strided_slice %212 {offsets = [0, 0], sizes = [1, 32], strides = [1, 1]} : vector<1x96xf32> to vector<1x32xf32>
    %221 = vector.broadcast %220 : vector<1x32xf32> to vector<16x32xf32>
    %222 = arith.addf %219, %221 : vector<16x32xf32>
    %223 = vector.extract_strided_slice %210 {offsets = [0, 32], sizes = [32, 32], strides = [1, 1]} : vector<32x96xbf16> to vector<32x32xbf16>
    %cst_96 = arith.constant dense<0.000000e+00> : vector<128x32xf32>
    %224 = tpu.matmul %207, %223, %cst_96 {dimension_numbers = #tpu.dot_dimension_numbers<[1], [0], [0], [1], [0, 0, 1, 1], [], []>} : vector<128x32xbf16>, vector<32x32xbf16>, vector<128x32xf32> -> vector<128x32xf32>
    %225 = vector.extract_strided_slice %212 {offsets = [0, 32], sizes = [1, 32], strides = [1, 1]} : vector<1x96xf32> to vector<1x32xf32>
    %226 = vector.broadcast %225 : vector<1x32xf32> to vector<128x32xf32>
    %227 = arith.addf %224, %226 : vector<128x32xf32>
    %228 = vector.extract_strided_slice %210 {offsets = [0, 64], sizes = [32, 32], strides = [1, 1]} : vector<32x96xbf16> to vector<32x32xbf16>
    %cst_97 = arith.constant dense<0.000000e+00> : vector<128x32xf32>
    %229 = tpu.matmul %208, %228, %cst_97 {dimension_numbers = #tpu.dot_dimension_numbers<[1], [0], [0], [1], [0, 0, 1, 1], [], []>} : vector<128x32xbf16>, vector<32x32xbf16>, vector<128x32xf32> -> vector<128x32xf32>
    %230 = vector.extract_strided_slice %212 {offsets = [0, 64], sizes = [1, 32], strides = [1, 1]} : vector<1x96xf32> to vector<1x32xf32>
    %231 = vector.broadcast %230 : vector<1x32xf32> to vector<128x32xf32>
    %232 = arith.addf %229, %231 : vector<128x32xf32>
    %233 = arith.truncf %222 : vector<16x32xf32> to vector<16x32xbf16>
    %234 = arith.truncf %227 : vector<128x32xf32> to vector<128x32xbf16>
    %235 = arith.truncf %232 : vector<128x32xf32> to vector<128x32xbf16>
    %236 = vector.extract_strided_slice %233 {offsets = [0, 0], sizes = [8, 32], strides = [1, 1]} : vector<16x32xbf16> to vector<8x32xbf16>
    %237 = vector.extract_strided_slice %234 {offsets = [0, 0], sizes = [64, 32], strides = [1, 1]} : vector<128x32xbf16> to vector<64x32xbf16>
    %238 = vector.extract_strided_slice %235 {offsets = [0, 0], sizes = [64, 32], strides = [1, 1]} : vector<128x32xbf16> to vector<64x32xbf16>
    %239 = vector.extract_strided_slice %6 {offsets = [0, 0, 0], sizes = [1, 1, 64], strides = [1, 1, 1]} : vector<2x1x64xf32> to vector<1x1x64xf32>
    %240 = vector.shape_cast %239 : vector<1x1x64xf32> to vector<1x64xf32>
    %241 = vector.shape_cast %240 : vector<1x64xf32> to vector<1x64xf32>
    %242 = vector.broadcast %241 : vector<1x64xf32> to vector<8x64xf32>
    %243 = vector.extract_strided_slice %236 {offsets = [0, 0], sizes = [8, 8], strides = [1, 1]} : vector<8x32xbf16> to vector<8x8xbf16>
    %244 = vector.extract_strided_slice %237 {offsets = [0, 0], sizes = [64, 8], strides = [1, 1]} : vector<64x32xbf16> to vector<64x8xbf16>
    %cst_98 = arith.constant dense<0.000000e+00> : vector<8x64xf32>
    %245 = tpu.matmul %243, %244, %cst_98 {dimension_numbers = #tpu.dot_dimension_numbers<[1], [1], [0], [0], [0, 0, 1, 0], [], []>} : vector<8x8xbf16>, vector<64x8xbf16>, vector<8x64xf32> -> vector<8x64xf32>
    %246 = arith.addf %245, %242 : vector<8x64xf32>
    %cst_99 = arith.constant dense<0xFF800000> : vector<8xf32>
    %247 = vector.multi_reduction <maximumf>, %246, %cst_99 [1] : vector<8x64xf32> to vector<8xf32>
    %248 = vector.shape_cast %247 : vector<8xf32> to vector<8x1xf32>
    %249 = vector.broadcast %248 : vector<8x1xf32> to vector<8x64xf32>
    %250 = arith.subf %246, %249 : vector<8x64xf32>
    %251 = math.exp %250 : vector<8x64xf32>
    %cst_100 = arith.constant dense<0.000000e+00> : vector<8xf32>
    %252 = vector.multi_reduction <add>, %251, %cst_100 [1] : vector<8x64xf32> to vector<8xf32>
    %253 = vector.shape_cast %252 : vector<8xf32> to vector<8x1xf32>
    %254 = tpu.reciprocal %253 {approx = true} : vector<8x1xf32> -> vector<8x1xf32>
    %255 = vector.broadcast %254 : vector<8x1xf32> to vector<8x64xf32>
    %256 = arith.mulf %251, %255 : vector<8x64xf32>
    %257 = arith.truncf %256 : vector<8x64xf32> to vector<8x64xbf16>
    %258 = vector.extract_strided_slice %238 {offsets = [0, 0], sizes = [64, 8], strides = [1, 1]} : vector<64x32xbf16> to vector<64x8xbf16>
    %cst_101 = arith.constant dense<0.000000e+00> : vector<8x8xf32>
    %259 = tpu.matmul %257, %258, %cst_101 {dimension_numbers = #tpu.dot_dimension_numbers<[1], [0], [0], [1], [0, 0, 1, 1], [], []>} : vector<8x64xbf16>, vector<64x8xbf16>, vector<8x8xf32> -> vector<8x8xf32>
    %c0_102 = arith.constant 0 : index
    %c0_103 = arith.constant 0 : index
    %260 = vector.load %arg21[%c0_102, %c0_103] : memref<16x32xf32, #tpu.memory_space<vmem>>, vector<8x8xf32>
    tpu.vector_store %arg21[%c0_102, %c0_103], %259 {strides = array<i32>} : memref<16x32xf32, #tpu.memory_space<vmem>>, vector<8x8xf32>,
    %261 = vector.extract_strided_slice %236 {offsets = [0, 8], sizes = [8, 8], strides = [1, 1]} : vector<8x32xbf16> to vector<8x8xbf16>
    %262 = vector.extract_strided_slice %237 {offsets = [0, 8], sizes = [64, 8], strides = [1, 1]} : vector<64x32xbf16> to vector<64x8xbf16>
    %cst_104 = arith.constant dense<0.000000e+00> : vector<8x64xf32>
    %263 = tpu.matmul %261, %262, %cst_104 {dimension_numbers = #tpu.dot_dimension_numbers<[1], [1], [0], [0], [0, 0, 1, 0], [], []>} : vector<8x8xbf16>, vector<64x8xbf16>, vector<8x64xf32> -> vector<8x64xf32>
    %264 = arith.addf %263, %242 : vector<8x64xf32>
    %cst_105 = arith.constant dense<0xFF800000> : vector<8xf32>
    %265 = vector.multi_reduction <maximumf>, %264, %cst_105 [1] : vector<8x64xf32> to vector<8xf32>
    %266 = vector.shape_cast %265 : vector<8xf32> to vector<8x1xf32>
    %267 = vector.broadcast %266 : vector<8x1xf32> to vector<8x64xf32>
    %268 = arith.subf %264, %267 : vector<8x64xf32>
    %269 = math.exp %268 : vector<8x64xf32>
    %cst_106 = arith.constant dense<0.000000e+00> : vector<8xf32>
    %270 = vector.multi_reduction <add>, %269, %cst_106 [1] : vector<8x64xf32> to vector<8xf32>
    %271 = vector.shape_cast %270 : vector<8xf32> to vector<8x1xf32>
    %272 = tpu.reciprocal %271 {approx = true} : vector<8x1xf32> -> vector<8x1xf32>
    %273 = vector.broadcast %272 : vector<8x1xf32> to vector<8x64xf32>
    %274 = arith.mulf %269, %273 : vector<8x64xf32>
    %275 = arith.truncf %274 : vector<8x64xf32> to vector<8x64xbf16>
    %276 = vector.extract_strided_slice %238 {offsets = [0, 8], sizes = [64, 8], strides = [1, 1]} : vector<64x32xbf16> to vector<64x8xbf16>
    %cst_107 = arith.constant dense<0.000000e+00> : vector<8x8xf32>
    %277 = tpu.matmul %275, %276, %cst_107 {dimension_numbers = #tpu.dot_dimension_numbers<[1], [0], [0], [1], [0, 0, 1, 1], [], []>} : vector<8x64xbf16>, vector<64x8xbf16>, vector<8x8xf32> -> vector<8x8xf32>
    %c0_108 = arith.constant 0 : index
    %c8_109 = arith.constant 8 : index
    %278 = vector.load %arg21[%c0_108, %c8_109] : memref<16x32xf32, #tpu.memory_space<vmem>>, vector<8x8xf32>
    tpu.vector_store %arg21[%c0_108, %c8_109], %277 {strides = array<i32>} : memref<16x32xf32, #tpu.memory_space<vmem>>, vector<8x8xf32>,
    %279 = vector.extract_strided_slice %236 {offsets = [0, 16], sizes = [8, 8], strides = [1, 1]} : vector<8x32xbf16> to vector<8x8xbf16>
    %280 = vector.extract_strided_slice %237 {offsets = [0, 16], sizes = [64, 8], strides = [1, 1]} : vector<64x32xbf16> to vector<64x8xbf16>
    %cst_110 = arith.constant dense<0.000000e+00> : vector<8x64xf32>
    %281 = tpu.matmul %279, %280, %cst_110 {dimension_numbers = #tpu.dot_dimension_numbers<[1], [1], [0], [0], [0, 0, 1, 0], [], []>} : vector<8x8xbf16>, vector<64x8xbf16>, vector<8x64xf32> -> vector<8x64xf32>
    %282 = arith.addf %281, %242 : vector<8x64xf32>
    %cst_111 = arith.constant dense<0xFF800000> : vector<8xf32>
    %283 = vector.multi_reduction <maximumf>, %282, %cst_111 [1] : vector<8x64xf32> to vector<8xf32>
    %284 = vector.shape_cast %283 : vector<8xf32> to vector<8x1xf32>
    %285 = vector.broadcast %284 : vector<8x1xf32> to vector<8x64xf32>
    %286 = arith.subf %282, %285 : vector<8x64xf32>
    %287 = math.exp %286 : vector<8x64xf32>
    %cst_112 = arith.constant dense<0.000000e+00> : vector<8xf32>
    %288 = vector.multi_reduction <add>, %287, %cst_112 [1] : vector<8x64xf32> to vector<8xf32>
    %289 = vector.shape_cast %288 : vector<8xf32> to vector<8x1xf32>
    %290 = tpu.reciprocal %289 {approx = true} : vector<8x1xf32> -> vector<8x1xf32>
    %291 = vector.broadcast %290 : vector<8x1xf32> to vector<8x64xf32>
    %292 = arith.mulf %287, %291 : vector<8x64xf32>
    %293 = arith.truncf %292 : vector<8x64xf32> to vector<8x64xbf16>
    %294 = vector.extract_strided_slice %238 {offsets = [0, 16], sizes = [64, 8], strides = [1, 1]} : vector<64x32xbf16> to vector<64x8xbf16>
    %cst_113 = arith.constant dense<0.000000e+00> : vector<8x8xf32>
    %295 = tpu.matmul %293, %294, %cst_113 {dimension_numbers = #tpu.dot_dimension_numbers<[1], [0], [0], [1], [0, 0, 1, 1], [], []>} : vector<8x64xbf16>, vector<64x8xbf16>, vector<8x8xf32> -> vector<8x8xf32>
    %c0_114 = arith.constant 0 : index
    %c16_115 = arith.constant 16 : index
    %296 = vector.load %arg21[%c0_114, %c16_115] : memref<16x32xf32, #tpu.memory_space<vmem>>, vector<8x8xf32>
    tpu.vector_store %arg21[%c0_114, %c16_115], %295 {strides = array<i32>} : memref<16x32xf32, #tpu.memory_space<vmem>>, vector<8x8xf32>,
    %297 = vector.extract_strided_slice %236 {offsets = [0, 24], sizes = [8, 8], strides = [1, 1]} : vector<8x32xbf16> to vector<8x8xbf16>
    %298 = vector.extract_strided_slice %237 {offsets = [0, 24], sizes = [64, 8], strides = [1, 1]} : vector<64x32xbf16> to vector<64x8xbf16>
    %cst_116 = arith.constant dense<0.000000e+00> : vector<8x64xf32>
    %299 = tpu.matmul %297, %298, %cst_116 {dimension_numbers = #tpu.dot_dimension_numbers<[1], [1], [0], [0], [0, 0, 1, 0], [], []>} : vector<8x8xbf16>, vector<64x8xbf16>, vector<8x64xf32> -> vector<8x64xf32>
    %300 = arith.addf %299, %242 : vector<8x64xf32>
    %cst_117 = arith.constant dense<0xFF800000> : vector<8xf32>
    %301 = vector.multi_reduction <maximumf>, %300, %cst_117 [1] : vector<8x64xf32> to vector<8xf32>
    %302 = vector.shape_cast %301 : vector<8xf32> to vector<8x1xf32>
    %303 = vector.broadcast %302 : vector<8x1xf32> to vector<8x64xf32>
    %304 = arith.subf %300, %303 : vector<8x64xf32>
    %305 = math.exp %304 : vector<8x64xf32>
    %cst_118 = arith.constant dense<0.000000e+00> : vector<8xf32>
    %306 = vector.multi_reduction <add>, %305, %cst_118 [1] : vector<8x64xf32> to vector<8xf32>
    %307 = vector.shape_cast %306 : vector<8xf32> to vector<8x1xf32>
    %308 = tpu.reciprocal %307 {approx = true} : vector<8x1xf32> -> vector<8x1xf32>
    %309 = vector.broadcast %308 : vector<8x1xf32> to vector<8x64xf32>
    %310 = arith.mulf %305, %309 : vector<8x64xf32>
    %311 = arith.truncf %310 : vector<8x64xf32> to vector<8x64xbf16>
    %312 = vector.extract_strided_slice %238 {offsets = [0, 24], sizes = [64, 8], strides = [1, 1]} : vector<64x32xbf16> to vector<64x8xbf16>
    %cst_119 = arith.constant dense<0.000000e+00> : vector<8x8xf32>
    %313 = tpu.matmul %311, %312, %cst_119 {dimension_numbers = #tpu.dot_dimension_numbers<[1], [0], [0], [1], [0, 0, 1, 1], [], []>} : vector<8x64xbf16>, vector<64x8xbf16>, vector<8x8xf32> -> vector<8x8xf32>
    %c0_120 = arith.constant 0 : index
    %c24_121 = arith.constant 24 : index
    %314 = vector.load %arg21[%c0_120, %c24_121] : memref<16x32xf32, #tpu.memory_space<vmem>>, vector<8x8xf32>
    tpu.vector_store %arg21[%c0_120, %c24_121], %313 {strides = array<i32>} : memref<16x32xf32, #tpu.memory_space<vmem>>, vector<8x8xf32>,
    %315 = vector.extract_strided_slice %233 {offsets = [8, 0], sizes = [8, 32], strides = [1, 1]} : vector<16x32xbf16> to vector<8x32xbf16>
    %316 = vector.extract_strided_slice %234 {offsets = [64, 0], sizes = [64, 32], strides = [1, 1]} : vector<128x32xbf16> to vector<64x32xbf16>
    %317 = vector.extract_strided_slice %235 {offsets = [64, 0], sizes = [64, 32], strides = [1, 1]} : vector<128x32xbf16> to vector<64x32xbf16>
    %318 = vector.extract_strided_slice %6 {offsets = [1, 0, 0], sizes = [1, 1, 64], strides = [1, 1, 1]} : vector<2x1x64xf32> to vector<1x1x64xf32>
    %319 = vector.shape_cast %318 : vector<1x1x64xf32> to vector<1x64xf32>
    %320 = vector.shape_cast %319 : vector<1x64xf32> to vector<1x64xf32>
    %321 = vector.broadcast %320 : vector<1x64xf32> to vector<8x64xf32>
    %322 = vector.extract_strided_slice %315 {offsets = [0, 0], sizes = [8, 8], strides = [1, 1]} : vector<8x32xbf16> to vector<8x8xbf16>
    %323 = vector.extract_strided_slice %316 {offsets = [0, 0], sizes = [64, 8], strides = [1, 1]} : vector<64x32xbf16> to vector<64x8xbf16>
    %cst_122 = arith.constant dense<0.000000e+00> : vector<8x64xf32>
    %324 = tpu.matmul %322, %323, %cst_122 {dimension_numbers = #tpu.dot_dimension_numbers<[1], [1], [0], [0], [0, 0, 1, 0], [], []>} : vector<8x8xbf16>, vector<64x8xbf16>, vector<8x64xf32> -> vector<8x64xf32>
    %325 = arith.addf %324, %321 : vector<8x64xf32>
    %cst_123 = arith.constant dense<0xFF800000> : vector<8xf32>
    %326 = vector.multi_reduction <maximumf>, %325, %cst_123 [1] : vector<8x64xf32> to vector<8xf32>
    %327 = vector.shape_cast %326 : vector<8xf32> to vector<8x1xf32>
    %328 = vector.broadcast %327 : vector<8x1xf32> to vector<8x64xf32>
    %329 = arith.subf %325, %328 : vector<8x64xf32>
    %330 = math.exp %329 : vector<8x64xf32>
    %cst_124 = arith.constant dense<0.000000e+00> : vector<8xf32>
    %331 = vector.multi_reduction <add>, %330, %cst_124 [1] : vector<8x64xf32> to vector<8xf32>
    %332 = vector.shape_cast %331 : vector<8xf32> to vector<8x1xf32>
    %333 = tpu.reciprocal %332 {approx = true} : vector<8x1xf32> -> vector<8x1xf32>
    %334 = vector.broadcast %333 : vector<8x1xf32> to vector<8x64xf32>
    %335 = arith.mulf %330, %334 : vector<8x64xf32>
    %336 = arith.truncf %335 : vector<8x64xf32> to vector<8x64xbf16>
    %337 = vector.extract_strided_slice %317 {offsets = [0, 0], sizes = [64, 8], strides = [1, 1]} : vector<64x32xbf16> to vector<64x8xbf16>
    %cst_125 = arith.constant dense<0.000000e+00> : vector<8x8xf32>
    %338 = tpu.matmul %336, %337, %cst_125 {dimension_numbers = #tpu.dot_dimension_numbers<[1], [0], [0], [1], [0, 0, 1, 1], [], []>} : vector<8x64xbf16>, vector<64x8xbf16>, vector<8x8xf32> -> vector<8x8xf32>
    %c8_126 = arith.constant 8 : index
    %c0_127 = arith.constant 0 : index
    %339 = vector.load %arg21[%c8_126, %c0_127] : memref<16x32xf32, #tpu.memory_space<vmem>>, vector<8x8xf32>
    tpu.vector_store %arg21[%c8_126, %c0_127], %338 {strides = array<i32>} : memref<16x32xf32, #tpu.memory_space<vmem>>, vector<8x8xf32>,
    %340 = vector.extract_strided_slice %315 {offsets = [0, 8], sizes = [8, 8], strides = [1, 1]} : vector<8x32xbf16> to vector<8x8xbf16>
    %341 = vector.extract_strided_slice %316 {offsets = [0, 8], sizes = [64, 8], strides = [1, 1]} : vector<64x32xbf16> to vector<64x8xbf16>
    %cst_128 = arith.constant dense<0.000000e+00> : vector<8x64xf32>
    %342 = tpu.matmul %340, %341, %cst_128 {dimension_numbers = #tpu.dot_dimension_numbers<[1], [1], [0], [0], [0, 0, 1, 0], [], []>} : vector<8x8xbf16>, vector<64x8xbf16>, vector<8x64xf32> -> vector<8x64xf32>
    %343 = arith.addf %342, %321 : vector<8x64xf32>
    %cst_129 = arith.constant dense<0xFF800000> : vector<8xf32>
    %344 = vector.multi_reduction <maximumf>, %343, %cst_129 [1] : vector<8x64xf32> to vector<8xf32>
    %345 = vector.shape_cast %344 : vector<8xf32> to vector<8x1xf32>
    %346 = vector.broadcast %345 : vector<8x1xf32> to vector<8x64xf32>
    %347 = arith.subf %343, %346 : vector<8x64xf32>
    %348 = math.exp %347 : vector<8x64xf32>
    %cst_130 = arith.constant dense<0.000000e+00> : vector<8xf32>
    %349 = vector.multi_reduction <add>, %348, %cst_130 [1] : vector<8x64xf32> to vector<8xf32>
    %350 = vector.shape_cast %349 : vector<8xf32> to vector<8x1xf32>
    %351 = tpu.reciprocal %350 {approx = true} : vector<8x1xf32> -> vector<8x1xf32>
    %352 = vector.broadcast %351 : vector<8x1xf32> to vector<8x64xf32>
    %353 = arith.mulf %348, %352 : vector<8x64xf32>
    %354 = arith.truncf %353 : vector<8x64xf32> to vector<8x64xbf16>
    %355 = vector.extract_strided_slice %317 {offsets = [0, 8], sizes = [64, 8], strides = [1, 1]} : vector<64x32xbf16> to vector<64x8xbf16>
    %cst_131 = arith.constant dense<0.000000e+00> : vector<8x8xf32>
    %356 = tpu.matmul %354, %355, %cst_131 {dimension_numbers = #tpu.dot_dimension_numbers<[1], [0], [0], [1], [0, 0, 1, 1], [], []>} : vector<8x64xbf16>, vector<64x8xbf16>, vector<8x8xf32> -> vector<8x8xf32>
    %c8_132 = arith.constant 8 : index
    %c8_133 = arith.constant 8 : index
    %357 = vector.load %arg21[%c8_132, %c8_133] : memref<16x32xf32, #tpu.memory_space<vmem>>, vector<8x8xf32>
    tpu.vector_store %arg21[%c8_132, %c8_133], %356 {strides = array<i32>} : memref<16x32xf32, #tpu.memory_space<vmem>>, vector<8x8xf32>,
    %358 = vector.extract_strided_slice %315 {offsets = [0, 16], sizes = [8, 8], strides = [1, 1]} : vector<8x32xbf16> to vector<8x8xbf16>
    %359 = vector.extract_strided_slice %316 {offsets = [0, 16], sizes = [64, 8], strides = [1, 1]} : vector<64x32xbf16> to vector<64x8xbf16>
    %cst_134 = arith.constant dense<0.000000e+00> : vector<8x64xf32>
    %360 = tpu.matmul %358, %359, %cst_134 {dimension_numbers = #tpu.dot_dimension_numbers<[1], [1], [0], [0], [0, 0, 1, 0], [], []>} : vector<8x8xbf16>, vector<64x8xbf16>, vector<8x64xf32> -> vector<8x64xf32>
    %361 = arith.addf %360, %321 : vector<8x64xf32>
    %cst_135 = arith.constant dense<0xFF800000> : vector<8xf32>
    %362 = vector.multi_reduction <maximumf>, %361, %cst_135 [1] : vector<8x64xf32> to vector<8xf32>
    %363 = vector.shape_cast %362 : vector<8xf32> to vector<8x1xf32>
    %364 = vector.broadcast %363 : vector<8x1xf32> to vector<8x64xf32>
    %365 = arith.subf %361, %364 : vector<8x64xf32>
    %366 = math.exp %365 : vector<8x64xf32>
    %cst_136 = arith.constant dense<0.000000e+00> : vector<8xf32>
    %367 = vector.multi_reduction <add>, %366, %cst_136 [1] : vector<8x64xf32> to vector<8xf32>
    %368 = vector.shape_cast %367 : vector<8xf32> to vector<8x1xf32>
    %369 = tpu.reciprocal %368 {approx = true} : vector<8x1xf32> -> vector<8x1xf32>
    %370 = vector.broadcast %369 : vector<8x1xf32> to vector<8x64xf32>
    %371 = arith.mulf %366, %370 : vector<8x64xf32>
    %372 = arith.truncf %371 : vector<8x64xf32> to vector<8x64xbf16>
    %373 = vector.extract_strided_slice %317 {offsets = [0, 16], sizes = [64, 8], strides = [1, 1]} : vector<64x32xbf16> to vector<64x8xbf16>
    %cst_137 = arith.constant dense<0.000000e+00> : vector<8x8xf32>
    %374 = tpu.matmul %372, %373, %cst_137 {dimension_numbers = #tpu.dot_dimension_numbers<[1], [0], [0], [1], [0, 0, 1, 1], [], []>} : vector<8x64xbf16>, vector<64x8xbf16>, vector<8x8xf32> -> vector<8x8xf32>
    %c8_138 = arith.constant 8 : index
    %c16_139 = arith.constant 16 : index
    %375 = vector.load %arg21[%c8_138, %c16_139] : memref<16x32xf32, #tpu.memory_space<vmem>>, vector<8x8xf32>
    tpu.vector_store %arg21[%c8_138, %c16_139], %374 {strides = array<i32>} : memref<16x32xf32, #tpu.memory_space<vmem>>, vector<8x8xf32>,
    %376 = vector.extract_strided_slice %315 {offsets = [0, 24], sizes = [8, 8], strides = [1, 1]} : vector<8x32xbf16> to vector<8x8xbf16>
    %377 = vector.extract_strided_slice %316 {offsets = [0, 24], sizes = [64, 8], strides = [1, 1]} : vector<64x32xbf16> to vector<64x8xbf16>
    %cst_140 = arith.constant dense<0.000000e+00> : vector<8x64xf32>
    %378 = tpu.matmul %376, %377, %cst_140 {dimension_numbers = #tpu.dot_dimension_numbers<[1], [1], [0], [0], [0, 0, 1, 0], [], []>} : vector<8x8xbf16>, vector<64x8xbf16>, vector<8x64xf32> -> vector<8x64xf32>
    %379 = arith.addf %378, %321 : vector<8x64xf32>
    %cst_141 = arith.constant dense<0xFF800000> : vector<8xf32>
    %380 = vector.multi_reduction <maximumf>, %379, %cst_141 [1] : vector<8x64xf32> to vector<8xf32>
    %381 = vector.shape_cast %380 : vector<8xf32> to vector<8x1xf32>
    %382 = vector.broadcast %381 : vector<8x1xf32> to vector<8x64xf32>
    %383 = arith.subf %379, %382 : vector<8x64xf32>
    %384 = math.exp %383 : vector<8x64xf32>
    %cst_142 = arith.constant dense<0.000000e+00> : vector<8xf32>
    %385 = vector.multi_reduction <add>, %384, %cst_142 [1] : vector<8x64xf32> to vector<8xf32>
    %386 = vector.shape_cast %385 : vector<8xf32> to vector<8x1xf32>
    %387 = tpu.reciprocal %386 {approx = true} : vector<8x1xf32> -> vector<8x1xf32>
    %388 = vector.broadcast %387 : vector<8x1xf32> to vector<8x64xf32>
    %389 = arith.mulf %384, %388 : vector<8x64xf32>
    %390 = arith.truncf %389 : vector<8x64xf32> to vector<8x64xbf16>
    %391 = vector.extract_strided_slice %317 {offsets = [0, 24], sizes = [64, 8], strides = [1, 1]} : vector<64x32xbf16> to vector<64x8xbf16>
    %cst_143 = arith.constant dense<0.000000e+00> : vector<8x8xf32>
    %392 = tpu.matmul %390, %391, %cst_143 {dimension_numbers = #tpu.dot_dimension_numbers<[1], [0], [0], [1], [0, 0, 1, 1], [], []>} : vector<8x64xbf16>, vector<64x8xbf16>, vector<8x8xf32> -> vector<8x8xf32>
    %c8_144 = arith.constant 8 : index
    %c24_145 = arith.constant 24 : index
    %393 = vector.load %arg21[%c8_144, %c24_145] : memref<16x32xf32, #tpu.memory_space<vmem>>, vector<8x8xf32>
    tpu.vector_store %arg21[%c8_144, %c24_145], %392 {strides = array<i32>} : memref<16x32xf32, #tpu.memory_space<vmem>>, vector<8x8xf32>,
    %c0_146 = arith.constant 0 : index
    %c0_147 = arith.constant 0 : index
    %394 = vector.load %arg21[%c0_146, %c0_147] : memref<16x32xf32, #tpu.memory_space<vmem>>, vector<16x32xf32>
    %395 = arith.truncf %394 : vector<16x32xf32> to vector<16x32xbf16>
    %cst_148 = arith.constant dense<0.000000e+00> : vector<16x32xf32>
    %396 = tpu.matmul %395, %214, %cst_148 {dimension_numbers = #tpu.dot_dimension_numbers<[1], [0], [0], [1], [0, 0, 1, 1], [], []>} : vector<16x32xbf16>, vector<32x32xbf16>, vector<16x32xf32> -> vector<16x32xf32>
    %397 = vector.broadcast %216 : vector<1x32xf32> to vector<16x32xf32>
    %398 = arith.addf %396, %397 : vector<16x32xf32>
    %399 = arith.addf %205, %398 : vector<16x32xf32>
    %400 = vector.extract_strided_slice %8 {offsets = [2, 0], sizes = [1, 32], strides = [1, 1]} : vector<6x32xf32> to vector<1x32xf32>
    %401 = vector.extract_strided_slice %8 {offsets = [3, 0], sizes = [1, 32], strides = [1, 1]} : vector<6x32xf32> to vector<1x32xf32>
    %cst_149 = arith.constant dense<0.000000e+00> : vector<16xf32>
    %402 = vector.multi_reduction <add>, %399, %cst_149 [1] : vector<16x32xf32> to vector<16xf32>
    %403 = vector.shape_cast %402 : vector<16xf32> to vector<16x1xf32>
    %cst_150 = arith.constant 3.200000e+01 : f32
    %404 = vector.broadcast %cst_150 : f32 to vector<16x1xf32>
    %405 = arith.divf %403, %404 : vector<16x1xf32>
    %406 = vector.broadcast %405 : vector<16x1xf32> to vector<16x32xf32>
    %407 = arith.subf %399, %406 : vector<16x32xf32>
    %408 = arith.mulf %407, %407 : vector<16x32xf32>
    %cst_151 = arith.constant dense<0.000000e+00> : vector<16xf32>
    %409 = vector.multi_reduction <add>, %408, %cst_151 [1] : vector<16x32xf32> to vector<16xf32>
    %410 = vector.shape_cast %409 : vector<16xf32> to vector<16x1xf32>
    %cst_152 = arith.constant 3.200000e+01 : f32
    %411 = vector.broadcast %cst_152 : f32 to vector<16x1xf32>
    %412 = arith.divf %410, %411 : vector<16x1xf32>
    %cst_153 = arith.constant 9.99999974E-6 : f32
    %413 = vector.broadcast %cst_153 : f32 to vector<16x1xf32>
    %414 = arith.addf %412, %413 : vector<16x1xf32>
    %415 = math.rsqrt %414 : vector<16x1xf32>
    %416 = vector.broadcast %415 : vector<16x1xf32> to vector<16x32xf32>
    %417 = arith.mulf %407, %416 : vector<16x32xf32>
    %418 = vector.broadcast %400 : vector<1x32xf32> to vector<16x32xf32>
    %419 = arith.mulf %417, %418 : vector<16x32xf32>
    %420 = vector.broadcast %401 : vector<1x32xf32> to vector<16x32xf32>
    %421 = arith.addf %419, %420 : vector<16x32xf32>
    %422 = arith.truncf %421 : vector<16x32xf32> to vector<16x32xbf16>
    %c0_154 = arith.constant 0 : index
    %c0_155 = arith.constant 0 : index
    %c0_156 = arith.constant 0 : index
    %423 = vector.load %arg13[%c0_154, %c0_155, %c0_156] : memref<1x32x64xbf16, #tpu.memory_space<vmem>>, vector<1x32x64xbf16>
    %424 = vector.shape_cast %423 : vector<1x32x64xbf16> to vector<32x64xbf16>
    %cst_157 = arith.constant dense<0.000000e+00> : vector<16x64xf32>
    %425 = tpu.matmul %422, %424, %cst_157 {dimension_numbers = #tpu.dot_dimension_numbers<[1], [0], [0], [1], [0, 0, 1, 1], [], []>} : vector<16x32xbf16>, vector<32x64xbf16>, vector<16x64xf32> -> vector<16x64xf32>
    %c0_158 = arith.constant 0 : index
    %c0_159 = arith.constant 0 : index
    %c0_160 = arith.constant 0 : index
    %426 = vector.load %arg14[%c0_158, %c0_159, %c0_160] : memref<1x1x64xf32, #tpu.memory_space<vmem>>, vector<1x1x64xf32>
    %427 = vector.shape_cast %426 : vector<1x1x64xf32> to vector<1x64xf32>
    %428 = vector.broadcast %427 : vector<1x64xf32> to vector<16x64xf32>
    %429 = arith.addf %425, %428 : vector<16x64xf32>
    %cst_161 = arith.constant 0.000000e+00 : f32
    %430 = vector.broadcast %cst_161 : f32 to vector<16x64xf32>
    %431 = arith.maximumf %429, %430 : vector<16x64xf32>
    %432 = arith.truncf %431 : vector<16x64xf32> to vector<16x64xbf16>
    %c0_162 = arith.constant 0 : index
    %c0_163 = arith.constant 0 : index
    %c0_164 = arith.constant 0 : index
    %433 = vector.load %arg15[%c0_162, %c0_163, %c0_164] : memref<1x64x32xbf16, #tpu.memory_space<vmem>>, vector<1x64x32xbf16>
    %434 = vector.shape_cast %433 : vector<1x64x32xbf16> to vector<64x32xbf16>
    %cst_165 = arith.constant dense<0.000000e+00> : vector<16x32xf32>
    %435 = tpu.matmul %432, %434, %cst_165 {dimension_numbers = #tpu.dot_dimension_numbers<[1], [0], [0], [1], [0, 0, 1, 1], [], []>} : vector<16x64xbf16>, vector<64x32xbf16>, vector<16x32xf32> -> vector<16x32xf32>
    %c0_166 = arith.constant 0 : index
    %c0_167 = arith.constant 0 : index
    %c0_168 = arith.constant 0 : index
    %436 = vector.load %arg16[%c0_166, %c0_167, %c0_168] : memref<1x1x32xf32, #tpu.memory_space<vmem>>, vector<1x1x32xf32>
    %437 = vector.shape_cast %436 : vector<1x1x32xf32> to vector<1x32xf32>
    %438 = vector.broadcast %437 : vector<1x32xf32> to vector<16x32xf32>
    %439 = arith.addf %435, %438 : vector<16x32xf32>
    %440 = arith.addf %421, %439 : vector<16x32xf32>
    %441 = vector.extract_strided_slice %8 {offsets = [4, 0], sizes = [1, 32], strides = [1, 1]} : vector<6x32xf32> to vector<1x32xf32>
    %442 = vector.extract_strided_slice %8 {offsets = [5, 0], sizes = [1, 32], strides = [1, 1]} : vector<6x32xf32> to vector<1x32xf32>
    %cst_169 = arith.constant dense<0.000000e+00> : vector<16xf32>
    %443 = vector.multi_reduction <add>, %440, %cst_169 [1] : vector<16x32xf32> to vector<16xf32>
    %444 = vector.shape_cast %443 : vector<16xf32> to vector<16x1xf32>
    %cst_170 = arith.constant 3.200000e+01 : f32
    %445 = vector.broadcast %cst_170 : f32 to vector<16x1xf32>
    %446 = arith.divf %444, %445 : vector<16x1xf32>
    %447 = vector.broadcast %446 : vector<16x1xf32> to vector<16x32xf32>
    %448 = arith.subf %440, %447 : vector<16x32xf32>
    %449 = arith.mulf %448, %448 : vector<16x32xf32>
    %cst_171 = arith.constant dense<0.000000e+00> : vector<16xf32>
    %450 = vector.multi_reduction <add>, %449, %cst_171 [1] : vector<16x32xf32> to vector<16xf32>
    %451 = vector.shape_cast %450 : vector<16xf32> to vector<16x1xf32>
    %cst_172 = arith.constant 3.200000e+01 : f32
    %452 = vector.broadcast %cst_172 : f32 to vector<16x1xf32>
    %453 = arith.divf %451, %452 : vector<16x1xf32>
    %cst_173 = arith.constant 9.99999974E-6 : f32
    %454 = vector.broadcast %cst_173 : f32 to vector<16x1xf32>
    %455 = arith.addf %453, %454 : vector<16x1xf32>
    %456 = math.rsqrt %455 : vector<16x1xf32>
    %457 = vector.broadcast %456 : vector<16x1xf32> to vector<16x32xf32>
    %458 = arith.mulf %448, %457 : vector<16x32xf32>
    %459 = vector.broadcast %441 : vector<1x32xf32> to vector<16x32xf32>
    %460 = arith.mulf %458, %459 : vector<16x32xf32>
    %461 = vector.broadcast %442 : vector<1x32xf32> to vector<16x32xf32>
    %462 = arith.addf %460, %461 : vector<16x32xf32>
    %c0_174 = arith.constant 0 : index
    %c0_175 = arith.constant 0 : index
    %463 = vector.load %arg20[%c0_174, %c0_175] : memref<16x32xf32, #tpu.memory_space<vmem>>, vector<16x32xf32>
    tpu.vector_store %arg20[%c0_174, %c0_175], %462 {strides = array<i32>} : memref<16x32xf32, #tpu.memory_space<vmem>>, vector<16x32xf32>,
    %464 = vector.extract_strided_slice %9 {offsets = [0, 0], sizes = [1, 32], strides = [1, 1]} : vector<2x32xf32> to vector<1x32xf32>
    %465 = vector.extract_strided_slice %9 {offsets = [1, 0], sizes = [1, 32], strides = [1, 1]} : vector<2x32xf32> to vector<1x32xf32>
    %cst_176 = arith.constant dense<0.000000e+00> : vector<16xf32>
    %466 = vector.multi_reduction <add>, %462, %cst_176 [1] : vector<16x32xf32> to vector<16xf32>
    %467 = vector.shape_cast %466 : vector<16xf32> to vector<16x1xf32>
    %cst_177 = arith.constant 3.200000e+01 : f32
    %468 = vector.broadcast %cst_177 : f32 to vector<16x1xf32>
    %469 = arith.divf %467, %468 : vector<16x1xf32>
    %470 = vector.broadcast %469 : vector<16x1xf32> to vector<16x32xf32>
    %471 = arith.subf %462, %470 : vector<16x32xf32>
    %472 = arith.mulf %471, %471 : vector<16x32xf32>
    %cst_178 = arith.constant dense<0.000000e+00> : vector<16xf32>
    %473 = vector.multi_reduction <add>, %472, %cst_178 [1] : vector<16x32xf32> to vector<16xf32>
    %474 = vector.shape_cast %473 : vector<16xf32> to vector<16x1xf32>
    %cst_179 = arith.constant 3.200000e+01 : f32
    %475 = vector.broadcast %cst_179 : f32 to vector<16x1xf32>
    %476 = arith.divf %474, %475 : vector<16x1xf32>
    %cst_180 = arith.constant 9.99999974E-6 : f32
    %477 = vector.broadcast %cst_180 : f32 to vector<16x1xf32>
    %478 = arith.addf %476, %477 : vector<16x1xf32>
    %479 = math.rsqrt %478 : vector<16x1xf32>
    %480 = vector.broadcast %479 : vector<16x1xf32> to vector<16x32xf32>
    %481 = arith.mulf %471, %480 : vector<16x32xf32>
    %482 = vector.broadcast %464 : vector<1x32xf32> to vector<16x32xf32>
    %483 = arith.mulf %481, %482 : vector<16x32xf32>
    %484 = vector.broadcast %465 : vector<1x32xf32> to vector<16x32xf32>
    %485 = arith.addf %483, %484 : vector<16x32xf32>
    %486 = vector.shape_cast %485 : vector<16x32xf32> to vector<2x8x32xf32>
    %c0_181 = arith.constant 0 : index
    %c0_182 = arith.constant 0 : index
    %c0_183 = arith.constant 0 : index
    %c0_184 = arith.constant 0 : index
    %487 = vector.load %arg19[%c0_181, %c0_182, %c0_183, %c0_184] : memref<1x2x8x32xf32, #tpu.memory_space<vmem>>, vector<1x2x8x32xf32>
    %488 = vector.shape_cast %487 : vector<1x2x8x32xf32> to vector<2x8x32xf32>
    %489 = vector.shape_cast %486 : vector<2x8x32xf32> to vector<1x2x8x32xf32>
    tpu.vector_store %arg19[%c0_181, %c0_182, %c0_183, %c0_184], %489 {strides = array<i32>} : memref<1x2x8x32xf32, #tpu.memory_space<vmem>>, vector<1x2x8x32xf32>,
    return
  }
  func.func @transform_0(%arg0: i32) -> (i32, i32, i32) {
    %c0_i32 = arith.constant 0 : i32
    %c0_i32_0 = arith.constant 0 : i32
    %c0_i32_1 = arith.constant 0 : i32
    %c0_i32_2 = arith.constant 0 : i32
    return %c0_i32, %c0_i32_0, %c0_i32_1 : i32, i32, i32
  }
  func.func @transform_1(%arg0: i32) -> (i32, i32, i32) {
    %c0_i32 = arith.constant 0 : i32
    %c0_i32_0 = arith.constant 0 : i32
    %c0_i32_1 = arith.constant 0 : i32
    %c0_i32_2 = arith.constant 0 : i32
    return %c0_i32, %c0_i32_0, %c0_i32_1 : i32, i32, i32
  }
  func.func @transform_2(%arg0: i32) -> (i32, i32, i32) {
    %c0_i32 = arith.constant 0 : i32
    %c0_i32_0 = arith.constant 0 : i32
    %c0_i32_1 = arith.constant 0 : i32
    %c0_i32_2 = arith.constant 0 : i32
    return %c0_i32, %c0_i32_0, %c0_i32_1 : i32, i32, i32
  }
  func.func @transform_3(%arg0: i32) -> (i32, i32, i32) {
    %c0_i32 = arith.constant 0 : i32
    %c0_i32_0 = arith.constant 0 : i32
    %c0_i32_1 = arith.constant 0 : i32
    %c0_i32_2 = arith.constant 0 : i32
    return %c0_i32, %c0_i32_0, %c0_i32_1 : i32, i32, i32
  }
  func.func @transform_4(%arg0: i32) -> (i32, i32, i32) {
    %c0_i32 = arith.constant 0 : i32
    %c0_i32_0 = arith.constant 0 : i32
    %c0_i32_1 = arith.constant 0 : i32
    return %arg0, %c0_i32, %c0_i32_0 : i32, i32, i32
  }
  func.func @transform_5(%arg0: i32) -> (i32, i32, i32) {
    %c0_i32 = arith.constant 0 : i32
    %c0_i32_0 = arith.constant 0 : i32
    %c0_i32_1 = arith.constant 0 : i32
    return %arg0, %c0_i32, %c0_i32_0 : i32, i32, i32
  }
  func.func @transform_6(%arg0: i32) -> (i32, i32, i32) {
    %c0_i32 = arith.constant 0 : i32
    %c0_i32_0 = arith.constant 0 : i32
    %c0_i32_1 = arith.constant 0 : i32
    return %arg0, %c0_i32, %c0_i32_0 : i32, i32, i32
  }
  func.func @transform_7(%arg0: i32) -> (i32, i32, i32) {
    %c0_i32 = arith.constant 0 : i32
    %c0_i32_0 = arith.constant 0 : i32
    %c0_i32_1 = arith.constant 0 : i32
    return %arg0, %c0_i32, %c0_i32_0 : i32, i32, i32
  }
  func.func @transform_8(%arg0: i32) -> (i32, i32, i32) {
    %c0_i32 = arith.constant 0 : i32
    %c0_i32_0 = arith.constant 0 : i32
    %c0_i32_1 = arith.constant 0 : i32
    return %arg0, %c0_i32, %c0_i32_0 : i32, i32, i32
  }
  func.func @transform_9(%arg0: i32) -> (i32, i32, i32) {
    %c0_i32 = arith.constant 0 : i32
    %c0_i32_0 = arith.constant 0 : i32
    %c0_i32_1 = arith.constant 0 : i32
    return %arg0, %c0_i32, %c0_i32_0 : i32, i32, i32
  }
  func.func @transform_10(%arg0: i32) -> (i32, i32, i32) {
    %c0_i32 = arith.constant 0 : i32
    %c0_i32_0 = arith.constant 0 : i32
    %c0_i32_1 = arith.constant 0 : i32
    return %arg0, %c0_i32, %c0_i32_0 : i32, i32, i32
  }
  func.func @transform_11(%arg0: i32) -> (i32, i32, i32) {
    %c0_i32 = arith.constant 0 : i32
    %c0_i32_0 = arith.constant 0 : i32
    %c0_i32_1 = arith.constant 0 : i32
    return %arg0, %c0_i32, %c0_i32_0 : i32, i32, i32
  }
  func.func @transform_12(%arg0: i32) -> (i32, i32, i32) {
    %c0_i32 = arith.constant 0 : i32
    %c0_i32_0 = arith.constant 0 : i32
    %c0_i32_1 = arith.constant 0 : i32
    return %arg0, %c0_i32, %c0_i32_0 : i32, i32, i32
  }
  func.func @transform_13(%arg0: i32) -> (i32, i32, i32) {
    %c0_i32 = arith.constant 0 : i32
    %c0_i32_0 = arith.constant 0 : i32
    %c0_i32_1 = arith.constant 0 : i32
    return %arg0, %c0_i32, %c0_i32_0 : i32, i32, i32
  }
  func.func @transform_14(%arg0: i32) -> (i32, i32, i32) {
    %c0_i32 = arith.constant 0 : i32
    %c0_i32_0 = arith.constant 0 : i32
    %c0_i32_1 = arith.constant 0 : i32
    return %arg0, %c0_i32, %c0_i32_0 : i32, i32, i32
  }
  func.func @transform_15(%arg0: i32) -> (i32, i32, i32) {
    %c0_i32 = arith.constant 0 : i32
    %c0_i32_0 = arith.constant 0 : i32
    %c0_i32_1 = arith.constant 0 : i32
    return %arg0, %c0_i32, %c0_i32_0 : i32, i32, i32
  }
  func.func @transform_16(%arg0: i32) -> (i32, i32, i32) {
    %c0_i32 = arith.constant 0 : i32
    %c0_i32_0 = arith.constant 0 : i32
    %c0_i32_1 = arith.constant 0 : i32
    return %arg0, %c0_i32, %c0_i32_0 : i32, i32, i32
  }
  func.func @transform_17(%arg0: i32) -> (i32, i32) {
    %c0_i32 = arith.constant 0 : i32
    %c0_i32_0 = arith.constant 0 : i32
    %c0_i32_1 = arith.constant 0 : i32
    return %c0_i32, %c0_i32_0 : i32, i32
  }
  func.func @transform_18(%arg0: i32) -> (i32, i32, i32, i32) {
    %c0_i32 = arith.constant 0 : i32
    %c0_i32_0 = arith.constant 0 : i32
    %c0_i32_1 = arith.constant 0 : i32
    %c0_i32_2 = arith.constant 0 : i32
    return %arg0, %c0_i32, %c0_i32_0, %c0_i32_1 : i32, i32, i32, i32
  }
}

</mosaic_0001>

<llo_original>
// kernel: conditional_detr_transformer.2
$region0: #{conditional_detr_transformer.2}
  #allocation0 [shape = 'u32[]', space=smem, size = 0x4, offset = 0x4, fixed_abs, tag = 'smem constant byte address 0x4 - core index']
  #allocation1 [shape = 'u32[144,128]{1,0:T(1,128)}', space=vmem, size = 0x12000, scoped, tag = 'internal scratch']
  #allocation2 [shape = 'f32[128,32]{1,0:T(8,128)}', space=vmem, size = 0x10000, scoped, tag = 'scratch operand']
  %s0 = inlined_call_operand.hbm [shape: f32[2,64,32], index: 0, kind: input, shape index: {}]
  %s1 = inlined_call_operand.vmem [shape: f32[2,64,32], index: 1, kind: input, shape index: {}]
  %s2 = inlined_call_operand.vmem [shape: f32[2,1,64], index: 2, kind: input, shape index: {}]
  %s3 = inlined_call_operand.vmem [shape: bf16[1,32,96], index: 3, kind: input, shape index: {}]
  %s4 = inlined_call_operand.vmem [shape: f32[1,1,96], index: 4, kind: input, shape index: {}]
  %s5 = inlined_call_operand.vmem [shape: bf16[1,32,32], index: 5, kind: input, shape index: {}]
  %s6 = inlined_call_operand.vmem [shape: f32[1,1,32], index: 6, kind: input, shape index: {}]
  %s7 = inlined_call_operand.vmem [shape: bf16[1,32,64], index: 7, kind: input, shape index: {}]
  %s8 = inlined_call_operand.vmem [shape: f32[1,1,64], index: 8, kind: input, shape index: {}]
  %s9 = inlined_call_operand.vmem [shape: bf16[1,64,32], index: 9, kind: input, shape index: {}]
  %s10 = inlined_call_operand.vmem [shape: f32[1,1,32], index: 10, kind: input, shape index: {}]
  %s11 = inlined_call_operand.vmem [shape: f32[1,4,32], index: 11, kind: input, shape index: {}]
  %s12 = inlined_call_operand.vmem [shape: f32[2,64,32], index: 12, kind: output, shape index: {}]
  %s13 = sld [smem:[#allocation0]]
  $region66: #{conditional_detr_transformer.2} parent=0
    _
  %s15 = ssub.s32 1, %s13
  %s16 = scalar_select 0, %s15, %s13
  $region1: #{conditional_detr_transformer.2} parent=0
    #allocation3 [shape = 'u8[65536]{0}', space=vmem, size = 0x10000, scoped, tag = 'input window, operand 0, single buffered']
    #allocation4 [shape = 's32[1]{0}', space=sflag, size = 0x4, scoped, tag = 'scoped memory for conditional_detr_transformer.2']
    %17 = vsyncpa [#allocation4], 0
    // Predicated region
    $region2: #{conditional_detr_transformer.2} parent=1 // pred_check
      _
    $region3: #{conditional_detr_transformer.2} parent=1 // pred_check_branch
      %19 = sbr.rel (0) target = $region5
    $region4: #{conditional_detr_transformer.2} parent=1 // pred_region
      %s21 = ssub.s32 2048, 2048
      %22 = vsyncadd [#allocation4], %s21
      %s23 = sshll.u32 [#allocation3], 4
      %s24 = int_to_ptr.vmem [resolvable:$true] %s23
      %29 = dma.hbm_to_vmem [thread:$0]  %s0, 2048, %s24, [#allocation4], 128, 128, 8
    $region5: #{conditional_detr_transformer.2} parent=1 // pred_fallthru
      _
    // Predicated region
    $region6: #{conditional_detr_transformer.2} parent=1 // pred_check
      _
    $region7: #{conditional_detr_transformer.2} parent=1 // pred_check_branch
      %31 = sbr.rel (0) target = $region9
    $region8: #{conditional_detr_transformer.2} parent=1 // pred_region
      _
    $region9: #{conditional_detr_transformer.2} parent=1 // pred_fallthru
      _
    // Predicated region
    $region10: #{conditional_detr_transformer.2} parent=1 // pred_check
      _
    $region11: #{conditional_detr_transformer.2} parent=1 // pred_check_branch
      %33 = sbr.rel (0) target = $region13
    $region12: #{conditional_detr_transformer.2} parent=1 // pred_region
      _
    $region13: #{conditional_detr_transformer.2} parent=1 // pred_fallthru
      _
    // Predicated region
    $region14: #{conditional_detr_transformer.2} parent=1 // pred_check
      _
    $region15: #{conditional_detr_transformer.2} parent=1 // pred_check_branch
      %35 = sbr.rel (0) target = $region17
    $region16: #{conditional_detr_transformer.2} parent=1 // pred_region
      _
    $region17: #{conditional_detr_transformer.2} parent=1 // pred_fallthru
      _
    // Predicated region
    $region18: #{conditional_detr_transformer.2} parent=1 // pred_check
      _
    $region19: #{conditional_detr_transformer.2} parent=1 // pred_check_branch
      %37 = sbr.rel (0) target = $region21
    $region20: #{conditional_detr_transformer.2} parent=1 // pred_region
      _
    $region21: #{conditional_detr_transformer.2} parent=1 // pred_fallthru
      _
    // Predicated region
    $region22: #{conditional_detr_transformer.2} parent=1 // pred_check
      _
    $region23: #{conditional_detr_transformer.2} parent=1 // pred_check_branch
      %39 = sbr.rel (0) target = $region25
    $region24: #{conditional_detr_transformer.2} parent=1 // pred_region
      _
    $region25: #{conditional_detr_transformer.2} parent=1 // pred_fallthru
      _
    // Predicated region
    $region26: #{conditional_detr_transformer.2} parent=1 // pred_check
      _
    $region27: #{conditional_detr_transformer.2} parent=1 // pred_check_branch
      %41 = sbr.rel (0) target = $region29
    $region28: #{conditional_detr_transformer.2} parent=1 // pred_region
      _
    $region29: #{conditional_detr_transformer.2} parent=1 // pred_fallthru
      _
    // Predicated region
    $region30: #{conditional_detr_transformer.2} parent=1 // pred_check
      _
    $region31: #{conditional_detr_transformer.2} parent=1 // pred_check_branch
      %43 = sbr.rel (0) target = $region33
    $region32: #{conditional_detr_transformer.2} parent=1 // pred_region
      _
    $region33: #{conditional_detr_transformer.2} parent=1 // pred_fallthru
      _
    // Predicated region
    $region34: #{conditional_detr_transformer.2} parent=1 // pred_check
      _
    $region35: #{conditional_detr_transformer.2} parent=1 // pred_check_branch
      %45 = sbr.rel (0) target = $region37
    $region36: #{conditional_detr_transformer.2} parent=1 // pred_region
      _
    $region37: #{conditional_detr_transformer.2} parent=1 // pred_fallthru
      _
    // Predicated region
    $region38: #{conditional_detr_transformer.2} parent=1 // pred_check
      _
    $region39: #{conditional_detr_transformer.2} parent=1 // pred_check_branch
      %47 = sbr.rel (0) target = $region41
    $region40: #{conditional_detr_transformer.2} parent=1 // pred_region
      _
    $region41: #{conditional_detr_transformer.2} parent=1 // pred_fallthru
      _
    // Predicated region
    $region42: #{conditional_detr_transformer.2} parent=1 // pred_check
      _
    $region43: #{conditional_detr_transformer.2} parent=1 // pred_check_branch
      %49 = sbr.rel (0) target = $region45
    $region44: #{conditional_detr_transformer.2} parent=1 // pred_region
      _
    $region45: #{conditional_detr_transformer.2} parent=1 // pred_fallthru
      _
    // Predicated region
    $region46: #{conditional_detr_transformer.2} parent=1 // pred_check
      _
    $region47: #{conditional_detr_transformer.2} parent=1 // pred_check_branch
      %51 = sbr.rel (0) target = $region49
    $region48: #{conditional_detr_transformer.2} parent=1 // pred_region
      _
    $region49: #{conditional_detr_transformer.2} parent=1 // pred_fallthru
      _
    // Predicated region
    $region50: #{conditional_detr_transformer.2} parent=1 // pred_check
      _
    $region51: #{conditional_detr_transformer.2} parent=1 // pred_check_branch
      %53 = sbr.rel (0) target = $region53
    $region52: #{conditional_detr_transformer.2} parent=1 // pred_region
      %54 = dma.done [#allocation4], 2048
    $region53: #{conditional_detr_transformer.2} parent=1 // pred_fallthru
      _
    %p56 = scmp.eq.s32.totalorder 0, 0
    // Predicated region
    $region54: #{conditional_detr_transformer.2} parent=1 // pred_check
      %p57 = pneg %p56
    $region55: #{conditional_detr_transformer.2} parent=1 // pred_check_branch
      %59 = sbr.rel (%p57) target = $region57
    $region56: #{conditional_detr_transformer.2} parent=1 // pred_region
      %v60 = vld [vmem:[#allocation3] sm:$0xff]
      %v61 = vld [vmem:[#allocation3 + $0x8] sm:$0xff]
      %v62 = vld [vmem:[#allocation3 + $0x10] sm:$0xff]
      %v63 = vld [vmem:[#allocation3 + $0x18] sm:$0xff]
      %v64 = vld [vmem:[#allocation3 + $0x20] sm:$0xff]
      %v65 = vld [vmem:[#allocation3 + $0x28] sm:$0xff]
      %v66 = vld [vmem:[#allocation3 + $0x30] sm:$0xff]
      %v67 = vld [vmem:[#allocation3 + $0x38] sm:$0xff]
      %v68 = vld [vmem:[#allocation3 + $0x40] sm:$0xff]
      %v69 = vld [vmem:[#allocation3 + $0x48] sm:$0xff]
      %v70 = vld [vmem:[#allocation3 + $0x50] sm:$0xff]
      %v71 = vld [vmem:[#allocation3 + $0x58] sm:$0xff]
      %v72 = vld [vmem:[#allocation3 + $0x60] sm:$0xff]
      %v73 = vld [vmem:[#allocation3 + $0x68] sm:$0xff]
      %v74 = vld [vmem:[#allocation3 + $0x70] sm:$0xff]
      %v75 = vld [vmem:[#allocation3 + $0x78] sm:$0xff]
      %vm76 = vcmask 261120
      %77 = vst.msk [vmem:[%s12] sm:$0xff] %vm76, %v60
      %78 = vst.msk [vmem:[%s12 + $0x8] sm:$0xff] %vm76, %v61
      %79 = vst.msk [vmem:[%s12 + $0x10] sm:$0xff] %vm76, %v62
      %80 = vst.msk [vmem:[%s12 + $0x18] sm:$0xff] %vm76, %v63
      %81 = vst.msk [vmem:[%s12 + $0x20] sm:$0xff] %vm76, %v64
      %82 = vst.msk [vmem:[%s12 + $0x28] sm:$0xff] %vm76, %v65
      %83 = vst.msk [vmem:[%s12 + $0x30] sm:$0xff] %vm76, %v66
      %84 = vst.msk [vmem:[%s12 + $0x38] sm:$0xff] %vm76, %v67
      %85 = vst.msk [vmem:[%s12 + $0x40] sm:$0xff] %vm76, %v68
      %86 = vst.msk [vmem:[%s12 + $0x48] sm:$0xff] %vm76, %v69
      %87 = vst.msk [vmem:[%s12 + $0x50] sm:$0xff] %vm76, %v70
      %88 = vst.msk [vmem:[%s12 + $0x58] sm:$0xff] %vm76, %v71
      %89 = vst.msk [vmem:[%s12 + $0x60] sm:$0xff] %vm76, %v72
      %90 = vst.msk [vmem:[%s12 + $0x68] sm:$0xff] %vm76, %v73
      %91 = vst.msk [vmem:[%s12 + $0x70] sm:$0xff] %vm76, %v74
      %92 = vst.msk [vmem:[%s12 + $0x78] sm:$0xff] %vm76, %v75
    $region57: #{conditional_detr_transformer.2} parent=1 // pred_fallthru
      _
    %v93 = vld [vmem:[%s12] sm:$0xff]
    %v94 = vld [vmem:[%s12 + $0x8] sm:$0xff]
    %v95 = vld [vmem:[%s12 + $0x10] sm:$0xff]
    %v96 = vld [vmem:[%s12 + $0x18] sm:$0xff]
    %v97 = vld [vmem:[%s12 + $0x20] sm:$0xff]
    %v98 = vld [vmem:[%s12 + $0x28] sm:$0xff]
    %v99 = vld [vmem:[%s12 + $0x30] sm:$0xff]
    %v100 = vld [vmem:[%s12 + $0x38] sm:$0xff]
    %v101 = vld [vmem:[%s12 + $0x40] sm:$0xff]
    %v102 = vld [vmem:[%s12 + $0x48] sm:$0xff]
    %v103 = vld [vmem:[%s12 + $0x50] sm:$0xff]
    %v104 = vld [vmem:[%s12 + $0x58] sm:$0xff]
    %v105 = vld [vmem:[%s12 + $0x60] sm:$0xff]
    %v106 = vld [vmem:[%s12 + $0x68] sm:$0xff]
    %v107 = vld [vmem:[%s12 + $0x70] sm:$0xff]
    %v108 = vld [vmem:[%s12 + $0x78] sm:$0xff]
    %v109 = vld [vmem:[%s1] sm:$0xff]
    %v110 = vld [vmem:[%s1 + $0x8] sm:$0xff]
    %v111 = vld [vmem:[%s1 + $0x10] sm:$0xff]
    %v112 = vld [vmem:[%s1 + $0x18] sm:$0xff]
    %v113 = vld [vmem:[%s1 + $0x20] sm:$0xff]
    %v114 = vld [vmem:[%s1 + $0x28] sm:$0xff]
    %v115 = vld [vmem:[%s1 + $0x30] sm:$0xff]
    %v116 = vld [vmem:[%s1 + $0x38] sm:$0xff]
    %v117 = vld [vmem:[%s1 + $0x40] sm:$0xff]
    %v118 = vld [vmem:[%s1 + $0x48] sm:$0xff]
    %v119 = vld [vmem:[%s1 + $0x50] sm:$0xff]
    %v120 = vld [vmem:[%s1 + $0x58] sm:$0xff]
    %v121 = vld [vmem:[%s1 + $0x60] sm:$0xff]
    %v122 = vld [vmem:[%s1 + $0x68] sm:$0xff]
    %v123 = vld [vmem:[%s1 + $0x70] sm:$0xff]
    %v124 = vld [vmem:[%s1 + $0x78] sm:$0xff]
    %v125 = vld [vmem:[%s2] sm:$0x1]
    %v126 = vld [vmem:[%s2 + $0x1] sm:$0x1]
    %v127 = vld [vmem:[%s11] sm:$0xf]
    %v128 = vadd.f32 %v93, %v109
    %v129 = vadd.f32 %v94, %v110
    %v130 = vadd.f32 %v95, %v111
    %v131 = vadd.f32 %v96, %v112
    %v132 = vadd.f32 %v97, %v113
    %v133 = vadd.f32 %v98, %v114
    %v134 = vadd.f32 %v99, %v115
    %v135 = vadd.f32 %v100, %v116
    %v136 = vadd.f32 %v101, %v117
    %v137 = vadd.f32 %v102, %v118
    %v138 = vadd.f32 %v103, %v119
    %v139 = vadd.f32 %v104, %v120
    %v140 = vadd.f32 %v105, %v121
    %v141 = vadd.f32 %v106, %v122
    %v142 = vadd.f32 %v107, %v123
    %v143 = vadd.f32 %v108, %v124
    %v144 = vld [vmem:[%s3] sm:$0xf]
    %v145 = vld [vmem:[%s3 + $0x4] sm:$0xf]
    %v146 = vld [vmem:[%s3 + $0x8] sm:$0xf]
    %v147 = vld [vmem:[%s3 + $0xc] sm:$0xf]
    %v148 = vld [vmem:[%s4] sm:$0x1]
    %v149 = vld [vmem:[%s5] sm:$0xf]
    %v150 = vld [vmem:[%s5 + $0x4] sm:$0xf]
    %v151 = vld [vmem:[%s5 + $0x8] sm:$0xf]
    %v152 = vld [vmem:[%s5 + $0xc] sm:$0xf]
    %v153 = vld [vmem:[%s6] sm:$0x1]
    %v154 = vpack.c.bf16 %v129, %v128
    %v155 = vpack.c.bf16 %v131, %v130
    %v156 = vpack.c.bf16 %v133, %v132
    %v157 = vpack.c.bf16 %v135, %v134
    %v158 = vpack.c.bf16 %v137, %v136
    %v159 = vpack.c.bf16 %v139, %v138
    %v160 = vpack.c.bf16 %v141, %v140
    %v161 = vpack.c.bf16 %v143, %v142
    %v162 = vpack.c.bf16 %v94, %v93
    %v163 = vpack.c.bf16 %v96, %v95
    %v164 = vpack.c.bf16 %v98, %v97
    %v165 = vpack.c.bf16 %v100, %v99
    %v166 = vpack.c.bf16 %v102, %v101
    %v167 = vpack.c.bf16 %v104, %v103
    %v168 = vpack.c.bf16 %v106, %v105
    %v169 = vpack.c.bf16 %v108, %v107
    %v171 = vlaneseq
    %v172 = vshrl.u32 %v171, 7
    %v173 = vsub.s32 0, %v172
    %v174 = vrot.slane %v148, %v173
    %v180 = vunpack.c.l.b16 %v144
    %v181 = vunpack.c.l.b16 %v145
    %v182 = vunpack.c.l.b16 %v146
    %v183 = vunpack.c.l.b16 %v147
    %v184 = vpack.c.b16 %v181, %v180
    %v185 = vpack.c.b16 %v183, %v182
    %vm188 = vcmask 261120
    %v190 = vsel %vm188, %v154, 0
    %v193 = vsel %vm188, %v155, 0
    %v196 = vsel %vm188, %v156, 0
    %v199 = vsel %vm188, %v157, 0
    %v202 = vsel %vm188, %v158, 0
    %v205 = vsel %vm188, %v159, 0
    %v208 = vsel %vm188, %v160, 0
    %v211 = vsel %vm188, %v161, 0
    %213 = vmatprep.subr.bf16.mxu0 0
    %214 = vmatpush1.bf16.msra.mxu0 %v184
    %215 = vmatprep.subr.bf16.mxu0 0
    %216 = vmatpush1.bf16.msra.mxu0 %v185
    %217 = vmatprep.subr.bf16.mxu0 0
    %218 = vmatpush1.bf16.msra.mxu0 0
    %219 = vmatprep.subr.bf16.mxu0 0
    %220 = vmatpush1.bf16.msra.mxu0 0
    %221 = vmatprep.subr.bf16.mxu0 0
    %222 = vmatpush1.bf16.msra.mxu0 0
    %223 = vmatprep.subr.bf16.mxu0 0
    %224 = vmatpush1.bf16.msra.mxu0 0
    %225 = vmatprep.subr.bf16.mxu0 0
    %226 = vmatpush1.bf16.msra.mxu0 0
    %227 = vmatprep.subr.bf16.mxu0 0
    %228 = vmatpush1.bf16.msra.mxu0 0
    %229 = vmatprep.subr.bf16.mxu0 0
    %230 = vmatpush1.bf16.msra.mxu0 0
    %231 = vmatprep.subr.bf16.mxu0 0
    %232 = vmatpush1.bf16.msra.mxu0 0
    %233 = vmatprep.subr.bf16.mxu0 0
    %234 = vmatpush1.bf16.msra.mxu0 0
    %235 = vmatprep.subr.bf16.mxu0 0
    %236 = vmatpush1.bf16.msra.mxu0 0
    %237 = vmatprep.subr.bf16.mxu0 0
    %238 = vmatpush1.bf16.msra.mxu0 0
    %239 = vmatprep.subr.bf16.mxu0 0
    %240 = vmatpush1.bf16.msra.mxu0 0
    %241 = vmatprep.subr.bf16.mxu0 0
    %242 = vmatpush1.bf16.msra.mxu0 0
    %243 = vmatprep.subr.bf16.mxu0 0
    %244 = vmatpush1.bf16.msra.mxu0 0
    %245 = vmatprep.mubr.bf16.mxu0 0
    %246 = vmatmul.mubr.bf16.gmra.mrb[0].mxu0 %v190
    %v247 = vpop.f32.mrb[0].mxu0
    %v248 = vadd.f32 %v174, %v247
    %v249 = vpop.f32.mrb[0].mxu0
    %v250 = vpop.f32.mrb[0].mxu0
    %v251 = vadd.f32 %v174, %v250
    %v252 = vpop.f32.mrb[0].mxu0
    %253 = vmatprep.mubr.bf16.mxu0 0
    %254 = vmatmul.mubr.bf16.gmra.mrb[0].mxu0 %v193
    %v255 = vpop.f32.mrb[0].mxu0
    %v256 = vadd.f32 %v174, %v255
    %v257 = vpop.f32.mrb[0].mxu0
    %v258 = vpop.f32.mrb[0].mxu0
    %v259 = vadd.f32 %v174, %v258
    %v260 = vpop.f32.mrb[0].mxu0
    %261 = vmatprep.mubr.bf16.mxu0 0
    %262 = vmatmul.mubr.bf16.gmra.mrb[0].mxu0 %v196
    %v263 = vpop.f32.mrb[0].mxu0
    %v264 = vadd.f32 %v174, %v263
    %v265 = vpop.f32.mrb[0].mxu0
    %v266 = vpop.f32.mrb[0].mxu0
    %v267 = vadd.f32 %v174, %v266
    %v268 = vpop.f32.mrb[0].mxu0
    %269 = vmatprep.mubr.bf16.mxu0 0
    %270 = vmatmul.mubr.bf16.gmra.mrb[0].mxu0 %v199
    %v271 = vpop.f32.mrb[0].mxu0
    %v272 = vadd.f32 %v174, %v271
    %v273 = vpop.f32.mrb[0].mxu0
    %v274 = vpop.f32.mrb[0].mxu0
    %v275 = vadd.f32 %v174, %v274
    %v276 = vpop.f32.mrb[0].mxu0
    %277 = vmatprep.mubr.bf16.mxu0 0
    %278 = vmatmul.mubr.bf16.gmra.mrb[0].mxu0 %v202
    %v279 = vpop.f32.mrb[0].mxu0
    %v280 = vadd.f32 %v174, %v279
    %v281 = vpop.f32.mrb[0].mxu0
    %v282 = vpop.f32.mrb[0].mxu0
    %v283 = vadd.f32 %v174, %v282
    %v284 = vpop.f32.mrb[0].mxu0
    %285 = vmatprep.mubr.bf16.mxu0 0
    %286 = vmatmul.mubr.bf16.gmra.mrb[0].mxu0 %v205
    %v287 = vpop.f32.mrb[0].mxu0
    %v288 = vadd.f32 %v174, %v287
    %v289 = vpop.f32.mrb[0].mxu0
    %v290 = vpop.f32.mrb[0].mxu0
    %v291 = vadd.f32 %v174, %v290
    %v292 = vpop.f32.mrb[0].mxu0
    %293 = vmatprep.mubr.bf16.mxu0 0
    %294 = vmatmul.mubr.bf16.gmra.mrb[0].mxu0 %v208
    %v295 = vpop.f32.mrb[0].mxu0
    %v296 = vadd.f32 %v174, %v295
    %v297 = vpop.f32.mrb[0].mxu0
    %v298 = vpop.f32.mrb[0].mxu0
    %v299 = vadd.f32 %v174, %v298
    %v300 = vpop.f32.mrb[0].mxu0
    %301 = vmatprep.mubr.bf16.mxu0 0
    %302 = vmatmul.mubr.bf16.gmra.mrb[0].mxu0 %v211
    %v303 = vpop.f32.mrb[0].mxu0
    %v304 = vadd.f32 %v174, %v303
    %v305 = vpop.f32.mrb[0].mxu0
    %v306 = vpop.f32.mrb[0].mxu0
    %v307 = vadd.f32 %v174, %v306
    %v308 = vpop.f32.mrb[0].mxu0
    %309 = vdwg.mxu0
    %310 = vrot.lane.b32.xlu0 %v184, 64
    %v311 = vpop.permute.xlu0 %310
    %312 = vrot.lane.b32.xlu0 %v185, 64
    %v313 = vpop.permute.xlu0 %312
    %316 = vrot.lane.b32.xlu0 %v174, 64
    %v317 = vpop.permute.xlu0 %316
    %v320 = vsel %vm188, %v162, 0
    %v323 = vsel %vm188, %v163, 0
    %v326 = vsel %vm188, %v164, 0
    %v329 = vsel %vm188, %v165, 0
    %v332 = vsel %vm188, %v166, 0
    %v335 = vsel %vm188, %v167, 0
    %v338 = vsel %vm188, %v168, 0
    %v341 = vsel %vm188, %v169, 0
    %343 = vmatprep.subr.bf16.mxu0 0
    %344 = vmatpush1.bf16.msra.mxu0 %v311
    %345 = vmatprep.subr.bf16.mxu0 0
    %346 = vmatpush1.bf16.msra.mxu0 %v313
    %347 = vmatprep.subr.bf16.mxu0 0
    %348 = vmatpush1.bf16.msra.mxu0 0
    %349 = vmatprep.subr.bf16.mxu0 0
    %350 = vmatpush1.bf16.msra.mxu0 0
    %351 = vmatprep.subr.bf16.mxu0 0
    %352 = vmatpush1.bf16.msra.mxu0 0
    %353 = vmatprep.subr.bf16.mxu0 0
    %354 = vmatpush1.bf16.msra.mxu0 0
    %355 = vmatprep.subr.bf16.mxu0 0
    %356 = vmatpush1.bf16.msra.mxu0 0
    %357 = vmatprep.subr.bf16.mxu0 0
    %358 = vmatpush1.bf16.msra.mxu0 0
    %359 = vmatprep.subr.bf16.mxu0 0
    %360 = vmatpush1.bf16.msra.mxu0 0
    %361 = vmatprep.subr.bf16.mxu0 0
    %362 = vmatpush1.bf16.msra.mxu0 0
    %363 = vmatprep.subr.bf16.mxu0 0
    %364 = vmatpush1.bf16.msra.mxu0 0
    %365 = vmatprep.subr.bf16.mxu0 0
    %366 = vmatpush1.bf16.msra.mxu0 0
    %367 = vmatprep.subr.bf16.mxu0 0
    %368 = vmatpush1.bf16.msra.mxu0 0
    %369 = vmatprep.subr.bf16.mxu0 0
    %370 = vmatpush1.bf16.msra.mxu0 0
    %371 = vmatprep.subr.bf16.mxu0 0
    %372 = vmatpush1.bf16.msra.mxu0 0
    %373 = vmatprep.subr.bf16.mxu0 0
    %374 = vmatpush1.bf16.msra.mxu0 0
    %375 = vmatprep.mubr.bf16.mxu0 0
    %376 = vmatmul.mubr.bf16.gmra.mrb[0].mxu0 %v320
    %v377 = vpop.f32.mrb[0].mxu0
    %v378 = vadd.f32 %v317, %v377
    %v379 = vpop.f32.mrb[0].mxu0
    %v380 = vpop.f32.mrb[0].mxu0
    %v381 = vadd.f32 %v317, %v380
    %v382 = vpop.f32.mrb[0].mxu0
    %383 = vmatprep.mubr.bf16.mxu0 0
    %384 = vmatmul.mubr.bf16.gmra.mrb[0].mxu0 %v323
    %v385 = vpop.f32.mrb[0].mxu0
    %v386 = vadd.f32 %v317, %v385
    %v387 = vpop.f32.mrb[0].mxu0
    %v388 = vpop.f32.mrb[0].mxu0
    %v389 = vadd.f32 %v317, %v388
    %v390 = vpop.f32.mrb[0].mxu0
    %391 = vmatprep.mubr.bf16.mxu0 0
    %392 = vmatmul.mubr.bf16.gmra.mrb[0].mxu0 %v326
    %v393 = vpop.f32.mrb[0].mxu0
    %v394 = vadd.f32 %v317, %v393
    %v395 = vpop.f32.mrb[0].mxu0
    %v396 = vpop.f32.mrb[0].mxu0
    %v397 = vadd.f32 %v317, %v396
    %v398 = vpop.f32.mrb[0].mxu0
    %399 = vmatprep.mubr.bf16.mxu0 0
    %400 = vmatmul.mubr.bf16.gmra.mrb[0].mxu0 %v329
    %v401 = vpop.f32.mrb[0].mxu0
    %v402 = vadd.f32 %v317, %v401
    %v403 = vpop.f32.mrb[0].mxu0
    %v404 = vpop.f32.mrb[0].mxu0
    %v405 = vadd.f32 %v317, %v404
    %v406 = vpop.f32.mrb[0].mxu0
    %407 = vmatprep.mubr.bf16.mxu0 0
    %408 = vmatmul.mubr.bf16.gmra.mrb[0].mxu0 %v332
    %v409 = vpop.f32.mrb[0].mxu0
    %v410 = vadd.f32 %v317, %v409
    %v411 = vpop.f32.mrb[0].mxu0
    %v412 = vpop.f32.mrb[0].mxu0
    %v413 = vadd.f32 %v317, %v412
    %v414 = vpop.f32.mrb[0].mxu0
    %415 = vmatprep.mubr.bf16.mxu0 0
    %416 = vmatmul.mubr.bf16.gmra.mrb[0].mxu0 %v335
    %v417 = vpop.f32.mrb[0].mxu0
    %v418 = vadd.f32 %v317, %v417
    %v419 = vpop.f32.mrb[0].mxu0
    %v420 = vpop.f32.mrb[0].mxu0
    %v421 = vadd.f32 %v317, %v420
    %v422 = vpop.f32.mrb[0].mxu0
    %423 = vmatprep.mubr.bf16.mxu0 0
    %424 = vmatmul.mubr.bf16.gmra.mrb[0].mxu0 %v338
    %v425 = vpop.f32.mrb[0].mxu0
    %v426 = vadd.f32 %v317, %v425
    %v427 = vpop.f32.mrb[0].mxu0
    %v428 = vpop.f32.mrb[0].mxu0
    %v429 = vadd.f32 %v317, %v428
    %v430 = vpop.f32.mrb[0].mxu0
    %431 = vmatprep.mubr.bf16.mxu0 0
    %432 = vmatmul.mubr.bf16.gmra.mrb[0].mxu0 %v341
    %v433 = vpop.f32.mrb[0].mxu0
    %v434 = vadd.f32 %v317, %v433
    %v435 = vpop.f32.mrb[0].mxu0
    %v436 = vpop.f32.mrb[0].mxu0
    %v437 = vadd.f32 %v317, %v436
    %v438 = vpop.f32.mrb[0].mxu0
    %439 = vdwg.mxu0
    %v440 = vpack.c.bf16 %v251, %v248
    %v441 = vpack.c.bf16 %v259, %v256
    %v442 = vpack.c.bf16 %v267, %v264
    %v443 = vpack.c.bf16 %v275, %v272
    %v444 = vpack.c.bf16 %v283, %v280
    %v445 = vpack.c.bf16 %v291, %v288
    %v446 = vpack.c.bf16 %v299, %v296
    %v447 = vpack.c.bf16 %v307, %v304
    %v448 = vpack.c.bf16 %v381, %v378
    %v449 = vpack.c.bf16 %v389, %v386
    %v450 = vpack.c.bf16 %v397, %v394
    %v451 = vpack.c.bf16 %v405, %v402
    %v452 = vpack.c.bf16 %v413, %v410
    %v453 = vpack.c.bf16 %v421, %v418
    %v454 = vpack.c.bf16 %v429, %v426
    %v455 = vpack.c.bf16 %v437, %v434
    %v457 = vlaneseq
    %v458 = vshrl.u32 %v457, 7
    %v459 = vsub.s32 0, %v458
    %v460 = vrot.slane %v125, %v459
    %466 = vrot.lane.b32.xlu0 %v440, 96
    %v467 = vpop.permute.xlu0 %466
    %468 = vrot.lane.b32.xlu0 %v441, 96
    %v469 = vpop.permute.xlu0 %468
    %470 = vrot.lane.b32.xlu0 %v442, 96
    %v471 = vpop.permute.xlu0 %470
    %472 = vrot.lane.b32.xlu0 %v443, 96
    %v473 = vpop.permute.xlu0 %472
    %vm474 = vcmask 64512
    %v476 = vsel %vm474, %v440, 0
    %v479 = vsel %vm474, %v441, 0
    %v482 = vsel %vm474, %v442, 0
    %v485 = vsel %vm474, %v443, 0
    %v488 = vsel %vm474, %v467, 0
    %v491 = vsel %vm474, %v469, 0
    %v494 = vsel %vm474, %v471, 0
    %v497 = vsel %vm474, %v473, 0
    %499 = vmatprep.subr.bf16.mxu0 0
    %500 = vmatpush1.bf16.xpose.msra.mxu0 %v488
    %501 = vmatprep.subr.bf16.mxu0 0
    %502 = vmatpush1.bf16.xpose.msra.mxu0 %v491
    %503 = vmatprep.subr.bf16.mxu0 0
    %504 = vmatpush1.bf16.xpose.msra.mxu0 %v494
    %505 = vmatprep.subr.bf16.mxu0 0
    %506 = vmatpush1.bf16.xpose.msra.mxu0 %v497
    %507 = vmatprep.subr.bf16.mxu0 0
    %508 = vmatpush1.bf16.xpose.msra.mxu0 0
    %509 = vmatprep.subr.bf16.mxu0 0
    %510 = vmatpush1.bf16.xpose.msra.mxu0 0
    %511 = vmatprep.subr.bf16.mxu0 0
    %512 = vmatpush1.bf16.xpose.msra.mxu0 0
    %513 = vmatprep.subr.bf16.mxu0 0
    %514 = vmatpush1.bf16.xpose.msra.mxu0 0
    %515 = vmatprep.subr.bf16.mxu0 0
    %516 = vmatpush1.bf16.xpose.msra.mxu0 0
    %517 = vmatprep.subr.bf16.mxu0 0
    %518 = vmatpush1.bf16.xpose.msra.mxu0 0
    %519 = vmatprep.subr.bf16.mxu0 0
    %520 = vmatpush1.bf16.xpose.msra.mxu0 0
    %521 = vmatprep.subr.bf16.mxu0 0
    %522 = vmatpush1.bf16.xpose.msra.mxu0 0
    %523 = vmatprep.subr.bf16.mxu0 0
    %524 = vmatpush1.bf16.xpose.msra.mxu0 0
    %525 = vmatprep.subr.bf16.mxu0 0
    %526 = vmatpush1.bf16.xpose.msra.mxu0 0
    %527 = vmatprep.subr.bf16.mxu0 0
    %528 = vmatpush1.bf16.xpose.msra.mxu0 0
    %529 = vmatprep.subr.bf16.mxu0 0
    %530 = vmatpush1.bf16.xpose.msra.mxu0 0
    %531 = vmatprep.mubr.bf16.mxu0 0
    %532 = vmatmul.mubr.bf16.gmra.mrb[0].mxu0 %v476
    %v533 = vpop.f32.mrb[0].mxu0
    %v534 = vadd.f32 %v460, %v533
    %v535 = vpop.f32.mrb[0].mxu0
    %v536 = vpop.f32.mrb[0].mxu0
    %v537 = vadd.f32 %v460, %v536
    %v538 = vpop.f32.mrb[0].mxu0
    %539 = vmatprep.mubr.bf16.mxu0 0
    %540 = vmatmul.mubr.bf16.gmra.mrb[0].mxu0 %v479
    %v541 = vpop.f32.mrb[0].mxu0
    %v542 = vadd.f32 %v460, %v541
    %v543 = vpop.f32.mrb[0].mxu0
    %v544 = vpop.f32.mrb[0].mxu0
    %v545 = vadd.f32 %v460, %v544
    %v546 = vpop.f32.mrb[0].mxu0
    %547 = vmatprep.mubr.bf16.mxu0 0
    %548 = vmatmul.mubr.bf16.gmra.mrb[0].mxu0 %v482
    %v549 = vpop.f32.mrb[0].mxu0
    %v550 = vadd.f32 %v460, %v549
    %v551 = vpop.f32.mrb[0].mxu0
    %v552 = vpop.f32.mrb[0].mxu0
    %v553 = vadd.f32 %v460, %v552
    %v554 = vpop.f32.mrb[0].mxu0
    %555 = vmatprep.mubr.bf16.mxu0 0
    %556 = vmatmul.mubr.bf16.gmra.mrb[0].mxu0 %v485
    %v557 = vpop.f32.mrb[0].mxu0
    %v558 = vadd.f32 %v460, %v557
    %v559 = vpop.f32.mrb[0].mxu0
    %v560 = vpop.f32.mrb[0].mxu0
    %v561 = vadd.f32 %v460, %v560
    %v562 = vpop.f32.mrb[0].mxu0
    %563 = vdwg.mxu0
    %vm564 = vcmask 523264
    %v565 = vsel %vm564, %v534, -inf
    %566 = vmax.xlane.f32.xlu0 %v565
    %v567 = vpop.xlane.xlu0 %566
    %v568 = vsel %vm564, %v537, -inf
    %569 = vmax.xlane.f32.xlu0 %v568
    %v570 = vpop.xlane.xlu0 %569
    %v571 = vsel %vm564, %v542, -inf
    %572 = vmax.xlane.f32.xlu0 %v571
    %v573 = vpop.xlane.xlu0 %572
    %v574 = vsel %vm564, %v545, -inf
    %575 = vmax.xlane.f32.xlu0 %v574
    %v576 = vpop.xlane.xlu0 %575
    %v577 = vsel %vm564, %v550, -inf
    %578 = vmax.xlane.f32.xlu0 %v577
    %v579 = vpop.xlane.xlu0 %578
    %v580 = vsel %vm564, %v553, -inf
    %581 = vmax.xlane.f32.xlu0 %v580
    %v582 = vpop.xlane.xlu0 %581
    %v583 = vsel %vm564, %v558, -inf
    %584 = vmax.xlane.f32.xlu0 %v583
    %v585 = vpop.xlane.xlu0 %584
    %v586 = vsel %vm564, %v561, -inf
    %587 = vmax.xlane.f32.xlu0 %v586
    %v588 = vpop.xlane.xlu0 %587
    %v589 = vsub.f32 %v534, %v567
    %v590 = vsub.f32 %v537, %v570
    %v591 = vsub.f32 %v542, %v573
    %v592 = vsub.f32 %v545, %v576
    %v593 = vsub.f32 %v550, %v579
    %v594 = vsub.f32 %v553, %v582
    %v595 = vsub.f32 %v558, %v585
    %v596 = vsub.f32 %v561, %v588
    %v597 = vmul.f32 %v589, 1.442695
    %v598 = vpow.pop %v597
    %v599 = vmul.f32 %v590, 1.442695
    %v600 = vpow.pop %v599
    %v601 = vmul.f32 %v591, 1.442695
    %v602 = vpow.pop %v601
    %v603 = vmul.f32 %v592, 1.442695
    %v604 = vpow.pop %v603
    %v605 = vmul.f32 %v593, 1.442695
    %v606 = vpow.pop %v605
    %v607 = vmul.f32 %v594, 1.442695
    %v608 = vpow.pop %v607
    %v609 = vmul.f32 %v595, 1.442695
    %v610 = vpow.pop %v609
    %v611 = vmul.f32 %v596, 1.442695
    %v612 = vpow.pop %v611
    %v613 = vsel %vm564, %v598, 0.0
    %614 = vadd.xlane.f32.xlu0 %v613
    %v615 = vpop.xlane.xlu0 %614
    %v616 = vsel %vm564, %v600, 0.0
    %617 = vadd.xlane.f32.xlu0 %v616
    %v618 = vpop.xlane.xlu0 %617
    %v619 = vsel %vm564, %v602, 0.0
    %620 = vadd.xlane.f32.xlu0 %v619
    %v621 = vpop.xlane.xlu0 %620
    %v622 = vsel %vm564, %v604, 0.0
    %623 = vadd.xlane.f32.xlu0 %v622
    %v624 = vpop.xlane.xlu0 %623
    %v625 = vsel %vm564, %v606, 0.0
    %626 = vadd.xlane.f32.xlu0 %v625
    %v627 = vpop.xlane.xlu0 %626
    %v628 = vsel %vm564, %v608, 0.0
    %629 = vadd.xlane.f32.xlu0 %v628
    %v630 = vpop.xlane.xlu0 %629
    %v631 = vsel %vm564, %v610, 0.0
    %632 = vadd.xlane.f32.xlu0 %v631
    %v633 = vpop.xlane.xlu0 %632
    %v634 = vsel %vm564, %v612, 0.0
    %635 = vadd.xlane.f32.xlu0 %v634
    %v636 = vpop.xlane.xlu0 %635
    %v637 = vrcp.pop %v615
    %v638 = vrcp.pop %v618
    %v639 = vrcp.pop %v621
    %v640 = vrcp.pop %v624
    %v641 = vrcp.pop %v627
    %v642 = vrcp.pop %v630
    %v643 = vrcp.pop %v633
    %v644 = vrcp.pop %v636
    %v645 = vmul.f32 %v598, %v637
    %v646 = vmul.f32 %v600, %v638
    %v647 = vmul.f32 %v602, %v639
    %v648 = vmul.f32 %v604, %v640
    %v649 = vmul.f32 %v606, %v641
    %v650 = vmul.f32 %v608, %v642
    %v651 = vmul.f32 %v610, %v643
    %v652 = vmul.f32 %v612, %v644
    %v653 = vpack.c.bf16 %v646, %v645
    %v654 = vpack.c.bf16 %v648, %v647
    %v655 = vpack.c.bf16 %v650, %v649
    %v656 = vpack.c.bf16 %v652, %v651
    %v658 = vsel %vm564, %v653, 0
    %v661 = vsel %vm564, %v654, 0
    %v664 = vsel %vm564, %v655, 0
    %v667 = vsel %vm564, %v656, 0
    %669 = vmatprep.subr.bf16.mxu0 0
    %670 = vmatpush1.bf16.msra.mxu0 %v448
    %671 = vmatprep.subr.bf16.mxu0 0
    %672 = vmatpush1.bf16.msra.mxu0 %v449
    %673 = vmatprep.subr.bf16.mxu0 0
    %674 = vmatpush1.bf16.msra.mxu0 %v450
    %675 = vmatprep.subr.bf16.mxu0 0
    %676 = vmatpush1.bf16.msra.mxu0 %v451
    %677 = vmatprep.subr.bf16.mxu0 0
    %678 = vmatpush1.bf16.msra.mxu0 0
    %679 = vmatprep.subr.bf16.mxu0 0
    %680 = vmatpush1.bf16.msra.mxu0 0
    %681 = vmatprep.subr.bf16.mxu0 0
    %682 = vmatpush1.bf16.msra.mxu0 0
    %683 = vmatprep.subr.bf16.mxu0 0
    %684 = vmatpush1.bf16.msra.mxu0 0
    %685 = vmatprep.subr.bf16.mxu0 0
    %686 = vmatpush1.bf16.msra.mxu0 0
    %687 = vmatprep.subr.bf16.mxu0 0
    %688 = vmatpush1.bf16.msra.mxu0 0
    %689 = vmatprep.subr.bf16.mxu0 0
    %690 = vmatpush1.bf16.msra.mxu0 0
    %691 = vmatprep.subr.bf16.mxu0 0
    %692 = vmatpush1.bf16.msra.mxu0 0
    %693 = vmatprep.subr.bf16.mxu0 0
    %694 = vmatpush1.bf16.msra.mxu0 0
    %695 = vmatprep.subr.bf16.mxu0 0
    %696 = vmatpush1.bf16.msra.mxu0 0
    %697 = vmatprep.subr.bf16.mxu0 0
    %698 = vmatpush1.bf16.msra.mxu0 0
    %699 = vmatprep.subr.bf16.mxu0 0
    %700 = vmatpush1.bf16.msra.mxu0 0
    %701 = vmatprep.mubr.bf16.mxu0 0
    %702 = vmatmul.mubr.bf16.gmra.mrb[0].mxu0 %v658
    %v703 = vpop.f32.mrb[0].mxu0
    %v704 = vadd.f32 0.0, %v703
    %v705 = vpop.f32.mrb[0].mxu0
    %v706 = vpop.f32.mrb[0].mxu0
    %v707 = vadd.f32 0.0, %v706
    %v708 = vpop.f32.mrb[0].mxu0
    %709 = vmatprep.mubr.bf16.mxu0 0
    %710 = vmatmul.mubr.bf16.gmra.mrb[0].mxu0 %v661
    %v711 = vpop.f32.mrb[0].mxu0
    %v712 = vadd.f32 0.0, %v711
    %v713 = vpop.f32.mrb[0].mxu0
    %v714 = vpop.f32.mrb[0].mxu0
    %v715 = vadd.f32 0.0, %v714
    %v716 = vpop.f32.mrb[0].mxu0
    %717 = vmatprep.mubr.bf16.mxu0 0
    %718 = vmatmul.mubr.bf16.gmra.mrb[0].mxu0 %v664
    %v719 = vpop.f32.mrb[0].mxu0
    %v720 = vadd.f32 0.0, %v719
    %v721 = vpop.f32.mrb[0].mxu0
    %v722 = vpop.f32.mrb[0].mxu0
    %v723 = vadd.f32 0.0, %v722
    %v724 = vpop.f32.mrb[0].mxu0
    %725 = vmatprep.mubr.bf16.mxu0 0
    %726 = vmatmul.mubr.bf16.gmra.mrb[0].mxu0 %v667
    %v727 = vpop.f32.mrb[0].mxu0
    %v728 = vadd.f32 0.0, %v727
    %v729 = vpop.f32.mrb[0].mxu0
    %v730 = vpop.f32.mrb[0].mxu0
    %v731 = vadd.f32 0.0, %v730
    %v732 = vpop.f32.mrb[0].mxu0
    %733 = vdwg.mxu0
    %734 = vst.msk [vmem:[#allocation2] sm:$0xff] %vm474, %v704
    %735 = vst.msk [vmem:[#allocation2 + $0x8] sm:$0xff] %vm474, %v707
    %736 = vst.msk [vmem:[#allocation2 + $0x10] sm:$0xff] %vm474, %v712
    %737 = vst.msk [vmem:[#allocation2 + $0x18] sm:$0xff] %vm474, %v715
    %738 = vst.msk [vmem:[#allocation2 + $0x20] sm:$0xff] %vm474, %v720
    %739 = vst.msk [vmem:[#allocation2 + $0x28] sm:$0xff] %vm474, %v723
    %740 = vst.msk [vmem:[#allocation2 + $0x30] sm:$0xff] %vm474, %v728
    %741 = vst.msk [vmem:[#allocation2 + $0x38] sm:$0xff] %vm474, %v731
    %742 = vrot.lane.b32.xlu0 %v440, 120
    %v743 = vpop.permute.xlu0 %742
    %744 = vrot.lane.b32.xlu0 %v441, 120
    %v745 = vpop.permute.xlu0 %744
    %746 = vrot.lane.b32.xlu0 %v442, 120
    %v747 = vpop.permute.xlu0 %746
    %748 = vrot.lane.b32.xlu0 %v443, 120
    %v749 = vpop.permute.xlu0 %748
    %750 = vrot.lane.b32.xlu0 %v440, 88
    %v751 = vpop.permute.xlu0 %750
    %752 = vrot.lane.b32.xlu0 %v441, 88
    %v753 = vpop.permute.xlu0 %752
    %754 = vrot.lane.b32.xlu0 %v442, 88
    %v755 = vpop.permute.xlu0 %754
    %756 = vrot.lane.b32.xlu0 %v443, 88
    %v757 = vpop.permute.xlu0 %756
    %v759 = vsel %vm474, %v743, 0
    %v762 = vsel %vm474, %v745, 0
    %v765 = vsel %vm474, %v747, 0
    %v768 = vsel %vm474, %v749, 0
    %v771 = vsel %vm474, %v751, 0
    %v774 = vsel %vm474, %v753, 0
    %v777 = vsel %vm474, %v755, 0
    %v780 = vsel %vm474, %v757, 0
    %782 = vmatprep.subr.bf16.mxu0 0
    %783 = vmatpush1.bf16.xpose.msra.mxu0 %v771
    %784 = vmatprep.subr.bf16.mxu0 0
    %785 = vmatpush1.bf16.xpose.msra.mxu0 %v774
    %786 = vmatprep.subr.bf16.mxu0 0
    %787 = vmatpush1.bf16.xpose.msra.mxu0 %v777
    %788 = vmatprep.subr.bf16.mxu0 0
    %789 = vmatpush1.bf16.xpose.msra.mxu0 %v780
    %790 = vmatprep.subr.bf16.mxu0 0
    %791 = vmatpush1.bf16.xpose.msra.mxu0 0
    %792 = vmatprep.subr.bf16.mxu0 0
    %793 = vmatpush1.bf16.xpose.msra.mxu0 0
    %794 = vmatprep.subr.bf16.mxu0 0
    %795 = vmatpush1.bf16.xpose.msra.mxu0 0
    %796 = vmatprep.subr.bf16.mxu0 0
    %797 = vmatpush1.bf16.xpose.msra.mxu0 0
    %798 = vmatprep.subr.bf16.mxu0 0
    %799 = vmatpush1.bf16.xpose.msra.mxu0 0
    %800 = vmatprep.subr.bf16.mxu0 0
    %801 = vmatpush1.bf16.xpose.msra.mxu0 0
    %802 = vmatprep.subr.bf16.mxu0 0
    %803 = vmatpush1.bf16.xpose.msra.mxu0 0
    %804 = vmatprep.subr.bf16.mxu0 0
    %805 = vmatpush1.bf16.xpose.msra.mxu0 0
    %806 = vmatprep.subr.bf16.mxu0 0
    %807 = vmatpush1.bf16.xpose.msra.mxu0 0
    %808 = vmatprep.subr.bf16.mxu0 0
    %809 = vmatpush1.bf16.xpose.msra.mxu0 0
    %810 = vmatprep.subr.bf16.mxu0 0
    %811 = vmatpush1.bf16.xpose.msra.mxu0 0
    %812 = vmatprep.subr.bf16.mxu0 0
    %813 = vmatpush1.bf16.xpose.msra.mxu0 0
    %814 = vmatprep.mubr.bf16.mxu0 0
    %815 = vmatmul.mubr.bf16.gmra.mrb[0].mxu0 %v759
    %v816 = vpop.f32.mrb[0].mxu0
    %v817 = vadd.f32 %v460, %v816
    %v818 = vpop.f32.mrb[0].mxu0
    %v819 = vpop.f32.mrb[0].mxu0
    %v820 = vadd.f32 %v460, %v819
    %v821 = vpop.f32.mrb[0].mxu0
    %822 = vmatprep.mubr.bf16.mxu0 0
    %823 = vmatmul.mubr.bf16.gmra.mrb[0].mxu0 %v762
    %v824 = vpop.f32.mrb[0].mxu0
    %v825 = vadd.f32 %v460, %v824
    %v826 = vpop.f32.mrb[0].mxu0
    %v827 = vpop.f32.mrb[0].mxu0
    %v828 = vadd.f32 %v460, %v827
    %v829 = vpop.f32.mrb[0].mxu0
    %830 = vmatprep.mubr.bf16.mxu0 0
    %831 = vmatmul.mubr.bf16.gmra.mrb[0].mxu0 %v765
    %v832 = vpop.f32.mrb[0].mxu0
    %v833 = vadd.f32 %v460, %v832
    %v834 = vpop.f32.mrb[0].mxu0
    %v835 = vpop.f32.mrb[0].mxu0
    %v836 = vadd.f32 %v460, %v835
    %v837 = vpop.f32.mrb[0].mxu0
    %838 = vmatprep.mubr.bf16.mxu0 0
    %839 = vmatmul.mubr.bf16.gmra.mrb[0].mxu0 %v768
    %v840 = vpop.f32.mrb[0].mxu0
    %v841 = vadd.f32 %v460, %v840
    %v842 = vpop.f32.mrb[0].mxu0
    %v843 = vpop.f32.mrb[0].mxu0
    %v844 = vadd.f32 %v460, %v843
    %v845 = vpop.f32.mrb[0].mxu0
    %846 = vdwg.mxu0
    %v847 = vsel %vm564, %v817, -inf
    %848 = vmax.xlane.f32.xlu0 %v847
    %v849 = vpop.xlane.xlu0 %848
    %v850 = vsel %vm564, %v820, -inf
    %851 = vmax.xlane.f32.xlu0 %v850
    %v852 = vpop.xlane.xlu0 %851
    %v853 = vsel %vm564, %v825, -inf
    %854 = vmax.xlane.f32.xlu0 %v853
    %v855 = vpop.xlane.xlu0 %854
    %v856 = vsel %vm564, %v828, -inf
    %857 = vmax.xlane.f32.xlu0 %v856
    %v858 = vpop.xlane.xlu0 %857
    %v859 = vsel %vm564, %v833, -inf
    %860 = vmax.xlane.f32.xlu0 %v859
    %v861 = vpop.xlane.xlu0 %860
    %v862 = vsel %vm564, %v836, -inf
    %863 = vmax.xlane.f32.xlu0 %v862
    %v864 = vpop.xlane.xlu0 %863
    %v865 = vsel %vm564, %v841, -inf
    %866 = vmax.xlane.f32.xlu0 %v865
    %v867 = vpop.xlane.xlu0 %866
    %v868 = vsel %vm564, %v844, -inf
    %869 = vmax.xlane.f32.xlu0 %v868
    %v870 = vpop.xlane.xlu0 %869
    %v871 = vsub.f32 %v817, %v849
    %v872 = vsub.f32 %v820, %v852
    %v873 = vsub.f32 %v825, %v855
    %v874 = vsub.f32 %v828, %v858
    %v875 = vsub.f32 %v833, %v861
    %v876 = vsub.f32 %v836, %v864
    %v877 = vsub.f32 %v841, %v867
    %v878 = vsub.f32 %v844, %v870
    %v879 = vmul.f32 %v871, 1.442695
    %v880 = vpow.pop %v879
    %v881 = vmul.f32 %v872, 1.442695
    %v882 = vpow.pop %v881
    %v883 = vmul.f32 %v873, 1.442695
    %v884 = vpow.pop %v883
    %v885 = vmul.f32 %v874, 1.442695
    %v886 = vpow.pop %v885
    %v887 = vmul.f32 %v875, 1.442695
    %v888 = vpow.pop %v887
    %v889 = vmul.f32 %v876, 1.442695
    %v890 = vpow.pop %v889
    %v891 = vmul.f32 %v877, 1.442695
    %v892 = vpow.pop %v891
    %v893 = vmul.f32 %v878, 1.442695
    %v894 = vpow.pop %v893
    %v895 = vsel %vm564, %v880, 0.0
    %896 = vadd.xlane.f32.xlu0 %v895
    %v897 = vpop.xlane.xlu0 %896
    %v898 = vsel %vm564, %v882, 0.0
    %899 = vadd.xlane.f32.xlu0 %v898
    %v900 = vpop.xlane.xlu0 %899
    %v901 = vsel %vm564, %v884, 0.0
    %902 = vadd.xlane.f32.xlu0 %v901
    %v903 = vpop.xlane.xlu0 %902
    %v904 = vsel %vm564, %v886, 0.0
    %905 = vadd.xlane.f32.xlu0 %v904
    %v906 = vpop.xlane.xlu0 %905
    %v907 = vsel %vm564, %v888, 0.0
    %908 = vadd.xlane.f32.xlu0 %v907
    %v909 = vpop.xlane.xlu0 %908
    %v910 = vsel %vm564, %v890, 0.0
    %911 = vadd.xlane.f32.xlu0 %v910
    %v912 = vpop.xlane.xlu0 %911
    %v913 = vsel %vm564, %v892, 0.0
    %914 = vadd.xlane.f32.xlu0 %v913
    %v915 = vpop.xlane.xlu0 %914
    %v916 = vsel %vm564, %v894, 0.0
    %917 = vadd.xlane.f32.xlu0 %v916
    %v918 = vpop.xlane.xlu0 %917
    %v919 = vrcp.pop %v897
    %v920 = vrcp.pop %v900
    %v921 = vrcp.pop %v903
    %v922 = vrcp.pop %v906
    %v923 = vrcp.pop %v909
    %v924 = vrcp.pop %v912
    %v925 = vrcp.pop %v915
    %v926 = vrcp.pop %v918
    %v927 = vmul.f32 %v880, %v919
    %v928 = vmul.f32 %v882, %v920
    %v929 = vmul.f32 %v884, %v921
    %v930 = vmul.f32 %v886, %v922
    %v931 = vmul.f32 %v888, %v923
    %v932 = vmul.f32 %v890, %v924
    %v933 = vmul.f32 %v892, %v925
    %v934 = vmul.f32 %v894, %v926
    %v935 = vpack.c.bf16 %v928, %v927
    %v936 = vpack.c.bf16 %v930, %v929
    %v937 = vpack.c.bf16 %v932, %v931
    %v938 = vpack.c.bf16 %v934, %v933
    %943 = vrot.lane.b32.xlu0 %v448, 120
    %v944 = vpop.permute.xlu0 %943
    %945 = vrot.lane.b32.xlu0 %v449, 120
    %v946 = vpop.permute.xlu0 %945
    %947 = vrot.lane.b32.xlu0 %v450, 120
    %v948 = vpop.permute.xlu0 %947
    %949 = vrot.lane.b32.xlu0 %v451, 120
    %v950 = vpop.permute.xlu0 %949
    %v956 = vsel %vm564, %v935, 0
    %v959 = vsel %vm564, %v936, 0
    %v962 = vsel %vm564, %v937, 0
    %v965 = vsel %vm564, %v938, 0
    %967 = vmatprep.subr.bf16.mxu0 0
    %968 = vmatpush1.bf16.msra.mxu0 %v944
    %969 = vmatprep.subr.bf16.mxu0 0
    %970 = vmatpush1.bf16.msra.mxu0 %v946
    %971 = vmatprep.subr.bf16.mxu0 0
    %972 = vmatpush1.bf16.msra.mxu0 %v948
    %973 = vmatprep.subr.bf16.mxu0 0
    %974 = vmatpush1.bf16.msra.mxu0 %v950
    %975 = vmatprep.subr.bf16.mxu0 0
    %976 = vmatpush1.bf16.msra.mxu0 0
    %977 = vmatprep.subr.bf16.mxu0 0
    %978 = vmatpush1.bf16.msra.mxu0 0
    %979 = vmatprep.subr.bf16.mxu0 0
    %980 = vmatpush1.bf16.msra.mxu0 0
    %981 = vmatprep.subr.bf16.mxu0 0
    %982 = vmatpush1.bf16.msra.mxu0 0
    %983 = vmatprep.subr.bf16.mxu0 0
    %984 = vmatpush1.bf16.msra.mxu0 0
    %985 = vmatprep.subr.bf16.mxu0 0
    %986 = vmatpush1.bf16.msra.mxu0 0
    %987 = vmatprep.subr.bf16.mxu0 0
    %988 = vmatpush1.bf16.msra.mxu0 0
    %989 = vmatprep.subr.bf16.mxu0 0
    %990 = vmatpush1.bf16.msra.mxu0 0
    %991 = vmatprep.subr.bf16.mxu0 0
    %992 = vmatpush1.bf16.msra.mxu0 0
    %993 = vmatprep.subr.bf16.mxu0 0
    %994 = vmatpush1.bf16.msra.mxu0 0
    %995 = vmatprep.subr.bf16.mxu0 0
    %996 = vmatpush1.bf16.msra.mxu0 0
    %997 = vmatprep.subr.bf16.mxu0 0
    %998 = vmatpush1.bf16.msra.mxu0 0
    %999 = vmatprep.mubr.bf16.mxu0 0
    %1000 = vmatmul.mubr.bf16.gmra.mrb[0].mxu0 %v956
    %v1001 = vpop.f32.mrb[0].mxu0
    %v1002 = vadd.f32 0.0, %v1001
    %v1003 = vpop.f32.mrb[0].mxu0
    %v1004 = vpop.f32.mrb[0].mxu0
    %v1005 = vadd.f32 0.0, %v1004
    %v1006 = vpop.f32.mrb[0].mxu0
    %1007 = vmatprep.mubr.bf16.mxu0 0
    %1008 = vmatmul.mubr.bf16.gmra.mrb[0].mxu0 %v959
    %v1009 = vpop.f32.mrb[0].mxu0
    %v1010 = vadd.f32 0.0, %v1009
    %v1011 = vpop.f32.mrb[0].mxu0
    %v1012 = vpop.f32.mrb[0].mxu0
    %v1013 = vadd.f32 0.0, %v1012
    %v1014 = vpop.f32.mrb[0].mxu0
    %1015 = vmatprep.mubr.bf16.mxu0 0
    %1016 = vmatmul.mubr.bf16.gmra.mrb[0].mxu0 %v962
    %v1017 = vpop.f32.mrb[0].mxu0
    %v1018 = vadd.f32 0.0, %v1017
    %v1019 = vpop.f32.mrb[0].mxu0
    %v1020 = vpop.f32.mrb[0].mxu0
    %v1021 = vadd.f32 0.0, %v1020
    %v1022 = vpop.f32.mrb[0].mxu0
    %1023 = vmatprep.mubr.bf16.mxu0 0
    %1024 = vmatmul.mubr.bf16.gmra.mrb[0].mxu0 %v965
    %v1025 = vpop.f32.mrb[0].mxu0
    %v1026 = vadd.f32 0.0, %v1025
    %v1027 = vpop.f32.mrb[0].mxu0
    %v1028 = vpop.f32.mrb[0].mxu0
    %v1029 = vadd.f32 0.0, %v1028
    %v1030 = vpop.f32.mrb[0].mxu0
    %1031 = vdwg.mxu0
    %1040 = vrot.lane.b32.xlu0 %v1002, 8
    %v1041 = vpop.permute.xlu0 %1040
    %1042 = vrot.lane.b32.xlu0 %v1005, 8
    %v1043 = vpop.permute.xlu0 %1042
    %1044 = vrot.lane.b32.xlu0 %v1010, 8
    %v1045 = vpop.permute.xlu0 %1044
    %1046 = vrot.lane.b32.xlu0 %v1013, 8
    %v1047 = vpop.permute.xlu0 %1046
    %1048 = vrot.lane.b32.xlu0 %v1018, 8
    %v1049 = vpop.permute.xlu0 %1048
    %1050 = vrot.lane.b32.xlu0 %v1021, 8
    %v1051 = vpop.permute.xlu0 %1050
    %1052 = vrot.lane.b32.xlu0 %v1026, 8
    %v1053 = vpop.permute.xlu0 %1052
    %1054 = vrot.lane.b32.xlu0 %v1029, 8
    %v1055 = vpop.permute.xlu0 %1054
    %vm1064 = vcmask 130112
    %1065 = vst.msk [vmem:[#allocation2] sm:$0xff] %vm1064, %v1041
    %1066 = vst.msk [vmem:[#allocation2 + $0x8] sm:$0xff] %vm1064, %v1043
    %1067 = vst.msk [vmem:[#allocation2 + $0x10] sm:$0xff] %vm1064, %v1045
    %1068 = vst.msk [vmem:[#allocation2 + $0x18] sm:$0xff] %vm1064, %v1047
    %1069 = vst.msk [vmem:[#allocation2 + $0x20] sm:$0xff] %vm1064, %v1049
    %1070 = vst.msk [vmem:[#allocation2 + $0x28] sm:$0xff] %vm1064, %v1051
    %1071 = vst.msk [vmem:[#allocation2 + $0x30] sm:$0xff] %vm1064, %v1053
    %1072 = vst.msk [vmem:[#allocation2 + $0x38] sm:$0xff] %vm1064, %v1055
    %1073 = vrot.lane.b32.xlu0 %v440, 112
    %v1074 = vpop.permute.xlu0 %1073
    %1075 = vrot.lane.b32.xlu0 %v441, 112
    %v1076 = vpop.permute.xlu0 %1075
    %1077 = vrot.lane.b32.xlu0 %v442, 112
    %v1078 = vpop.permute.xlu0 %1077
    %1079 = vrot.lane.b32.xlu0 %v443, 112
    %v1080 = vpop.permute.xlu0 %1079
    %1081 = vrot.lane.b32.xlu0 %v440, 80
    %v1082 = vpop.permute.xlu0 %1081
    %1083 = vrot.lane.b32.xlu0 %v441, 80
    %v1084 = vpop.permute.xlu0 %1083
    %1085 = vrot.lane.b32.xlu0 %v442, 80
    %v1086 = vpop.permute.xlu0 %1085
    %1087 = vrot.lane.b32.xlu0 %v443, 80
    %v1088 = vpop.permute.xlu0 %1087
    %v1090 = vsel %vm474, %v1074, 0
    %v1093 = vsel %vm474, %v1076, 0
    %v1096 = vsel %vm474, %v1078, 0
    %v1099 = vsel %vm474, %v1080, 0
    %v1102 = vsel %vm474, %v1082, 0
    %v1105 = vsel %vm474, %v1084, 0
    %v1108 = vsel %vm474, %v1086, 0
    %v1111 = vsel %vm474, %v1088, 0
    %1113 = vmatprep.subr.bf16.mxu0 0
    %1114 = vmatpush1.bf16.xpose.msra.mxu0 %v1102
    %1115 = vmatprep.subr.bf16.mxu0 0
    %1116 = vmatpush1.bf16.xpose.msra.mxu0 %v1105
    %1117 = vmatprep.subr.bf16.mxu0 0
    %1118 = vmatpush1.bf16.xpose.msra.mxu0 %v1108
    %1119 = vmatprep.subr.bf16.mxu0 0
    %1120 = vmatpush1.bf16.xpose.msra.mxu0 %v1111
    %1121 = vmatprep.subr.bf16.mxu0 0
    %1122 = vmatpush1.bf16.xpose.msra.mxu0 0
    %1123 = vmatprep.subr.bf16.mxu0 0
    %1124 = vmatpush1.bf16.xpose.msra.mxu0 0
    %1125 = vmatprep.subr.bf16.mxu0 0
    %1126 = vmatpush1.bf16.xpose.msra.mxu0 0
    %1127 = vmatprep.subr.bf16.mxu0 0
    %1128 = vmatpush1.bf16.xpose.msra.mxu0 0
    %1129 = vmatprep.subr.bf16.mxu0 0
    %1130 = vmatpush1.bf16.xpose.msra.mxu0 0
    %1131 = vmatprep.subr.bf16.mxu0 0
    %1132 = vmatpush1.bf16.xpose.msra.mxu0 0
    %1133 = vmatprep.subr.bf16.mxu0 0
    %1134 = vmatpush1.bf16.xpose.msra.mxu0 0
    %1135 = vmatprep.subr.bf16.mxu0 0
    %1136 = vmatpush1.bf16.xpose.msra.mxu0 0
    %1137 = vmatprep.subr.bf16.mxu0 0
    %1138 = vmatpush1.bf16.xpose.msra.mxu0 0
    %1139 = vmatprep.subr.bf16.mxu0 0
    %1140 = vmatpush1.bf16.xpose.msra.mxu0 0
    %1141 = vmatprep.subr.bf16.mxu0 0
    %1142 = vmatpush1.bf16.xpose.msra.mxu0 0
    %1143 = vmatprep.subr.bf16.mxu0 0
    %1144 = vmatpush1.bf16.xpose.msra.mxu0 0
    %1145 = vmatprep.mubr.bf16.mxu0 0
    %1146 = vmatmul.mubr.bf16.gmra.mrb[0].mxu0 %v1090
    %v1147 = vpop.f32.mrb[0].mxu0
    %v1148 = vadd.f32 %v460, %v1147
    %v1149 = vpop.f32.mrb[0].mxu0
    %v1150 = vpop.f32.mrb[0].mxu0
    %v1151 = vadd.f32 %v460, %v1150
    %v1152 = vpop.f32.mrb[0].mxu0
    %1153 = vmatprep.mubr.bf16.mxu0 0
    %1154 = vmatmul.mubr.bf16.gmra.mrb[0].mxu0 %v1093
    %v1155 = vpop.f32.mrb[0].mxu0
    %v1156 = vadd.f32 %v460, %v1155
    %v1157 = vpop.f32.mrb[0].mxu0
    %v1158 = vpop.f32.mrb[0].mxu0
    %v1159 = vadd.f32 %v460, %v1158
    %v1160 = vpop.f32.mrb[0].mxu0
    %1161 = vmatprep.mubr.bf16.mxu0 0
    %1162 = vmatmul.mubr.bf16.gmra.mrb[0].mxu0 %v1096
    %v1163 = vpop.f32.mrb[0].mxu0
    %v1164 = vadd.f32 %v460, %v1163
    %v1165 = vpop.f32.mrb[0].mxu0
    %v1166 = vpop.f32.mrb[0].mxu0
    %v1167 = vadd.f32 %v460, %v1166
    %v1168 = vpop.f32.mrb[0].mxu0
    %1169 = vmatprep.mubr.bf16.mxu0 0
    %1170 = vmatmul.mubr.bf16.gmra.mrb[0].mxu0 %v1099
    %v1171 = vpop.f32.mrb[0].mxu0
    %v1172 = vadd.f32 %v460, %v1171
    %v1173 = vpop.f32.mrb[0].mxu0
    %v1174 = vpop.f32.mrb[0].mxu0
    %v1175 = vadd.f32 %v460, %v1174
    %v1176 = vpop.f32.mrb[0].mxu0
    %1177 = vdwg.mxu0
    %v1178 = vsel %vm564, %v1148, -inf
    %1179 = vmax.xlane.f32.xlu0 %v1178
    %v1180 = vpop.xlane.xlu0 %1179
    %v1181 = vsel %vm564, %v1151, -inf
    %1182 = vmax.xlane.f32.xlu0 %v1181
    %v1183 = vpop.xlane.xlu0 %1182
    %v1184 = vsel %vm564, %v1156, -inf
    %1185 = vmax.xlane.f32.xlu0 %v1184
    %v1186 = vpop.xlane.xlu0 %1185
    %v1187 = vsel %vm564, %v1159, -inf
    %1188 = vmax.xlane.f32.xlu0 %v1187
    %v1189 = vpop.xlane.xlu0 %1188
    %v1190 = vsel %vm564, %v1164, -inf
    %1191 = vmax.xlane.f32.xlu0 %v1190
    %v1192 = vpop.xlane.xlu0 %1191
    %v1193 = vsel %vm564, %v1167, -inf
    %1194 = vmax.xlane.f32.xlu0 %v1193
    %v1195 = vpop.xlane.xlu0 %1194
    %v1196 = vsel %vm564, %v1172, -inf
    %1197 = vmax.xlane.f32.xlu0 %v1196
    %v1198 = vpop.xlane.xlu0 %1197
    %v1199 = vsel %vm564, %v1175, -inf
    %1200 = vmax.xlane.f32.xlu0 %v1199
    %v1201 = vpop.xlane.xlu0 %1200
    %v1202 = vsub.f32 %v1148, %v1180
    %v1203 = vsub.f32 %v1151, %v1183
    %v1204 = vsub.f32 %v1156, %v1186
    %v1205 = vsub.f32 %v1159, %v1189
    %v1206 = vsub.f32 %v1164, %v1192
    %v1207 = vsub.f32 %v1167, %v1195
    %v1208 = vsub.f32 %v1172, %v1198
    %v1209 = vsub.f32 %v1175, %v1201
    %v1210 = vmul.f32 %v1202, 1.442695
    %v1211 = vpow.pop %v1210
    %v1212 = vmul.f32 %v1203, 1.442695
    %v1213 = vpow.pop %v1212
    %v1214 = vmul.f32 %v1204, 1.442695
    %v1215 = vpow.pop %v1214
    %v1216 = vmul.f32 %v1205, 1.442695
    %v1217 = vpow.pop %v1216
    %v1218 = vmul.f32 %v1206, 1.442695
    %v1219 = vpow.pop %v1218
    %v1220 = vmul.f32 %v1207, 1.442695
    %v1221 = vpow.pop %v1220
    %v1222 = vmul.f32 %v1208, 1.442695
    %v1223 = vpow.pop %v1222
    %v1224 = vmul.f32 %v1209, 1.442695
    %v1225 = vpow.pop %v1224
    %v1226 = vsel %vm564, %v1211, 0.0
    %1227 = vadd.xlane.f32.xlu0 %v1226
    %v1228 = vpop.xlane.xlu0 %1227
    %v1229 = vsel %vm564, %v1213, 0.0
    %1230 = vadd.xlane.f32.xlu0 %v1229
    %v1231 = vpop.xlane.xlu0 %1230
    %v1232 = vsel %vm564, %v1215, 0.0
    %1233 = vadd.xlane.f32.xlu0 %v1232
    %v1234 = vpop.xlane.xlu0 %1233
    %v1235 = vsel %vm564, %v1217, 0.0
    %1236 = vadd.xlane.f32.xlu0 %v1235
    %v1237 = vpop.xlane.xlu0 %1236
    %v1238 = vsel %vm564, %v1219, 0.0
    %1239 = vadd.xlane.f32.xlu0 %v1238
    %v1240 = vpop.xlane.xlu0 %1239
    %v1241 = vsel %vm564, %v1221, 0.0
    %1242 = vadd.xlane.f32.xlu0 %v1241
    %v1243 = vpop.xlane.xlu0 %1242
    %v1244 = vsel %vm564, %v1223, 0.0
    %1245 = vadd.xlane.f32.xlu0 %v1244
    %v1246 = vpop.xlane.xlu0 %1245
    %v1247 = vsel %vm564, %v1225, 0.0
    %1248 = vadd.xlane.f32.xlu0 %v1247
    %v1249 = vpop.xlane.xlu0 %1248
    %v1250 = vrcp.pop %v1228
    %v1251 = vrcp.pop %v1231
    %v1252 = vrcp.pop %v1234
    %v1253 = vrcp.pop %v1237
    %v1254 = vrcp.pop %v1240
    %v1255 = vrcp.pop %v1243
    %v1256 = vrcp.pop %v1246
    %v1257 = vrcp.pop %v1249
    %v1258 = vmul.f32 %v1211, %v1250
    %v1259 = vmul.f32 %v1213, %v1251
    %v1260 = vmul.f32 %v1215, %v1252
    %v1261 = vmul.f32 %v1217, %v1253
    %v1262 = vmul.f32 %v1219, %v1254
    %v1263 = vmul.f32 %v1221, %v1255
    %v1264 = vmul.f32 %v1223, %v1256
    %v1265 = vmul.f32 %v1225, %v1257
    %v1266 = vpack.c.bf16 %v1259, %v1258
    %v1267 = vpack.c.bf16 %v1261, %v1260
    %v1268 = vpack.c.bf16 %v1263, %v1262
    %v1269 = vpack.c.bf16 %v1265, %v1264
    %1270 = vrot.lane.b32.xlu0 %v448, 112
    %v1271 = vpop.permute.xlu0 %1270
    %1272 = vrot.lane.b32.xlu0 %v449, 112
    %v1273 = vpop.permute.xlu0 %1272
    %1274 = vrot.lane.b32.xlu0 %v450, 112
    %v1275 = vpop.permute.xlu0 %1274
    %1276 = vrot.lane.b32.xlu0 %v451, 112
    %v1277 = vpop.permute.xlu0 %1276
    %v1283 = vsel %vm564, %v1266, 0
    %v1286 = vsel %vm564, %v1267, 0
    %v1289 = vsel %vm564, %v1268, 0
    %v1292 = vsel %vm564, %v1269, 0
    %1294 = vmatprep.subr.bf16.mxu0 0
    %1295 = vmatpush1.bf16.msra.mxu0 %v1271
    %1296 = vmatprep.subr.bf16.mxu0 0
    %1297 = vmatpush1.bf16.msra.mxu0 %v1273
    %1298 = vmatprep.subr.bf16.mxu0 0
    %1299 = vmatpush1.bf16.msra.mxu0 %v1275
    %1300 = vmatprep.subr.bf16.mxu0 0
    %1301 = vmatpush1.bf16.msra.mxu0 %v1277
    %1302 = vmatprep.subr.bf16.mxu0 0
    %1303 = vmatpush1.bf16.msra.mxu0 0
    %1304 = vmatprep.subr.bf16.mxu0 0
    %1305 = vmatpush1.bf16.msra.mxu0 0
    %1306 = vmatprep.subr.bf16.mxu0 0
    %1307 = vmatpush1.bf16.msra.mxu0 0
    %1308 = vmatprep.subr.bf16.mxu0 0
    %1309 = vmatpush1.bf16.msra.mxu0 0
    %1310 = vmatprep.subr.bf16.mxu0 0
    %1311 = vmatpush1.bf16.msra.mxu0 0
    %1312 = vmatprep.subr.bf16.mxu0 0
    %1313 = vmatpush1.bf16.msra.mxu0 0
    %1314 = vmatprep.subr.bf16.mxu0 0
    %1315 = vmatpush1.bf16.msra.mxu0 0
    %1316 = vmatprep.subr.bf16.mxu0 0
    %1317 = vmatpush1.bf16.msra.mxu0 0
    %1318 = vmatprep.subr.bf16.mxu0 0
    %1319 = vmatpush1.bf16.msra.mxu0 0
    %1320 = vmatprep.subr.bf16.mxu0 0
    %1321 = vmatpush1.bf16.msra.mxu0 0
    %1322 = vmatprep.subr.bf16.mxu0 0
    %1323 = vmatpush1.bf16.msra.mxu0 0
    %1324 = vmatprep.subr.bf16.mxu0 0
    %1325 = vmatpush1.bf16.msra.mxu0 0
    %1326 = vmatprep.mubr.bf16.mxu0 0
    %1327 = vmatmul.mubr.bf16.gmra.mrb[0].mxu0 %v1283
    %v1328 = vpop.f32.mrb[0].mxu0
    %v1329 = vadd.f32 0.0, %v1328
    %v1330 = vpop.f32.mrb[0].mxu0
    %v1331 = vpop.f32.mrb[0].mxu0
    %v1332 = vadd.f32 0.0, %v1331
    %v1333 = vpop.f32.mrb[0].mxu0
    %1334 = vmatprep.mubr.bf16.mxu0 0
    %1335 = vmatmul.mubr.bf16.gmra.mrb[0].mxu0 %v1286
    %v1336 = vpop.f32.mrb[0].mxu0
    %v1337 = vadd.f32 0.0, %v1336
    %v1338 = vpop.f32.mrb[0].mxu0
    %v1339 = vpop.f32.mrb[0].mxu0
    %v1340 = vadd.f32 0.0, %v1339
    %v1341 = vpop.f32.mrb[0].mxu0
    %1342 = vmatprep.mubr.bf16.mxu0 0
    %1343 = vmatmul.mubr.bf16.gmra.mrb[0].mxu0 %v1289
    %v1344 = vpop.f32.mrb[0].mxu0
    %v1345 = vadd.f32 0.0, %v1344
    %v1346 = vpop.f32.mrb[0].mxu0
    %v1347 = vpop.f32.mrb[0].mxu0
    %v1348 = vadd.f32 0.0, %v1347
    %v1349 = vpop.f32.mrb[0].mxu0
    %1350 = vmatprep.mubr.bf16.mxu0 0
    %1351 = vmatmul.mubr.bf16.gmra.mrb[0].mxu0 %v1292
    %v1352 = vpop.f32.mrb[0].mxu0
    %v1353 = vadd.f32 0.0, %v1352
    %v1354 = vpop.f32.mrb[0].mxu0
    %v1355 = vpop.f32.mrb[0].mxu0
    %v1356 = vadd.f32 0.0, %v1355
    %v1357 = vpop.f32.mrb[0].mxu0
    %1358 = vdwg.mxu0
    %1367 = vrot.lane.b32.xlu0 %v1329, 16
    %v1368 = vpop.permute.xlu0 %1367
    %1369 = vrot.lane.b32.xlu0 %v1332, 16
    %v1370 = vpop.permute.xlu0 %1369
    %1371 = vrot.lane.b32.xlu0 %v1337, 16
    %v1372 = vpop.permute.xlu0 %1371
    %1373 = vrot.lane.b32.xlu0 %v1340, 16
    %v1374 = vpop.permute.xlu0 %1373
    %1375 = vrot.lane.b32.xlu0 %v1345, 16
    %v1376 = vpop.permute.xlu0 %1375
    %1377 = vrot.lane.b32.xlu0 %v1348, 16
    %v1378 = vpop.permute.xlu0 %1377
    %1379 = vrot.lane.b32.xlu0 %v1353, 16
    %v1380 = vpop.permute.xlu0 %1379
    %1381 = vrot.lane.b32.xlu0 %v1356, 16
    %v1382 = vpop.permute.xlu0 %1381
    %vm1391 = vcmask 195712
    %1392 = vst.msk [vmem:[#allocation2] sm:$0xff] %vm1391, %v1368
    %1393 = vst.msk [vmem:[#allocation2 + $0x8] sm:$0xff] %vm1391, %v1370
    %1394 = vst.msk [vmem:[#allocation2 + $0x10] sm:$0xff] %vm1391, %v1372
    %1395 = vst.msk [vmem:[#allocation2 + $0x18] sm:$0xff] %vm1391, %v1374
    %1396 = vst.msk [vmem:[#allocation2 + $0x20] sm:$0xff] %vm1391, %v1376
    %1397 = vst.msk [vmem:[#allocation2 + $0x28] sm:$0xff] %vm1391, %v1378
    %1398 = vst.msk [vmem:[#allocation2 + $0x30] sm:$0xff] %vm1391, %v1380
    %1399 = vst.msk [vmem:[#allocation2 + $0x38] sm:$0xff] %vm1391, %v1382
    %1400 = vrot.lane.b32.xlu0 %v440, 104
    %v1401 = vpop.permute.xlu0 %1400
    %1402 = vrot.lane.b32.xlu0 %v441, 104
    %v1403 = vpop.permute.xlu0 %1402
    %1404 = vrot.lane.b32.xlu0 %v442, 104
    %v1405 = vpop.permute.xlu0 %1404
    %1406 = vrot.lane.b32.xlu0 %v443, 104
    %v1407 = vpop.permute.xlu0 %1406
    %1408 = vrot.lane.b32.xlu0 %v440, 72
    %v1409 = vpop.permute.xlu0 %1408
    %1410 = vrot.lane.b32.xlu0 %v441, 72
    %v1411 = vpop.permute.xlu0 %1410
    %1412 = vrot.lane.b32.xlu0 %v442, 72
    %v1413 = vpop.permute.xlu0 %1412
    %1414 = vrot.lane.b32.xlu0 %v443, 72
    %v1415 = vpop.permute.xlu0 %1414
    %v1417 = vsel %vm474, %v1401, 0
    %v1420 = vsel %vm474, %v1403, 0
    %v1423 = vsel %vm474, %v1405, 0
    %v1426 = vsel %vm474, %v1407, 0
    %v1429 = vsel %vm474, %v1409, 0
    %v1432 = vsel %vm474, %v1411, 0
    %v1435 = vsel %vm474, %v1413, 0
    %v1438 = vsel %vm474, %v1415, 0
    %1440 = vmatprep.subr.bf16.mxu0 0
    %1441 = vmatpush1.bf16.xpose.msra.mxu0 %v1429
    %1442 = vmatprep.subr.bf16.mxu0 0
    %1443 = vmatpush1.bf16.xpose.msra.mxu0 %v1432
    %1444 = vmatprep.subr.bf16.mxu0 0
    %1445 = vmatpush1.bf16.xpose.msra.mxu0 %v1435
    %1446 = vmatprep.subr.bf16.mxu0 0
    %1447 = vmatpush1.bf16.xpose.msra.mxu0 %v1438
    %1448 = vmatprep.subr.bf16.mxu0 0
    %1449 = vmatpush1.bf16.xpose.msra.mxu0 0
    %1450 = vmatprep.subr.bf16.mxu0 0
    %1451 = vmatpush1.bf16.xpose.msra.mxu0 0
    %1452 = vmatprep.subr.bf16.mxu0 0
    %1453 = vmatpush1.bf16.xpose.msra.mxu0 0
    %1454 = vmatprep.subr.bf16.mxu0 0
    %1455 = vmatpush1.bf16.xpose.msra.mxu0 0
    %1456 = vmatprep.subr.bf16.mxu0 0
    %1457 = vmatpush1.bf16.xpose.msra.mxu0 0
    %1458 = vmatprep.subr.bf16.mxu0 0
    %1459 = vmatpush1.bf16.xpose.msra.mxu0 0
    %1460 = vmatprep.subr.bf16.mxu0 0
    %1461 = vmatpush1.bf16.xpose.msra.mxu0 0
    %1462 = vmatprep.subr.bf16.mxu0 0
    %1463 = vmatpush1.bf16.xpose.msra.mxu0 0
    %1464 = vmatprep.subr.bf16.mxu0 0
    %1465 = vmatpush1.bf16.xpose.msra.mxu0 0
    %1466 = vmatprep.subr.bf16.mxu0 0
    %1467 = vmatpush1.bf16.xpose.msra.mxu0 0
    %1468 = vmatprep.subr.bf16.mxu0 0
    %1469 = vmatpush1.bf16.xpose.msra.mxu0 0
    %1470 = vmatprep.subr.bf16.mxu0 0
    %1471 = vmatpush1.bf16.xpose.msra.mxu0 0
    %1472 = vmatprep.mubr.bf16.mxu0 0
    %1473 = vmatmul.mubr.bf16.gmra.mrb[0].mxu0 %v1417
    %v1474 = vpop.f32.mrb[0].mxu0
    %v1475 = vadd.f32 %v460, %v1474
    %v1476 = vpop.f32.mrb[0].mxu0
    %v1477 = vpop.f32.mrb[0].mxu0
    %v1478 = vadd.f32 %v460, %v1477
    %v1479 = vpop.f32.mrb[0].mxu0
    %1480 = vmatprep.mubr.bf16.mxu0 0
    %1481 = vmatmul.mubr.bf16.gmra.mrb[0].mxu0 %v1420
    %v1482 = vpop.f32.mrb[0].mxu0
    %v1483 = vadd.f32 %v460, %v1482
    %v1484 = vpop.f32.mrb[0].mxu0
    %v1485 = vpop.f32.mrb[0].mxu0
    %v1486 = vadd.f32 %v460, %v1485
    %v1487 = vpop.f32.mrb[0].mxu0
    %1488 = vmatprep.mubr.bf16.mxu0 0
    %1489 = vmatmul.mubr.bf16.gmra.mrb[0].mxu0 %v1423
    %v1490 = vpop.f32.mrb[0].mxu0
    %v1491 = vadd.f32 %v460, %v1490
    %v1492 = vpop.f32.mrb[0].mxu0
    %v1493 = vpop.f32.mrb[0].mxu0
    %v1494 = vadd.f32 %v460, %v1493
    %v1495 = vpop.f32.mrb[0].mxu0
    %1496 = vmatprep.mubr.bf16.mxu0 0
    %1497 = vmatmul.mubr.bf16.gmra.mrb[0].mxu0 %v1426
    %v1498 = vpop.f32.mrb[0].mxu0
    %v1499 = vadd.f32 %v460, %v1498
    %v1500 = vpop.f32.mrb[0].mxu0
    %v1501 = vpop.f32.mrb[0].mxu0
    %v1502 = vadd.f32 %v460, %v1501
    %v1503 = vpop.f32.mrb[0].mxu0
    %1504 = vdwg.mxu0
    %v1505 = vsel %vm564, %v1475, -inf
    %1506 = vmax.xlane.f32.xlu0 %v1505
    %v1507 = vpop.xlane.xlu0 %1506
    %v1508 = vsel %vm564, %v1478, -inf
    %1509 = vmax.xlane.f32.xlu0 %v1508
    %v1510 = vpop.xlane.xlu0 %1509
    %v1511 = vsel %vm564, %v1483, -inf
    %1512 = vmax.xlane.f32.xlu0 %v1511
    %v1513 = vpop.xlane.xlu0 %1512
    %v1514 = vsel %vm564, %v1486, -inf
    %1515 = vmax.xlane.f32.xlu0 %v1514
    %v1516 = vpop.xlane.xlu0 %1515
    %v1517 = vsel %vm564, %v1491, -inf
    %1518 = vmax.xlane.f32.xlu0 %v1517
    %v1519 = vpop.xlane.xlu0 %1518
    %v1520 = vsel %vm564, %v1494, -inf
    %1521 = vmax.xlane.f32.xlu0 %v1520
    %v1522 = vpop.xlane.xlu0 %1521
    %v1523 = vsel %vm564, %v1499, -inf
    %1524 = vmax.xlane.f32.xlu0 %v1523
    %v1525 = vpop.xlane.xlu0 %1524
    %v1526 = vsel %vm564, %v1502, -inf
    %1527 = vmax.xlane.f32.xlu0 %v1526
    %v1528 = vpop.xlane.xlu0 %1527
    %v1529 = vsub.f32 %v1475, %v1507
    %v1530 = vsub.f32 %v1478, %v1510
    %v1531 = vsub.f32 %v1483, %v1513
    %v1532 = vsub.f32 %v1486, %v1516
    %v1533 = vsub.f32 %v1491, %v1519
    %v1534 = vsub.f32 %v1494, %v1522
    %v1535 = vsub.f32 %v1499, %v1525
    %v1536 = vsub.f32 %v1502, %v1528
    %v1537 = vmul.f32 %v1529, 1.442695
    %v1538 = vpow.pop %v1537
    %v1539 = vmul.f32 %v1530, 1.442695
    %v1540 = vpow.pop %v1539
    %v1541 = vmul.f32 %v1531, 1.442695
    %v1542 = vpow.pop %v1541
    %v1543 = vmul.f32 %v1532, 1.442695
    %v1544 = vpow.pop %v1543
    %v1545 = vmul.f32 %v1533, 1.442695
    %v1546 = vpow.pop %v1545
    %v1547 = vmul.f32 %v1534, 1.442695
    %v1548 = vpow.pop %v1547
    %v1549 = vmul.f32 %v1535, 1.442695
    %v1550 = vpow.pop %v1549
    %v1551 = vmul.f32 %v1536, 1.442695
    %v1552 = vpow.pop %v1551
    %v1553 = vsel %vm564, %v1538, 0.0
    %1554 = vadd.xlane.f32.xlu0 %v1553
    %v1555 = vpop.xlane.xlu0 %1554
    %v1556 = vsel %vm564, %v1540, 0.0
    %1557 = vadd.xlane.f32.xlu0 %v1556
    %v1558 = vpop.xlane.xlu0 %1557
    %v1559 = vsel %vm564, %v1542, 0.0
    %1560 = vadd.xlane.f32.xlu0 %v1559
    %v1561 = vpop.xlane.xlu0 %1560
    %v1562 = vsel %vm564, %v1544, 0.0
    %1563 = vadd.xlane.f32.xlu0 %v1562
    %v1564 = vpop.xlane.xlu0 %1563
    %v1565 = vsel %vm564, %v1546, 0.0
    %1566 = vadd.xlane.f32.xlu0 %v1565
    %v1567 = vpop.xlane.xlu0 %1566
    %v1568 = vsel %vm564, %v1548, 0.0
    %1569 = vadd.xlane.f32.xlu0 %v1568
    %v1570 = vpop.xlane.xlu0 %1569
    %v1571 = vsel %vm564, %v1550, 0.0
    %1572 = vadd.xlane.f32.xlu0 %v1571
    %v1573 = vpop.xlane.xlu0 %1572
    %v1574 = vsel %vm564, %v1552, 0.0
    %1575 = vadd.xlane.f32.xlu0 %v1574
    %v1576 = vpop.xlane.xlu0 %1575
    %v1577 = vrcp.pop %v1555
    %v1578 = vrcp.pop %v1558
    %v1579 = vrcp.pop %v1561
    %v1580 = vrcp.pop %v1564
    %v1581 = vrcp.pop %v1567
    %v1582 = vrcp.pop %v1570
    %v1583 = vrcp.pop %v1573
    %v1584 = vrcp.pop %v1576
    %v1585 = vmul.f32 %v1538, %v1577
    %v1586 = vmul.f32 %v1540, %v1578
    %v1587 = vmul.f32 %v1542, %v1579
    %v1588 = vmul.f32 %v1544, %v1580
    %v1589 = vmul.f32 %v1546, %v1581
    %v1590 = vmul.f32 %v1548, %v1582
    %v1591 = vmul.f32 %v1550, %v1583
    %v1592 = vmul.f32 %v1552, %v1584
    %v1593 = vpack.c.bf16 %v1586, %v1585
    %v1594 = vpack.c.bf16 %v1588, %v1587
    %v1595 = vpack.c.bf16 %v1590, %v1589
    %v1596 = vpack.c.bf16 %v1592, %v1591
    %1597 = vrot.lane.b32.xlu0 %v448, 104
    %v1598 = vpop.permute.xlu0 %1597
    %1599 = vrot.lane.b32.xlu0 %v449, 104
    %v1600 = vpop.permute.xlu0 %1599
    %1601 = vrot.lane.b32.xlu0 %v450, 104
    %v1602 = vpop.permute.xlu0 %1601
    %1603 = vrot.lane.b32.xlu0 %v451, 104
    %v1604 = vpop.permute.xlu0 %1603
    %v1610 = vsel %vm564, %v1593, 0
    %v1613 = vsel %vm564, %v1594, 0
    %v1616 = vsel %vm564, %v1595, 0
    %v1619 = vsel %vm564, %v1596, 0
    %1621 = vmatprep.subr.bf16.mxu0 0
    %1622 = vmatpush1.bf16.msra.mxu0 %v1598
    %1623 = vmatprep.subr.bf16.mxu0 0
    %1624 = vmatpush1.bf16.msra.mxu0 %v1600
    %1625 = vmatprep.subr.bf16.mxu0 0
    %1626 = vmatpush1.bf16.msra.mxu0 %v1602
    %1627 = vmatprep.subr.bf16.mxu0 0
    %1628 = vmatpush1.bf16.msra.mxu0 %v1604
    %1629 = vmatprep.subr.bf16.mxu0 0
    %1630 = vmatpush1.bf16.msra.mxu0 0
    %1631 = vmatprep.subr.bf16.mxu0 0
    %1632 = vmatpush1.bf16.msra.mxu0 0
    %1633 = vmatprep.subr.bf16.mxu0 0
    %1634 = vmatpush1.bf16.msra.mxu0 0
    %1635 = vmatprep.subr.bf16.mxu0 0
    %1636 = vmatpush1.bf16.msra.mxu0 0
    %1637 = vmatprep.subr.bf16.mxu0 0
    %1638 = vmatpush1.bf16.msra.mxu0 0
    %1639 = vmatprep.subr.bf16.mxu0 0
    %1640 = vmatpush1.bf16.msra.mxu0 0
    %1641 = vmatprep.subr.bf16.mxu0 0
    %1642 = vmatpush1.bf16.msra.mxu0 0
    %1643 = vmatprep.subr.bf16.mxu0 0
    %1644 = vmatpush1.bf16.msra.mxu0 0
    %1645 = vmatprep.subr.bf16.mxu0 0
    %1646 = vmatpush1.bf16.msra.mxu0 0
    %1647 = vmatprep.subr.bf16.mxu0 0
    %1648 = vmatpush1.bf16.msra.mxu0 0
    %1649 = vmatprep.subr.bf16.mxu0 0
    %1650 = vmatpush1.bf16.msra.mxu0 0
    %1651 = vmatprep.subr.bf16.mxu0 0
    %1652 = vmatpush1.bf16.msra.mxu0 0
    %1653 = vmatprep.mubr.bf16.mxu0 0
    %1654 = vmatmul.mubr.bf16.gmra.mrb[0].mxu0 %v1610
    %v1655 = vpop.f32.mrb[0].mxu0
    %v1656 = vadd.f32 0.0, %v1655
    %v1657 = vpop.f32.mrb[0].mxu0
    %v1658 = vpop.f32.mrb[0].mxu0
    %v1659 = vadd.f32 0.0, %v1658
    %v1660 = vpop.f32.mrb[0].mxu0
    %1661 = vmatprep.mubr.bf16.mxu0 0
    %1662 = vmatmul.mubr.bf16.gmra.mrb[0].mxu0 %v1613
    %v1663 = vpop.f32.mrb[0].mxu0
    %v1664 = vadd.f32 0.0, %v1663
    %v1665 = vpop.f32.mrb[0].mxu0
    %v1666 = vpop.f32.mrb[0].mxu0
    %v1667 = vadd.f32 0.0, %v1666
    %v1668 = vpop.f32.mrb[0].mxu0
    %1669 = vmatprep.mubr.bf16.mxu0 0
    %1670 = vmatmul.mubr.bf16.gmra.mrb[0].mxu0 %v1616
    %v1671 = vpop.f32.mrb[0].mxu0
    %v1672 = vadd.f32 0.0, %v1671
    %v1673 = vpop.f32.mrb[0].mxu0
    %v1674 = vpop.f32.mrb[0].mxu0
    %v1675 = vadd.f32 0.0, %v1674
    %v1676 = vpop.f32.mrb[0].mxu0
    %1677 = vmatprep.mubr.bf16.mxu0 0
    %1678 = vmatmul.mubr.bf16.gmra.mrb[0].mxu0 %v1619
    %v1679 = vpop.f32.mrb[0].mxu0
    %v1680 = vadd.f32 0.0, %v1679
    %v1681 = vpop.f32.mrb[0].mxu0
    %v1682 = vpop.f32.mrb[0].mxu0
    %v1683 = vadd.f32 0.0, %v1682
    %v1684 = vpop.f32.mrb[0].mxu0
    %1685 = vdwg.mxu0
    %1694 = vrot.lane.b32.xlu0 %v1656, 24
    %v1695 = vpop.permute.xlu0 %1694
    %1696 = vrot.lane.b32.xlu0 %v1659, 24
    %v1697 = vpop.permute.xlu0 %1696
    %1698 = vrot.lane.b32.xlu0 %v1664, 24
    %v1699 = vpop.permute.xlu0 %1698
    %1700 = vrot.lane.b32.xlu0 %v1667, 24
    %v1701 = vpop.permute.xlu0 %1700
    %1702 = vrot.lane.b32.xlu0 %v1672, 24
    %v1703 = vpop.permute.xlu0 %1702
    %1704 = vrot.lane.b32.xlu0 %v1675, 24
    %v1705 = vpop.permute.xlu0 %1704
    %1706 = vrot.lane.b32.xlu0 %v1680, 24
    %v1707 = vpop.permute.xlu0 %1706
    %1708 = vrot.lane.b32.xlu0 %v1683, 24
    %v1709 = vpop.permute.xlu0 %1708
    %vm1718 = vcmask 261312
    %1719 = vst.msk [vmem:[#allocation2] sm:$0xff] %vm1718, %v1695
    %1720 = vst.msk [vmem:[#allocation2 + $0x8] sm:$0xff] %vm1718, %v1697
    %1721 = vst.msk [vmem:[#allocation2 + $0x10] sm:$0xff] %vm1718, %v1699
    %1722 = vst.msk [vmem:[#allocation2 + $0x18] sm:$0xff] %vm1718, %v1701
    %1723 = vst.msk [vmem:[#allocation2 + $0x20] sm:$0xff] %vm1718, %v1703
    %1724 = vst.msk [vmem:[#allocation2 + $0x28] sm:$0xff] %vm1718, %v1705
    %1725 = vst.msk [vmem:[#allocation2 + $0x30] sm:$0xff] %vm1718, %v1707
    %1726 = vst.msk [vmem:[#allocation2 + $0x38] sm:$0xff] %vm1718, %v1709
    %v1728 = vlaneseq
    %v1729 = vshrl.u32 %v1728, 7
    %v1730 = vsub.s32 0, %v1729
    %v1731 = vrot.slane %v126, %v1730
    %1737 = vrot.lane.b32.xlu0 %v444, 96
    %v1738 = vpop.permute.xlu0 %1737
    %1739 = vrot.lane.b32.xlu0 %v445, 96
    %v1740 = vpop.permute.xlu0 %1739
    %1741 = vrot.lane.b32.xlu0 %v446, 96
    %v1742 = vpop.permute.xlu0 %1741
    %1743 = vrot.lane.b32.xlu0 %v447, 96
    %v1744 = vpop.permute.xlu0 %1743
    %v1746 = vsel %vm474, %v444, 0
    %v1749 = vsel %vm474, %v445, 0
    %v1752 = vsel %vm474, %v446, 0
    %v1755 = vsel %vm474, %v447, 0
    %v1758 = vsel %vm474, %v1738, 0
    %v1761 = vsel %vm474, %v1740, 0
    %v1764 = vsel %vm474, %v1742, 0
    %v1767 = vsel %vm474, %v1744, 0
    %1769 = vmatprep.subr.bf16.mxu0 0
    %1770 = vmatpush1.bf16.xpose.msra.mxu0 %v1758
    %1771 = vmatprep.subr.bf16.mxu0 0
    %1772 = vmatpush1.bf16.xpose.msra.mxu0 %v1761
    %1773 = vmatprep.subr.bf16.mxu0 0
    %1774 = vmatpush1.bf16.xpose.msra.mxu0 %v1764
    %1775 = vmatprep.subr.bf16.mxu0 0
    %1776 = vmatpush1.bf16.xpose.msra.mxu0 %v1767
    %1777 = vmatprep.subr.bf16.mxu0 0
    %1778 = vmatpush1.bf16.xpose.msra.mxu0 0
    %1779 = vmatprep.subr.bf16.mxu0 0
    %1780 = vmatpush1.bf16.xpose.msra.mxu0 0
    %1781 = vmatprep.subr.bf16.mxu0 0
    %1782 = vmatpush1.bf16.xpose.msra.mxu0 0
    %1783 = vmatprep.subr.bf16.mxu0 0
    %1784 = vmatpush1.bf16.xpose.msra.mxu0 0
    %1785 = vmatprep.subr.bf16.mxu0 0
    %1786 = vmatpush1.bf16.xpose.msra.mxu0 0
    %1787 = vmatprep.subr.bf16.mxu0 0
    %1788 = vmatpush1.bf16.xpose.msra.mxu0 0
    %1789 = vmatprep.subr.bf16.mxu0 0
    %1790 = vmatpush1.bf16.xpose.msra.mxu0 0
    %1791 = vmatprep.subr.bf16.mxu0 0
    %1792 = vmatpush1.bf16.xpose.msra.mxu0 0
    %1793 = vmatprep.subr.bf16.mxu0 0
    %1794 = vmatpush1.bf16.xpose.msra.mxu0 0
    %1795 = vmatprep.subr.bf16.mxu0 0
    %1796 = vmatpush1.bf16.xpose.msra.mxu0 0
    %1797 = vmatprep.subr.bf16.mxu0 0
    %1798 = vmatpush1.bf16.xpose.msra.mxu0 0
    %1799 = vmatprep.subr.bf16.mxu0 0
    %1800 = vmatpush1.bf16.xpose.msra.mxu0 0
    %1801 = vmatprep.mubr.bf16.mxu0 0
    %1802 = vmatmul.mubr.bf16.gmra.mrb[0].mxu0 %v1746
    %v1803 = vpop.f32.mrb[0].mxu0
    %v1804 = vadd.f32 %v1731, %v1803
    %v1805 = vpop.f32.mrb[0].mxu0
    %v1806 = vpop.f32.mrb[0].mxu0
    %v1807 = vadd.f32 %v1731, %v1806
    %v1808 = vpop.f32.mrb[0].mxu0
    %1809 = vmatprep.mubr.bf16.mxu0 0
    %1810 = vmatmul.mubr.bf16.gmra.mrb[0].mxu0 %v1749
    %v1811 = vpop.f32.mrb[0].mxu0
    %v1812 = vadd.f32 %v1731, %v1811
    %v1813 = vpop.f32.mrb[0].mxu0
    %v1814 = vpop.f32.mrb[0].mxu0
    %v1815 = vadd.f32 %v1731, %v1814
    %v1816 = vpop.f32.mrb[0].mxu0
    %1817 = vmatprep.mubr.bf16.mxu0 0
    %1818 = vmatmul.mubr.bf16.gmra.mrb[0].mxu0 %v1752
    %v1819 = vpop.f32.mrb[0].mxu0
    %v1820 = vadd.f32 %v1731, %v1819
    %v1821 = vpop.f32.mrb[0].mxu0
    %v1822 = vpop.f32.mrb[0].mxu0
    %v1823 = vadd.f32 %v1731, %v1822
    %v1824 = vpop.f32.mrb[0].mxu0
    %1825 = vmatprep.mubr.bf16.mxu0 0
    %1826 = vmatmul.mubr.bf16.gmra.mrb[0].mxu0 %v1755
    %v1827 = vpop.f32.mrb[0].mxu0
    %v1828 = vadd.f32 %v1731, %v1827
    %v1829 = vpop.f32.mrb[0].mxu0
    %v1830 = vpop.f32.mrb[0].mxu0
    %v1831 = vadd.f32 %v1731, %v1830
    %v1832 = vpop.f32.mrb[0].mxu0
    %1833 = vdwg.mxu0
    %v1834 = vsel %vm564, %v1804, -inf
    %1835 = vmax.xlane.f32.xlu0 %v1834
    %v1836 = vpop.xlane.xlu0 %1835
    %v1837 = vsel %vm564, %v1807, -inf
    %1838 = vmax.xlane.f32.xlu0 %v1837
    %v1839 = vpop.xlane.xlu0 %1838
    %v1840 = vsel %vm564, %v1812, -inf
    %1841 = vmax.xlane.f32.xlu0 %v1840
    %v1842 = vpop.xlane.xlu0 %1841
    %v1843 = vsel %vm564, %v1815, -inf
    %1844 = vmax.xlane.f32.xlu0 %v1843
    %v1845 = vpop.xlane.xlu0 %1844
    %v1846 = vsel %vm564, %v1820, -inf
    %1847 = vmax.xlane.f32.xlu0 %v1846
    %v1848 = vpop.xlane.xlu0 %1847
    %v1849 = vsel %vm564, %v1823, -inf
    %1850 = vmax.xlane.f32.xlu0 %v1849
    %v1851 = vpop.xlane.xlu0 %1850
    %v1852 = vsel %vm564, %v1828, -inf
    %1853 = vmax.xlane.f32.xlu0 %v1852
    %v1854 = vpop.xlane.xlu0 %1853
    %v1855 = vsel %vm564, %v1831, -inf
    %1856 = vmax.xlane.f32.xlu0 %v1855
    %v1857 = vpop.xlane.xlu0 %1856
    %v1858 = vsub.f32 %v1804, %v1836
    %v1859 = vsub.f32 %v1807, %v1839
    %v1860 = vsub.f32 %v1812, %v1842
    %v1861 = vsub.f32 %v1815, %v1845
    %v1862 = vsub.f32 %v1820, %v1848
    %v1863 = vsub.f32 %v1823, %v1851
    %v1864 = vsub.f32 %v1828, %v1854
    %v1865 = vsub.f32 %v1831, %v1857
    %v1866 = vmul.f32 %v1858, 1.442695
    %v1867 = vpow.pop %v1866
    %v1868 = vmul.f32 %v1859, 1.442695
    %v1869 = vpow.pop %v1868
    %v1870 = vmul.f32 %v1860, 1.442695
    %v1871 = vpow.pop %v1870
    %v1872 = vmul.f32 %v1861, 1.442695
    %v1873 = vpow.pop %v1872
    %v1874 = vmul.f32 %v1862, 1.442695
    %v1875 = vpow.pop %v1874
    %v1876 = vmul.f32 %v1863, 1.442695
    %v1877 = vpow.pop %v1876
    %v1878 = vmul.f32 %v1864, 1.442695
    %v1879 = vpow.pop %v1878
    %v1880 = vmul.f32 %v1865, 1.442695
    %v1881 = vpow.pop %v1880
    %v1882 = vsel %vm564, %v1867, 0.0
    %1883 = vadd.xlane.f32.xlu0 %v1882
    %v1884 = vpop.xlane.xlu0 %1883
    %v1885 = vsel %vm564, %v1869, 0.0
    %1886 = vadd.xlane.f32.xlu0 %v1885
    %v1887 = vpop.xlane.xlu0 %1886
    %v1888 = vsel %vm564, %v1871, 0.0
    %1889 = vadd.xlane.f32.xlu0 %v1888
    %v1890 = vpop.xlane.xlu0 %1889
    %v1891 = vsel %vm564, %v1873, 0.0
    %1892 = vadd.xlane.f32.xlu0 %v1891
    %v1893 = vpop.xlane.xlu0 %1892
    %v1894 = vsel %vm564, %v1875, 0.0
    %1895 = vadd.xlane.f32.xlu0 %v1894
    %v1896 = vpop.xlane.xlu0 %1895
    %v1897 = vsel %vm564, %v1877, 0.0
    %1898 = vadd.xlane.f32.xlu0 %v1897
    %v1899 = vpop.xlane.xlu0 %1898
    %v1900 = vsel %vm564, %v1879, 0.0
    %1901 = vadd.xlane.f32.xlu0 %v1900
    %v1902 = vpop.xlane.xlu0 %1901
    %v1903 = vsel %vm564, %v1881, 0.0
    %1904 = vadd.xlane.f32.xlu0 %v1903
    %v1905 = vpop.xlane.xlu0 %1904
    %v1906 = vrcp.pop %v1884
    %v1907 = vrcp.pop %v1887
    %v1908 = vrcp.pop %v1890
    %v1909 = vrcp.pop %v1893
    %v1910 = vrcp.pop %v1896
    %v1911 = vrcp.pop %v1899
    %v1912 = vrcp.pop %v1902
    %v1913 = vrcp.pop %v1905
    %v1914 = vmul.f32 %v1867, %v1906
    %v1915 = vmul.f32 %v1869, %v1907
    %v1916 = vmul.f32 %v1871, %v1908
    %v1917 = vmul.f32 %v1873, %v1909
    %v1918 = vmul.f32 %v1875, %v1910
    %v1919 = vmul.f32 %v1877, %v1911
    %v1920 = vmul.f32 %v1879, %v1912
    %v1921 = vmul.f32 %v1881, %v1913
    %v1922 = vpack.c.bf16 %v1915, %v1914
    %v1923 = vpack.c.bf16 %v1917, %v1916
    %v1924 = vpack.c.bf16 %v1919, %v1918
    %v1925 = vpack.c.bf16 %v1921, %v1920
    %v1927 = vsel %vm564, %v1922, 0
    %v1930 = vsel %vm564, %v1923, 0
    %v1933 = vsel %vm564, %v1924, 0
    %v1936 = vsel %vm564, %v1925, 0
    %1938 = vmatprep.subr.bf16.mxu0 0
    %1939 = vmatpush1.bf16.msra.mxu0 %v452
    %1940 = vmatprep.subr.bf16.mxu0 0
    %1941 = vmatpush1.bf16.msra.mxu0 %v453
    %1942 = vmatprep.subr.bf16.mxu0 0
    %1943 = vmatpush1.bf16.msra.mxu0 %v454
    %1944 = vmatprep.subr.bf16.mxu0 0
    %1945 = vmatpush1.bf16.msra.mxu0 %v455
    %1946 = vmatprep.subr.bf16.mxu0 0
    %1947 = vmatpush1.bf16.msra.mxu0 0
    %1948 = vmatprep.subr.bf16.mxu0 0
    %1949 = vmatpush1.bf16.msra.mxu0 0
    %1950 = vmatprep.subr.bf16.mxu0 0
    %1951 = vmatpush1.bf16.msra.mxu0 0
    %1952 = vmatprep.subr.bf16.mxu0 0
    %1953 = vmatpush1.bf16.msra.mxu0 0
    %1954 = vmatprep.subr.bf16.mxu0 0
    %1955 = vmatpush1.bf16.msra.mxu0 0
    %1956 = vmatprep.subr.bf16.mxu0 0
    %1957 = vmatpush1.bf16.msra.mxu0 0
    %1958 = vmatprep.subr.bf16.mxu0 0
    %1959 = vmatpush1.bf16.msra.mxu0 0
    %1960 = vmatprep.subr.bf16.mxu0 0
    %1961 = vmatpush1.bf16.msra.mxu0 0
    %1962 = vmatprep.subr.bf16.mxu0 0
    %1963 = vmatpush1.bf16.msra.mxu0 0
    %1964 = vmatprep.subr.bf16.mxu0 0
    %1965 = vmatpush1.bf16.msra.mxu0 0
    %1966 = vmatprep.subr.bf16.mxu0 0
    %1967 = vmatpush1.bf16.msra.mxu0 0
    %1968 = vmatprep.subr.bf16.mxu0 0
    %1969 = vmatpush1.bf16.msra.mxu0 0
    %1970 = vmatprep.mubr.bf16.mxu0 0
    %1971 = vmatmul.mubr.bf16.gmra.mrb[0].mxu0 %v1927
    %v1972 = vpop.f32.mrb[0].mxu0
    %v1973 = vadd.f32 0.0, %v1972
    %v1974 = vpop.f32.mrb[0].mxu0
    %v1975 = vpop.f32.mrb[0].mxu0
    %v1976 = vadd.f32 0.0, %v1975
    %v1977 = vpop.f32.mrb[0].mxu0
    %1978 = vmatprep.mubr.bf16.mxu0 0
    %1979 = vmatmul.mubr.bf16.gmra.mrb[0].mxu0 %v1930
    %v1980 = vpop.f32.mrb[0].mxu0
    %v1981 = vadd.f32 0.0, %v1980
    %v1982 = vpop.f32.mrb[0].mxu0
    %v1983 = vpop.f32.mrb[0].mxu0
    %v1984 = vadd.f32 0.0, %v1983
    %v1985 = vpop.f32.mrb[0].mxu0
    %1986 = vmatprep.mubr.bf16.mxu0 0
    %1987 = vmatmul.mubr.bf16.gmra.mrb[0].mxu0 %v1933
    %v1988 = vpop.f32.mrb[0].mxu0
    %v1989 = vadd.f32 0.0, %v1988
    %v1990 = vpop.f32.mrb[0].mxu0
    %v1991 = vpop.f32.mrb[0].mxu0
    %v1992 = vadd.f32 0.0, %v1991
    %v1993 = vpop.f32.mrb[0].mxu0
    %1994 = vmatprep.mubr.bf16.mxu0 0
    %1995 = vmatmul.mubr.bf16.gmra.mrb[0].mxu0 %v1936
    %v1996 = vpop.f32.mrb[0].mxu0
    %v1997 = vadd.f32 0.0, %v1996
    %v1998 = vpop.f32.mrb[0].mxu0
    %v1999 = vpop.f32.mrb[0].mxu0
    %v2000 = vadd.f32 0.0, %v1999
    %v2001 = vpop.f32.mrb[0].mxu0
    %2002 = vdwg.mxu0
    %2003 = vst.msk [vmem:[#allocation2 + $0x40] sm:$0xff] %vm474, %v1973
    %2004 = vst.msk [vmem:[#allocation2 + $0x48] sm:$0xff] %vm474, %v1976
    %2005 = vst.msk [vmem:[#allocation2 + $0x50] sm:$0xff] %vm474, %v1981
    %2006 = vst.msk [vmem:[#allocation2 + $0x58] sm:$0xff] %vm474, %v1984
    %2007 = vst.msk [vmem:[#allocation2 + $0x60] sm:$0xff] %vm474, %v1989
    %2008 = vst.msk [vmem:[#allocation2 + $0x68] sm:$0xff] %vm474, %v1992
    %2009 = vst.msk [vmem:[#allocation2 + $0x70] sm:$0xff] %vm474, %v1997
    %2010 = vst.msk [vmem:[#allocation2 + $0x78] sm:$0xff] %vm474, %v2000
    %2011 = vrot.lane.b32.xlu0 %v444, 120
    %v2012 = vpop.permute.xlu0 %2011
    %2013 = vrot.lane.b32.xlu0 %v445, 120
    %v2014 = vpop.permute.xlu0 %2013
    %2015 = vrot.lane.b32.xlu0 %v446, 120
    %v2016 = vpop.permute.xlu0 %2015
    %2017 = vrot.lane.b32.xlu0 %v447, 120
    %v2018 = vpop.permute.xlu0 %2017
    %2019 = vrot.lane.b32.xlu0 %v444, 88
    %v2020 = vpop.permute.xlu0 %2019
    %2021 = vrot.lane.b32.xlu0 %v445, 88
    %v2022 = vpop.permute.xlu0 %2021
    %2023 = vrot.lane.b32.xlu0 %v446, 88
    %v2024 = vpop.permute.xlu0 %2023
    %2025 = vrot.lane.b32.xlu0 %v447, 88
    %v2026 = vpop.permute.xlu0 %2025
    %v2028 = vsel %vm474, %v2012, 0
    %v2031 = vsel %vm474, %v2014, 0
    %v2034 = vsel %vm474, %v2016, 0
    %v2037 = vsel %vm474, %v2018, 0
    %v2040 = vsel %vm474, %v2020, 0
    %v2043 = vsel %vm474, %v2022, 0
    %v2046 = vsel %vm474, %v2024, 0
    %v2049 = vsel %vm474, %v2026, 0
    %2051 = vmatprep.subr.bf16.mxu0 0
    %2052 = vmatpush1.bf16.xpose.msra.mxu0 %v2040
    %2053 = vmatprep.subr.bf16.mxu0 0
    %2054 = vmatpush1.bf16.xpose.msra.mxu0 %v2043
    %2055 = vmatprep.subr.bf16.mxu0 0
    %2056 = vmatpush1.bf16.xpose.msra.mxu0 %v2046
    %2057 = vmatprep.subr.bf16.mxu0 0
    %2058 = vmatpush1.bf16.xpose.msra.mxu0 %v2049
    %2059 = vmatprep.subr.bf16.mxu0 0
    %2060 = vmatpush1.bf16.xpose.msra.mxu0 0
    %2061 = vmatprep.subr.bf16.mxu0 0
    %2062 = vmatpush1.bf16.xpose.msra.mxu0 0
    %2063 = vmatprep.subr.bf16.mxu0 0
    %2064 = vmatpush1.bf16.xpose.msra.mxu0 0
    %2065 = vmatprep.subr.bf16.mxu0 0
    %2066 = vmatpush1.bf16.xpose.msra.mxu0 0
    %2067 = vmatprep.subr.bf16.mxu0 0
    %2068 = vmatpush1.bf16.xpose.msra.mxu0 0
    %2069 = vmatprep.subr.bf16.mxu0 0
    %2070 = vmatpush1.bf16.xpose.msra.mxu0 0
    %2071 = vmatprep.subr.bf16.mxu0 0
    %2072 = vmatpush1.bf16.xpose.msra.mxu0 0
    %2073 = vmatprep.subr.bf16.mxu0 0
    %2074 = vmatpush1.bf16.xpose.msra.mxu0 0
    %2075 = vmatprep.subr.bf16.mxu0 0
    %2076 = vmatpush1.bf16.xpose.msra.mxu0 0
    %2077 = vmatprep.subr.bf16.mxu0 0
    %2078 = vmatpush1.bf16.xpose.msra.mxu0 0
    %2079 = vmatprep.subr.bf16.mxu0 0
    %2080 = vmatpush1.bf16.xpose.msra.mxu0 0
    %2081 = vmatprep.subr.bf16.mxu0 0
    %2082 = vmatpush1.bf16.xpose.msra.mxu0 0
    %2083 = vmatprep.mubr.bf16.mxu0 0
    %2084 = vmatmul.mubr.bf16.gmra.mrb[0].mxu0 %v2028
    %v2085 = vpop.f32.mrb[0].mxu0
    %v2086 = vadd.f32 %v1731, %v2085
    %v2087 = vpop.f32.mrb[0].mxu0
    %v2088 = vpop.f32.mrb[0].mxu0
    %v2089 = vadd.f32 %v1731, %v2088
    %v2090 = vpop.f32.mrb[0].mxu0
    %2091 = vmatprep.mubr.bf16.mxu0 0
    %2092 = vmatmul.mubr.bf16.gmra.mrb[0].mxu0 %v2031
    %v2093 = vpop.f32.mrb[0].mxu0
    %v2094 = vadd.f32 %v1731, %v2093
    %v2095 = vpop.f32.mrb[0].mxu0
    %v2096 = vpop.f32.mrb[0].mxu0
    %v2097 = vadd.f32 %v1731, %v2096
    %v2098 = vpop.f32.mrb[0].mxu0
    %2099 = vmatprep.mubr.bf16.mxu0 0
    %2100 = vmatmul.mubr.bf16.gmra.mrb[0].mxu0 %v2034
    %v2101 = vpop.f32.mrb[0].mxu0
    %v2102 = vadd.f32 %v1731, %v2101
    %v2103 = vpop.f32.mrb[0].mxu0
    %v2104 = vpop.f32.mrb[0].mxu0
    %v2105 = vadd.f32 %v1731, %v2104
    %v2106 = vpop.f32.mrb[0].mxu0
    %2107 = vmatprep.mubr.bf16.mxu0 0
    %2108 = vmatmul.mubr.bf16.gmra.mrb[0].mxu0 %v2037
    %v2109 = vpop.f32.mrb[0].mxu0
    %v2110 = vadd.f32 %v1731, %v2109
    %v2111 = vpop.f32.mrb[0].mxu0
    %v2112 = vpop.f32.mrb[0].mxu0
    %v2113 = vadd.f32 %v1731, %v2112
    %v2114 = vpop.f32.mrb[0].mxu0
    %2115 = vdwg.mxu0
    %v2116 = vsel %vm564, %v2086, -inf
    %2117 = vmax.xlane.f32.xlu0 %v2116
    %v2118 = vpop.xlane.xlu0 %2117
    %v2119 = vsel %vm564, %v2089, -inf
    %2120 = vmax.xlane.f32.xlu0 %v2119
    %v2121 = vpop.xlane.xlu0 %2120
    %v2122 = vsel %vm564, %v2094, -inf
    %2123 = vmax.xlane.f32.xlu0 %v2122
    %v2124 = vpop.xlane.xlu0 %2123
    %v2125 = vsel %vm564, %v2097, -inf
    %2126 = vmax.xlane.f32.xlu0 %v2125
    %v2127 = vpop.xlane.xlu0 %2126
    %v2128 = vsel %vm564, %v2102, -inf
    %2129 = vmax.xlane.f32.xlu0 %v2128
    %v2130 = vpop.xlane.xlu0 %2129
    %v2131 = vsel %vm564, %v2105, -inf
    %2132 = vmax.xlane.f32.xlu0 %v2131
    %v2133 = vpop.xlane.xlu0 %2132
    %v2134 = vsel %vm564, %v2110, -inf
    %2135 = vmax.xlane.f32.xlu0 %v2134
    %v2136 = vpop.xlane.xlu0 %2135
    %v2137 = vsel %vm564, %v2113, -inf
    %2138 = vmax.xlane.f32.xlu0 %v2137
    %v2139 = vpop.xlane.xlu0 %2138
    %v2140 = vsub.f32 %v2086, %v2118
    %v2141 = vsub.f32 %v2089, %v2121
    %v2142 = vsub.f32 %v2094, %v2124
    %v2143 = vsub.f32 %v2097, %v2127
    %v2144 = vsub.f32 %v2102, %v2130
    %v2145 = vsub.f32 %v2105, %v2133
    %v2146 = vsub.f32 %v2110, %v2136
    %v2147 = vsub.f32 %v2113, %v2139
    %v2148 = vmul.f32 %v2140, 1.442695
    %v2149 = vpow.pop %v2148
    %v2150 = vmul.f32 %v2141, 1.442695
    %v2151 = vpow.pop %v2150
    %v2152 = vmul.f32 %v2142, 1.442695
    %v2153 = vpow.pop %v2152
    %v2154 = vmul.f32 %v2143, 1.442695
    %v2155 = vpow.pop %v2154
    %v2156 = vmul.f32 %v2144, 1.442695
    %v2157 = vpow.pop %v2156
    %v2158 = vmul.f32 %v2145, 1.442695
    %v2159 = vpow.pop %v2158
    %v2160 = vmul.f32 %v2146, 1.442695
    %v2161 = vpow.pop %v2160
    %v2162 = vmul.f32 %v2147, 1.442695
    %v2163 = vpow.pop %v2162
    %v2164 = vsel %vm564, %v2149, 0.0
    %2165 = vadd.xlane.f32.xlu0 %v2164
    %v2166 = vpop.xlane.xlu0 %2165
    %v2167 = vsel %vm564, %v2151, 0.0
    %2168 = vadd.xlane.f32.xlu0 %v2167
    %v2169 = vpop.xlane.xlu0 %2168
    %v2170 = vsel %vm564, %v2153, 0.0
    %2171 = vadd.xlane.f32.xlu0 %v2170
    %v2172 = vpop.xlane.xlu0 %2171
    %v2173 = vsel %vm564, %v2155, 0.0
    %2174 = vadd.xlane.f32.xlu0 %v2173
    %v2175 = vpop.xlane.xlu0 %2174
    %v2176 = vsel %vm564, %v2157, 0.0
    %2177 = vadd.xlane.f32.xlu0 %v2176
    %v2178 = vpop.xlane.xlu0 %2177
    %v2179 = vsel %vm564, %v2159, 0.0
    %2180 = vadd.xlane.f32.xlu0 %v2179
    %v2181 = vpop.xlane.xlu0 %2180
    %v2182 = vsel %vm564, %v2161, 0.0
    %2183 = vadd.xlane.f32.xlu0 %v2182
    %v2184 = vpop.xlane.xlu0 %2183
    %v2185 = vsel %vm564, %v2163, 0.0
    %2186 = vadd.xlane.f32.xlu0 %v2185
    %v2187 = vpop.xlane.xlu0 %2186
    %v2188 = vrcp.pop %v2166
    %v2189 = vrcp.pop %v2169
    %v2190 = vrcp.pop %v2172
    %v2191 = vrcp.pop %v2175
    %v2192 = vrcp.pop %v2178
    %v2193 = vrcp.pop %v2181
    %v2194 = vrcp.pop %v2184
    %v2195 = vrcp.pop %v2187
    %v2196 = vmul.f32 %v2149, %v2188
    %v2197 = vmul.f32 %v2151, %v2189
    %v2198 = vmul.f32 %v2153, %v2190
    %v2199 = vmul.f32 %v2155, %v2191
    %v2200 = vmul.f32 %v2157, %v2192
    %v2201 = vmul.f32 %v2159, %v2193
    %v2202 = vmul.f32 %v2161, %v2194
    %v2203 = vmul.f32 %v2163, %v2195
    %v2204 = vpack.c.bf16 %v2197, %v2196
    %v2205 = vpack.c.bf16 %v2199, %v2198
    %v2206 = vpack.c.bf16 %v2201, %v2200
    %v2207 = vpack.c.bf16 %v2203, %v2202
    %2212 = vrot.lane.b32.xlu0 %v452, 120
    %v2213 = vpop.permute.xlu0 %2212
    %2214 = vrot.lane.b32.xlu0 %v453, 120
    %v2215 = vpop.permute.xlu0 %2214
    %2216 = vrot.lane.b32.xlu0 %v454, 120
    %v2217 = vpop.permute.xlu0 %2216
    %2218 = vrot.lane.b32.xlu0 %v455, 120
    %v2219 = vpop.permute.xlu0 %2218
    %v2225 = vsel %vm564, %v2204, 0
    %v2228 = vsel %vm564, %v2205, 0
    %v2231 = vsel %vm564, %v2206, 0
    %v2234 = vsel %vm564, %v2207, 0
    %2236 = vmatprep.subr.bf16.mxu0 0
    %2237 = vmatpush1.bf16.msra.mxu0 %v2213
    %2238 = vmatprep.subr.bf16.mxu0 0
    %2239 = vmatpush1.bf16.msra.mxu0 %v2215
    %2240 = vmatprep.subr.bf16.mxu0 0
    %2241 = vmatpush1.bf16.msra.mxu0 %v2217
    %2242 = vmatprep.subr.bf16.mxu0 0
    %2243 = vmatpush1.bf16.msra.mxu0 %v2219
    %2244 = vmatprep.subr.bf16.mxu0 0
    %2245 = vmatpush1.bf16.msra.mxu0 0
    %2246 = vmatprep.subr.bf16.mxu0 0
    %2247 = vmatpush1.bf16.msra.mxu0 0
    %2248 = vmatprep.subr.bf16.mxu0 0
    %2249 = vmatpush1.bf16.msra.mxu0 0
    %2250 = vmatprep.subr.bf16.mxu0 0
    %2251 = vmatpush1.bf16.msra.mxu0 0
    %2252 = vmatprep.subr.bf16.mxu0 0
    %2253 = vmatpush1.bf16.msra.mxu0 0
    %2254 = vmatprep.subr.bf16.mxu0 0
    %2255 = vmatpush1.bf16.msra.mxu0 0
    %2256 = vmatprep.subr.bf16.mxu0 0
    %2257 = vmatpush1.bf16.msra.mxu0 0
    %2258 = vmatprep.subr.bf16.mxu0 0
    %2259 = vmatpush1.bf16.msra.mxu0 0
    %2260 = vmatprep.subr.bf16.mxu0 0
    %2261 = vmatpush1.bf16.msra.mxu0 0
    %2262 = vmatprep.subr.bf16.mxu0 0
    %2263 = vmatpush1.bf16.msra.mxu0 0
    %2264 = vmatprep.subr.bf16.mxu0 0
    %2265 = vmatpush1.bf16.msra.mxu0 0
    %2266 = vmatprep.subr.bf16.mxu0 0
    %2267 = vmatpush1.bf16.msra.mxu0 0
    %2268 = vmatprep.mubr.bf16.mxu0 0
    %2269 = vmatmul.mubr.bf16.gmra.mrb[0].mxu0 %v2225
    %v2270 = vpop.f32.mrb[0].mxu0
    %v2271 = vadd.f32 0.0, %v2270
    %v2272 = vpop.f32.mrb[0].mxu0
    %v2273 = vpop.f32.mrb[0].mxu0
    %v2274 = vadd.f32 0.0, %v2273
    %v2275 = vpop.f32.mrb[0].mxu0
    %2276 = vmatprep.mubr.bf16.mxu0 0
    %2277 = vmatmul.mubr.bf16.gmra.mrb[0].mxu0 %v2228
    %v2278 = vpop.f32.mrb[0].mxu0
    %v2279 = vadd.f32 0.0, %v2278
    %v2280 = vpop.f32.mrb[0].mxu0
    %v2281 = vpop.f32.mrb[0].mxu0
    %v2282 = vadd.f32 0.0, %v2281
    %v2283 = vpop.f32.mrb[0].mxu0
    %2284 = vmatprep.mubr.bf16.mxu0 0
    %2285 = vmatmul.mubr.bf16.gmra.mrb[0].mxu0 %v2231
    %v2286 = vpop.f32.mrb[0].mxu0
    %v2287 = vadd.f32 0.0, %v2286
    %v2288 = vpop.f32.mrb[0].mxu0
    %v2289 = vpop.f32.mrb[0].mxu0
    %v2290 = vadd.f32 0.0, %v2289
    %v2291 = vpop.f32.mrb[0].mxu0
    %2292 = vmatprep.mubr.bf16.mxu0 0
    %2293 = vmatmul.mubr.bf16.gmra.mrb[0].mxu0 %v2234
    %v2294 = vpop.f32.mrb[0].mxu0
    %v2295 = vadd.f32 0.0, %v2294
    %v2296 = vpop.f32.mrb[0].mxu0
    %v2297 = vpop.f32.mrb[0].mxu0
    %v2298 = vadd.f32 0.0, %v2297
    %v2299 = vpop.f32.mrb[0].mxu0
    %2300 = vdwg.mxu0
    %2309 = vrot.lane.b32.xlu0 %v2271, 8
    %v2310 = vpop.permute.xlu0 %2309
    %2311 = vrot.lane.b32.xlu0 %v2274, 8
    %v2312 = vpop.permute.xlu0 %2311
    %2313 = vrot.lane.b32.xlu0 %v2279, 8
    %v2314 = vpop.permute.xlu0 %2313
    %2315 = vrot.lane.b32.xlu0 %v2282, 8
    %v2316 = vpop.permute.xlu0 %2315
    %2317 = vrot.lane.b32.xlu0 %v2287, 8
    %v2318 = vpop.permute.xlu0 %2317
    %2319 = vrot.lane.b32.xlu0 %v2290, 8
    %v2320 = vpop.permute.xlu0 %2319
    %2321 = vrot.lane.b32.xlu0 %v2295, 8
    %v2322 = vpop.permute.xlu0 %2321
    %2323 = vrot.lane.b32.xlu0 %v2298, 8
    %v2324 = vpop.permute.xlu0 %2323
    %2333 = vst.msk [vmem:[#allocation2 + $0x40] sm:$0xff] %vm1064, %v2310
    %2334 = vst.msk [vmem:[#allocation2 + $0x48] sm:$0xff] %vm1064, %v2312
    %2335 = vst.msk [vmem:[#allocation2 + $0x50] sm:$0xff] %vm1064, %v2314
    %2336 = vst.msk [vmem:[#allocation2 + $0x58] sm:$0xff] %vm1064, %v2316
    %2337 = vst.msk [vmem:[#allocation2 + $0x60] sm:$0xff] %vm1064, %v2318
    %2338 = vst.msk [vmem:[#allocation2 + $0x68] sm:$0xff] %vm1064, %v2320
    %2339 = vst.msk [vmem:[#allocation2 + $0x70] sm:$0xff] %vm1064, %v2322
    %2340 = vst.msk [vmem:[#allocation2 + $0x78] sm:$0xff] %vm1064, %v2324
    %2341 = vrot.lane.b32.xlu0 %v444, 112
    %v2342 = vpop.permute.xlu0 %2341
    %2343 = vrot.lane.b32.xlu0 %v445, 112
    %v2344 = vpop.permute.xlu0 %2343
    %2345 = vrot.lane.b32.xlu0 %v446, 112
    %v2346 = vpop.permute.xlu0 %2345
    %2347 = vrot.lane.b32.xlu0 %v447, 112
    %v2348 = vpop.permute.xlu0 %2347
    %2349 = vrot.lane.b32.xlu0 %v444, 80
    %v2350 = vpop.permute.xlu0 %2349
    %2351 = vrot.lane.b32.xlu0 %v445, 80
    %v2352 = vpop.permute.xlu0 %2351
    %2353 = vrot.lane.b32.xlu0 %v446, 80
    %v2354 = vpop.permute.xlu0 %2353
    %2355 = vrot.lane.b32.xlu0 %v447, 80
    %v2356 = vpop.permute.xlu0 %2355
    %v2358 = vsel %vm474, %v2342, 0
    %v2361 = vsel %vm474, %v2344, 0
    %v2364 = vsel %vm474, %v2346, 0
    %v2367 = vsel %vm474, %v2348, 0
    %v2370 = vsel %vm474, %v2350, 0
    %v2373 = vsel %vm474, %v2352, 0
    %v2376 = vsel %vm474, %v2354, 0
    %v2379 = vsel %vm474, %v2356, 0
    %2381 = vmatprep.subr.bf16.mxu0 0
    %2382 = vmatpush1.bf16.xpose.msra.mxu0 %v2370
    %2383 = vmatprep.subr.bf16.mxu0 0
    %2384 = vmatpush1.bf16.xpose.msra.mxu0 %v2373
    %2385 = vmatprep.subr.bf16.mxu0 0
    %2386 = vmatpush1.bf16.xpose.msra.mxu0 %v2376
    %2387 = vmatprep.subr.bf16.mxu0 0
    %2388 = vmatpush1.bf16.xpose.msra.mxu0 %v2379
    %2389 = vmatprep.subr.bf16.mxu0 0
    %2390 = vmatpush1.bf16.xpose.msra.mxu0 0
    %2391 = vmatprep.subr.bf16.mxu0 0
    %2392 = vmatpush1.bf16.xpose.msra.mxu0 0
    %2393 = vmatprep.subr.bf16.mxu0 0
    %2394 = vmatpush1.bf16.xpose.msra.mxu0 0
    %2395 = vmatprep.subr.bf16.mxu0 0
    %2396 = vmatpush1.bf16.xpose.msra.mxu0 0
    %2397 = vmatprep.subr.bf16.mxu0 0
    %2398 = vmatpush1.bf16.xpose.msra.mxu0 0
    %2399 = vmatprep.subr.bf16.mxu0 0
    %2400 = vmatpush1.bf16.xpose.msra.mxu0 0
    %2401 = vmatprep.subr.bf16.mxu0 0
    %2402 = vmatpush1.bf16.xpose.msra.mxu0 0
    %2403 = vmatprep.subr.bf16.mxu0 0
    %2404 = vmatpush1.bf16.xpose.msra.mxu0 0
    %2405 = vmatprep.subr.bf16.mxu0 0
    %2406 = vmatpush1.bf16.xpose.msra.mxu0 0
    %2407 = vmatprep.subr.bf16.mxu0 0
    %2408 = vmatpush1.bf16.xpose.msra.mxu0 0
    %2409 = vmatprep.subr.bf16.mxu0 0
    %2410 = vmatpush1.bf16.xpose.msra.mxu0 0
    %2411 = vmatprep.subr.bf16.mxu0 0
    %2412 = vmatpush1.bf16.xpose.msra.mxu0 0
    %2413 = vmatprep.mubr.bf16.mxu0 0
    %2414 = vmatmul.mubr.bf16.gmra.mrb[0].mxu0 %v2358
    %v2415 = vpop.f32.mrb[0].mxu0
    %v2416 = vadd.f32 %v1731, %v2415
    %v2417 = vpop.f32.mrb[0].mxu0
    %v2418 = vpop.f32.mrb[0].mxu0
    %v2419 = vadd.f32 %v1731, %v2418
    %v2420 = vpop.f32.mrb[0].mxu0
    %2421 = vmatprep.mubr.bf16.mxu0 0
    %2422 = vmatmul.mubr.bf16.gmra.mrb[0].mxu0 %v2361
    %v2423 = vpop.f32.mrb[0].mxu0
    %v2424 = vadd.f32 %v1731, %v2423
    %v2425 = vpop.f32.mrb[0].mxu0
    %v2426 = vpop.f32.mrb[0].mxu0
    %v2427 = vadd.f32 %v1731, %v2426
    %v2428 = vpop.f32.mrb[0].mxu0
    %2429 = vmatprep.mubr.bf16.mxu0 0
    %2430 = vmatmul.mubr.bf16.gmra.mrb[0].mxu0 %v2364
    %v2431 = vpop.f32.mrb[0].mxu0
    %v2432 = vadd.f32 %v1731, %v2431
    %v2433 = vpop.f32.mrb[0].mxu0
    %v2434 = vpop.f32.mrb[0].mxu0
    %v2435 = vadd.f32 %v1731, %v2434
    %v2436 = vpop.f32.mrb[0].mxu0
    %2437 = vmatprep.mubr.bf16.mxu0 0
    %2438 = vmatmul.mubr.bf16.gmra.mrb[0].mxu0 %v2367
    %v2439 = vpop.f32.mrb[0].mxu0
    %v2440 = vadd.f32 %v1731, %v2439
    %v2441 = vpop.f32.mrb[0].mxu0
    %v2442 = vpop.f32.mrb[0].mxu0
    %v2443 = vadd.f32 %v1731, %v2442
    %v2444 = vpop.f32.mrb[0].mxu0
    %2445 = vdwg.mxu0
    %v2446 = vsel %vm564, %v2416, -inf
    %2447 = vmax.xlane.f32.xlu0 %v2446
    %v2448 = vpop.xlane.xlu0 %2447
    %v2449 = vsel %vm564, %v2419, -inf
    %2450 = vmax.xlane.f32.xlu0 %v2449
    %v2451 = vpop.xlane.xlu0 %2450
    %v2452 = vsel %vm564, %v2424, -inf
    %2453 = vmax.xlane.f32.xlu0 %v2452
    %v2454 = vpop.xlane.xlu0 %2453
    %v2455 = vsel %vm564, %v2427, -inf
    %2456 = vmax.xlane.f32.xlu0 %v2455
    %v2457 = vpop.xlane.xlu0 %2456
    %v2458 = vsel %vm564, %v2432, -inf
    %2459 = vmax.xlane.f32.xlu0 %v2458
    %v2460 = vpop.xlane.xlu0 %2459
    %v2461 = vsel %vm564, %v2435, -inf
    %2462 = vmax.xlane.f32.xlu0 %v2461
    %v2463 = vpop.xlane.xlu0 %2462
    %v2464 = vsel %vm564, %v2440, -inf
    %2465 = vmax.xlane.f32.xlu0 %v2464
    %v2466 = vpop.xlane.xlu0 %2465
    %v2467 = vsel %vm564, %v2443, -inf
    %2468 = vmax.xlane.f32.xlu0 %v2467
    %v2469 = vpop.xlane.xlu0 %2468
    %v2470 = vsub.f32 %v2416, %v2448
    %v2471 = vsub.f32 %v2419, %v2451
    %v2472 = vsub.f32 %v2424, %v2454
    %v2473 = vsub.f32 %v2427, %v2457
    %v2474 = vsub.f32 %v2432, %v2460
    %v2475 = vsub.f32 %v2435, %v2463
    %v2476 = vsub.f32 %v2440, %v2466
    %v2477 = vsub.f32 %v2443, %v2469
    %v2478 = vmul.f32 %v2470, 1.442695
    %v2479 = vpow.pop %v2478
    %v2480 = vmul.f32 %v2471, 1.442695
    %v2481 = vpow.pop %v2480
    %v2482 = vmul.f32 %v2472, 1.442695
    %v2483 = vpow.pop %v2482
    %v2484 = vmul.f32 %v2473, 1.442695
    %v2485 = vpow.pop %v2484
    %v2486 = vmul.f32 %v2474, 1.442695
    %v2487 = vpow.pop %v2486
    %v2488 = vmul.f32 %v2475, 1.442695
    %v2489 = vpow.pop %v2488
    %v2490 = vmul.f32 %v2476, 1.442695
    %v2491 = vpow.pop %v2490
    %v2492 = vmul.f32 %v2477, 1.442695
    %v2493 = vpow.pop %v2492
    %v2494 = vsel %vm564, %v2479, 0.0
    %2495 = vadd.xlane.f32.xlu0 %v2494
    %v2496 = vpop.xlane.xlu0 %2495
    %v2497 = vsel %vm564, %v2481, 0.0
    %2498 = vadd.xlane.f32.xlu0 %v2497
    %v2499 = vpop.xlane.xlu0 %2498
    %v2500 = vsel %vm564, %v2483, 0.0
    %2501 = vadd.xlane.f32.xlu0 %v2500
    %v2502 = vpop.xlane.xlu0 %2501
    %v2503 = vsel %vm564, %v2485, 0.0
    %2504 = vadd.xlane.f32.xlu0 %v2503
    %v2505 = vpop.xlane.xlu0 %2504
    %v2506 = vsel %vm564, %v2487, 0.0
    %2507 = vadd.xlane.f32.xlu0 %v2506
    %v2508 = vpop.xlane.xlu0 %2507
    %v2509 = vsel %vm564, %v2489, 0.0
    %2510 = vadd.xlane.f32.xlu0 %v2509
    %v2511 = vpop.xlane.xlu0 %2510
    %v2512 = vsel %vm564, %v2491, 0.0
    %2513 = vadd.xlane.f32.xlu0 %v2512
    %v2514 = vpop.xlane.xlu0 %2513
    %v2515 = vsel %vm564, %v2493, 0.0
    %2516 = vadd.xlane.f32.xlu0 %v2515
    %v2517 = vpop.xlane.xlu0 %2516
    %v2518 = vrcp.pop %v2496
    %v2519 = vrcp.pop %v2499
    %v2520 = vrcp.pop %v2502
    %v2521 = vrcp.pop %v2505
    %v2522 = vrcp.pop %v2508
    %v2523 = vrcp.pop %v2511
    %v2524 = vrcp.pop %v2514
    %v2525 = vrcp.pop %v2517
    %v2526 = vmul.f32 %v2479, %v2518
    %v2527 = vmul.f32 %v2481, %v2519
    %v2528 = vmul.f32 %v2483, %v2520
    %v2529 = vmul.f32 %v2485, %v2521
    %v2530 = vmul.f32 %v2487, %v2522
    %v2531 = vmul.f32 %v2489, %v2523
    %v2532 = vmul.f32 %v2491, %v2524
    %v2533 = vmul.f32 %v2493, %v2525
    %v2534 = vpack.c.bf16 %v2527, %v2526
    %v2535 = vpack.c.bf16 %v2529, %v2528
    %v2536 = vpack.c.bf16 %v2531, %v2530
    %v2537 = vpack.c.bf16 %v2533, %v2532
    %2538 = vrot.lane.b32.xlu0 %v452, 112
    %v2539 = vpop.permute.xlu0 %2538
    %2540 = vrot.lane.b32.xlu0 %v453, 112
    %v2541 = vpop.permute.xlu0 %2540
    %2542 = vrot.lane.b32.xlu0 %v454, 112
    %v2543 = vpop.permute.xlu0 %2542
    %2544 = vrot.lane.b32.xlu0 %v455, 112
    %v2545 = vpop.permute.xlu0 %2544
    %v2551 = vsel %vm564, %v2534, 0
    %v2554 = vsel %vm564, %v2535, 0
    %v2557 = vsel %vm564, %v2536, 0
    %v2560 = vsel %vm564, %v2537, 0
    %2562 = vmatprep.subr.bf16.mxu0 0
    %2563 = vmatpush1.bf16.msra.mxu0 %v2539
    %2564 = vmatprep.subr.bf16.mxu0 0
    %2565 = vmatpush1.bf16.msra.mxu0 %v2541
    %2566 = vmatprep.subr.bf16.mxu0 0
    %2567 = vmatpush1.bf16.msra.mxu0 %v2543
    %2568 = vmatprep.subr.bf16.mxu0 0
    %2569 = vmatpush1.bf16.msra.mxu0 %v2545
    %2570 = vmatprep.subr.bf16.mxu0 0
    %2571 = vmatpush1.bf16.msra.mxu0 0
    %2572 = vmatprep.subr.bf16.mxu0 0
    %2573 = vmatpush1.bf16.msra.mxu0 0
    %2574 = vmatprep.subr.bf16.mxu0 0
    %2575 = vmatpush1.bf16.msra.mxu0 0
    %2576 = vmatprep.subr.bf16.mxu0 0
    %2577 = vmatpush1.bf16.msra.mxu0 0
    %2578 = vmatprep.subr.bf16.mxu0 0
    %2579 = vmatpush1.bf16.msra.mxu0 0
    %2580 = vmatprep.subr.bf16.mxu0 0
    %2581 = vmatpush1.bf16.msra.mxu0 0
    %2582 = vmatprep.subr.bf16.mxu0 0
    %2583 = vmatpush1.bf16.msra.mxu0 0
    %2584 = vmatprep.subr.bf16.mxu0 0
    %2585 = vmatpush1.bf16.msra.mxu0 0
    %2586 = vmatprep.subr.bf16.mxu0 0
    %2587 = vmatpush1.bf16.msra.mxu0 0
    %2588 = vmatprep.subr.bf16.mxu0 0
    %2589 = vmatpush1.bf16.msra.mxu0 0
    %2590 = vmatprep.subr.bf16.mxu0 0
    %2591 = vmatpush1.bf16.msra.mxu0 0
    %2592 = vmatprep.subr.bf16.mxu0 0
    %2593 = vmatpush1.bf16.msra.mxu0 0
    %2594 = vmatprep.mubr.bf16.mxu0 0
    %2595 = vmatmul.mubr.bf16.gmra.mrb[0].mxu0 %v2551
    %v2596 = vpop.f32.mrb[0].mxu0
    %v2597 = vadd.f32 0.0, %v2596
    %v2598 = vpop.f32.mrb[0].mxu0
    %v2599 = vpop.f32.mrb[0].mxu0
    %v2600 = vadd.f32 0.0, %v2599
    %v2601 = vpop.f32.mrb[0].mxu0
    %2602 = vmatprep.mubr.bf16.mxu0 0
    %2603 = vmatmul.mubr.bf16.gmra.mrb[0].mxu0 %v2554
    %v2604 = vpop.f32.mrb[0].mxu0
    %v2605 = vadd.f32 0.0, %v2604
    %v2606 = vpop.f32.mrb[0].mxu0
    %v2607 = vpop.f32.mrb[0].mxu0
    %v2608 = vadd.f32 0.0, %v2607
    %v2609 = vpop.f32.mrb[0].mxu0
    %2610 = vmatprep.mubr.bf16.mxu0 0
    %2611 = vmatmul.mubr.bf16.gmra.mrb[0].mxu0 %v2557
    %v2612 = vpop.f32.mrb[0].mxu0
    %v2613 = vadd.f32 0.0, %v2612
    %v2614 = vpop.f32.mrb[0].mxu0
    %v2615 = vpop.f32.mrb[0].mxu0
    %v2616 = vadd.f32 0.0, %v2615
    %v2617 = vpop.f32.mrb[0].mxu0
    %2618 = vmatprep.mubr.bf16.mxu0 0
    %2619 = vmatmul.mubr.bf16.gmra.mrb[0].mxu0 %v2560
    %v2620 = vpop.f32.mrb[0].mxu0
    %v2621 = vadd.f32 0.0, %v2620
    %v2622 = vpop.f32.mrb[0].mxu0
    %v2623 = vpop.f32.mrb[0].mxu0
    %v2624 = vadd.f32 0.0, %v2623
    %v2625 = vpop.f32.mrb[0].mxu0
    %2626 = vdwg.mxu0
    %2635 = vrot.lane.b32.xlu0 %v2597, 16
    %v2636 = vpop.permute.xlu0 %2635
    %2637 = vrot.lane.b32.xlu0 %v2600, 16
    %v2638 = vpop.permute.xlu0 %2637
    %2639 = vrot.lane.b32.xlu0 %v2605, 16
    %v2640 = vpop.permute.xlu0 %2639
    %2641 = vrot.lane.b32.xlu0 %v2608, 16
    %v2642 = vpop.permute.xlu0 %2641
    %2643 = vrot.lane.b32.xlu0 %v2613, 16
    %v2644 = vpop.permute.xlu0 %2643
    %2645 = vrot.lane.b32.xlu0 %v2616, 16
    %v2646 = vpop.permute.xlu0 %2645
    %2647 = vrot.lane.b32.xlu0 %v2621, 16
    %v2648 = vpop.permute.xlu0 %2647
    %2649 = vrot.lane.b32.xlu0 %v2624, 16
    %v2650 = vpop.permute.xlu0 %2649
    %2659 = vst.msk [vmem:[#allocation2 + $0x40] sm:$0xff] %vm1391, %v2636
    %2660 = vst.msk [vmem:[#allocation2 + $0x48] sm:$0xff] %vm1391, %v2638
    %2661 = vst.msk [vmem:[#allocation2 + $0x50] sm:$0xff] %vm1391, %v2640
    %2662 = vst.msk [vmem:[#allocation2 + $0x58] sm:$0xff] %vm1391, %v2642
    %2663 = vst.msk [vmem:[#allocation2 + $0x60] sm:$0xff] %vm1391, %v2644
    %2664 = vst.msk [vmem:[#allocation2 + $0x68] sm:$0xff] %vm1391, %v2646
    %2665 = vst.msk [vmem:[#allocation2 + $0x70] sm:$0xff] %vm1391, %v2648
    %2666 = vst.msk [vmem:[#allocation2 + $0x78] sm:$0xff] %vm1391, %v2650
    %2667 = vrot.lane.b32.xlu0 %v444, 104
    %v2668 = vpop.permute.xlu0 %2667
    %2669 = vrot.lane.b32.xlu0 %v445, 104
    %v2670 = vpop.permute.xlu0 %2669
    %2671 = vrot.lane.b32.xlu0 %v446, 104
    %v2672 = vpop.permute.xlu0 %2671
    %2673 = vrot.lane.b32.xlu0 %v447, 104
    %v2674 = vpop.permute.xlu0 %2673
    %2675 = vrot.lane.b32.xlu0 %v444, 72
    %v2676 = vpop.permute.xlu0 %2675
    %2677 = vrot.lane.b32.xlu0 %v445, 72
    %v2678 = vpop.permute.xlu0 %2677
    %2679 = vrot.lane.b32.xlu0 %v446, 72
    %v2680 = vpop.permute.xlu0 %2679
    %2681 = vrot.lane.b32.xlu0 %v447, 72
    %v2682 = vpop.permute.xlu0 %2681
    %v2684 = vsel %vm474, %v2668, 0
    %v2687 = vsel %vm474, %v2670, 0
    %v2690 = vsel %vm474, %v2672, 0
    %v2693 = vsel %vm474, %v2674, 0
    %v2696 = vsel %vm474, %v2676, 0
    %v2699 = vsel %vm474, %v2678, 0
    %v2702 = vsel %vm474, %v2680, 0
    %v2705 = vsel %vm474, %v2682, 0
    %2707 = vmatprep.subr.bf16.mxu0 0
    %2708 = vmatpush1.bf16.xpose.msra.mxu0 %v2696
    %2709 = vmatprep.subr.bf16.mxu0 0
    %2710 = vmatpush1.bf16.xpose.msra.mxu0 %v2699
    %2711 = vmatprep.subr.bf16.mxu0 0
    %2712 = vmatpush1.bf16.xpose.msra.mxu0 %v2702
    %2713 = vmatprep.subr.bf16.mxu0 0
    %2714 = vmatpush1.bf16.xpose.msra.mxu0 %v2705
    %2715 = vmatprep.subr.bf16.mxu0 0
    %2716 = vmatpush1.bf16.xpose.msra.mxu0 0
    %2717 = vmatprep.subr.bf16.mxu0 0
    %2718 = vmatpush1.bf16.xpose.msra.mxu0 0
    %2719 = vmatprep.subr.bf16.mxu0 0
    %2720 = vmatpush1.bf16.xpose.msra.mxu0 0
    %2721 = vmatprep.subr.bf16.mxu0 0
    %2722 = vmatpush1.bf16.xpose.msra.mxu0 0
    %2723 = vmatprep.subr.bf16.mxu0 0
    %2724 = vmatpush1.bf16.xpose.msra.mxu0 0
    %2725 = vmatprep.subr.bf16.mxu0 0
    %2726 = vmatpush1.bf16.xpose.msra.mxu0 0
    %2727 = vmatprep.subr.bf16.mxu0 0
    %2728 = vmatpush1.bf16.xpose.msra.mxu0 0
    %2729 = vmatprep.subr.bf16.mxu0 0
    %2730 = vmatpush1.bf16.xpose.msra.mxu0 0
    %2731 = vmatprep.subr.bf16.mxu0 0
    %2732 = vmatpush1.bf16.xpose.msra.mxu0 0
    %2733 = vmatprep.subr.bf16.mxu0 0
    %2734 = vmatpush1.bf16.xpose.msra.mxu0 0
    %2735 = vmatprep.subr.bf16.mxu0 0
    %2736 = vmatpush1.bf16.xpose.msra.mxu0 0
    %2737 = vmatprep.subr.bf16.mxu0 0
    %2738 = vmatpush1.bf16.xpose.msra.mxu0 0
    %2739 = vmatprep.mubr.bf16.mxu0 0
    %2740 = vmatmul.mubr.bf16.gmra.mrb[0].mxu0 %v2684
    %v2741 = vpop.f32.mrb[0].mxu0
    %v2742 = vadd.f32 %v1731, %v2741
    %v2743 = vpop.f32.mrb[0].mxu0
    %v2744 = vpop.f32.mrb[0].mxu0
    %v2745 = vadd.f32 %v1731, %v2744
    %v2746 = vpop.f32.mrb[0].mxu0
    %2747 = vmatprep.mubr.bf16.mxu0 0
    %2748 = vmatmul.mubr.bf16.gmra.mrb[0].mxu0 %v2687
    %v2749 = vpop.f32.mrb[0].mxu0
    %v2750 = vadd.f32 %v1731, %v2749
    %v2751 = vpop.f32.mrb[0].mxu0
    %v2752 = vpop.f32.mrb[0].mxu0
    %v2753 = vadd.f32 %v1731, %v2752
    %v2754 = vpop.f32.mrb[0].mxu0
    %2755 = vmatprep.mubr.bf16.mxu0 0
    %2756 = vmatmul.mubr.bf16.gmra.mrb[0].mxu0 %v2690
    %v2757 = vpop.f32.mrb[0].mxu0
    %v2758 = vadd.f32 %v1731, %v2757
    %v2759 = vpop.f32.mrb[0].mxu0
    %v2760 = vpop.f32.mrb[0].mxu0
    %v2761 = vadd.f32 %v1731, %v2760
    %v2762 = vpop.f32.mrb[0].mxu0
    %2763 = vmatprep.mubr.bf16.mxu0 0
    %2764 = vmatmul.mubr.bf16.gmra.mrb[0].mxu0 %v2693
    %v2765 = vpop.f32.mrb[0].mxu0
    %v2766 = vadd.f32 %v1731, %v2765
    %v2767 = vpop.f32.mrb[0].mxu0
    %v2768 = vpop.f32.mrb[0].mxu0
    %v2769 = vadd.f32 %v1731, %v2768
    %v2770 = vpop.f32.mrb[0].mxu0
    %2771 = vdwg.mxu0
    %v2772 = vsel %vm564, %v2742, -inf
    %2773 = vmax.xlane.f32.xlu0 %v2772
    %v2774 = vpop.xlane.xlu0 %2773
    %v2775 = vsel %vm564, %v2745, -inf
    %2776 = vmax.xlane.f32.xlu0 %v2775
    %v2777 = vpop.xlane.xlu0 %2776
    %v2778 = vsel %vm564, %v2750, -inf
    %2779 = vmax.xlane.f32.xlu0 %v2778
    %v2780 = vpop.xlane.xlu0 %2779
    %v2781 = vsel %vm564, %v2753, -inf
    %2782 = vmax.xlane.f32.xlu0 %v2781
    %v2783 = vpop.xlane.xlu0 %2782
    %v2784 = vsel %vm564, %v2758, -inf
    %2785 = vmax.xlane.f32.xlu0 %v2784
    %v2786 = vpop.xlane.xlu0 %2785
    %v2787 = vsel %vm564, %v2761, -inf
    %2788 = vmax.xlane.f32.xlu0 %v2787
    %v2789 = vpop.xlane.xlu0 %2788
    %v2790 = vsel %vm564, %v2766, -inf
    %2791 = vmax.xlane.f32.xlu0 %v2790
    %v2792 = vpop.xlane.xlu0 %2791
    %v2793 = vsel %vm564, %v2769, -inf
    %2794 = vmax.xlane.f32.xlu0 %v2793
    %v2795 = vpop.xlane.xlu0 %2794
    %v2796 = vsub.f32 %v2742, %v2774
    %v2797 = vsub.f32 %v2745, %v2777
    %v2798 = vsub.f32 %v2750, %v2780
    %v2799 = vsub.f32 %v2753, %v2783
    %v2800 = vsub.f32 %v2758, %v2786
    %v2801 = vsub.f32 %v2761, %v2789
    %v2802 = vsub.f32 %v2766, %v2792
    %v2803 = vsub.f32 %v2769, %v2795
    %v2804 = vmul.f32 %v2796, 1.442695
    %v2805 = vpow.pop %v2804
    %v2806 = vmul.f32 %v2797, 1.442695
    %v2807 = vpow.pop %v2806
    %v2808 = vmul.f32 %v2798, 1.442695
    %v2809 = vpow.pop %v2808
    %v2810 = vmul.f32 %v2799, 1.442695
    %v2811 = vpow.pop %v2810
    %v2812 = vmul.f32 %v2800, 1.442695
    %v2813 = vpow.pop %v2812
    %v2814 = vmul.f32 %v2801, 1.442695
    %v2815 = vpow.pop %v2814
    %v2816 = vmul.f32 %v2802, 1.442695
    %v2817 = vpow.pop %v2816
    %v2818 = vmul.f32 %v2803, 1.442695
    %v2819 = vpow.pop %v2818
    %v2820 = vsel %vm564, %v2805, 0.0
    %2821 = vadd.xlane.f32.xlu0 %v2820
    %v2822 = vpop.xlane.xlu0 %2821
    %v2823 = vsel %vm564, %v2807, 0.0
    %2824 = vadd.xlane.f32.xlu0 %v2823
    %v2825 = vpop.xlane.xlu0 %2824
    %v2826 = vsel %vm564, %v2809, 0.0
    %2827 = vadd.xlane.f32.xlu0 %v2826
    %v2828 = vpop.xlane.xlu0 %2827
    %v2829 = vsel %vm564, %v2811, 0.0
    %2830 = vadd.xlane.f32.xlu0 %v2829
    %v2831 = vpop.xlane.xlu0 %2830
    %v2832 = vsel %vm564, %v2813, 0.0
    %2833 = vadd.xlane.f32.xlu0 %v2832
    %v2834 = vpop.xlane.xlu0 %2833
    %v2835 = vsel %vm564, %v2815, 0.0
    %2836 = vadd.xlane.f32.xlu0 %v2835
    %v2837 = vpop.xlane.xlu0 %2836
    %v2838 = vsel %vm564, %v2817, 0.0
    %2839 = vadd.xlane.f32.xlu0 %v2838
    %v2840 = vpop.xlane.xlu0 %2839
    %v2841 = vsel %vm564, %v2819, 0.0
    %2842 = vadd.xlane.f32.xlu0 %v2841
    %v2843 = vpop.xlane.xlu0 %2842
    %v2844 = vrcp.pop %v2822
    %v2845 = vrcp.pop %v2825
    %v2846 = vrcp.pop %v2828
    %v2847 = vrcp.pop %v2831
    %v2848 = vrcp.pop %v2834
    %v2849 = vrcp.pop %v2837
    %v2850 = vrcp.pop %v2840
    %v2851 = vrcp.pop %v2843
    %v2852 = vmul.f32 %v2805, %v2844
    %v2853 = vmul.f32 %v2807, %v2845
    %v2854 = vmul.f32 %v2809, %v2846
    %v2855 = vmul.f32 %v2811, %v2847
    %v2856 = vmul.f32 %v2813, %v2848
    %v2857 = vmul.f32 %v2815, %v2849
    %v2858 = vmul.f32 %v2817, %v2850
    %v2859 = vmul.f32 %v2819, %v2851
    %v2860 = vpack.c.bf16 %v2853, %v2852
    %v2861 = vpack.c.bf16 %v2855, %v2854
    %v2862 = vpack.c.bf16 %v2857, %v2856
    %v2863 = vpack.c.bf16 %v2859, %v2858
    %2864 = vrot.lane.b32.xlu0 %v452, 104
    %v2865 = vpop.permute.xlu0 %2864
    %2866 = vrot.lane.b32.xlu0 %v453, 104
    %v2867 = vpop.permute.xlu0 %2866
    %2868 = vrot.lane.b32.xlu0 %v454, 104
    %v2869 = vpop.permute.xlu0 %2868
    %2870 = vrot.lane.b32.xlu0 %v455, 104
    %v2871 = vpop.permute.xlu0 %2870
    %v2877 = vsel %vm564, %v2860, 0
    %v2880 = vsel %vm564, %v2861, 0
    %v2883 = vsel %vm564, %v2862, 0
    %v2886 = vsel %vm564, %v2863, 0
    %2888 = vmatprep.subr.bf16.mxu0 0
    %2889 = vmatpush1.bf16.msra.mxu0 %v2865
    %2890 = vmatprep.subr.bf16.mxu0 0
    %2891 = vmatpush1.bf16.msra.mxu0 %v2867
    %2892 = vmatprep.subr.bf16.mxu0 0
    %2893 = vmatpush1.bf16.msra.mxu0 %v2869
    %2894 = vmatprep.subr.bf16.mxu0 0
    %2895 = vmatpush1.bf16.msra.mxu0 %v2871
    %2896 = vmatprep.subr.bf16.mxu0 0
    %2897 = vmatpush1.bf16.msra.mxu0 0
    %2898 = vmatprep.subr.bf16.mxu0 0
    %2899 = vmatpush1.bf16.msra.mxu0 0
    %2900 = vmatprep.subr.bf16.mxu0 0
    %2901 = vmatpush1.bf16.msra.mxu0 0
    %2902 = vmatprep.subr.bf16.mxu0 0
    %2903 = vmatpush1.bf16.msra.mxu0 0
    %2904 = vmatprep.subr.bf16.mxu0 0
    %2905 = vmatpush1.bf16.msra.mxu0 0
    %2906 = vmatprep.subr.bf16.mxu0 0
    %2907 = vmatpush1.bf16.msra.mxu0 0
    %2908 = vmatprep.subr.bf16.mxu0 0
    %2909 = vmatpush1.bf16.msra.mxu0 0
    %2910 = vmatprep.subr.bf16.mxu0 0
    %2911 = vmatpush1.bf16.msra.mxu0 0
    %2912 = vmatprep.subr.bf16.mxu0 0
    %2913 = vmatpush1.bf16.msra.mxu0 0
    %2914 = vmatprep.subr.bf16.mxu0 0
    %2915 = vmatpush1.bf16.msra.mxu0 0
    %2916 = vmatprep.subr.bf16.mxu0 0
    %2917 = vmatpush1.bf16.msra.mxu0 0
    %2918 = vmatprep.subr.bf16.mxu0 0
    %2919 = vmatpush1.bf16.msra.mxu0 0
    %2920 = vmatprep.mubr.bf16.mxu0 0
    %2921 = vmatmul.mubr.bf16.gmra.mrb[0].mxu0 %v2877
    %v2922 = vpop.f32.mrb[0].mxu0
    %v2923 = vadd.f32 0.0, %v2922
    %v2924 = vpop.f32.mrb[0].mxu0
    %v2925 = vpop.f32.mrb[0].mxu0
    %v2926 = vadd.f32 0.0, %v2925
    %v2927 = vpop.f32.mrb[0].mxu0
    %2928 = vmatprep.mubr.bf16.mxu0 0
    %2929 = vmatmul.mubr.bf16.gmra.mrb[0].mxu0 %v2880
    %v2930 = vpop.f32.mrb[0].mxu0
    %v2931 = vadd.f32 0.0, %v2930
    %v2932 = vpop.f32.mrb[0].mxu0
    %v2933 = vpop.f32.mrb[0].mxu0
    %v2934 = vadd.f32 0.0, %v2933
    %v2935 = vpop.f32.mrb[0].mxu0
    %2936 = vmatprep.mubr.bf16.mxu0 0
    %2937 = vmatmul.mubr.bf16.gmra.mrb[0].mxu0 %v2883
    %v2938 = vpop.f32.mrb[0].mxu0
    %v2939 = vadd.f32 0.0, %v2938
    %v2940 = vpop.f32.mrb[0].mxu0
    %v2941 = vpop.f32.mrb[0].mxu0
    %v2942 = vadd.f32 0.0, %v2941
    %v2943 = vpop.f32.mrb[0].mxu0
    %2944 = vmatprep.mubr.bf16.mxu0 0
    %2945 = vmatmul.mubr.bf16.gmra.mrb[0].mxu0 %v2886
    %v2946 = vpop.f32.mrb[0].mxu0
    %v2947 = vadd.f32 0.0, %v2946
    %v2948 = vpop.f32.mrb[0].mxu0
    %v2949 = vpop.f32.mrb[0].mxu0
    %v2950 = vadd.f32 0.0, %v2949
    %v2951 = vpop.f32.mrb[0].mxu0
    %2952 = vdwg.mxu0
    %2961 = vrot.lane.b32.xlu0 %v2923, 24
    %v2962 = vpop.permute.xlu0 %2961
    %2963 = vrot.lane.b32.xlu0 %v2926, 24
    %v2964 = vpop.permute.xlu0 %2963
    %2965 = vrot.lane.b32.xlu0 %v2931, 24
    %v2966 = vpop.permute.xlu0 %2965
    %2967 = vrot.lane.b32.xlu0 %v2934, 24
    %v2968 = vpop.permute.xlu0 %2967
    %2969 = vrot.lane.b32.xlu0 %v2939, 24
    %v2970 = vpop.permute.xlu0 %2969
    %2971 = vrot.lane.b32.xlu0 %v2942, 24
    %v2972 = vpop.permute.xlu0 %2971
    %2973 = vrot.lane.b32.xlu0 %v2947, 24
    %v2974 = vpop.permute.xlu0 %2973
    %2975 = vrot.lane.b32.xlu0 %v2950, 24
    %v2976 = vpop.permute.xlu0 %2975
    %2985 = vst.msk [vmem:[#allocation2 + $0x40] sm:$0xff] %vm1718, %v2962
    %2986 = vst.msk [vmem:[#allocation2 + $0x48] sm:$0xff] %vm1718, %v2964
    %2987 = vst.msk [vmem:[#allocation2 + $0x50] sm:$0xff] %vm1718, %v2966
    %2988 = vst.msk [vmem:[#allocation2 + $0x58] sm:$0xff] %vm1718, %v2968
    %2989 = vst.msk [vmem:[#allocation2 + $0x60] sm:$0xff] %vm1718, %v2970
    %2990 = vst.msk [vmem:[#allocation2 + $0x68] sm:$0xff] %vm1718, %v2972
    %2991 = vst.msk [vmem:[#allocation2 + $0x70] sm:$0xff] %vm1718, %v2974
    %2992 = vst.msk [vmem:[#allocation2 + $0x78] sm:$0xff] %vm1718, %v2976
    %v2993 = vld [vmem:[#allocation2] sm:$0xff]
    %v2994 = vld [vmem:[#allocation2 + $0x8] sm:$0xff]
    %v2995 = vld [vmem:[#allocation2 + $0x10] sm:$0xff]
    %v2996 = vld [vmem:[#allocation2 + $0x18] sm:$0xff]
    %v2997 = vld [vmem:[#allocation2 + $0x20] sm:$0xff]
    %v2998 = vld [vmem:[#allocation2 + $0x28] sm:$0xff]
    %v2999 = vld [vmem:[#allocation2 + $0x30] sm:$0xff]
    %v3000 = vld [vmem:[#allocation2 + $0x38] sm:$0xff]
    %v3001 = vld [vmem:[#allocation2 + $0x40] sm:$0xff]
    %v3002 = vld [vmem:[#allocation2 + $0x48] sm:$0xff]
    %v3003 = vld [vmem:[#allocation2 + $0x50] sm:$0xff]
    %v3004 = vld [vmem:[#allocation2 + $0x58] sm:$0xff]
    %v3005 = vld [vmem:[#allocation2 + $0x60] sm:$0xff]
    %v3006 = vld [vmem:[#allocation2 + $0x68] sm:$0xff]
    %v3007 = vld [vmem:[#allocation2 + $0x70] sm:$0xff]
    %v3008 = vld [vmem:[#allocation2 + $0x78] sm:$0xff]
    %v3009 = vpack.c.bf16 %v2994, %v2993
    %v3010 = vpack.c.bf16 %v2996, %v2995
    %v3011 = vpack.c.bf16 %v2998, %v2997
    %v3012 = vpack.c.bf16 %v3000, %v2999
    %v3013 = vpack.c.bf16 %v3002, %v3001
    %v3014 = vpack.c.bf16 %v3004, %v3003
    %v3015 = vpack.c.bf16 %v3006, %v3005
    %v3016 = vpack.c.bf16 %v3008, %v3007
    %v3018 = vlaneseq
    %v3019 = vshrl.u32 %v3018, 7
    %v3020 = vsub.s32 0, %v3019
    %v3021 = vrot.slane %v153, %v3020
    %v3027 = vunpack.c.l.b16 %v149
    %v3028 = vunpack.c.l.b16 %v150
    %v3029 = vunpack.c.l.b16 %v151
    %v3030 = vunpack.c.l.b16 %v152
    %v3031 = vpack.c.b16 %v3028, %v3027
    %v3032 = vpack.c.b16 %v3030, %v3029
    %v3036 = vsel %vm188, %v3009, 0
    %v3039 = vsel %vm188, %v3010, 0
    %v3042 = vsel %vm188, %v3011, 0
    %v3045 = vsel %vm188, %v3012, 0
    %v3048 = vsel %vm188, %v3013, 0
    %v3051 = vsel %vm188, %v3014, 0
    %v3054 = vsel %vm188, %v3015, 0
    %v3057 = vsel %vm188, %v3016, 0
    %3059 = vmatprep.subr.bf16.mxu0 0
    %3060 = vmatpush1.bf16.msra.mxu0 %v3031
    %3061 = vmatprep.subr.bf16.mxu0 0
    %3062 = vmatpush1.bf16.msra.mxu0 %v3032
    %3063 = vmatprep.subr.bf16.mxu0 0
    %3064 = vmatpush1.bf16.msra.mxu0 0
    %3065 = vmatprep.subr.bf16.mxu0 0
    %3066 = vmatpush1.bf16.msra.mxu0 0
    %3067 = vmatprep.subr.bf16.mxu0 0
    %3068 = vmatpush1.bf16.msra.mxu0 0
    %3069 = vmatprep.subr.bf16.mxu0 0
    %3070 = vmatpush1.bf16.msra.mxu0 0
    %3071 = vmatprep.subr.bf16.mxu0 0
    %3072 = vmatpush1.bf16.msra.mxu0 0
    %3073 = vmatprep.subr.bf16.mxu0 0
    %3074 = vmatpush1.bf16.msra.mxu0 0
    %3075 = vmatprep.subr.bf16.mxu0 0
    %3076 = vmatpush1.bf16.msra.mxu0 0
    %3077 = vmatprep.subr.bf16.mxu0 0
    %3078 = vmatpush1.bf16.msra.mxu0 0
    %3079 = vmatprep.subr.bf16.mxu0 0
    %3080 = vmatpush1.bf16.msra.mxu0 0
    %3081 = vmatprep.subr.bf16.mxu0 0
    %3082 = vmatpush1.bf16.msra.mxu0 0
    %3083 = vmatprep.subr.bf16.mxu0 0
    %3084 = vmatpush1.bf16.msra.mxu0 0
    %3085 = vmatprep.subr.bf16.mxu0 0
    %3086 = vmatpush1.bf16.msra.mxu0 0
    %3087 = vmatprep.subr.bf16.mxu0 0
    %3088 = vmatpush1.bf16.msra.mxu0 0
    %3089 = vmatprep.subr.bf16.mxu0 0
    %3090 = vmatpush1.bf16.msra.mxu0 0
    %3091 = vmatprep.mubr.bf16.mxu0 0
    %3092 = vmatmul.mubr.bf16.gmra.mrb[0].mxu0 %v3036
    %v3093 = vpop.f32.mrb[0].mxu0
    %v3094 = vadd.f32 %v3021, %v3093
    %v3095 = vpop.f32.mrb[0].mxu0
    %v3096 = vpop.f32.mrb[0].mxu0
    %v3097 = vadd.f32 %v3021, %v3096
    %v3098 = vpop.f32.mrb[0].mxu0
    %3099 = vmatprep.mubr.bf16.mxu0 0
    %3100 = vmatmul.mubr.bf16.gmra.mrb[0].mxu0 %v3039
    %v3101 = vpop.f32.mrb[0].mxu0
    %v3102 = vadd.f32 %v3021, %v3101
    %v3103 = vpop.f32.mrb[0].mxu0
    %v3104 = vpop.f32.mrb[0].mxu0
    %v3105 = vadd.f32 %v3021, %v3104
    %v3106 = vpop.f32.mrb[0].mxu0
    %3107 = vmatprep.mubr.bf16.mxu0 0
    %3108 = vmatmul.mubr.bf16.gmra.mrb[0].mxu0 %v3042
    %v3109 = vpop.f32.mrb[0].mxu0
    %v3110 = vadd.f32 %v3021, %v3109
    %v3111 = vpop.f32.mrb[0].mxu0
    %v3112 = vpop.f32.mrb[0].mxu0
    %v3113 = vadd.f32 %v3021, %v3112
    %v3114 = vpop.f32.mrb[0].mxu0
    %3115 = vmatprep.mubr.bf16.mxu0 0
    %3116 = vmatmul.mubr.bf16.gmra.mrb[0].mxu0 %v3045
    %v3117 = vpop.f32.mrb[0].mxu0
    %v3118 = vadd.f32 %v3021, %v3117
    %v3119 = vpop.f32.mrb[0].mxu0
    %v3120 = vpop.f32.mrb[0].mxu0
    %v3121 = vadd.f32 %v3021, %v3120
    %v3122 = vpop.f32.mrb[0].mxu0
    %3123 = vmatprep.mubr.bf16.mxu0 0
    %3124 = vmatmul.mubr.bf16.gmra.mrb[0].mxu0 %v3048
    %v3125 = vpop.f32.mrb[0].mxu0
    %v3126 = vadd.f32 %v3021, %v3125
    %v3127 = vpop.f32.mrb[0].mxu0
    %v3128 = vpop.f32.mrb[0].mxu0
    %v3129 = vadd.f32 %v3021, %v3128
    %v3130 = vpop.f32.mrb[0].mxu0
    %3131 = vmatprep.mubr.bf16.mxu0 0
    %3132 = vmatmul.mubr.bf16.gmra.mrb[0].mxu0 %v3051
    %v3133 = vpop.f32.mrb[0].mxu0
    %v3134 = vadd.f32 %v3021, %v3133
    %v3135 = vpop.f32.mrb[0].mxu0
    %v3136 = vpop.f32.mrb[0].mxu0
    %v3137 = vadd.f32 %v3021, %v3136
    %v3138 = vpop.f32.mrb[0].mxu0
    %3139 = vmatprep.mubr.bf16.mxu0 0
    %3140 = vmatmul.mubr.bf16.gmra.mrb[0].mxu0 %v3054
    %v3141 = vpop.f32.mrb[0].mxu0
    %v3142 = vadd.f32 %v3021, %v3141
    %v3143 = vpop.f32.mrb[0].mxu0
    %v3144 = vpop.f32.mrb[0].mxu0
    %v3145 = vadd.f32 %v3021, %v3144
    %v3146 = vpop.f32.mrb[0].mxu0
    %3147 = vmatprep.mubr.bf16.mxu0 0
    %3148 = vmatmul.mubr.bf16.gmra.mrb[0].mxu0 %v3057
    %v3149 = vpop.f32.mrb[0].mxu0
    %v3150 = vadd.f32 %v3021, %v3149
    %v3151 = vpop.f32.mrb[0].mxu0
    %v3152 = vpop.f32.mrb[0].mxu0
    %v3153 = vadd.f32 %v3021, %v3152
    %v3154 = vpop.f32.mrb[0].mxu0
    %3155 = vdwg.mxu0
    %v3156 = vadd.f32 %v93, %v3094
    %v3157 = vadd.f32 %v94, %v3097
    %v3158 = vadd.f32 %v95, %v3102
    %v3159 = vadd.f32 %v96, %v3105
    %v3160 = vadd.f32 %v97, %v3110
    %v3161 = vadd.f32 %v98, %v3113
    %v3162 = vadd.f32 %v99, %v3118
    %v3163 = vadd.f32 %v100, %v3121
    %v3164 = vadd.f32 %v101, %v3126
    %v3165 = vadd.f32 %v102, %v3129
    %v3166 = vadd.f32 %v103, %v3134
    %v3167 = vadd.f32 %v104, %v3137
    %v3168 = vadd.f32 %v105, %v3142
    %v3169 = vadd.f32 %v106, %v3145
    %v3170 = vadd.f32 %v107, %v3150
    %v3171 = vadd.f32 %v108, %v3153
    %v3172 = vsel %vm188, %v3156, 0.0
    %3173 = vadd.xlane.f32.xlu0 %v3172
    %v3174 = vpop.xlane.xlu0 %3173
    %v3175 = vsel %vm188, %v3157, 0.0
    %3176 = vadd.xlane.f32.xlu0 %v3175
    %v3177 = vpop.xlane.xlu0 %3176
    %v3178 = vsel %vm188, %v3158, 0.0
    %3179 = vadd.xlane.f32.xlu0 %v3178
    %v3180 = vpop.xlane.xlu0 %3179
    %v3181 = vsel %vm188, %v3159, 0.0
    %3182 = vadd.xlane.f32.xlu0 %v3181
    %v3183 = vpop.xlane.xlu0 %3182
    %v3184 = vsel %vm188, %v3160, 0.0
    %3185 = vadd.xlane.f32.xlu0 %v3184
    %v3186 = vpop.xlane.xlu0 %3185
    %v3187 = vsel %vm188, %v3161, 0.0
    %3188 = vadd.xlane.f32.xlu0 %v3187
    %v3189 = vpop.xlane.xlu0 %3188
    %v3190 = vsel %vm188, %v3162, 0.0
    %3191 = vadd.xlane.f32.xlu0 %v3190
    %v3192 = vpop.xlane.xlu0 %3191
    %v3193 = vsel %vm188, %v3163, 0.0
    %3194 = vadd.xlane.f32.xlu0 %v3193
    %v3195 = vpop.xlane.xlu0 %3194
    %v3196 = vsel %vm188, %v3164, 0.0
    %3197 = vadd.xlane.f32.xlu0 %v3196
    %v3198 = vpop.xlane.xlu0 %3197
    %v3199 = vsel %vm188, %v3165, 0.0
    %3200 = vadd.xlane.f32.xlu0 %v3199
    %v3201 = vpop.xlane.xlu0 %3200
    %v3202 = vsel %vm188, %v3166, 0.0
    %3203 = vadd.xlane.f32.xlu0 %v3202
    %v3204 = vpop.xlane.xlu0 %3203
    %v3205 = vsel %vm188, %v3167, 0.0
    %3206 = vadd.xlane.f32.xlu0 %v3205
    %v3207 = vpop.xlane.xlu0 %3206
    %v3208 = vsel %vm188, %v3168, 0.0
    %3209 = vadd.xlane.f32.xlu0 %v3208
    %v3210 = vpop.xlane.xlu0 %3209
    %v3211 = vsel %vm188, %v3169, 0.0
    %3212 = vadd.xlane.f32.xlu0 %v3211
    %v3213 = vpop.xlane.xlu0 %3212
    %v3214 = vsel %vm188, %v3170, 0.0
    %3215 = vadd.xlane.f32.xlu0 %v3214
    %v3216 = vpop.xlane.xlu0 %3215
    %v3217 = vsel %vm188, %v3171, 0.0
    %3218 = vadd.xlane.f32.xlu0 %v3217
    %v3219 = vpop.xlane.xlu0 %3218
    %v3220 = vrcp.pop 32.0
    %v3221 = vmul.f32 %v3174, %v3220
    %v3222 = vmul.f32 %v3177, %v3220
    %v3223 = vmul.f32 %v3180, %v3220
    %v3224 = vmul.f32 %v3183, %v3220
    %v3225 = vmul.f32 %v3186, %v3220
    %v3226 = vmul.f32 %v3189, %v3220
    %v3227 = vmul.f32 %v3192, %v3220
    %v3228 = vmul.f32 %v3195, %v3220
    %v3229 = vmul.f32 %v3198, %v3220
    %v3230 = vmul.f32 %v3201, %v3220
    %v3231 = vmul.f32 %v3204, %v3220
    %v3232 = vmul.f32 %v3207, %v3220
    %v3233 = vmul.f32 %v3210, %v3220
    %v3234 = vmul.f32 %v3213, %v3220
    %v3235 = vmul.f32 %v3216, %v3220
    %v3236 = vmul.f32 %v3219, %v3220
    %v3237 = vsub.f32 %v3156, %v3221
    %v3238 = vsub.f32 %v3157, %v3222
    %v3239 = vsub.f32 %v3158, %v3223
    %v3240 = vsub.f32 %v3159, %v3224
    %v3241 = vsub.f32 %v3160, %v3225
    %v3242 = vsub.f32 %v3161, %v3226
    %v3243 = vsub.f32 %v3162, %v3227
    %v3244 = vsub.f32 %v3163, %v3228
    %v3245 = vsub.f32 %v3164, %v3229
    %v3246 = vsub.f32 %v3165, %v3230
    %v3247 = vsub.f32 %v3166, %v3231
    %v3248 = vsub.f32 %v3167, %v3232
    %v3249 = vsub.f32 %v3168, %v3233
    %v3250 = vsub.f32 %v3169, %v3234
    %v3251 = vsub.f32 %v3170, %v3235
    %v3252 = vsub.f32 %v3171, %v3236
    %v3253 = vmul.f32 %v3237, %v3237
    %v3254 = vmul.f32 %v3238, %v3238
    %v3255 = vmul.f32 %v3239, %v3239
    %v3256 = vmul.f32 %v3240, %v3240
    %v3257 = vmul.f32 %v3241, %v3241
    %v3258 = vmul.f32 %v3242, %v3242
    %v3259 = vmul.f32 %v3243, %v3243
    %v3260 = vmul.f32 %v3244, %v3244
    %v3261 = vmul.f32 %v3245, %v3245
    %v3262 = vmul.f32 %v3246, %v3246
    %v3263 = vmul.f32 %v3247, %v3247
    %v3264 = vmul.f32 %v3248, %v3248
    %v3265 = vmul.f32 %v3249, %v3249
    %v3266 = vmul.f32 %v3250, %v3250
    %v3267 = vmul.f32 %v3251, %v3251
    %v3268 = vmul.f32 %v3252, %v3252
    %v3269 = vsel %vm188, %v3253, 0.0
    %3270 = vadd.xlane.f32.xlu0 %v3269
    %v3271 = vpop.xlane.xlu0 %3270
    %v3272 = vsel %vm188, %v3254, 0.0
    %3273 = vadd.xlane.f32.xlu0 %v3272
    %v3274 = vpop.xlane.xlu0 %3273
    %v3275 = vsel %vm188, %v3255, 0.0
    %3276 = vadd.xlane.f32.xlu0 %v3275
    %v3277 = vpop.xlane.xlu0 %3276
    %v3278 = vsel %vm188, %v3256, 0.0
    %3279 = vadd.xlane.f32.xlu0 %v3278
    %v3280 = vpop.xlane.xlu0 %3279
    %v3281 = vsel %vm188, %v3257, 0.0
    %3282 = vadd.xlane.f32.xlu0 %v3281
    %v3283 = vpop.xlane.xlu0 %3282
    %v3284 = vsel %vm188, %v3258, 0.0
    %3285 = vadd.xlane.f32.xlu0 %v3284
    %v3286 = vpop.xlane.xlu0 %3285
    %v3287 = vsel %vm188, %v3259, 0.0
    %3288 = vadd.xlane.f32.xlu0 %v3287
    %v3289 = vpop.xlane.xlu0 %3288
    %v3290 = vsel %vm188, %v3260, 0.0
    %3291 = vadd.xlane.f32.xlu0 %v3290
    %v3292 = vpop.xlane.xlu0 %3291
    %v3293 = vsel %vm188, %v3261, 0.0
    %3294 = vadd.xlane.f32.xlu0 %v3293
    %v3295 = vpop.xlane.xlu0 %3294
    %v3296 = vsel %vm188, %v3262, 0.0
    %3297 = vadd.xlane.f32.xlu0 %v3296
    %v3298 = vpop.xlane.xlu0 %3297
    %v3299 = vsel %vm188, %v3263, 0.0
    %3300 = vadd.xlane.f32.xlu0 %v3299
    %v3301 = vpop.xlane.xlu0 %3300
    %v3302 = vsel %vm188, %v3264, 0.0
    %3303 = vadd.xlane.f32.xlu0 %v3302
    %v3304 = vpop.xlane.xlu0 %3303
    %v3305 = vsel %vm188, %v3265, 0.0
    %3306 = vadd.xlane.f32.xlu0 %v3305
    %v3307 = vpop.xlane.xlu0 %3306
    %v3308 = vsel %vm188, %v3266, 0.0
    %3309 = vadd.xlane.f32.xlu0 %v3308
    %v3310 = vpop.xlane.xlu0 %3309
    %v3311 = vsel %vm188, %v3267, 0.0
    %3312 = vadd.xlane.f32.xlu0 %v3311
    %v3313 = vpop.xlane.xlu0 %3312
    %v3314 = vsel %vm188, %v3268, 0.0
    %3315 = vadd.xlane.f32.xlu0 %v3314
    %v3316 = vpop.xlane.xlu0 %3315
    %v3317 = vmul.f32 %v3271, %v3220
    %v3318 = vmul.f32 %v3274, %v3220
    %v3319 = vmul.f32 %v3277, %v3220
    %v3320 = vmul.f32 %v3280, %v3220
    %v3321 = vmul.f32 %v3283, %v3220
    %v3322 = vmul.f32 %v3286, %v3220
    %v3323 = vmul.f32 %v3289, %v3220
    %v3324 = vmul.f32 %v3292, %v3220
    %v3325 = vmul.f32 %v3295, %v3220
    %v3326 = vmul.f32 %v3298, %v3220
    %v3327 = vmul.f32 %v3301, %v3220
    %v3328 = vmul.f32 %v3304, %v3220
    %v3329 = vmul.f32 %v3307, %v3220
    %v3330 = vmul.f32 %v3310, %v3220
    %v3331 = vmul.f32 %v3313, %v3220
    %v3332 = vmul.f32 %v3316, %v3220
    %v3333 = vadd.f32 %v3317, 1e-05
    %v3334 = vadd.f32 %v3318, 1e-05
    %v3335 = vadd.f32 %v3319, 1e-05
    %v3336 = vadd.f32 %v3320, 1e-05
    %v3337 = vadd.f32 %v3321, 1e-05
    %v3338 = vadd.f32 %v3322, 1e-05
    %v3339 = vadd.f32 %v3323, 1e-05
    %v3340 = vadd.f32 %v3324, 1e-05
    %v3341 = vadd.f32 %v3325, 1e-05
    %v3342 = vadd.f32 %v3326, 1e-05
    %v3343 = vadd.f32 %v3327, 1e-05
    %v3344 = vadd.f32 %v3328, 1e-05
    %v3345 = vadd.f32 %v3329, 1e-05
    %v3346 = vadd.f32 %v3330, 1e-05
    %v3347 = vadd.f32 %v3331, 1e-05
    %v3348 = vadd.f32 %v3332, 1e-05
    %v3349 = vrsqrt.pop %v3333
    %v3350 = vrsqrt.pop %v3334
    %v3351 = vrsqrt.pop %v3335
    %v3352 = vrsqrt.pop %v3336
    %v3353 = vrsqrt.pop %v3337
    %v3354 = vrsqrt.pop %v3338
    %v3355 = vrsqrt.pop %v3339
    %v3356 = vrsqrt.pop %v3340
    %v3357 = vrsqrt.pop %v3341
    %v3358 = vrsqrt.pop %v3342
    %v3359 = vrsqrt.pop %v3343
    %v3360 = vrsqrt.pop %v3344
    %v3361 = vrsqrt.pop %v3345
    %v3362 = vrsqrt.pop %v3346
    %v3363 = vrsqrt.pop %v3347
    %v3364 = vrsqrt.pop %v3348
    %v3365 = vmul.f32 %v3237, %v3349
    %v3366 = vmul.f32 %v3238, %v3350
    %v3367 = vmul.f32 %v3239, %v3351
    %v3368 = vmul.f32 %v3240, %v3352
    %v3369 = vmul.f32 %v3241, %v3353
    %v3370 = vmul.f32 %v3242, %v3354
    %v3371 = vmul.f32 %v3243, %v3355
    %v3372 = vmul.f32 %v3244, %v3356
    %v3373 = vmul.f32 %v3245, %v3357
    %v3374 = vmul.f32 %v3246, %v3358
    %v3375 = vmul.f32 %v3247, %v3359
    %v3376 = vmul.f32 %v3248, %v3360
    %v3377 = vmul.f32 %v3249, %v3361
    %v3378 = vmul.f32 %v3250, %v3362
    %v3379 = vmul.f32 %v3251, %v3363
    %v3380 = vmul.f32 %v3252, %v3364
    %v3381 = vlaneseq
    %v3382 = vshrl.u32 %v3381, 7
    %v3383 = vsub.s32 0, %v3382
    %v3384 = vrot.slane %v127, %v3383
    %v3385 = vmul.f32 %v3365, %v3384
    %v3386 = vmul.f32 %v3366, %v3384
    %v3387 = vmul.f32 %v3367, %v3384
    %v3388 = vmul.f32 %v3368, %v3384
    %v3389 = vmul.f32 %v3369, %v3384
    %v3390 = vmul.f32 %v3370, %v3384
    %v3391 = vmul.f32 %v3371, %v3384
    %v3392 = vmul.f32 %v3372, %v3384
    %v3393 = vmul.f32 %v3373, %v3384
    %v3394 = vmul.f32 %v3374, %v3384
    %v3395 = vmul.f32 %v3375, %v3384
    %v3396 = vmul.f32 %v3376, %v3384
    %v3397 = vmul.f32 %v3377, %v3384
    %v3398 = vmul.f32 %v3378, %v3384
    %v3399 = vmul.f32 %v3379, %v3384
    %v3400 = vmul.f32 %v3380, %v3384
    %v3401 = vlaneseq
    %v3402 = vshrl.u32 %v3401, 7
    %v3403 = vsub.s32 1, %v3402
    %v3404 = vrot.slane %v127, %v3403
    %v3405 = vadd.f32 %v3385, %v3404
    %v3406 = vadd.f32 %v3386, %v3404
    %v3407 = vadd.f32 %v3387, %v3404
    %v3408 = vadd.f32 %v3388, %v3404
    %v3409 = vadd.f32 %v3389, %v3404
    %v3410 = vadd.f32 %v3390, %v3404
    %v3411 = vadd.f32 %v3391, %v3404
    %v3412 = vadd.f32 %v3392, %v3404
    %v3413 = vadd.f32 %v3393, %v3404
    %v3414 = vadd.f32 %v3394, %v3404
    %v3415 = vadd.f32 %v3395, %v3404
    %v3416 = vadd.f32 %v3396, %v3404
    %v3417 = vadd.f32 %v3397, %v3404
    %v3418 = vadd.f32 %v3398, %v3404
    %v3419 = vadd.f32 %v3399, %v3404
    %v3420 = vadd.f32 %v3400, %v3404
    %v3421 = vpack.c.bf16 %v3406, %v3405
    %v3422 = vpack.c.bf16 %v3408, %v3407
    %v3423 = vpack.c.bf16 %v3410, %v3409
    %v3424 = vpack.c.bf16 %v3412, %v3411
    %v3425 = vpack.c.bf16 %v3414, %v3413
    %v3426 = vpack.c.bf16 %v3416, %v3415
    %v3427 = vpack.c.bf16 %v3418, %v3417
    %v3428 = vpack.c.bf16 %v3420, %v3419
    %v3429 = vld [vmem:[%s7] sm:$0xf]
    %v3430 = vld [vmem:[%s7 + $0x4] sm:$0xf]
    %v3431 = vld [vmem:[%s7 + $0x8] sm:$0xf]
    %v3432 = vld [vmem:[%s7 + $0xc] sm:$0xf]
    %v3433 = vld [vmem:[%s8] sm:$0x1]
    %v3435 = vlaneseq
    %v3436 = vshrl.u32 %v3435, 7
    %v3437 = vsub.s32 0, %v3436
    %v3438 = vrot.slane %v3433, %v3437
    %v3444 = vunpack.c.l.b16 %v3429
    %v3445 = vunpack.c.l.b16 %v3430
    %v3446 = vunpack.c.l.b16 %v3431
    %v3447 = vunpack.c.l.b16 %v3432
    %v3448 = vpack.c.b16 %v3445, %v3444
    %v3449 = vpack.c.b16 %v3447, %v3446
    %v3453 = vsel %vm188, %v3421, 0
    %v3456 = vsel %vm188, %v3422, 0
    %v3459 = vsel %vm188, %v3423, 0
    %v3462 = vsel %vm188, %v3424, 0
    %v3465 = vsel %vm188, %v3425, 0
    %v3468 = vsel %vm188, %v3426, 0
    %v3471 = vsel %vm188, %v3427, 0
    %v3474 = vsel %vm188, %v3428, 0
    %3476 = vmatprep.subr.bf16.mxu0 0
    %3477 = vmatpush1.bf16.msra.mxu0 %v3448
    %3478 = vmatprep.subr.bf16.mxu0 0
    %3479 = vmatpush1.bf16.msra.mxu0 %v3449
    %3480 = vmatprep.subr.bf16.mxu0 0
    %3481 = vmatpush1.bf16.msra.mxu0 0
    %3482 = vmatprep.subr.bf16.mxu0 0
    %3483 = vmatpush1.bf16.msra.mxu0 0
    %3484 = vmatprep.subr.bf16.mxu0 0
    %3485 = vmatpush1.bf16.msra.mxu0 0
    %3486 = vmatprep.subr.bf16.mxu0 0
    %3487 = vmatpush1.bf16.msra.mxu0 0
    %3488 = vmatprep.subr.bf16.mxu0 0
    %3489 = vmatpush1.bf16.msra.mxu0 0
    %3490 = vmatprep.subr.bf16.mxu0 0
    %3491 = vmatpush1.bf16.msra.mxu0 0
    %3492 = vmatprep.subr.bf16.mxu0 0
    %3493 = vmatpush1.bf16.msra.mxu0 0
    %3494 = vmatprep.subr.bf16.mxu0 0
    %3495 = vmatpush1.bf16.msra.mxu0 0
    %3496 = vmatprep.subr.bf16.mxu0 0
    %3497 = vmatpush1.bf16.msra.mxu0 0
    %3498 = vmatprep.subr.bf16.mxu0 0
    %3499 = vmatpush1.bf16.msra.mxu0 0
    %3500 = vmatprep.subr.bf16.mxu0 0
    %3501 = vmatpush1.bf16.msra.mxu0 0
    %3502 = vmatprep.subr.bf16.mxu0 0
    %3503 = vmatpush1.bf16.msra.mxu0 0
    %3504 = vmatprep.subr.bf16.mxu0 0
    %3505 = vmatpush1.bf16.msra.mxu0 0
    %3506 = vmatprep.subr.bf16.mxu0 0
    %3507 = vmatpush1.bf16.msra.mxu0 0
    %3508 = vmatprep.mubr.bf16.mxu0 0
    %3509 = vmatmul.mubr.bf16.gmra.mrb[0].mxu0 %v3453
    %v3510 = vpop.f32.mrb[0].mxu0
    %v3511 = vadd.f32 %v3438, %v3510
    %v3512 = vpop.f32.mrb[0].mxu0
    %v3513 = vpop.f32.mrb[0].mxu0
    %v3514 = vadd.f32 %v3438, %v3513
    %v3515 = vpop.f32.mrb[0].mxu0
    %3516 = vmatprep.mubr.bf16.mxu0 0
    %3517 = vmatmul.mubr.bf16.gmra.mrb[0].mxu0 %v3456
    %v3518 = vpop.f32.mrb[0].mxu0
    %v3519 = vadd.f32 %v3438, %v3518
    %v3520 = vpop.f32.mrb[0].mxu0
    %v3521 = vpop.f32.mrb[0].mxu0
    %v3522 = vadd.f32 %v3438, %v3521
    %v3523 = vpop.f32.mrb[0].mxu0
    %3524 = vmatprep.mubr.bf16.mxu0 0
    %3525 = vmatmul.mubr.bf16.gmra.mrb[0].mxu0 %v3459
    %v3526 = vpop.f32.mrb[0].mxu0
    %v3527 = vadd.f32 %v3438, %v3526
    %v3528 = vpop.f32.mrb[0].mxu0
    %v3529 = vpop.f32.mrb[0].mxu0
    %v3530 = vadd.f32 %v3438, %v3529
    %v3531 = vpop.f32.mrb[0].mxu0
    %3532 = vmatprep.mubr.bf16.mxu0 0
    %3533 = vmatmul.mubr.bf16.gmra.mrb[0].mxu0 %v3462
    %v3534 = vpop.f32.mrb[0].mxu0
    %v3535 = vadd.f32 %v3438, %v3534
    %v3536 = vpop.f32.mrb[0].mxu0
    %v3537 = vpop.f32.mrb[0].mxu0
    %v3538 = vadd.f32 %v3438, %v3537
    %v3539 = vpop.f32.mrb[0].mxu0
    %3540 = vmatprep.mubr.bf16.mxu0 0
    %3541 = vmatmul.mubr.bf16.gmra.mrb[0].mxu0 %v3465
    %v3542 = vpop.f32.mrb[0].mxu0
    %v3543 = vadd.f32 %v3438, %v3542
    %v3544 = vpop.f32.mrb[0].mxu0
    %v3545 = vpop.f32.mrb[0].mxu0
    %v3546 = vadd.f32 %v3438, %v3545
    %v3547 = vpop.f32.mrb[0].mxu0
    %3548 = vmatprep.mubr.bf16.mxu0 0
    %3549 = vmatmul.mubr.bf16.gmra.mrb[0].mxu0 %v3468
    %v3550 = vpop.f32.mrb[0].mxu0
    %v3551 = vadd.f32 %v3438, %v3550
    %v3552 = vpop.f32.mrb[0].mxu0
    %v3553 = vpop.f32.mrb[0].mxu0
    %v3554 = vadd.f32 %v3438, %v3553
    %v3555 = vpop.f32.mrb[0].mxu0
    %3556 = vmatprep.mubr.bf16.mxu0 0
    %3557 = vmatmul.mubr.bf16.gmra.mrb[0].mxu0 %v3471
    %v3558 = vpop.f32.mrb[0].mxu0
    %v3559 = vadd.f32 %v3438, %v3558
    %v3560 = vpop.f32.mrb[0].mxu0
    %v3561 = vpop.f32.mrb[0].mxu0
    %v3562 = vadd.f32 %v3438, %v3561
    %v3563 = vpop.f32.mrb[0].mxu0
    %3564 = vmatprep.mubr.bf16.mxu0 0
    %3565 = vmatmul.mubr.bf16.gmra.mrb[0].mxu0 %v3474
    %v3566 = vpop.f32.mrb[0].mxu0
    %v3567 = vadd.f32 %v3438, %v3566
    %v3568 = vpop.f32.mrb[0].mxu0
    %v3569 = vpop.f32.mrb[0].mxu0
    %v3570 = vadd.f32 %v3438, %v3569
    %v3571 = vpop.f32.mrb[0].mxu0
    %3572 = vdwg.mxu0
    %v3573 = vmax.f32 %v3511, 0.0
    %v3574 = vmax.f32 %v3514, 0.0
    %v3575 = vmax.f32 %v3519, 0.0
    %v3576 = vmax.f32 %v3522, 0.0
    %v3577 = vmax.f32 %v3527, 0.0
    %v3578 = vmax.f32 %v3530, 0.0
    %v3579 = vmax.f32 %v3535, 0.0
    %v3580 = vmax.f32 %v3538, 0.0
    %v3581 = vmax.f32 %v3543, 0.0
    %v3582 = vmax.f32 %v3546, 0.0
    %v3583 = vmax.f32 %v3551, 0.0
    %v3584 = vmax.f32 %v3554, 0.0
    %v3585 = vmax.f32 %v3559, 0.0
    %v3586 = vmax.f32 %v3562, 0.0
    %v3587 = vmax.f32 %v3567, 0.0
    %v3588 = vmax.f32 %v3570, 0.0
    %v3589 = vpack.c.bf16 %v3574, %v3573
    %v3590 = vpack.c.bf16 %v3576, %v3575
    %v3591 = vpack.c.bf16 %v3578, %v3577
    %v3592 = vpack.c.bf16 %v3580, %v3579
    %v3593 = vpack.c.bf16 %v3582, %v3581
    %v3594 = vpack.c.bf16 %v3584, %v3583
    %v3595 = vpack.c.bf16 %v3586, %v3585
    %v3596 = vpack.c.bf16 %v3588, %v3587
    %v3597 = vld [vmem:[%s9] sm:$0xf]
    %v3598 = vld [vmem:[%s9 + $0x4] sm:$0xf]
    %v3599 = vld [vmem:[%s9 + $0x8] sm:$0xf]
    %v3600 = vld [vmem:[%s9 + $0xc] sm:$0xf]
    %v3601 = vld [vmem:[%s9 + $0x10] sm:$0xf]
    %v3602 = vld [vmem:[%s9 + $0x14] sm:$0xf]
    %v3603 = vld [vmem:[%s9 + $0x18] sm:$0xf]
    %v3604 = vld [vmem:[%s9 + $0x1c] sm:$0xf]
    %v3605 = vld [vmem:[%s10] sm:$0x1]
    %v3607 = vlaneseq
    %v3608 = vshrl.u32 %v3607, 7
    %v3609 = vsub.s32 0, %v3608
    %v3610 = vrot.slane %v3605, %v3609
    %v3620 = vunpack.c.l.b16 %v3597
    %v3621 = vunpack.c.l.b16 %v3598
    %v3622 = vunpack.c.l.b16 %v3599
    %v3623 = vunpack.c.l.b16 %v3600
    %v3624 = vunpack.c.l.b16 %v3601
    %v3625 = vunpack.c.l.b16 %v3602
    %v3626 = vunpack.c.l.b16 %v3603
    %v3627 = vunpack.c.l.b16 %v3604
    %v3628 = vpack.c.b16 %v3621, %v3620
    %v3629 = vpack.c.b16 %v3623, %v3622
    %v3630 = vpack.c.b16 %v3625, %v3624
    %v3631 = vpack.c.b16 %v3627, %v3626
    %v3637 = vsel %vm564, %v3589, 0
    %v3640 = vsel %vm564, %v3590, 0
    %v3643 = vsel %vm564, %v3591, 0
    %v3646 = vsel %vm564, %v3592, 0
    %v3649 = vsel %vm564, %v3593, 0
    %v3652 = vsel %vm564, %v3594, 0
    %v3655 = vsel %vm564, %v3595, 0
    %v3658 = vsel %vm564, %v3596, 0
    %3660 = vmatprep.subr.bf16.mxu0 0
    %3661 = vmatpush1.bf16.msra.mxu0 %v3628
    %3662 = vmatprep.subr.bf16.mxu0 0
    %3663 = vmatpush1.bf16.msra.mxu0 %v3629
    %3664 = vmatprep.subr.bf16.mxu0 0
    %3665 = vmatpush1.bf16.msra.mxu0 %v3630
    %3666 = vmatprep.subr.bf16.mxu0 0
    %3667 = vmatpush1.bf16.msra.mxu0 %v3631
    %3668 = vmatprep.subr.bf16.mxu0 0
    %3669 = vmatpush1.bf16.msra.mxu0 0
    %3670 = vmatprep.subr.bf16.mxu0 0
    %3671 = vmatpush1.bf16.msra.mxu0 0
    %3672 = vmatprep.subr.bf16.mxu0 0
    %3673 = vmatpush1.bf16.msra.mxu0 0
    %3674 = vmatprep.subr.bf16.mxu0 0
    %3675 = vmatpush1.bf16.msra.mxu0 0
    %3676 = vmatprep.subr.bf16.mxu0 0
    %3677 = vmatpush1.bf16.msra.mxu0 0
    %3678 = vmatprep.subr.bf16.mxu0 0
    %3679 = vmatpush1.bf16.msra.mxu0 0
    %3680 = vmatprep.subr.bf16.mxu0 0
    %3681 = vmatpush1.bf16.msra.mxu0 0
    %3682 = vmatprep.subr.bf16.mxu0 0
    %3683 = vmatpush1.bf16.msra.mxu0 0
    %3684 = vmatprep.subr.bf16.mxu0 0
    %3685 = vmatpush1.bf16.msra.mxu0 0
    %3686 = vmatprep.subr.bf16.mxu0 0
    %3687 = vmatpush1.bf16.msra.mxu0 0
    %3688 = vmatprep.subr.bf16.mxu0 0
    %3689 = vmatpush1.bf16.msra.mxu0 0
    %3690 = vmatprep.subr.bf16.mxu0 0
    %3691 = vmatpush1.bf16.msra.mxu0 0
    %3692 = vmatprep.mubr.bf16.mxu0 0
    %3693 = vmatmul.mubr.bf16.gmra.mrb[0].mxu0 %v3637
    %v3694 = vpop.f32.mrb[0].mxu0
    %v3695 = vadd.f32 %v3610, %v3694
    %v3696 = vpop.f32.mrb[0].mxu0
    %v3697 = vpop.f32.mrb[0].mxu0
    %v3698 = vadd.f32 %v3610, %v3697
    %v3699 = vpop.f32.mrb[0].mxu0
    %3700 = vmatprep.mubr.bf16.mxu0 0
    %3701 = vmatmul.mubr.bf16.gmra.mrb[0].mxu0 %v3640
    %v3702 = vpop.f32.mrb[0].mxu0
    %v3703 = vadd.f32 %v3610, %v3702
    %v3704 = vpop.f32.mrb[0].mxu0
    %v3705 = vpop.f32.mrb[0].mxu0
    %v3706 = vadd.f32 %v3610, %v3705
    %v3707 = vpop.f32.mrb[0].mxu0
    %3708 = vmatprep.mubr.bf16.mxu0 0
    %3709 = vmatmul.mubr.bf16.gmra.mrb[0].mxu0 %v3643
    %v3710 = vpop.f32.mrb[0].mxu0
    %v3711 = vadd.f32 %v3610, %v3710
    %v3712 = vpop.f32.mrb[0].mxu0
    %v3713 = vpop.f32.mrb[0].mxu0
    %v3714 = vadd.f32 %v3610, %v3713
    %v3715 = vpop.f32.mrb[0].mxu0
    %3716 = vmatprep.mubr.bf16.mxu0 0
    %3717 = vmatmul.mubr.bf16.gmra.mrb[0].mxu0 %v3646
    %v3718 = vpop.f32.mrb[0].mxu0
    %v3719 = vadd.f32 %v3610, %v3718
    %v3720 = vpop.f32.mrb[0].mxu0
    %v3721 = vpop.f32.mrb[0].mxu0
    %v3722 = vadd.f32 %v3610, %v3721
    %v3723 = vpop.f32.mrb[0].mxu0
    %3724 = vmatprep.mubr.bf16.mxu0 0
    %3725 = vmatmul.mubr.bf16.gmra.mrb[0].mxu0 %v3649
    %v3726 = vpop.f32.mrb[0].mxu0
    %v3727 = vadd.f32 %v3610, %v3726
    %v3728 = vpop.f32.mrb[0].mxu0
    %v3729 = vpop.f32.mrb[0].mxu0
    %v3730 = vadd.f32 %v3610, %v3729
    %v3731 = vpop.f32.mrb[0].mxu0
    %3732 = vmatprep.mubr.bf16.mxu0 0
    %3733 = vmatmul.mubr.bf16.gmra.mrb[0].mxu0 %v3652
    %v3734 = vpop.f32.mrb[0].mxu0
    %v3735 = vadd.f32 %v3610, %v3734
    %v3736 = vpop.f32.mrb[0].mxu0
    %v3737 = vpop.f32.mrb[0].mxu0
    %v3738 = vadd.f32 %v3610, %v3737
    %v3739 = vpop.f32.mrb[0].mxu0
    %3740 = vmatprep.mubr.bf16.mxu0 0
    %3741 = vmatmul.mubr.bf16.gmra.mrb[0].mxu0 %v3655
    %v3742 = vpop.f32.mrb[0].mxu0
    %v3743 = vadd.f32 %v3610, %v3742
    %v3744 = vpop.f32.mrb[0].mxu0
    %v3745 = vpop.f32.mrb[0].mxu0
    %v3746 = vadd.f32 %v3610, %v3745
    %v3747 = vpop.f32.mrb[0].mxu0
    %3748 = vmatprep.mubr.bf16.mxu0 0
    %3749 = vmatmul.mubr.bf16.gmra.mrb[0].mxu0 %v3658
    %v3750 = vpop.f32.mrb[0].mxu0
    %v3751 = vadd.f32 %v3610, %v3750
    %v3752 = vpop.f32.mrb[0].mxu0
    %v3753 = vpop.f32.mrb[0].mxu0
    %v3754 = vadd.f32 %v3610, %v3753
    %v3755 = vpop.f32.mrb[0].mxu0
    %3756 = vdwg.mxu0
    %v3757 = vadd.f32 %v3405, %v3695
    %v3758 = vadd.f32 %v3406, %v3698
    %v3759 = vadd.f32 %v3407, %v3703
    %v3760 = vadd.f32 %v3408, %v3706
    %v3761 = vadd.f32 %v3409, %v3711
    %v3762 = vadd.f32 %v3410, %v3714
    %v3763 = vadd.f32 %v3411, %v3719
    %v3764 = vadd.f32 %v3412, %v3722
    %v3765 = vadd.f32 %v3413, %v3727
    %v3766 = vadd.f32 %v3414, %v3730
    %v3767 = vadd.f32 %v3415, %v3735
    %v3768 = vadd.f32 %v3416, %v3738
    %v3769 = vadd.f32 %v3417, %v3743
    %v3770 = vadd.f32 %v3418, %v3746
    %v3771 = vadd.f32 %v3419, %v3751
    %v3772 = vadd.f32 %v3420, %v3754
    %v3773 = vsel %vm188, %v3757, 0.0
    %3774 = vadd.xlane.f32.xlu0 %v3773
    %v3775 = vpop.xlane.xlu0 %3774
    %v3776 = vsel %vm188, %v3758, 0.0
    %3777 = vadd.xlane.f32.xlu0 %v3776
    %v3778 = vpop.xlane.xlu0 %3777
    %v3779 = vsel %vm188, %v3759, 0.0
    %3780 = vadd.xlane.f32.xlu0 %v3779
    %v3781 = vpop.xlane.xlu0 %3780
    %v3782 = vsel %vm188, %v3760, 0.0
    %3783 = vadd.xlane.f32.xlu0 %v3782
    %v3784 = vpop.xlane.xlu0 %3783
    %v3785 = vsel %vm188, %v3761, 0.0
    %3786 = vadd.xlane.f32.xlu0 %v3785
    %v3787 = vpop.xlane.xlu0 %3786
    %v3788 = vsel %vm188, %v3762, 0.0
    %3789 = vadd.xlane.f32.xlu0 %v3788
    %v3790 = vpop.xlane.xlu0 %3789
    %v3791 = vsel %vm188, %v3763, 0.0
    %3792 = vadd.xlane.f32.xlu0 %v3791
    %v3793 = vpop.xlane.xlu0 %3792
    %v3794 = vsel %vm188, %v3764, 0.0
    %3795 = vadd.xlane.f32.xlu0 %v3794
    %v3796 = vpop.xlane.xlu0 %3795
    %v3797 = vsel %vm188, %v3765, 0.0
    %3798 = vadd.xlane.f32.xlu0 %v3797
    %v3799 = vpop.xlane.xlu0 %3798
    %v3800 = vsel %vm188, %v3766, 0.0
    %3801 = vadd.xlane.f32.xlu0 %v3800
    %v3802 = vpop.xlane.xlu0 %3801
    %v3803 = vsel %vm188, %v3767, 0.0
    %3804 = vadd.xlane.f32.xlu0 %v3803
    %v3805 = vpop.xlane.xlu0 %3804
    %v3806 = vsel %vm188, %v3768, 0.0
    %3807 = vadd.xlane.f32.xlu0 %v3806
    %v3808 = vpop.xlane.xlu0 %3807
    %v3809 = vsel %vm188, %v3769, 0.0
    %3810 = vadd.xlane.f32.xlu0 %v3809
    %v3811 = vpop.xlane.xlu0 %3810
    %v3812 = vsel %vm188, %v3770, 0.0
    %3813 = vadd.xlane.f32.xlu0 %v3812
    %v3814 = vpop.xlane.xlu0 %3813
    %v3815 = vsel %vm188, %v3771, 0.0
    %3816 = vadd.xlane.f32.xlu0 %v3815
    %v3817 = vpop.xlane.xlu0 %3816
    %v3818 = vsel %vm188, %v3772, 0.0
    %3819 = vadd.xlane.f32.xlu0 %v3818
    %v3820 = vpop.xlane.xlu0 %3819
    %v3821 = vmul.f32 %v3775, %v3220
    %v3822 = vmul.f32 %v3778, %v3220
    %v3823 = vmul.f32 %v3781, %v3220
    %v3824 = vmul.f32 %v3784, %v3220
    %v3825 = vmul.f32 %v3787, %v3220
    %v3826 = vmul.f32 %v3790, %v3220
    %v3827 = vmul.f32 %v3793, %v3220
    %v3828 = vmul.f32 %v3796, %v3220
    %v3829 = vmul.f32 %v3799, %v3220
    %v3830 = vmul.f32 %v3802, %v3220
    %v3831 = vmul.f32 %v3805, %v3220
    %v3832 = vmul.f32 %v3808, %v3220
    %v3833 = vmul.f32 %v3811, %v3220
    %v3834 = vmul.f32 %v3814, %v3220
    %v3835 = vmul.f32 %v3817, %v3220
    %v3836 = vmul.f32 %v3820, %v3220
    %v3837 = vsub.f32 %v3757, %v3821
    %v3838 = vsub.f32 %v3758, %v3822
    %v3839 = vsub.f32 %v3759, %v3823
    %v3840 = vsub.f32 %v3760, %v3824
    %v3841 = vsub.f32 %v3761, %v3825
    %v3842 = vsub.f32 %v3762, %v3826
    %v3843 = vsub.f32 %v3763, %v3827
    %v3844 = vsub.f32 %v3764, %v3828
    %v3845 = vsub.f32 %v3765, %v3829
    %v3846 = vsub.f32 %v3766, %v3830
    %v3847 = vsub.f32 %v3767, %v3831
    %v3848 = vsub.f32 %v3768, %v3832
    %v3849 = vsub.f32 %v3769, %v3833
    %v3850 = vsub.f32 %v3770, %v3834
    %v3851 = vsub.f32 %v3771, %v3835
    %v3852 = vsub.f32 %v3772, %v3836
    %v3853 = vmul.f32 %v3837, %v3837
    %v3854 = vmul.f32 %v3838, %v3838
    %v3855 = vmul.f32 %v3839, %v3839
    %v3856 = vmul.f32 %v3840, %v3840
    %v3857 = vmul.f32 %v3841, %v3841
    %v3858 = vmul.f32 %v3842, %v3842
    %v3859 = vmul.f32 %v3843, %v3843
    %v3860 = vmul.f32 %v3844, %v3844
    %v3861 = vmul.f32 %v3845, %v3845
    %v3862 = vmul.f32 %v3846, %v3846
    %v3863 = vmul.f32 %v3847, %v3847
    %v3864 = vmul.f32 %v3848, %v3848
    %v3865 = vmul.f32 %v3849, %v3849
    %v3866 = vmul.f32 %v3850, %v3850
    %v3867 = vmul.f32 %v3851, %v3851
    %v3868 = vmul.f32 %v3852, %v3852
    %v3869 = vsel %vm188, %v3853, 0.0
    %3870 = vadd.xlane.f32.xlu0 %v3869
    %v3871 = vpop.xlane.xlu0 %3870
    %v3872 = vsel %vm188, %v3854, 0.0
    %3873 = vadd.xlane.f32.xlu0 %v3872
    %v3874 = vpop.xlane.xlu0 %3873
    %v3875 = vsel %vm188, %v3855, 0.0
    %3876 = vadd.xlane.f32.xlu0 %v3875
    %v3877 = vpop.xlane.xlu0 %3876
    %v3878 = vsel %vm188, %v3856, 0.0
    %3879 = vadd.xlane.f32.xlu0 %v3878
    %v3880 = vpop.xlane.xlu0 %3879
    %v3881 = vsel %vm188, %v3857, 0.0
    %3882 = vadd.xlane.f32.xlu0 %v3881
    %v3883 = vpop.xlane.xlu0 %3882
    %v3884 = vsel %vm188, %v3858, 0.0
    %3885 = vadd.xlane.f32.xlu0 %v3884
    %v3886 = vpop.xlane.xlu0 %3885
    %v3887 = vsel %vm188, %v3859, 0.0
    %3888 = vadd.xlane.f32.xlu0 %v3887
    %v3889 = vpop.xlane.xlu0 %3888
    %v3890 = vsel %vm188, %v3860, 0.0
    %3891 = vadd.xlane.f32.xlu0 %v3890
    %v3892 = vpop.xlane.xlu0 %3891
    %v3893 = vsel %vm188, %v3861, 0.0
    %3894 = vadd.xlane.f32.xlu0 %v3893
    %v3895 = vpop.xlane.xlu0 %3894
    %v3896 = vsel %vm188, %v3862, 0.0
    %3897 = vadd.xlane.f32.xlu0 %v3896
    %v3898 = vpop.xlane.xlu0 %3897
    %v3899 = vsel %vm188, %v3863, 0.0
    %3900 = vadd.xlane.f32.xlu0 %v3899
    %v3901 = vpop.xlane.xlu0 %3900
    %v3902 = vsel %vm188, %v3864, 0.0
    %3903 = vadd.xlane.f32.xlu0 %v3902
    %v3904 = vpop.xlane.xlu0 %3903
    %v3905 = vsel %vm188, %v3865, 0.0
    %3906 = vadd.xlane.f32.xlu0 %v3905
    %v3907 = vpop.xlane.xlu0 %3906
    %v3908 = vsel %vm188, %v3866, 0.0
    %3909 = vadd.xlane.f32.xlu0 %v3908
    %v3910 = vpop.xlane.xlu0 %3909
    %v3911 = vsel %vm188, %v3867, 0.0
    %3912 = vadd.xlane.f32.xlu0 %v3911
    %v3913 = vpop.xlane.xlu0 %3912
    %v3914 = vsel %vm188, %v3868, 0.0
    %3915 = vadd.xlane.f32.xlu0 %v3914
    %v3916 = vpop.xlane.xlu0 %3915
    %v3917 = vmul.f32 %v3871, %v3220
    %v3918 = vmul.f32 %v3874, %v3220
    %v3919 = vmul.f32 %v3877, %v3220
    %v3920 = vmul.f32 %v3880, %v3220
    %v3921 = vmul.f32 %v3883, %v3220
    %v3922 = vmul.f32 %v3886, %v3220
    %v3923 = vmul.f32 %v3889, %v3220
    %v3924 = vmul.f32 %v3892, %v3220
    %v3925 = vmul.f32 %v3895, %v3220
    %v3926 = vmul.f32 %v3898, %v3220
    %v3927 = vmul.f32 %v3901, %v3220
    %v3928 = vmul.f32 %v3904, %v3220
    %v3929 = vmul.f32 %v3907, %v3220
    %v3930 = vmul.f32 %v3910, %v3220
    %v3931 = vmul.f32 %v3913, %v3220
    %v3932 = vmul.f32 %v3916, %v3220
    %v3933 = vadd.f32 %v3917, 1e-05
    %v3934 = vadd.f32 %v3918, 1e-05
    %v3935 = vadd.f32 %v3919, 1e-05
    %v3936 = vadd.f32 %v3920, 1e-05
    %v3937 = vadd.f32 %v3921, 1e-05
    %v3938 = vadd.f32 %v3922, 1e-05
    %v3939 = vadd.f32 %v3923, 1e-05
    %v3940 = vadd.f32 %v3924, 1e-05
    %v3941 = vadd.f32 %v3925, 1e-05
    %v3942 = vadd.f32 %v3926, 1e-05
    %v3943 = vadd.f32 %v3927, 1e-05
    %v3944 = vadd.f32 %v3928, 1e-05
    %v3945 = vadd.f32 %v3929, 1e-05
    %v3946 = vadd.f32 %v3930, 1e-05
    %v3947 = vadd.f32 %v3931, 1e-05
    %v3948 = vadd.f32 %v3932, 1e-05
    %v3949 = vrsqrt.pop %v3933
    %v3950 = vrsqrt.pop %v3934
    %v3951 = vrsqrt.pop %v3935
    %v3952 = vrsqrt.pop %v3936
    %v3953 = vrsqrt.pop %v3937
    %v3954 = vrsqrt.pop %v3938
    %v3955 = vrsqrt.pop %v3939
    %v3956 = vrsqrt.pop %v3940
    %v3957 = vrsqrt.pop %v3941
    %v3958 = vrsqrt.pop %v3942
    %v3959 = vrsqrt.pop %v3943
    %v3960 = vrsqrt.pop %v3944
    %v3961 = vrsqrt.pop %v3945
    %v3962 = vrsqrt.pop %v3946
    %v3963 = vrsqrt.pop %v3947
    %v3964 = vrsqrt.pop %v3948
    %v3965 = vmul.f32 %v3837, %v3949
    %v3966 = vmul.f32 %v3838, %v3950
    %v3967 = vmul.f32 %v3839, %v3951
    %v3968 = vmul.f32 %v3840, %v3952
    %v3969 = vmul.f32 %v3841, %v3953
    %v3970 = vmul.f32 %v3842, %v3954
    %v3971 = vmul.f32 %v3843, %v3955
    %v3972 = vmul.f32 %v3844, %v3956
    %v3973 = vmul.f32 %v3845, %v3957
    %v3974 = vmul.f32 %v3846, %v3958
    %v3975 = vmul.f32 %v3847, %v3959
    %v3976 = vmul.f32 %v3848, %v3960
    %v3977 = vmul.f32 %v3849, %v3961
    %v3978 = vmul.f32 %v3850, %v3962
    %v3979 = vmul.f32 %v3851, %v3963
    %v3980 = vmul.f32 %v3852, %v3964
    %v3981 = vlaneseq
    %v3982 = vshrl.u32 %v3981, 7
    %v3983 = vsub.s32 2, %v3982
    %v3984 = vrot.slane %v127, %v3983
    %v3985 = vmul.f32 %v3965, %v3984
    %v3986 = vmul.f32 %v3966, %v3984
    %v3987 = vmul.f32 %v3967, %v3984
    %v3988 = vmul.f32 %v3968, %v3984
    %v3989 = vmul.f32 %v3969, %v3984
    %v3990 = vmul.f32 %v3970, %v3984
    %v3991 = vmul.f32 %v3971, %v3984
    %v3992 = vmul.f32 %v3972, %v3984
    %v3993 = vmul.f32 %v3973, %v3984
    %v3994 = vmul.f32 %v3974, %v3984
    %v3995 = vmul.f32 %v3975, %v3984
    %v3996 = vmul.f32 %v3976, %v3984
    %v3997 = vmul.f32 %v3977, %v3984
    %v3998 = vmul.f32 %v3978, %v3984
    %v3999 = vmul.f32 %v3979, %v3984
    %v4000 = vmul.f32 %v3980, %v3984
    %v4001 = vlaneseq
    %v4002 = vshrl.u32 %v4001, 7
    %v4003 = vsub.s32 3, %v4002
    %v4004 = vrot.slane %v127, %v4003
    %v4005 = vadd.f32 %v3985, %v4004
    %v4006 = vadd.f32 %v3986, %v4004
    %v4007 = vadd.f32 %v3987, %v4004
    %v4008 = vadd.f32 %v3988, %v4004
    %v4009 = vadd.f32 %v3989, %v4004
    %v4010 = vadd.f32 %v3990, %v4004
    %v4011 = vadd.f32 %v3991, %v4004
    %v4012 = vadd.f32 %v3992, %v4004
    %v4013 = vadd.f32 %v3993, %v4004
    %v4014 = vadd.f32 %v3994, %v4004
    %v4015 = vadd.f32 %v3995, %v4004
    %v4016 = vadd.f32 %v3996, %v4004
    %v4017 = vadd.f32 %v3997, %v4004
    %v4018 = vadd.f32 %v3998, %v4004
    %v4019 = vadd.f32 %v3999, %v4004
    %v4020 = vadd.f32 %v4000, %v4004
    %4021 = vst.msk [vmem:[%s12] sm:$0xff] %vm188, %v4005
    %4022 = vst.msk [vmem:[%s12 + $0x8] sm:$0xff] %vm188, %v4006
    %4023 = vst.msk [vmem:[%s12 + $0x10] sm:$0xff] %vm188, %v4007
    %4024 = vst.msk [vmem:[%s12 + $0x18] sm:$0xff] %vm188, %v4008
    %4025 = vst.msk [vmem:[%s12 + $0x20] sm:$0xff] %vm188, %v4009
    %4026 = vst.msk [vmem:[%s12 + $0x28] sm:$0xff] %vm188, %v4010
    %4027 = vst.msk [vmem:[%s12 + $0x30] sm:$0xff] %vm188, %v4011
    %4028 = vst.msk [vmem:[%s12 + $0x38] sm:$0xff] %vm188, %v4012
    %4029 = vst.msk [vmem:[%s12 + $0x40] sm:$0xff] %vm188, %v4013
    %4030 = vst.msk [vmem:[%s12 + $0x48] sm:$0xff] %vm188, %v4014
    %4031 = vst.msk [vmem:[%s12 + $0x50] sm:$0xff] %vm188, %v4015
    %4032 = vst.msk [vmem:[%s12 + $0x58] sm:$0xff] %vm188, %v4016
    %4033 = vst.msk [vmem:[%s12 + $0x60] sm:$0xff] %vm188, %v4017
    %4034 = vst.msk [vmem:[%s12 + $0x68] sm:$0xff] %vm188, %v4018
    %4035 = vst.msk [vmem:[%s12 + $0x70] sm:$0xff] %vm188, %v4019
    %4036 = vst.msk [vmem:[%s12 + $0x78] sm:$0xff] %vm188, %v4020
    // Predicated region
    $region58: #{conditional_detr_transformer.2} parent=1 // pred_check
      _
    $region59: #{conditional_detr_transformer.2} parent=1 // pred_check_branch
      %4038 = sbr.rel (0) target = $region61
    $region60: #{conditional_detr_transformer.2} parent=1 // pred_region
      _
    $region61: #{conditional_detr_transformer.2} parent=1 // pred_fallthru
      _
    // Predicated region
    $region62: #{conditional_detr_transformer.2} parent=1 // pred_check
      _
    $region63: #{conditional_detr_transformer.2} parent=1 // pred_check_branch
      %4040 = sbr.rel (0) target = $region65
    $region64: #{conditional_detr_transformer.2} parent=1 // pred_region
      _
    $region65: #{conditional_detr_transformer.2} parent=1 // pred_fallthru
      _
    %4041 = vsyncpa [#allocation4], 1

// kernel: conditional_detr_transformer.3
$region0: #{conditional_detr_transformer.3}
  #allocation0 [shape = 'u32[]', space=smem, size = 0x4, offset = 0x4, fixed_abs, tag = 'smem constant byte address 0x4 - core index']
  #allocation1 [shape = 'u32[144,128]{1,0:T(1,128)}', space=vmem, size = 0x12000, scoped, tag = 'internal scratch']
  #allocation2 [shape = 'f32[16,32]{1,0:T(8,128)}', space=vmem, size = 0x2000, scoped, tag = 'scratch operand']
  #allocation3 [shape = 'f32[16,32]{1,0:T(8,128)}', space=vmem, size = 0x2000, scoped, tag = 'scratch operand']
  #allocation4 [shape = 'bf16[128,32]{1,0:T(16,128)(2,1)}', space=vmem, size = 0x8000, scoped, tag = 'scratch operand']
  #allocation5 [shape = 'bf16[128,32]{1,0:T(16,128)(2,1)}', space=vmem, size = 0x8000, scoped, tag = 'scratch operand']
  %s0 = inlined_call_operand.vmem [shape: f32[2,64,32], index: 0, kind: input, shape index: {}]
  %s1 = inlined_call_operand.vmem [shape: f32[2,8,32], index: 1, kind: input, shape index: {}]
  %s2 = inlined_call_operand.vmem [shape: f32[2,64,32], index: 2, kind: input, shape index: {}]
  %s3 = inlined_call_operand.vmem [shape: f32[2,1,64], index: 3, kind: input, shape index: {}]
  %s4 = inlined_call_operand.vmem [shape: bf16[2,32,96], index: 4, kind: input, shape index: {}]
  %s5 = inlined_call_operand.vmem [shape: f32[2,1,96], index: 5, kind: input, shape index: {}]
  %s6 = inlined_call_operand.vmem [shape: bf16[2,32,32], index: 6, kind: input, shape index: {}]
  %s7 = inlined_call_operand.vmem [shape: f32[2,1,32], index: 7, kind: input, shape index: {}]
  %s8 = inlined_call_operand.vmem [shape: bf16[2,32,96], index: 8, kind: input, shape index: {}]
  %s9 = inlined_call_operand.vmem [shape: f32[2,1,96], index: 9, kind: input, shape index: {}]
  %s10 = inlined_call_operand.vmem [shape: bf16[2,32,32], index: 10, kind: input, shape index: {}]
  %s11 = inlined_call_operand.vmem [shape: f32[2,1,32], index: 11, kind: input, shape index: {}]
  %s12 = inlined_call_operand.vmem [shape: bf16[2,32,64], index: 12, kind: input, shape index: {}]
  %s13 = inlined_call_operand.vmem [shape: f32[2,1,64], index: 13, kind: input, shape index: {}]
  %s14 = inlined_call_operand.vmem [shape: bf16[2,64,32], index: 14, kind: input, shape index: {}]
  %s15 = inlined_call_operand.vmem [shape: f32[2,1,32], index: 15, kind: input, shape index: {}]
  %s16 = inlined_call_operand.vmem [shape: f32[2,6,32], index: 16, kind: input, shape index: {}]
  %s17 = inlined_call_operand.vmem [shape: f32[2,32], index: 17, kind: input, shape index: {}]
  %s18 = inlined_call_operand.vmem [shape: f32[2,2,8,32], index: 18, kind: output, shape index: {}]
  %s19 = sld [smem:[#allocation0]]
  $region109: #{conditional_detr_transformer.3} parent=0
    _
  %s21 = ssub.s32 1, %s19
  %s22 = scalar_select 0, %s21, %s19
  loop: start=0, step=1, limit=4
  $region2: #{conditional_detr_transformer.3} parent=0 // loop_pre_header
    _
  $region3: #{conditional_detr_transformer.3} parent=0 // loop_header
    %s24 = sphi 0, %s28
    %p25 = scmp.ge.s32.totalorder %s24, 4
    %s32 = sphi 0, %s32
    %s34 = sphi 0, %s32
    %s35 = sphi 0, %s34
    %s49 = sphi 0, %s35
    %s53 = sphi 0, %s53
    %s55 = sphi 0, %s53
    %s56 = sphi 0, %s55
    %s70 = sphi 0, %s56
    %s74 = sphi 0, %s74
    %s76 = sphi 0, %s74
    %s77 = sphi 0, %s76
    %s91 = sphi 0, %s77
    %s95 = sphi 0, %s95
    %s97 = sphi 0, %s95
    %s98 = sphi 0, %s97
    %s112 = sphi 0, %s98
    %s118 = sphi 0, %s120
    %s121 = sphi 0, %s118
    %s122 = sphi 0, %s121
    %s138 = sphi 0, %s122
    %s144 = sphi 0, %s146
    %s147 = sphi 0, %s144
    %s148 = sphi 0, %s147
    %s164 = sphi 0, %s148
    %s170 = sphi 0, %s172
    %s173 = sphi 0, %s170
    %s174 = sphi 0, %s173
    %s190 = sphi 0, %s174
    %s196 = sphi 0, %s198
    %s199 = sphi 0, %s196
    %s200 = sphi 0, %s199
    %s216 = sphi 0, %s200
    %s222 = sphi 0, %s224
    %s225 = sphi 0, %s222
    %s226 = sphi 0, %s225
    %s242 = sphi 0, %s226
    %s248 = sphi 0, %s250
    %s251 = sphi 0, %s248
    %s252 = sphi 0, %s251
    %s268 = sphi 0, %s252
    %s274 = sphi 0, %s276
    %s277 = sphi 0, %s274
    %s278 = sphi 0, %s277
    %s294 = sphi 0, %s278
    %s300 = sphi 0, %s302
    %s303 = sphi 0, %s300
    %s304 = sphi 0, %s303
    %s320 = sphi 0, %s304
    %s326 = sphi 0, %s328
    %s329 = sphi 0, %s326
    %s330 = sphi 0, %s329
    %s346 = sphi 0, %s330
    %s352 = sphi 0, %s354
    %s355 = sphi 0, %s352
    %s356 = sphi 0, %s355
    %s372 = sphi 0, %s356
    %s378 = sphi 0, %s380
    %s381 = sphi 0, %s378
    %s382 = sphi 0, %s381
    %s398 = sphi 0, %s382
    %s404 = sphi 0, %s406
    %s407 = sphi 0, %s404
    %s408 = sphi 0, %s407
    %s424 = sphi 0, %s408
    %s430 = sphi 0, %s432
    %s433 = sphi 0, %s430
    %s434 = sphi 0, %s433
    %s450 = sphi 0, %s434
    %s454 = sphi 0, %s454
    %s456 = sphi 0, %s454
    %s457 = sphi 0, %s456
    %s471 = sphi 0, %s457
    %s477 = sphi 0, %s479
    %s480 = sphi 0, %s477
    %s481 = sphi 0, %s480
    %s497 = sphi 0, %s481
  $region4: #{conditional_detr_transformer.3} parent=0 // loop_header_branch
    %27 = sbr.rel (%p25) target = $region8
  $region5: #{conditional_detr_transformer.3} parent=0 // loop_body
    %s29 = ssub.s32 %s24, 1
    %s30 = ssub.s32 %s24, 2
    %s31 = sadd.s32 %s24, 1
    %s33 = sadd.s32 %s32, 1
    %p36 = scmp.eq.s32.totalorder %s24, 1
    %p37 = scmp.ne.s32.totalorder %s32, %s34
    %p38 = scmp.eq.s32.totalorder %s24, 0
    %p39 = por %p37, %p38
    %p40 = scmp.ne.s32.totalorder %s32, %s34
    %p41 = scmp.eq.s32.totalorder %s29, 1
    %p42 = por %p40, %p41
    %p43 = scmp.ne.s32.totalorder %s34, %s35
    %p44 = scmp.eq.s32.totalorder %s29, 0
    %p45 = por %p43, %p44
    %p46 = scmp.ne.s32.totalorder %s34, %s35
    %p47 = scmp.eq.s32.totalorder %s30, 1
    %p48 = por %p46, %p47
    %p50 = scmp.ne.s32.totalorder %s35, %s49
    %p51 = scmp.eq.s32.totalorder %s30, 0
    %p52 = por %p50, %p51
    %s54 = sadd.s32 %s53, 1
    %p57 = scmp.eq.s32.totalorder %s24, 1
    %p58 = scmp.ne.s32.totalorder %s53, %s55
    %p59 = scmp.eq.s32.totalorder %s24, 0
    %p60 = por %p58, %p59
    %p61 = scmp.ne.s32.totalorder %s53, %s55
    %p62 = scmp.eq.s32.totalorder %s29, 1
    %p63 = por %p61, %p62
    %p64 = scmp.ne.s32.totalorder %s55, %s56
    %p65 = scmp.eq.s32.totalorder %s29, 0
    %p66 = por %p64, %p65
    %p67 = scmp.ne.s32.totalorder %s55, %s56
    %p68 = scmp.eq.s32.totalorder %s30, 1
    %p69 = por %p67, %p68
    %p71 = scmp.ne.s32.totalorder %s56, %s70
    %p72 = scmp.eq.s32.totalorder %s30, 0
    %p73 = por %p71, %p72
    %s75 = sadd.s32 %s74, 1
    %p78 = scmp.eq.s32.totalorder %s24, 1
    %p79 = scmp.ne.s32.totalorder %s74, %s76
    %p80 = scmp.eq.s32.totalorder %s24, 0
    %p81 = por %p79, %p80
    %p82 = scmp.ne.s32.totalorder %s74, %s76
    %p83 = scmp.eq.s32.totalorder %s29, 1
    %p84 = por %p82, %p83
    %p85 = scmp.ne.s32.totalorder %s76, %s77
    %p86 = scmp.eq.s32.totalorder %s29, 0
    %p87 = por %p85, %p86
    %p88 = scmp.ne.s32.totalorder %s76, %s77
    %p89 = scmp.eq.s32.totalorder %s30, 1
    %p90 = por %p88, %p89
    %p92 = scmp.ne.s32.totalorder %s77, %s91
    %p93 = scmp.eq.s32.totalorder %s30, 0
    %p94 = por %p92, %p93
    %s96 = sadd.s32 %s95, 1
    %p99 = scmp.eq.s32.totalorder %s24, 1
    %p100 = scmp.ne.s32.totalorder %s95, %s97
    %p101 = scmp.eq.s32.totalorder %s24, 0
    %p102 = por %p100, %p101
    %p103 = scmp.ne.s32.totalorder %s95, %s97
    %p104 = scmp.eq.s32.totalorder %s29, 1
    %p105 = por %p103, %p104
    %p106 = scmp.ne.s32.totalorder %s97, %s98
    %p107 = scmp.eq.s32.totalorder %s29, 0
    %p108 = por %p106, %p107
    %p109 = scmp.ne.s32.totalorder %s97, %s98
    %p110 = scmp.eq.s32.totalorder %s30, 1
    %p111 = por %p109, %p110
    %p113 = scmp.ne.s32.totalorder %s98, %s112
    %p114 = scmp.eq.s32.totalorder %s30, 0
    %p115 = por %p113, %p114
    %s116 = ssub.s32 %s24, %s31
    %p117 = scmp.eq.s32.totalorder %s116, 0
    %s119 = sadd.s32 %s118, 1
    %s120 = scalar_select %p117, %s118, %s119
    %p123 = pneg %p117
    %p124 = scmp.eq.s32.totalorder %s24, 1
    %p125 = por %p123, %p124
    %p126 = scmp.ne.s32.totalorder %s118, %s121
    %p127 = scmp.eq.s32.totalorder %s24, 0
    %p128 = por %p126, %p127
    %p129 = scmp.ne.s32.totalorder %s118, %s121
    %p130 = scmp.eq.s32.totalorder %s29, 1
    %p131 = por %p129, %p130
    %p132 = scmp.ne.s32.totalorder %s121, %s122
    %p133 = scmp.eq.s32.totalorder %s29, 0
    %p134 = por %p132, %p133
    %p135 = scmp.ne.s32.totalorder %s121, %s122
    %p136 = scmp.eq.s32.totalorder %s30, 1
    %p137 = por %p135, %p136
    %p139 = scmp.ne.s32.totalorder %s122, %s138
    %p140 = scmp.eq.s32.totalorder %s30, 0
    %p141 = por %p139, %p140
    %s142 = ssub.s32 %s24, %s31
    %p143 = scmp.eq.s32.totalorder %s142, 0
    %s145 = sadd.s32 %s144, 1
    %s146 = scalar_select %p143, %s144, %s145
    %p149 = pneg %p143
    %p150 = scmp.eq.s32.totalorder %s24, 1
    %p151 = por %p149, %p150
    %p152 = scmp.ne.s32.totalorder %s144, %s147
    %p153 = scmp.eq.s32.totalorder %s24, 0
    %p154 = por %p152, %p153
    %p155 = scmp.ne.s32.totalorder %s144, %s147
    %p156 = scmp.eq.s32.totalorder %s29, 1
    %p157 = por %p155, %p156
    %p158 = scmp.ne.s32.totalorder %s147, %s148
    %p159 = scmp.eq.s32.totalorder %s29, 0
    %p160 = por %p158, %p159
    %p161 = scmp.ne.s32.totalorder %s147, %s148
    %p162 = scmp.eq.s32.totalorder %s30, 1
    %p163 = por %p161, %p162
    %p165 = scmp.ne.s32.totalorder %s148, %s164
    %p166 = scmp.eq.s32.totalorder %s30, 0
    %p167 = por %p165, %p166
    %s168 = ssub.s32 %s24, %s31
    %p169 = scmp.eq.s32.totalorder %s168, 0
    %s171 = sadd.s32 %s170, 1
    %s172 = scalar_select %p169, %s170, %s171
    %p175 = pneg %p169
    %p176 = scmp.eq.s32.totalorder %s24, 1
    %p177 = por %p175, %p176
    %p178 = scmp.ne.s32.totalorder %s170, %s173
    %p179 = scmp.eq.s32.totalorder %s24, 0
    %p180 = por %p178, %p179
    %p181 = scmp.ne.s32.totalorder %s170, %s173
    %p182 = scmp.eq.s32.totalorder %s29, 1
    %p183 = por %p181, %p182
    %p184 = scmp.ne.s32.totalorder %s173, %s174
    %p185 = scmp.eq.s32.totalorder %s29, 0
    %p186 = por %p184, %p185
    %p187 = scmp.ne.s32.totalorder %s173, %s174
    %p188 = scmp.eq.s32.totalorder %s30, 1
    %p189 = por %p187, %p188
    %p191 = scmp.ne.s32.totalorder %s174, %s190
    %p192 = scmp.eq.s32.totalorder %s30, 0
    %p193 = por %p191, %p192
    %s194 = ssub.s32 %s24, %s31
    %p195 = scmp.eq.s32.totalorder %s194, 0
    %s197 = sadd.s32 %s196, 1
    %s198 = scalar_select %p195, %s196, %s197
    %p201 = pneg %p195
    %p202 = scmp.eq.s32.totalorder %s24, 1
    %p203 = por %p201, %p202
    %p204 = scmp.ne.s32.totalorder %s196, %s199
    %p205 = scmp.eq.s32.totalorder %s24, 0
    %p206 = por %p204, %p205
    %p207 = scmp.ne.s32.totalorder %s196, %s199
    %p208 = scmp.eq.s32.totalorder %s29, 1
    %p209 = por %p207, %p208
    %p210 = scmp.ne.s32.totalorder %s199, %s200
    %p211 = scmp.eq.s32.totalorder %s29, 0
    %p212 = por %p210, %p211
    %p213 = scmp.ne.s32.totalorder %s199, %s200
    %p214 = scmp.eq.s32.totalorder %s30, 1
    %p215 = por %p213, %p214
    %p217 = scmp.ne.s32.totalorder %s200, %s216
    %p218 = scmp.eq.s32.totalorder %s30, 0
    %p219 = por %p217, %p218
    %s220 = ssub.s32 %s24, %s31
    %p221 = scmp.eq.s32.totalorder %s220, 0
    %s223 = sadd.s32 %s222, 1
    %s224 = scalar_select %p221, %s222, %s223
    %p227 = pneg %p221
    %p228 = scmp.eq.s32.totalorder %s24, 1
    %p229 = por %p227, %p228
    %p230 = scmp.ne.s32.totalorder %s222, %s225
    %p231 = scmp.eq.s32.totalorder %s24, 0
    %p232 = por %p230, %p231
    %p233 = scmp.ne.s32.totalorder %s222, %s225
    %p234 = scmp.eq.s32.totalorder %s29, 1
    %p235 = por %p233, %p234
    %p236 = scmp.ne.s32.totalorder %s225, %s226
    %p237 = scmp.eq.s32.totalorder %s29, 0
    %p238 = por %p236, %p237
    %p239 = scmp.ne.s32.totalorder %s225, %s226
    %p240 = scmp.eq.s32.totalorder %s30, 1
    %p241 = por %p239, %p240
    %p243 = scmp.ne.s32.totalorder %s226, %s242
    %p244 = scmp.eq.s32.totalorder %s30, 0
    %p245 = por %p243, %p244
    %s246 = ssub.s32 %s24, %s31
    %p247 = scmp.eq.s32.totalorder %s246, 0
    %s249 = sadd.s32 %s248, 1
    %s250 = scalar_select %p247, %s248, %s249
    %p253 = pneg %p247
    %p254 = scmp.eq.s32.totalorder %s24, 1
    %p255 = por %p253, %p254
    %p256 = scmp.ne.s32.totalorder %s248, %s251
    %p257 = scmp.eq.s32.totalorder %s24, 0
    %p258 = por %p256, %p257
    %p259 = scmp.ne.s32.totalorder %s248, %s251
    %p260 = scmp.eq.s32.totalorder %s29, 1
    %p261 = por %p259, %p260
    %p262 = scmp.ne.s32.totalorder %s251, %s252
    %p263 = scmp.eq.s32.totalorder %s29, 0
    %p264 = por %p262, %p263
    %p265 = scmp.ne.s32.totalorder %s251, %s252
    %p266 = scmp.eq.s32.totalorder %s30, 1
    %p267 = por %p265, %p266
    %p269 = scmp.ne.s32.totalorder %s252, %s268
    %p270 = scmp.eq.s32.totalorder %s30, 0
    %p271 = por %p269, %p270
    %s272 = ssub.s32 %s24, %s31
    %p273 = scmp.eq.s32.totalorder %s272, 0
    %s275 = sadd.s32 %s274, 1
    %s276 = scalar_select %p273, %s274, %s275
    %p279 = pneg %p273
    %p280 = scmp.eq.s32.totalorder %s24, 1
    %p281 = por %p279, %p280
    %p282 = scmp.ne.s32.totalorder %s274, %s277
    %p283 = scmp.eq.s32.totalorder %s24, 0
    %p284 = por %p282, %p283
    %p285 = scmp.ne.s32.totalorder %s274, %s277
    %p286 = scmp.eq.s32.totalorder %s29, 1
    %p287 = por %p285, %p286
    %p288 = scmp.ne.s32.totalorder %s277, %s278
    %p289 = scmp.eq.s32.totalorder %s29, 0
    %p290 = por %p288, %p289
    %p291 = scmp.ne.s32.totalorder %s277, %s278
    %p292 = scmp.eq.s32.totalorder %s30, 1
    %p293 = por %p291, %p292
    %p295 = scmp.ne.s32.totalorder %s278, %s294
    %p296 = scmp.eq.s32.totalorder %s30, 0
    %p297 = por %p295, %p296
    %s298 = ssub.s32 %s24, %s31
    %p299 = scmp.eq.s32.totalorder %s298, 0
    %s301 = sadd.s32 %s300, 1
    %s302 = scalar_select %p299, %s300, %s301
    %p305 = pneg %p299
    %p306 = scmp.eq.s32.totalorder %s24, 1
    %p307 = por %p305, %p306
    %p308 = scmp.ne.s32.totalorder %s300, %s303
    %p309 = scmp.eq.s32.totalorder %s24, 0
    %p310 = por %p308, %p309
    %p311 = scmp.ne.s32.totalorder %s300, %s303
    %p312 = scmp.eq.s32.totalorder %s29, 1
    %p313 = por %p311, %p312
    %p314 = scmp.ne.s32.totalorder %s303, %s304
    %p315 = scmp.eq.s32.totalorder %s29, 0
    %p316 = por %p314, %p315
    %p317 = scmp.ne.s32.totalorder %s303, %s304
    %p318 = scmp.eq.s32.totalorder %s30, 1
    %p319 = por %p317, %p318
    %p321 = scmp.ne.s32.totalorder %s304, %s320
    %p322 = scmp.eq.s32.totalorder %s30, 0
    %p323 = por %p321, %p322
    %s324 = ssub.s32 %s24, %s31
    %p325 = scmp.eq.s32.totalorder %s324, 0
    %s327 = sadd.s32 %s326, 1
    %s328 = scalar_select %p325, %s326, %s327
    %p331 = pneg %p325
    %p332 = scmp.eq.s32.totalorder %s24, 1
    %p333 = por %p331, %p332
    %p334 = scmp.ne.s32.totalorder %s326, %s329
    %p335 = scmp.eq.s32.totalorder %s24, 0
    %p336 = por %p334, %p335
    %p337 = scmp.ne.s32.totalorder %s326, %s329
    %p338 = scmp.eq.s32.totalorder %s29, 1
    %p339 = por %p337, %p338
    %p340 = scmp.ne.s32.totalorder %s329, %s330
    %p341 = scmp.eq.s32.totalorder %s29, 0
    %p342 = por %p340, %p341
    %p343 = scmp.ne.s32.totalorder %s329, %s330
    %p344 = scmp.eq.s32.totalorder %s30, 1
    %p345 = por %p343, %p344
    %p347 = scmp.ne.s32.totalorder %s330, %s346
    %p348 = scmp.eq.s32.totalorder %s30, 0
    %p349 = por %p347, %p348
    %s350 = ssub.s32 %s24, %s31
    %p351 = scmp.eq.s32.totalorder %s350, 0
    %s353 = sadd.s32 %s352, 1
    %s354 = scalar_select %p351, %s352, %s353
    %p357 = pneg %p351
    %p358 = scmp.eq.s32.totalorder %s24, 1
    %p359 = por %p357, %p358
    %p360 = scmp.ne.s32.totalorder %s352, %s355
    %p361 = scmp.eq.s32.totalorder %s24, 0
    %p362 = por %p360, %p361
    %p363 = scmp.ne.s32.totalorder %s352, %s355
    %p364 = scmp.eq.s32.totalorder %s29, 1
    %p365 = por %p363, %p364
    %p366 = scmp.ne.s32.totalorder %s355, %s356
    %p367 = scmp.eq.s32.totalorder %s29, 0
    %p368 = por %p366, %p367
    %p369 = scmp.ne.s32.totalorder %s355, %s356
    %p370 = scmp.eq.s32.totalorder %s30, 1
    %p371 = por %p369, %p370
    %p373 = scmp.ne.s32.totalorder %s356, %s372
    %p374 = scmp.eq.s32.totalorder %s30, 0
    %p375 = por %p373, %p374
    %s376 = ssub.s32 %s24, %s31
    %p377 = scmp.eq.s32.totalorder %s376, 0
    %s379 = sadd.s32 %s378, 1
    %s380 = scalar_select %p377, %s378, %s379
    %p383 = pneg %p377
    %p384 = scmp.eq.s32.totalorder %s24, 1
    %p385 = por %p383, %p384
    %p386 = scmp.ne.s32.totalorder %s378, %s381
    %p387 = scmp.eq.s32.totalorder %s24, 0
    %p388 = por %p386, %p387
    %p389 = scmp.ne.s32.totalorder %s378, %s381
    %p390 = scmp.eq.s32.totalorder %s29, 1
    %p391 = por %p389, %p390
    %p392 = scmp.ne.s32.totalorder %s381, %s382
    %p393 = scmp.eq.s32.totalorder %s29, 0
    %p394 = por %p392, %p393
    %p395 = scmp.ne.s32.totalorder %s381, %s382
    %p396 = scmp.eq.s32.totalorder %s30, 1
    %p397 = por %p395, %p396
    %p399 = scmp.ne.s32.totalorder %s382, %s398
    %p400 = scmp.eq.s32.totalorder %s30, 0
    %p401 = por %p399, %p400
    %s402 = ssub.s32 %s24, %s31
    %p403 = scmp.eq.s32.totalorder %s402, 0
    %s405 = sadd.s32 %s404, 1
    %s406 = scalar_select %p403, %s404, %s405
    %p409 = pneg %p403
    %p410 = scmp.eq.s32.totalorder %s24, 1
    %p411 = por %p409, %p410
    %p412 = scmp.ne.s32.totalorder %s404, %s407
    %p413 = scmp.eq.s32.totalorder %s24, 0
    %p414 = por %p412, %p413
    %p415 = scmp.ne.s32.totalorder %s404, %s407
    %p416 = scmp.eq.s32.totalorder %s29, 1
    %p417 = por %p415, %p416
    %p418 = scmp.ne.s32.totalorder %s407, %s408
    %p419 = scmp.eq.s32.totalorder %s29, 0
    %p420 = por %p418, %p419
    %p421 = scmp.ne.s32.totalorder %s407, %s408
    %p422 = scmp.eq.s32.totalorder %s30, 1
    %p423 = por %p421, %p422
    %p425 = scmp.ne.s32.totalorder %s408, %s424
    %p426 = scmp.eq.s32.totalorder %s30, 0
    %p427 = por %p425, %p426
    %s428 = ssub.s32 %s24, %s31
    %p429 = scmp.eq.s32.totalorder %s428, 0
    %s431 = sadd.s32 %s430, 1
    %s432 = scalar_select %p429, %s430, %s431
    %p435 = pneg %p429
    %p436 = scmp.eq.s32.totalorder %s24, 1
    %p437 = por %p435, %p436
    %p438 = scmp.ne.s32.totalorder %s430, %s433
    %p439 = scmp.eq.s32.totalorder %s24, 0
    %p440 = por %p438, %p439
    %p441 = scmp.ne.s32.totalorder %s430, %s433
    %p442 = scmp.eq.s32.totalorder %s29, 1
    %p443 = por %p441, %p442
    %p444 = scmp.ne.s32.totalorder %s433, %s434
    %p445 = scmp.eq.s32.totalorder %s29, 0
    %p446 = por %p444, %p445
    %p447 = scmp.ne.s32.totalorder %s433, %s434
    %p448 = scmp.eq.s32.totalorder %s30, 1
    %p449 = por %p447, %p448
    %p451 = scmp.ne.s32.totalorder %s434, %s450
    %p452 = scmp.eq.s32.totalorder %s30, 0
    %p453 = por %p451, %p452
    %s455 = sadd.s32 %s454, 1
    %p458 = scmp.eq.s32.totalorder %s24, 1
    %p459 = scmp.ne.s32.totalorder %s454, %s456
    %p460 = scmp.eq.s32.totalorder %s24, 0
    %p461 = por %p459, %p460
    %p462 = scmp.ne.s32.totalorder %s454, %s456
    %p463 = scmp.eq.s32.totalorder %s29, 1
    %p464 = por %p462, %p463
    %p465 = scmp.ne.s32.totalorder %s456, %s457
    %p466 = scmp.eq.s32.totalorder %s29, 0
    %p467 = por %p465, %p466
    %p468 = scmp.ne.s32.totalorder %s456, %s457
    %p469 = scmp.eq.s32.totalorder %s30, 1
    %p470 = por %p468, %p469
    %p472 = scmp.ne.s32.totalorder %s457, %s471
    %p473 = scmp.eq.s32.totalorder %s30, 0
    %p474 = por %p472, %p473
    %s475 = ssub.s32 %s24, %s31
    %p476 = scmp.eq.s32.totalorder %s475, 0
    %s478 = sadd.s32 %s477, 1
    %s479 = scalar_select %p476, %s477, %s478
    %p482 = pneg %p476
    %p483 = scmp.eq.s32.totalorder %s24, 1
    %p484 = por %p482, %p483
    %p485 = scmp.ne.s32.totalorder %s477, %s480
    %p486 = scmp.eq.s32.totalorder %s24, 0
    %p487 = por %p485, %p486
    %p488 = scmp.ne.s32.totalorder %s477, %s480
    %p489 = scmp.eq.s32.totalorder %s29, 1
    %p490 = por %p488, %p489
    %p491 = scmp.ne.s32.totalorder %s480, %s481
    %p492 = scmp.eq.s32.totalorder %s29, 0
    %p493 = por %p491, %p492
    %p494 = scmp.ne.s32.totalorder %s480, %s481
    %p495 = scmp.eq.s32.totalorder %s30, 1
    %p496 = por %p494, %p495
    %p498 = scmp.ne.s32.totalorder %s481, %s497
    %p499 = scmp.eq.s32.totalorder %s30, 0
    %p500 = por %p498, %p499
    %p501 = scmp.le.s32.totalorder 1, %s24
    %p502 = scmp.lt.s32.totalorder %s24, 3
    %p503 = pnand %p501, %p502
    %p504 = pneg %p503
    // Predicated region
    $region9: #{conditional_detr_transformer.3} parent=5 // pred_check
      _
    $region10: #{conditional_detr_transformer.3} parent=5 // pred_check_branch
      %506 = sbr.rel (%p503) target = $region12
    $region11: #{conditional_detr_transformer.3} parent=5 // pred_region
      %s507 = ssub.s32 %s24, 1
      // Predicated region
      $region13: #{conditional_detr_transformer.3} parent=11 // pred_check
        %p508 = pneg %p45
      $region14: #{conditional_detr_transformer.3} parent=11 // pred_check_branch
        %510 = sbr.rel (%p508) target = $region16
      $region15: #{conditional_detr_transformer.3} parent=11 // pred_region
        _
      $region16: #{conditional_detr_transformer.3} parent=11 // pred_fallthru
        _
      // Predicated region
      $region17: #{conditional_detr_transformer.3} parent=11 // pred_check
        %p511 = pneg %p66
      $region18: #{conditional_detr_transformer.3} parent=11 // pred_check_branch
        %513 = sbr.rel (%p511) target = $region20
      $region19: #{conditional_detr_transformer.3} parent=11 // pred_region
        _
      $region20: #{conditional_detr_transformer.3} parent=11 // pred_fallthru
        _
      // Predicated region
      $region21: #{conditional_detr_transformer.3} parent=11 // pred_check
        %p514 = pneg %p87
      $region22: #{conditional_detr_transformer.3} parent=11 // pred_check_branch
        %516 = sbr.rel (%p514) target = $region24
      $region23: #{conditional_detr_transformer.3} parent=11 // pred_region
        _
      $region24: #{conditional_detr_transformer.3} parent=11 // pred_fallthru
        _
      // Predicated region
      $region25: #{conditional_detr_transformer.3} parent=11 // pred_check
        %p517 = pneg %p108
      $region26: #{conditional_detr_transformer.3} parent=11 // pred_check_branch
        %519 = sbr.rel (%p517) target = $region28
      $region27: #{conditional_detr_transformer.3} parent=11 // pred_region
        _
      $region28: #{conditional_detr_transformer.3} parent=11 // pred_fallthru
        _
      // Predicated region
      $region29: #{conditional_detr_transformer.3} parent=11 // pred_check
        %p520 = pneg %p467
      $region30: #{conditional_detr_transformer.3} parent=11 // pred_check_branch
        %522 = sbr.rel (%p520) target = $region32
      $region31: #{conditional_detr_transformer.3} parent=11 // pred_region
        _
      $region32: #{conditional_detr_transformer.3} parent=11 // pred_fallthru
        _
    $region12: #{conditional_detr_transformer.3} parent=5 // pred_fallthru
      _
    %p523 = scmp.lt.s32.totalorder %s24, 2
    // Predicated region
    $region33: #{conditional_detr_transformer.3} parent=5 // pred_check
      %p524 = pneg %p523
    $region34: #{conditional_detr_transformer.3} parent=5 // pred_check_branch
      %526 = sbr.rel (%p524) target = $region36
    $region35: #{conditional_detr_transformer.3} parent=5 // pred_region
      // Predicated region
      $region37: #{conditional_detr_transformer.3} parent=35 // pred_check
        %p527 = pneg %p128
      $region38: #{conditional_detr_transformer.3} parent=35 // pred_check_branch
        %529 = sbr.rel (%p527) target = $region40
      $region39: #{conditional_detr_transformer.3} parent=35 // pred_region
        %p530 = scmp.lt.s32.totalorder %s24, 1
        %s531 = scalar_select %p530, %s24, 1
        %s532 = smul.addr %s531, 4
        %s533 = smul.addr %s532, 4
        %s534 = scalar_lea.vmem %s4, %s533
      $region40: #{conditional_detr_transformer.3} parent=35 // pred_fallthru
        _
      // Predicated region
      $region41: #{conditional_detr_transformer.3} parent=35 // pred_check
        %p535 = pneg %p154
      $region42: #{conditional_detr_transformer.3} parent=35 // pred_check_branch
        %537 = sbr.rel (%p535) target = $region44
      $region43: #{conditional_detr_transformer.3} parent=35 // pred_region
        %p538 = scmp.lt.s32.totalorder %s24, 1
        %s539 = scalar_select %p538, %s24, 1
        %s540 = scalar_lea.vmem %s5, %s539
      $region44: #{conditional_detr_transformer.3} parent=35 // pred_fallthru
        _
      // Predicated region
      $region45: #{conditional_detr_transformer.3} parent=35 // pred_check
        %p541 = pneg %p180
      $region46: #{conditional_detr_transformer.3} parent=35 // pred_check_branch
        %543 = sbr.rel (%p541) target = $region48
      $region47: #{conditional_detr_transformer.3} parent=35 // pred_region
        %p544 = scmp.lt.s32.totalorder %s24, 1
        %s545 = scalar_select %p544, %s24, 1
        %s546 = smul.addr %s545, 4
        %s547 = smul.addr %s546, 4
        %s548 = scalar_lea.vmem %s6, %s547
      $region48: #{conditional_detr_transformer.3} parent=35 // pred_fallthru
        _
      // Predicated region
      $region49: #{conditional_detr_transformer.3} parent=35 // pred_check
        %p549 = pneg %p206
      $region50: #{conditional_detr_transformer.3} parent=35 // pred_check_branch
        %551 = sbr.rel (%p549) target = $region52
      $region51: #{conditional_detr_transformer.3} parent=35 // pred_region
        %p552 = scmp.lt.s32.totalorder %s24, 1
        %s553 = scalar_select %p552, %s24, 1
        %s554 = scalar_lea.vmem %s7, %s553
      $region52: #{conditional_detr_transformer.3} parent=35 // pred_fallthru
        _
      // Predicated region
      $region53: #{conditional_detr_transformer.3} parent=35 // pred_check
        %p555 = pneg %p232
      $region54: #{conditional_detr_transformer.3} parent=35 // pred_check_branch
        %557 = sbr.rel (%p555) target = $region56
      $region55: #{conditional_detr_transformer.3} parent=35 // pred_region
        %p558 = scmp.lt.s32.totalorder %s24, 1
        %s559 = scalar_select %p558, %s24, 1
        %s560 = smul.addr %s559, 4
        %s561 = smul.addr %s560, 4
        %s562 = scalar_lea.vmem %s8, %s561
      $region56: #{conditional_detr_transformer.3} parent=35 // pred_fallthru
        _
      // Predicated region
      $region57: #{conditional_detr_transformer.3} parent=35 // pred_check
        %p563 = pneg %p258
      $region58: #{conditional_detr_transformer.3} parent=35 // pred_check_branch
        %565 = sbr.rel (%p563) target = $region60
      $region59: #{conditional_detr_transformer.3} parent=35 // pred_region
        %p566 = scmp.lt.s32.totalorder %s24, 1
        %s567 = scalar_select %p566, %s24, 1
        %s568 = scalar_lea.vmem %s9, %s567
      $region60: #{conditional_detr_transformer.3} parent=35 // pred_fallthru
        _
      // Predicated region
      $region61: #{conditional_detr_transformer.3} parent=35 // pred_check
        %p569 = pneg %p284
      $region62: #{conditional_detr_transformer.3} parent=35 // pred_check_branch
        %571 = sbr.rel (%p569) target = $region64
      $region63: #{conditional_detr_transformer.3} parent=35 // pred_region
        %p572 = scmp.lt.s32.totalorder %s24, 1
        %s573 = scalar_select %p572, %s24, 1
        %s574 = smul.addr %s573, 4
        %s575 = smul.addr %s574, 4
        %s576 = scalar_lea.vmem %s10, %s575
      $region64: #{conditional_detr_transformer.3} parent=35 // pred_fallthru
        _
      // Predicated region
      $region65: #{conditional_detr_transformer.3} parent=35 // pred_check
        %p577 = pneg %p310
      $region66: #{conditional_detr_transformer.3} parent=35 // pred_check_branch
        %579 = sbr.rel (%p577) target = $region68
      $region67: #{conditional_detr_transformer.3} parent=35 // pred_region
        %p580 = scmp.lt.s32.totalorder %s24, 1
        %s581 = scalar_select %p580, %s24, 1
        %s582 = scalar_lea.vmem %s11, %s581
      $region68: #{conditional_detr_transformer.3} parent=35 // pred_fallthru
        _
      // Predicated region
      $region69: #{conditional_detr_transformer.3} parent=35 // pred_check
        %p583 = pneg %p336
      $region70: #{conditional_detr_transformer.3} parent=35 // pred_check_branch
        %585 = sbr.rel (%p583) target = $region72
      $region71: #{conditional_detr_transformer.3} parent=35 // pred_region
        %p586 = scmp.lt.s32.totalorder %s24, 1
        %s587 = scalar_select %p586, %s24, 1
        %s588 = smul.addr %s587, 4
        %s589 = smul.addr %s588, 4
        %s590 = scalar_lea.vmem %s12, %s589
      $region72: #{conditional_detr_transformer.3} parent=35 // pred_fallthru
        _
      // Predicated region
      $region73: #{conditional_detr_transformer.3} parent=35 // pred_check
        %p591 = pneg %p362
      $region74: #{conditional_detr_transformer.3} parent=35 // pred_check_branch
        %593 = sbr.rel (%p591) target = $region76
      $region75: #{conditional_detr_transformer.3} parent=35 // pred_region
        %p594 = scmp.lt.s32.totalorder %s24, 1
        %s595 = scalar_select %p594, %s24, 1
        %s596 = scalar_lea.vmem %s13, %s595
      $region76: #{conditional_detr_transformer.3} parent=35 // pred_fallthru
        _
      // Predicated region
      $region77: #{conditional_detr_transformer.3} parent=35 // pred_check
        %p597 = pneg %p388
      $region78: #{conditional_detr_transformer.3} parent=35 // pred_check_branch
        %599 = sbr.rel (%p597) target = $region80
      $region79: #{conditional_detr_transformer.3} parent=35 // pred_region
        %p600 = scmp.lt.s32.totalorder %s24, 1
        %s601 = scalar_select %p600, %s24, 1
        %s602 = smul.addr %s601, 8
        %s603 = smul.addr %s602, 4
        %s604 = scalar_lea.vmem %s14, %s603
      $region80: #{conditional_detr_transformer.3} parent=35 // pred_fallthru
        _
      // Predicated region
      $region81: #{conditional_detr_transformer.3} parent=35 // pred_check
        %p605 = pneg %p414
      $region82: #{conditional_detr_transformer.3} parent=35 // pred_check_branch
        %607 = sbr.rel (%p605) target = $region84
      $region83: #{conditional_detr_transformer.3} parent=35 // pred_region
        %p608 = scmp.lt.s32.totalorder %s24, 1
        %s609 = scalar_select %p608, %s24, 1
        %s610 = scalar_lea.vmem %s15, %s609
      $region84: #{conditional_detr_transformer.3} parent=35 // pred_fallthru
        _
      // Predicated region
      $region85: #{conditional_detr_transformer.3} parent=35 // pred_check
        %p611 = pneg %p440
      $region86: #{conditional_detr_transformer.3} parent=35 // pred_check_branch
        %613 = sbr.rel (%p611) target = $region88
      $region87: #{conditional_detr_transformer.3} parent=35 // pred_region
        %p614 = scmp.lt.s32.totalorder %s24, 1
        %s615 = scalar_select %p614, %s24, 1
        %s616 = smul.addr %s615, 8
        %s617 = scalar_lea.vmem %s16, %s616
      $region88: #{conditional_detr_transformer.3} parent=35 // pred_fallthru
        _
    $region36: #{conditional_detr_transformer.3} parent=5 // pred_fallthru
      _
    %p618 = scmp.le.s32.totalorder 1, %s24
    %p619 = scmp.lt.s32.totalorder %s24, 3
    %p620 = pnand %p618, %p619
    %p621 = pneg %p620
    // Predicated region
    $region89: #{conditional_detr_transformer.3} parent=5 // pred_check
      _
    $region90: #{conditional_detr_transformer.3} parent=5 // pred_check_branch
      %623 = sbr.rel (%p620) target = $region92
    $region91: #{conditional_detr_transformer.3} parent=5 // pred_region
      %s624 = ssub.s32 %s24, 1
      %p625 = pneg %p45
      %p626 = pneg %p42
      %p627 = pneg %p66
      %p628 = pneg %p63
      %p629 = pneg %p87
      %p630 = pneg %p84
      %p631 = pneg %p108
      %p632 = pneg %p105
      %p633 = scmp.lt.s32.totalorder %s29, 1
      %s634 = scalar_select %p633, %s29, 1
      %s635 = smul.addr %s634, 4
      %s636 = smul.addr %s635, 4
      %s637 = scalar_lea.vmem %s4, %s636
      %p638 = pneg %p134
      %p639 = pneg %p131
      %p640 = scmp.lt.s32.totalorder %s29, 1
      %s641 = scalar_select %p640, %s29, 1
      %s642 = scalar_lea.vmem %s5, %s641
      %p643 = pneg %p160
      %p644 = pneg %p157
      %p645 = scmp.lt.s32.totalorder %s29, 1
      %s646 = scalar_select %p645, %s29, 1
      %s647 = smul.addr %s646, 4
      %s648 = smul.addr %s647, 4
      %s649 = scalar_lea.vmem %s6, %s648
      %p650 = pneg %p186
      %p651 = pneg %p183
      %p652 = scmp.lt.s32.totalorder %s29, 1
      %s653 = scalar_select %p652, %s29, 1
      %s654 = scalar_lea.vmem %s7, %s653
      %p655 = pneg %p212
      %p656 = pneg %p209
      %p657 = scmp.lt.s32.totalorder %s29, 1
      %s658 = scalar_select %p657, %s29, 1
      %s659 = smul.addr %s658, 4
      %s660 = smul.addr %s659, 4
      %s661 = scalar_lea.vmem %s8, %s660
      %p662 = pneg %p238
      %p663 = pneg %p235
      %p664 = scmp.lt.s32.totalorder %s29, 1
      %s665 = scalar_select %p664, %s29, 1
      %s666 = scalar_lea.vmem %s9, %s665
      %p667 = pneg %p264
      %p668 = pneg %p261
      %p669 = scmp.lt.s32.totalorder %s29, 1
      %s670 = scalar_select %p669, %s29, 1
      %s671 = smul.addr %s670, 4
      %s672 = smul.addr %s671, 4
      %s673 = scalar_lea.vmem %s10, %s672
      %p674 = pneg %p290
      %p675 = pneg %p287
      %p676 = scmp.lt.s32.totalorder %s29, 1
      %s677 = scalar_select %p676, %s29, 1
      %s678 = scalar_lea.vmem %s11, %s677
      %p679 = pneg %p316
      %p680 = pneg %p313
      %p681 = scmp.lt.s32.totalorder %s29, 1
      %s682 = scalar_select %p681, %s29, 1
      %s683 = smul.addr %s682, 4
      %s684 = smul.addr %s683, 4
      %s685 = scalar_lea.vmem %s12, %s684
      %p686 = pneg %p342
      %p687 = pneg %p339
      %p688 = scmp.lt.s32.totalorder %s29, 1
      %s689 = scalar_select %p688, %s29, 1
      %s690 = scalar_lea.vmem %s13, %s689
      %p691 = pneg %p368
      %p692 = pneg %p365
      %p693 = scmp.lt.s32.totalorder %s29, 1
      %s694 = scalar_select %p693, %s29, 1
      %s695 = smul.addr %s694, 8
      %s696 = smul.addr %s695, 4
      %s697 = scalar_lea.vmem %s14, %s696
      %p698 = pneg %p394
      %p699 = pneg %p391
      %p700 = scmp.lt.s32.totalorder %s29, 1
      %s701 = scalar_select %p700, %s29, 1
      %s702 = scalar_lea.vmem %s15, %s701
      %p703 = pneg %p420
      %p704 = pneg %p417
      %p705 = scmp.lt.s32.totalorder %s29, 1
      %s706 = scalar_select %p705, %s29, 1
      %s707 = smul.addr %s706, 8
      %s708 = scalar_lea.vmem %s16, %s707
      %p709 = pneg %p446
      %p710 = pneg %p443
      %p711 = pneg %p467
      %p712 = pneg %p464
      %p713 = pneg %p493
      %p714 = pneg %p490
      %p715 = scmp.lt.s32.totalorder %s29, 1
      %s716 = scalar_select %p715, %s29, 1
      %s717 = smul.addr %s716, 2
      %s718 = smul.addr %s717, 8
      %s719 = scalar_lea.vmem %s18, %s718
      %p720 = scmp.lt.s32.totalorder %s29, 1
      %s721 = scalar_select %p720, %s29, 1
      %s722 = smul.addr %s721, 4
      %s723 = smul.addr %s722, 4
      %s724 = scalar_lea.vmem %s4, %s723
      %p725 = scmp.lt.s32.totalorder %s29, 1
      %s726 = scalar_select %p725, %s29, 1
      %s727 = scalar_lea.vmem %s5, %s726
      %p728 = scmp.lt.s32.totalorder %s29, 1
      %s729 = scalar_select %p728, %s29, 1
      %s730 = smul.addr %s729, 4
      %s731 = smul.addr %s730, 4
      %s732 = scalar_lea.vmem %s6, %s731
      %p733 = scmp.lt.s32.totalorder %s29, 1
      %s734 = scalar_select %p733, %s29, 1
      %s735 = scalar_lea.vmem %s7, %s734
      %p736 = scmp.lt.s32.totalorder %s29, 1
      %s737 = scalar_select %p736, %s29, 1
      %s738 = smul.addr %s737, 4
      %s739 = smul.addr %s738, 4
      %s740 = scalar_lea.vmem %s8, %s739
      %p741 = scmp.lt.s32.totalorder %s29, 1
      %s742 = scalar_select %p741, %s29, 1
      %s743 = scalar_lea.vmem %s9, %s742
      %p744 = scmp.lt.s32.totalorder %s29, 1
      %s745 = scalar_select %p744, %s29, 1
      %s746 = smul.addr %s745, 4
      %s747 = smul.addr %s746, 4
      %s748 = scalar_lea.vmem %s10, %s747
      %p749 = scmp.lt.s32.totalorder %s29, 1
      %s750 = scalar_select %p749, %s29, 1
      %s751 = scalar_lea.vmem %s11, %s750
      %p752 = scmp.lt.s32.totalorder %s29, 1
      %s753 = scalar_select %p752, %s29, 1
      %s754 = smul.addr %s753, 4
      %s755 = smul.addr %s754, 4
      %s756 = scalar_lea.vmem %s12, %s755
      %p757 = scmp.lt.s32.totalorder %s29, 1
      %s758 = scalar_select %p757, %s29, 1
      %s759 = scalar_lea.vmem %s13, %s758
      %p760 = scmp.lt.s32.totalorder %s29, 1
      %s761 = scalar_select %p760, %s29, 1
      %s762 = smul.addr %s761, 8
      %s763 = smul.addr %s762, 4
      %s764 = scalar_lea.vmem %s14, %s763
      %p765 = scmp.lt.s32.totalorder %s29, 1
      %s766 = scalar_select %p765, %s29, 1
      %s767 = scalar_lea.vmem %s15, %s766
      %p768 = scmp.lt.s32.totalorder %s29, 1
      %s769 = scalar_select %p768, %s29, 1
      %s770 = smul.addr %s769, 8
      %s771 = scalar_lea.vmem %s16, %s770
      %p772 = scmp.lt.s32.totalorder %s29, 1
      %s773 = scalar_select %p772, %s29, 1
      %s774 = smul.addr %s773, 2
      %s775 = smul.addr %s774, 8
      %s776 = scalar_lea.vmem %s18, %s775
      %p778 = scmp.eq.s32.totalorder %s29, 0
      // Predicated region
      $region93: #{conditional_detr_transformer.3} parent=91 // pred_check
        %p779 = pneg %p778
      $region94: #{conditional_detr_transformer.3} parent=91 // pred_check_branch
        %781 = sbr.rel (%p779) target = $region96
      $region95: #{conditional_detr_transformer.3} parent=91 // pred_region
        %vm782 = vcmask 261120
        %783 = vst.msk [vmem:[#allocation2] sm:$0xff] %vm782, 0.0
        %784 = vst.msk [vmem:[#allocation2 + $0x8] sm:$0xff] %vm782, 0.0
        %v785 = vld [vmem:[%s0] sm:$0xff]
        %v786 = vld [vmem:[%s0 + $0x8] sm:$0xff]
        %v787 = vld [vmem:[%s0 + $0x10] sm:$0xff]
        %v788 = vld [vmem:[%s0 + $0x18] sm:$0xff]
        %v789 = vld [vmem:[%s0 + $0x20] sm:$0xff]
        %v790 = vld [vmem:[%s0 + $0x28] sm:$0xff]
        %v791 = vld [vmem:[%s0 + $0x30] sm:$0xff]
        %v792 = vld [vmem:[%s0 + $0x38] sm:$0xff]
        %v793 = vld [vmem:[%s0 + $0x40] sm:$0xff]
        %v794 = vld [vmem:[%s0 + $0x48] sm:$0xff]
        %v795 = vld [vmem:[%s0 + $0x50] sm:$0xff]
        %v796 = vld [vmem:[%s0 + $0x58] sm:$0xff]
        %v797 = vld [vmem:[%s0 + $0x60] sm:$0xff]
        %v798 = vld [vmem:[%s0 + $0x68] sm:$0xff]
        %v799 = vld [vmem:[%s0 + $0x70] sm:$0xff]
        %v800 = vld [vmem:[%s0 + $0x78] sm:$0xff]
        %v801 = vld [vmem:[%s2] sm:$0xff]
        %v802 = vld [vmem:[%s2 + $0x8] sm:$0xff]
        %v803 = vld [vmem:[%s2 + $0x10] sm:$0xff]
        %v804 = vld [vmem:[%s2 + $0x18] sm:$0xff]
        %v805 = vld [vmem:[%s2 + $0x20] sm:$0xff]
        %v806 = vld [vmem:[%s2 + $0x28] sm:$0xff]
        %v807 = vld [vmem:[%s2 + $0x30] sm:$0xff]
        %v808 = vld [vmem:[%s2 + $0x38] sm:$0xff]
        %v809 = vld [vmem:[%s2 + $0x40] sm:$0xff]
        %v810 = vld [vmem:[%s2 + $0x48] sm:$0xff]
        %v811 = vld [vmem:[%s2 + $0x50] sm:$0xff]
        %v812 = vld [vmem:[%s2 + $0x58] sm:$0xff]
        %v813 = vld [vmem:[%s2 + $0x60] sm:$0xff]
        %v814 = vld [vmem:[%s2 + $0x68] sm:$0xff]
        %v815 = vld [vmem:[%s2 + $0x70] sm:$0xff]
        %v816 = vld [vmem:[%s2 + $0x78] sm:$0xff]
        %v817 = vadd.f32 %v785, %v801
        %v818 = vadd.f32 %v786, %v802
        %v819 = vadd.f32 %v787, %v803
        %v820 = vadd.f32 %v788, %v804
        %v821 = vadd.f32 %v789, %v805
        %v822 = vadd.f32 %v790, %v806
        %v823 = vadd.f32 %v791, %v807
        %v824 = vadd.f32 %v792, %v808
        %v825 = vadd.f32 %v793, %v809
        %v826 = vadd.f32 %v794, %v810
        %v827 = vadd.f32 %v795, %v811
        %v828 = vadd.f32 %v796, %v812
        %v829 = vadd.f32 %v797, %v813
        %v830 = vadd.f32 %v798, %v814
        %v831 = vadd.f32 %v799, %v815
        %v832 = vadd.f32 %v800, %v816
        %v833 = vpack.c.bf16 %v818, %v817
        %v834 = vpack.c.bf16 %v820, %v819
        %v835 = vpack.c.bf16 %v822, %v821
        %v836 = vpack.c.bf16 %v824, %v823
        %v837 = vpack.c.bf16 %v826, %v825
        %v838 = vpack.c.bf16 %v828, %v827
        %v839 = vpack.c.bf16 %v830, %v829
        %v840 = vpack.c.bf16 %v832, %v831
        %841 = vst.msk [vmem:[#allocation4] sm:$0xff] %vm782, %v833
        %842 = vst.msk [vmem:[#allocation4 + $0x8] sm:$0xff] %vm782, %v834
        %843 = vst.msk [vmem:[#allocation4 + $0x10] sm:$0xff] %vm782, %v835
        %844 = vst.msk [vmem:[#allocation4 + $0x18] sm:$0xff] %vm782, %v836
        %845 = vst.msk [vmem:[#allocation4 + $0x20] sm:$0xff] %vm782, %v837
        %846 = vst.msk [vmem:[#allocation4 + $0x28] sm:$0xff] %vm782, %v838
        %847 = vst.msk [vmem:[#allocation4 + $0x30] sm:$0xff] %vm782, %v839
        %848 = vst.msk [vmem:[#allocation4 + $0x38] sm:$0xff] %vm782, %v840
        %v849 = vpack.c.bf16 %v786, %v785
        %v850 = vpack.c.bf16 %v788, %v787
        %v851 = vpack.c.bf16 %v790, %v789
        %v852 = vpack.c.bf16 %v792, %v791
        %v853 = vpack.c.bf16 %v794, %v793
        %v854 = vpack.c.bf16 %v796, %v795
        %v855 = vpack.c.bf16 %v798, %v797
        %v856 = vpack.c.bf16 %v800, %v799
        %857 = vst.msk [vmem:[#allocation5] sm:$0xff] %vm782, %v849
        %858 = vst.msk [vmem:[#allocation5 + $0x8] sm:$0xff] %vm782, %v850
        %859 = vst.msk [vmem:[#allocation5 + $0x10] sm:$0xff] %vm782, %v851
        %860 = vst.msk [vmem:[#allocation5 + $0x18] sm:$0xff] %vm782, %v852
        %861 = vst.msk [vmem:[#allocation5 + $0x20] sm:$0xff] %vm782, %v853
        %862 = vst.msk [vmem:[#allocation5 + $0x28] sm:$0xff] %vm782, %v854
        %863 = vst.msk [vmem:[#allocation5 + $0x30] sm:$0xff] %vm782, %v855
        %864 = vst.msk [vmem:[#allocation5 + $0x38] sm:$0xff] %vm782, %v856
      $region96: #{conditional_detr_transformer.3} parent=91 // pred_fallthru
        _
      %v865 = vld [vmem:[#allocation2] sm:$0xff]
      %v866 = vld [vmem:[#allocation2 + $0x8] sm:$0xff]
      %v867 = vld [vmem:[%s1] sm:$0xff]
      %v868 = vld [vmem:[%s1 + $0x8] sm:$0xff]
      %v869 = vld [vmem:[%s3] sm:$0x1]
      %v870 = vld [vmem:[%s3 + $0x1] sm:$0x1]
      %v871 = vld [vmem:[%s771] sm:$0x3f]
      %v872 = vld [vmem:[%s17] sm:$0x3]
      %v873 = vadd.f32 %v865, %v867
      %v874 = vadd.f32 %v866, %v868
      %v875 = vld [vmem:[%s724] sm:$0xf]
      %v876 = vld [vmem:[%s724 + $0x4] sm:$0xf]
      %v877 = vld [vmem:[%s724 + $0x8] sm:$0xf]
      %v878 = vld [vmem:[%s724 + $0xc] sm:$0xf]
      %v879 = vld [vmem:[%s727] sm:$0x1]
      %v880 = vld [vmem:[%s732] sm:$0xf]
      %v881 = vld [vmem:[%s732 + $0x4] sm:$0xf]
      %v882 = vld [vmem:[%s732 + $0x8] sm:$0xf]
      %v883 = vld [vmem:[%s732 + $0xc] sm:$0xf]
      %v884 = vld [vmem:[%s735] sm:$0x1]
      %v885 = vpack.c.bf16 %v874, %v873
      %v886 = vpack.c.bf16 %v866, %v865
      %v888 = vlaneseq
      %v889 = vshrl.u32 %v888, 7
      %v890 = vsub.s32 0, %v889
      %v891 = vrot.slane %v879, %v890
      %v897 = vunpack.c.l.b16 %v875
      %v898 = vunpack.c.l.b16 %v876
      %v899 = vunpack.c.l.b16 %v877
      %v900 = vunpack.c.l.b16 %v878
      %v901 = vpack.c.b16 %v898, %v897
      %v902 = vpack.c.b16 %v900, %v899
      %vm905 = vcmask 261120
      %v907 = vsel %vm905, %v885, 0
      %909 = vmatprep.subr.bf16.mxu0 0
      %910 = vmatpush1.bf16.msra.mxu0 %v901
      %911 = vmatprep.subr.bf16.mxu0 0
      %912 = vmatpush1.bf16.msra.mxu0 %v902
      %913 = vmatprep.subr.bf16.mxu0 0
      %914 = vmatpush1.bf16.msra.mxu0 0
      %915 = vmatprep.subr.bf16.mxu0 0
      %916 = vmatpush1.bf16.msra.mxu0 0
      %917 = vmatprep.subr.bf16.mxu0 0
      %918 = vmatpush1.bf16.msra.mxu0 0
      %919 = vmatprep.subr.bf16.mxu0 0
      %920 = vmatpush1.bf16.msra.mxu0 0
      %921 = vmatprep.subr.bf16.mxu0 0
      %922 = vmatpush1.bf16.msra.mxu0 0
      %923 = vmatprep.subr.bf16.mxu0 0
      %924 = vmatpush1.bf16.msra.mxu0 0
      %925 = vmatprep.subr.bf16.mxu0 0
      %926 = vmatpush1.bf16.msra.mxu0 0
      %927 = vmatprep.subr.bf16.mxu0 0
      %928 = vmatpush1.bf16.msra.mxu0 0
      %929 = vmatprep.subr.bf16.mxu0 0
      %930 = vmatpush1.bf16.msra.mxu0 0
      %931 = vmatprep.subr.bf16.mxu0 0
      %932 = vmatpush1.bf16.msra.mxu0 0
      %933 = vmatprep.subr.bf16.mxu0 0
      %934 = vmatpush1.bf16.msra.mxu0 0
      %935 = vmatprep.subr.bf16.mxu0 0
      %936 = vmatpush1.bf16.msra.mxu0 0
      %937 = vmatprep.subr.bf16.mxu0 0
      %938 = vmatpush1.bf16.msra.mxu0 0
      %939 = vmatprep.subr.bf16.mxu0 0
      %940 = vmatpush1.bf16.msra.mxu0 0
      %941 = vmatprep.mubr.bf16.mxu0 0
      %942 = vmatmul.mubr.bf16.gmra.mrb[0].mxu0 %v907
      %v943 = vpop.f32.mrb[0].mxu0
      %v944 = vadd.f32 %v891, %v943
      %v945 = vpop.f32.mrb[0].mxu0
      %v946 = vpop.f32.mrb[0].mxu0
      %v947 = vadd.f32 %v891, %v946
      %v948 = vpop.f32.mrb[0].mxu0
      %949 = vdwg.mxu0
      %950 = vrot.lane.b32.xlu0 %v901, 64
      %v951 = vpop.permute.xlu0 %950
      %952 = vrot.lane.b32.xlu0 %v902, 64
      %v953 = vpop.permute.xlu0 %952
      %956 = vrot.lane.b32.xlu0 %v891, 64
      %v957 = vpop.permute.xlu0 %956
      %v960 = vsel %vm905, %v886, 0
      %962 = vmatprep.subr.bf16.mxu0 0
      %963 = vmatpush1.bf16.msra.mxu0 %v951
      %964 = vmatprep.subr.bf16.mxu0 0
      %965 = vmatpush1.bf16.msra.mxu0 %v953
      %966 = vmatprep.subr.bf16.mxu0 0
      %967 = vmatpush1.bf16.msra.mxu0 0
      %968 = vmatprep.subr.bf16.mxu0 0
      %969 = vmatpush1.bf16.msra.mxu0 0
      %970 = vmatprep.subr.bf16.mxu0 0
      %971 = vmatpush1.bf16.msra.mxu0 0
      %972 = vmatprep.subr.bf16.mxu0 0
      %973 = vmatpush1.bf16.msra.mxu0 0
      %974 = vmatprep.subr.bf16.mxu0 0
      %975 = vmatpush1.bf16.msra.mxu0 0
      %976 = vmatprep.subr.bf16.mxu0 0
      %977 = vmatpush1.bf16.msra.mxu0 0
      %978 = vmatprep.subr.bf16.mxu0 0
      %979 = vmatpush1.bf16.msra.mxu0 0
      %980 = vmatprep.subr.bf16.mxu0 0
      %981 = vmatpush1.bf16.msra.mxu0 0
      %982 = vmatprep.subr.bf16.mxu0 0
      %983 = vmatpush1.bf16.msra.mxu0 0
      %984 = vmatprep.subr.bf16.mxu0 0
      %985 = vmatpush1.bf16.msra.mxu0 0
      %986 = vmatprep.subr.bf16.mxu0 0
      %987 = vmatpush1.bf16.msra.mxu0 0
      %988 = vmatprep.subr.bf16.mxu0 0
      %989 = vmatpush1.bf16.msra.mxu0 0
      %990 = vmatprep.subr.bf16.mxu0 0
      %991 = vmatpush1.bf16.msra.mxu0 0
      %992 = vmatprep.subr.bf16.mxu0 0
      %993 = vmatpush1.bf16.msra.mxu0 0
      %994 = vmatprep.mubr.bf16.mxu0 0
      %995 = vmatmul.mubr.bf16.gmra.mrb[0].mxu0 %v960
      %v996 = vpop.f32.mrb[0].mxu0
      %v997 = vadd.f32 %v957, %v996
      %v998 = vpop.f32.mrb[0].mxu0
      %v999 = vpop.f32.mrb[0].mxu0
      %v1000 = vadd.f32 %v957, %v999
      %v1001 = vpop.f32.mrb[0].mxu0
      %1002 = vdwg.mxu0
      %v1003 = vpack.c.bf16 %v947, %v944
      %v1004 = vpack.c.bf16 %v1000, %v997
      %1006 = vrot.lane.b32.xlu0 %v1003, 96
      %v1007 = vpop.permute.xlu0 %1006
      %vm1008 = vcmask 64512
      %v1010 = vsel %vm1008, %v1003, 0
      %v1013 = vsel %vm1008, %v1007, 0
      %1015 = vmatprep.subr.bf16.mxu0 0
      %1016 = vmatpush1.bf16.xpose.msra.mxu0 %v1013
      %1017 = vmatprep.subr.bf16.mxu0 0
      %1018 = vmatpush1.bf16.xpose.msra.mxu0 0
      %1019 = vmatprep.subr.bf16.mxu0 0
      %1020 = vmatpush1.bf16.xpose.msra.mxu0 0
      %1021 = vmatprep.subr.bf16.mxu0 0
      %1022 = vmatpush1.bf16.xpose.msra.mxu0 0
      %1023 = vmatprep.subr.bf16.mxu0 0
      %1024 = vmatpush1.bf16.xpose.msra.mxu0 0
      %1025 = vmatprep.subr.bf16.mxu0 0
      %1026 = vmatpush1.bf16.xpose.msra.mxu0 0
      %1027 = vmatprep.subr.bf16.mxu0 0
      %1028 = vmatpush1.bf16.xpose.msra.mxu0 0
      %1029 = vmatprep.subr.bf16.mxu0 0
      %1030 = vmatpush1.bf16.xpose.msra.mxu0 0
      %1031 = vmatprep.subr.bf16.mxu0 0
      %1032 = vmatpush1.bf16.xpose.msra.mxu0 0
      %1033 = vmatprep.subr.bf16.mxu0 0
      %1034 = vmatpush1.bf16.xpose.msra.mxu0 0
      %1035 = vmatprep.subr.bf16.mxu0 0
      %1036 = vmatpush1.bf16.xpose.msra.mxu0 0
      %1037 = vmatprep.subr.bf16.mxu0 0
      %1038 = vmatpush1.bf16.xpose.msra.mxu0 0
      %1039 = vmatprep.subr.bf16.mxu0 0
      %1040 = vmatpush1.bf16.xpose.msra.mxu0 0
      %1041 = vmatprep.subr.bf16.mxu0 0
      %1042 = vmatpush1.bf16.xpose.msra.mxu0 0
      %1043 = vmatprep.subr.bf16.mxu0 0
      %1044 = vmatpush1.bf16.xpose.msra.mxu0 0
      %1045 = vmatprep.subr.bf16.mxu0 0
      %1046 = vmatpush1.bf16.xpose.msra.mxu0 0
      %1047 = vmatprep.mubr.bf16.mxu0 0
      %1048 = vmatmul.mubr.bf16.gmra.mrb[0].mxu0 %v1010
      %v1049 = vpop.f32.mrb[0].mxu0
      %v1050 = vadd.f32 0.0, %v1049
      %v1051 = vpop.f32.mrb[0].mxu0
      %v1052 = vpop.f32.mrb[0].mxu0
      %v1053 = vpop.f32.mrb[0].mxu0
      %1054 = vdwg.mxu0
      %v1055 = vsel %vm1008, %v1050, -inf
      %1056 = vmax.xlane.f32.xlu0 %v1055
      %v1057 = vpop.xlane.xlu0 %1056
      %v1058 = vsub.f32 %v1050, %v1057
      %v1059 = vmul.f32 %v1058, 1.442695
      %v1060 = vpow.pop %v1059
      %v1061 = vsel %vm1008, %v1060, 0.0
      %1062 = vadd.xlane.f32.xlu0 %v1061
      %v1063 = vpop.xlane.xlu0 %1062
      %v1064 = vrcp.pop %v1063
      %v1065 = vmul.f32 %v1060, %v1064
      %v1066 = vpack.c.bf16 %v1065, %v1065
      %v1068 = vsel %vm1008, %v1066, 0
      %vm1070 = vcmask 1043456
      %v1072 = vsel %vm1070, %v1004, 0
      %1074 = vmatprep.subr.bf16.mxu0 0
      %1075 = vmatpush1.bf16.msra.mxu0 %v1072
      %1076 = vmatprep.subr.bf16.mxu0 0
      %1077 = vmatpush1.bf16.msra.mxu0 0
      %1078 = vmatprep.subr.bf16.mxu0 0
      %1079 = vmatpush1.bf16.msra.mxu0 0
      %1080 = vmatprep.subr.bf16.mxu0 0
      %1081 = vmatpush1.bf16.msra.mxu0 0
      %1082 = vmatprep.subr.bf16.mxu0 0
      %1083 = vmatpush1.bf16.msra.mxu0 0
      %1084 = vmatprep.subr.bf16.mxu0 0
      %1085 = vmatpush1.bf16.msra.mxu0 0
      %1086 = vmatprep.subr.bf16.mxu0 0
      %1087 = vmatpush1.bf16.msra.mxu0 0
      %1088 = vmatprep.subr.bf16.mxu0 0
      %1089 = vmatpush1.bf16.msra.mxu0 0
      %1090 = vmatprep.subr.bf16.mxu0 0
      %1091 = vmatpush1.bf16.msra.mxu0 0
      %1092 = vmatprep.subr.bf16.mxu0 0
      %1093 = vmatpush1.bf16.msra.mxu0 0
      %1094 = vmatprep.subr.bf16.mxu0 0
      %1095 = vmatpush1.bf16.msra.mxu0 0
      %1096 = vmatprep.subr.bf16.mxu0 0
      %1097 = vmatpush1.bf16.msra.mxu0 0
      %1098 = vmatprep.subr.bf16.mxu0 0
      %1099 = vmatpush1.bf16.msra.mxu0 0
      %1100 = vmatprep.subr.bf16.mxu0 0
      %1101 = vmatpush1.bf16.msra.mxu0 0
      %1102 = vmatprep.subr.bf16.mxu0 0
      %1103 = vmatpush1.bf16.msra.mxu0 0
      %1104 = vmatprep.subr.bf16.mxu0 0
      %1105 = vmatpush1.bf16.msra.mxu0 0
      %1106 = vmatprep.mubr.bf16.mxu0 0
      %1107 = vmatmul.mubr.bf16.gmra.mrb[0].mxu0 %v1068
      %v1108 = vpop.f32.mrb[0].mxu0
      %v1109 = vadd.f32 0.0, %v1108
      %v1110 = vpop.f32.mrb[0].mxu0
      %v1111 = vpop.f32.mrb[0].mxu0
      %v1112 = vpop.f32.mrb[0].mxu0
      %1113 = vdwg.mxu0
      %1114 = vst.msk [vmem:[#allocation3] sm:$0xff] %vm1008, %v1109
      %1115 = vrot.lane.b32.xlu0 %v1003, 120
      %v1116 = vpop.permute.xlu0 %1115
      %1117 = vrot.lane.b32.xlu0 %v1003, 88
      %v1118 = vpop.permute.xlu0 %1117
      %v1120 = vsel %vm1008, %v1116, 0
      %v1123 = vsel %vm1008, %v1118, 0
      %1125 = vmatprep.subr.bf16.mxu0 0
      %1126 = vmatpush1.bf16.xpose.msra.mxu0 %v1123
      %1127 = vmatprep.subr.bf16.mxu0 0
      %1128 = vmatpush1.bf16.xpose.msra.mxu0 0
      %1129 = vmatprep.subr.bf16.mxu0 0
      %1130 = vmatpush1.bf16.xpose.msra.mxu0 0
      %1131 = vmatprep.subr.bf16.mxu0 0
      %1132 = vmatpush1.bf16.xpose.msra.mxu0 0
      %1133 = vmatprep.subr.bf16.mxu0 0
      %1134 = vmatpush1.bf16.xpose.msra.mxu0 0
      %1135 = vmatprep.subr.bf16.mxu0 0
      %1136 = vmatpush1.bf16.xpose.msra.mxu0 0
      %1137 = vmatprep.subr.bf16.mxu0 0
      %1138 = vmatpush1.bf16.xpose.msra.mxu0 0
      %1139 = vmatprep.subr.bf16.mxu0 0
      %1140 = vmatpush1.bf16.xpose.msra.mxu0 0
      %1141 = vmatprep.subr.bf16.mxu0 0
      %1142 = vmatpush1.bf16.xpose.msra.mxu0 0
      %1143 = vmatprep.subr.bf16.mxu0 0
      %1144 = vmatpush1.bf16.xpose.msra.mxu0 0
      %1145 = vmatprep.subr.bf16.mxu0 0
      %1146 = vmatpush1.bf16.xpose.msra.mxu0 0
      %1147 = vmatprep.subr.bf16.mxu0 0
      %1148 = vmatpush1.bf16.xpose.msra.mxu0 0
      %1149 = vmatprep.subr.bf16.mxu0 0
      %1150 = vmatpush1.bf16.xpose.msra.mxu0 0
      %1151 = vmatprep.subr.bf16.mxu0 0
      %1152 = vmatpush1.bf16.xpose.msra.mxu0 0
      %1153 = vmatprep.subr.bf16.mxu0 0
      %1154 = vmatpush1.bf16.xpose.msra.mxu0 0
      %1155 = vmatprep.subr.bf16.mxu0 0
      %1156 = vmatpush1.bf16.xpose.msra.mxu0 0
      %1157 = vmatprep.mubr.bf16.mxu0 0
      %1158 = vmatmul.mubr.bf16.gmra.mrb[0].mxu0 %v1120
      %v1159 = vpop.f32.mrb[0].mxu0
      %v1160 = vadd.f32 0.0, %v1159
      %v1161 = vpop.f32.mrb[0].mxu0
      %v1162 = vpop.f32.mrb[0].mxu0
      %v1163 = vpop.f32.mrb[0].mxu0
      %1164 = vdwg.mxu0
      %v1165 = vsel %vm1008, %v1160, -inf
      %1166 = vmax.xlane.f32.xlu0 %v1165
      %v1167 = vpop.xlane.xlu0 %1166
      %v1168 = vsub.f32 %v1160, %v1167
      %v1169 = vmul.f32 %v1168, 1.442695
      %v1170 = vpow.pop %v1169
      %v1171 = vsel %vm1008, %v1170, 0.0
      %1172 = vadd.xlane.f32.xlu0 %v1171
      %v1173 = vpop.xlane.xlu0 %1172
      %v1174 = vrcp.pop %v1173
      %v1175 = vmul.f32 %v1170, %v1174
      %v1176 = vpack.c.bf16 %v1175, %v1175
      %1178 = vrot.lane.b32.xlu0 %v1004, 120
      %v1179 = vpop.permute.xlu0 %1178
      %v1181 = vsel %vm1008, %v1176, 0
      %v1184 = vsel %vm1070, %v1179, 0
      %1186 = vmatprep.subr.bf16.mxu0 0
      %1187 = vmatpush1.bf16.msra.mxu0 %v1184
      %1188 = vmatprep.subr.bf16.mxu0 0
      %1189 = vmatpush1.bf16.msra.mxu0 0
      %1190 = vmatprep.subr.bf16.mxu0 0
      %1191 = vmatpush1.bf16.msra.mxu0 0
      %1192 = vmatprep.subr.bf16.mxu0 0
      %1193 = vmatpush1.bf16.msra.mxu0 0
      %1194 = vmatprep.subr.bf16.mxu0 0
      %1195 = vmatpush1.bf16.msra.mxu0 0
      %1196 = vmatprep.subr.bf16.mxu0 0
      %1197 = vmatpush1.bf16.msra.mxu0 0
      %1198 = vmatprep.subr.bf16.mxu0 0
      %1199 = vmatpush1.bf16.msra.mxu0 0
      %1200 = vmatprep.subr.bf16.mxu0 0
      %1201 = vmatpush1.bf16.msra.mxu0 0
      %1202 = vmatprep.subr.bf16.mxu0 0
      %1203 = vmatpush1.bf16.msra.mxu0 0
      %1204 = vmatprep.subr.bf16.mxu0 0
      %1205 = vmatpush1.bf16.msra.mxu0 0
      %1206 = vmatprep.subr.bf16.mxu0 0
      %1207 = vmatpush1.bf16.msra.mxu0 0
      %1208 = vmatprep.subr.bf16.mxu0 0
      %1209 = vmatpush1.bf16.msra.mxu0 0
      %1210 = vmatprep.subr.bf16.mxu0 0
      %1211 = vmatpush1.bf16.msra.mxu0 0
      %1212 = vmatprep.subr.bf16.mxu0 0
      %1213 = vmatpush1.bf16.msra.mxu0 0
      %1214 = vmatprep.subr.bf16.mxu0 0
      %1215 = vmatpush1.bf16.msra.mxu0 0
      %1216 = vmatprep.subr.bf16.mxu0 0
      %1217 = vmatpush1.bf16.msra.mxu0 0
      %1218 = vmatprep.mubr.bf16.mxu0 0
      %1219 = vmatmul.mubr.bf16.gmra.mrb[0].mxu0 %v1181
      %v1220 = vpop.f32.mrb[0].mxu0
      %v1221 = vadd.f32 0.0, %v1220
      %v1222 = vpop.f32.mrb[0].mxu0
      %v1223 = vpop.f32.mrb[0].mxu0
      %v1224 = vpop.f32.mrb[0].mxu0
      %1225 = vdwg.mxu0
      %1227 = vrot.lane.b32.xlu0 %v1221, 8
      %v1228 = vpop.permute.xlu0 %1227
      %vm1230 = vcmask 130112
      %1231 = vst.msk [vmem:[#allocation3] sm:$0xff] %vm1230, %v1228
      %1232 = vrot.lane.b32.xlu0 %v1003, 112
      %v1233 = vpop.permute.xlu0 %1232
      %1234 = vrot.lane.b32.xlu0 %v1003, 80
      %v1235 = vpop.permute.xlu0 %1234
      %v1237 = vsel %vm1008, %v1233, 0
      %v1240 = vsel %vm1008, %v1235, 0
      %1242 = vmatprep.subr.bf16.mxu0 0
      %1243 = vmatpush1.bf16.xpose.msra.mxu0 %v1240
      %1244 = vmatprep.subr.bf16.mxu0 0
      %1245 = vmatpush1.bf16.xpose.msra.mxu0 0
      %1246 = vmatprep.subr.bf16.mxu0 0
      %1247 = vmatpush1.bf16.xpose.msra.mxu0 0
      %1248 = vmatprep.subr.bf16.mxu0 0
      %1249 = vmatpush1.bf16.xpose.msra.mxu0 0
      %1250 = vmatprep.subr.bf16.mxu0 0
      %1251 = vmatpush1.bf16.xpose.msra.mxu0 0
      %1252 = vmatprep.subr.bf16.mxu0 0
      %1253 = vmatpush1.bf16.xpose.msra.mxu0 0
      %1254 = vmatprep.subr.bf16.mxu0 0
      %1255 = vmatpush1.bf16.xpose.msra.mxu0 0
      %1256 = vmatprep.subr.bf16.mxu0 0
      %1257 = vmatpush1.bf16.xpose.msra.mxu0 0
      %1258 = vmatprep.subr.bf16.mxu0 0
      %1259 = vmatpush1.bf16.xpose.msra.mxu0 0
      %1260 = vmatprep.subr.bf16.mxu0 0
      %1261 = vmatpush1.bf16.xpose.msra.mxu0 0
      %1262 = vmatprep.subr.bf16.mxu0 0
      %1263 = vmatpush1.bf16.xpose.msra.mxu0 0
      %1264 = vmatprep.subr.bf16.mxu0 0
      %1265 = vmatpush1.bf16.xpose.msra.mxu0 0
      %1266 = vmatprep.subr.bf16.mxu0 0
      %1267 = vmatpush1.bf16.xpose.msra.mxu0 0
      %1268 = vmatprep.subr.bf16.mxu0 0
      %1269 = vmatpush1.bf16.xpose.msra.mxu0 0
      %1270 = vmatprep.subr.bf16.mxu0 0
      %1271 = vmatpush1.bf16.xpose.msra.mxu0 0
      %1272 = vmatprep.subr.bf16.mxu0 0
      %1273 = vmatpush1.bf16.xpose.msra.mxu0 0
      %1274 = vmatprep.mubr.bf16.mxu0 0
      %1275 = vmatmul.mubr.bf16.gmra.mrb[0].mxu0 %v1237
      %v1276 = vpop.f32.mrb[0].mxu0
      %v1277 = vadd.f32 0.0, %v1276
      %v1278 = vpop.f32.mrb[0].mxu0
      %v1279 = vpop.f32.mrb[0].mxu0
      %v1280 = vpop.f32.mrb[0].mxu0
      %1281 = vdwg.mxu0
      %v1282 = vsel %vm1008, %v1277, -inf
      %1283 = vmax.xlane.f32.xlu0 %v1282
      %v1284 = vpop.xlane.xlu0 %1283
      %v1285 = vsub.f32 %v1277, %v1284
      %v1286 = vmul.f32 %v1285, 1.442695
      %v1287 = vpow.pop %v1286
      %v1288 = vsel %vm1008, %v1287, 0.0
      %1289 = vadd.xlane.f32.xlu0 %v1288
      %v1290 = vpop.xlane.xlu0 %1289
      %v1291 = vrcp.pop %v1290
      %v1292 = vmul.f32 %v1287, %v1291
      %v1293 = vpack.c.bf16 %v1292, %v1292
      %1294 = vrot.lane.b32.xlu0 %v1004, 112
      %v1295 = vpop.permute.xlu0 %1294
      %v1297 = vsel %vm1008, %v1293, 0
      %v1300 = vsel %vm1070, %v1295, 0
      %1302 = vmatprep.subr.bf16.mxu0 0
      %1303 = vmatpush1.bf16.msra.mxu0 %v1300
      %1304 = vmatprep.subr.bf16.mxu0 0
      %1305 = vmatpush1.bf16.msra.mxu0 0
      %1306 = vmatprep.subr.bf16.mxu0 0
      %1307 = vmatpush1.bf16.msra.mxu0 0
      %1308 = vmatprep.subr.bf16.mxu0 0
      %1309 = vmatpush1.bf16.msra.mxu0 0
      %1310 = vmatprep.subr.bf16.mxu0 0
      %1311 = vmatpush1.bf16.msra.mxu0 0
      %1312 = vmatprep.subr.bf16.mxu0 0
      %1313 = vmatpush1.bf16.msra.mxu0 0
      %1314 = vmatprep.subr.bf16.mxu0 0
      %1315 = vmatpush1.bf16.msra.mxu0 0
      %1316 = vmatprep.subr.bf16.mxu0 0
      %1317 = vmatpush1.bf16.msra.mxu0 0
      %1318 = vmatprep.subr.bf16.mxu0 0
      %1319 = vmatpush1.bf16.msra.mxu0 0
      %1320 = vmatprep.subr.bf16.mxu0 0
      %1321 = vmatpush1.bf16.msra.mxu0 0
      %1322 = vmatprep.subr.bf16.mxu0 0
      %1323 = vmatpush1.bf16.msra.mxu0 0
      %1324 = vmatprep.subr.bf16.mxu0 0
      %1325 = vmatpush1.bf16.msra.mxu0 0
      %1326 = vmatprep.subr.bf16.mxu0 0
      %1327 = vmatpush1.bf16.msra.mxu0 0
      %1328 = vmatprep.subr.bf16.mxu0 0
      %1329 = vmatpush1.bf16.msra.mxu0 0
      %1330 = vmatprep.subr.bf16.mxu0 0
      %1331 = vmatpush1.bf16.msra.mxu0 0
      %1332 = vmatprep.subr.bf16.mxu0 0
      %1333 = vmatpush1.bf16.msra.mxu0 0
      %1334 = vmatprep.mubr.bf16.mxu0 0
      %1335 = vmatmul.mubr.bf16.gmra.mrb[0].mxu0 %v1297
      %v1336 = vpop.f32.mrb[0].mxu0
      %v1337 = vadd.f32 0.0, %v1336
      %v1338 = vpop.f32.mrb[0].mxu0
      %v1339 = vpop.f32.mrb[0].mxu0
      %v1340 = vpop.f32.mrb[0].mxu0
      %1341 = vdwg.mxu0
      %1343 = vrot.lane.b32.xlu0 %v1337, 16
      %v1344 = vpop.permute.xlu0 %1343
      %vm1346 = vcmask 195712
      %1347 = vst.msk [vmem:[#allocation3] sm:$0xff] %vm1346, %v1344
      %1348 = vrot.lane.b32.xlu0 %v1003, 104
      %v1349 = vpop.permute.xlu0 %1348
      %1350 = vrot.lane.b32.xlu0 %v1003, 72
      %v1351 = vpop.permute.xlu0 %1350
      %v1353 = vsel %vm1008, %v1349, 0
      %v1356 = vsel %vm1008, %v1351, 0
      %1358 = vmatprep.subr.bf16.mxu0 0
      %1359 = vmatpush1.bf16.xpose.msra.mxu0 %v1356
      %1360 = vmatprep.subr.bf16.mxu0 0
      %1361 = vmatpush1.bf16.xpose.msra.mxu0 0
      %1362 = vmatprep.subr.bf16.mxu0 0
      %1363 = vmatpush1.bf16.xpose.msra.mxu0 0
      %1364 = vmatprep.subr.bf16.mxu0 0
      %1365 = vmatpush1.bf16.xpose.msra.mxu0 0
      %1366 = vmatprep.subr.bf16.mxu0 0
      %1367 = vmatpush1.bf16.xpose.msra.mxu0 0
      %1368 = vmatprep.subr.bf16.mxu0 0
      %1369 = vmatpush1.bf16.xpose.msra.mxu0 0
      %1370 = vmatprep.subr.bf16.mxu0 0
      %1371 = vmatpush1.bf16.xpose.msra.mxu0 0
      %1372 = vmatprep.subr.bf16.mxu0 0
      %1373 = vmatpush1.bf16.xpose.msra.mxu0 0
      %1374 = vmatprep.subr.bf16.mxu0 0
      %1375 = vmatpush1.bf16.xpose.msra.mxu0 0
      %1376 = vmatprep.subr.bf16.mxu0 0
      %1377 = vmatpush1.bf16.xpose.msra.mxu0 0
      %1378 = vmatprep.subr.bf16.mxu0 0
      %1379 = vmatpush1.bf16.xpose.msra.mxu0 0
      %1380 = vmatprep.subr.bf16.mxu0 0
      %1381 = vmatpush1.bf16.xpose.msra.mxu0 0
      %1382 = vmatprep.subr.bf16.mxu0 0
      %1383 = vmatpush1.bf16.xpose.msra.mxu0 0
      %1384 = vmatprep.subr.bf16.mxu0 0
      %1385 = vmatpush1.bf16.xpose.msra.mxu0 0
      %1386 = vmatprep.subr.bf16.mxu0 0
      %1387 = vmatpush1.bf16.xpose.msra.mxu0 0
      %1388 = vmatprep.subr.bf16.mxu0 0
      %1389 = vmatpush1.bf16.xpose.msra.mxu0 0
      %1390 = vmatprep.mubr.bf16.mxu0 0
      %1391 = vmatmul.mubr.bf16.gmra.mrb[0].mxu0 %v1353
      %v1392 = vpop.f32.mrb[0].mxu0
      %v1393 = vadd.f32 0.0, %v1392
      %v1394 = vpop.f32.mrb[0].mxu0
      %v1395 = vpop.f32.mrb[0].mxu0
      %v1396 = vpop.f32.mrb[0].mxu0
      %1397 = vdwg.mxu0
      %v1398 = vsel %vm1008, %v1393, -inf
      %1399 = vmax.xlane.f32.xlu0 %v1398
      %v1400 = vpop.xlane.xlu0 %1399
      %v1401 = vsub.f32 %v1393, %v1400
      %v1402 = vmul.f32 %v1401, 1.442695
      %v1403 = vpow.pop %v1402
      %v1404 = vsel %vm1008, %v1403, 0.0
      %1405 = vadd.xlane.f32.xlu0 %v1404
      %v1406 = vpop.xlane.xlu0 %1405
      %v1407 = vrcp.pop %v1406
      %v1408 = vmul.f32 %v1403, %v1407
      %v1409 = vpack.c.bf16 %v1408, %v1408
      %1410 = vrot.lane.b32.xlu0 %v1004, 104
      %v1411 = vpop.permute.xlu0 %1410
      %v1413 = vsel %vm1008, %v1409, 0
      %v1416 = vsel %vm1070, %v1411, 0
      %1418 = vmatprep.subr.bf16.mxu0 0
      %1419 = vmatpush1.bf16.msra.mxu0 %v1416
      %1420 = vmatprep.subr.bf16.mxu0 0
      %1421 = vmatpush1.bf16.msra.mxu0 0
      %1422 = vmatprep.subr.bf16.mxu0 0
      %1423 = vmatpush1.bf16.msra.mxu0 0
      %1424 = vmatprep.subr.bf16.mxu0 0
      %1425 = vmatpush1.bf16.msra.mxu0 0
      %1426 = vmatprep.subr.bf16.mxu0 0
      %1427 = vmatpush1.bf16.msra.mxu0 0
      %1428 = vmatprep.subr.bf16.mxu0 0
      %1429 = vmatpush1.bf16.msra.mxu0 0
      %1430 = vmatprep.subr.bf16.mxu0 0
      %1431 = vmatpush1.bf16.msra.mxu0 0
      %1432 = vmatprep.subr.bf16.mxu0 0
      %1433 = vmatpush1.bf16.msra.mxu0 0
      %1434 = vmatprep.subr.bf16.mxu0 0
      %1435 = vmatpush1.bf16.msra.mxu0 0
      %1436 = vmatprep.subr.bf16.mxu0 0
      %1437 = vmatpush1.bf16.msra.mxu0 0
      %1438 = vmatprep.subr.bf16.mxu0 0
      %1439 = vmatpush1.bf16.msra.mxu0 0
      %1440 = vmatprep.subr.bf16.mxu0 0
      %1441 = vmatpush1.bf16.msra.mxu0 0
      %1442 = vmatprep.subr.bf16.mxu0 0
      %1443 = vmatpush1.bf16.msra.mxu0 0
      %1444 = vmatprep.subr.bf16.mxu0 0
      %1445 = vmatpush1.bf16.msra.mxu0 0
      %1446 = vmatprep.subr.bf16.mxu0 0
      %1447 = vmatpush1.bf16.msra.mxu0 0
      %1448 = vmatprep.subr.bf16.mxu0 0
      %1449 = vmatpush1.bf16.msra.mxu0 0
      %1450 = vmatprep.mubr.bf16.mxu0 0
      %1451 = vmatmul.mubr.bf16.gmra.mrb[0].mxu0 %v1413
      %v1452 = vpop.f32.mrb[0].mxu0
      %v1453 = vadd.f32 0.0, %v1452
      %v1454 = vpop.f32.mrb[0].mxu0
      %v1455 = vpop.f32.mrb[0].mxu0
      %v1456 = vpop.f32.mrb[0].mxu0
      %1457 = vdwg.mxu0
      %1459 = vrot.lane.b32.xlu0 %v1453, 24
      %v1460 = vpop.permute.xlu0 %1459
      %vm1462 = vcmask 261312
      %1463 = vst.msk [vmem:[#allocation3] sm:$0xff] %vm1462, %v1460
      %v1464 = vrot.slane %v1003, 4
      %1465 = vrot.lane.b32.xlu0 %v1464, 96
      %v1466 = vpop.permute.xlu0 %1465
      %v1468 = vsel %vm1008, %v1464, 0
      %v1471 = vsel %vm1008, %v1466, 0
      %1473 = vmatprep.subr.bf16.mxu0 0
      %1474 = vmatpush1.bf16.xpose.msra.mxu0 %v1471
      %1475 = vmatprep.subr.bf16.mxu0 0
      %1476 = vmatpush1.bf16.xpose.msra.mxu0 0
      %1477 = vmatprep.subr.bf16.mxu0 0
      %1478 = vmatpush1.bf16.xpose.msra.mxu0 0
      %1479 = vmatprep.subr.bf16.mxu0 0
      %1480 = vmatpush1.bf16.xpose.msra.mxu0 0
      %1481 = vmatprep.subr.bf16.mxu0 0
      %1482 = vmatpush1.bf16.xpose.msra.mxu0 0
      %1483 = vmatprep.subr.bf16.mxu0 0
      %1484 = vmatpush1.bf16.xpose.msra.mxu0 0
      %1485 = vmatprep.subr.bf16.mxu0 0
      %1486 = vmatpush1.bf16.xpose.msra.mxu0 0
      %1487 = vmatprep.subr.bf16.mxu0 0
      %1488 = vmatpush1.bf16.xpose.msra.mxu0 0
      %1489 = vmatprep.subr.bf16.mxu0 0
      %1490 = vmatpush1.bf16.xpose.msra.mxu0 0
      %1491 = vmatprep.subr.bf16.mxu0 0
      %1492 = vmatpush1.bf16.xpose.msra.mxu0 0
      %1493 = vmatprep.subr.bf16.mxu0 0
      %1494 = vmatpush1.bf16.xpose.msra.mxu0 0
      %1495 = vmatprep.subr.bf16.mxu0 0
      %1496 = vmatpush1.bf16.xpose.msra.mxu0 0
      %1497 = vmatprep.subr.bf16.mxu0 0
      %1498 = vmatpush1.bf16.xpose.msra.mxu0 0
      %1499 = vmatprep.subr.bf16.mxu0 0
      %1500 = vmatpush1.bf16.xpose.msra.mxu0 0
      %1501 = vmatprep.subr.bf16.mxu0 0
      %1502 = vmatpush1.bf16.xpose.msra.mxu0 0
      %1503 = vmatprep.subr.bf16.mxu0 0
      %1504 = vmatpush1.bf16.xpose.msra.mxu0 0
      %1505 = vmatprep.mubr.bf16.mxu0 0
      %1506 = vmatmul.mubr.bf16.gmra.mrb[0].mxu0 %v1468
      %v1507 = vpop.f32.mrb[0].mxu0
      %v1508 = vadd.f32 0.0, %v1507
      %v1509 = vpop.f32.mrb[0].mxu0
      %v1510 = vpop.f32.mrb[0].mxu0
      %v1511 = vpop.f32.mrb[0].mxu0
      %1512 = vdwg.mxu0
      %v1513 = vsel %vm1008, %v1508, -inf
      %1514 = vmax.xlane.f32.xlu0 %v1513
      %v1515 = vpop.xlane.xlu0 %1514
      %v1516 = vsub.f32 %v1508, %v1515
      %v1517 = vmul.f32 %v1516, 1.442695
      %v1518 = vpow.pop %v1517
      %v1519 = vsel %vm1008, %v1518, 0.0
      %1520 = vadd.xlane.f32.xlu0 %v1519
      %v1521 = vpop.xlane.xlu0 %1520
      %v1522 = vrcp.pop %v1521
      %v1523 = vmul.f32 %v1518, %v1522
      %v1524 = vpack.c.bf16 %v1523, %v1523
      %v1525 = vrot.slane %v1004, 4
      %v1527 = vsel %vm1008, %v1524, 0
      %v1530 = vsel %vm1070, %v1525, 0
      %1532 = vmatprep.subr.bf16.mxu0 0
      %1533 = vmatpush1.bf16.msra.mxu0 %v1530
      %1534 = vmatprep.subr.bf16.mxu0 0
      %1535 = vmatpush1.bf16.msra.mxu0 0
      %1536 = vmatprep.subr.bf16.mxu0 0
      %1537 = vmatpush1.bf16.msra.mxu0 0
      %1538 = vmatprep.subr.bf16.mxu0 0
      %1539 = vmatpush1.bf16.msra.mxu0 0
      %1540 = vmatprep.subr.bf16.mxu0 0
      %1541 = vmatpush1.bf16.msra.mxu0 0
      %1542 = vmatprep.subr.bf16.mxu0 0
      %1543 = vmatpush1.bf16.msra.mxu0 0
      %1544 = vmatprep.subr.bf16.mxu0 0
      %1545 = vmatpush1.bf16.msra.mxu0 0
      %1546 = vmatprep.subr.bf16.mxu0 0
      %1547 = vmatpush1.bf16.msra.mxu0 0
      %1548 = vmatprep.subr.bf16.mxu0 0
      %1549 = vmatpush1.bf16.msra.mxu0 0
      %1550 = vmatprep.subr.bf16.mxu0 0
      %1551 = vmatpush1.bf16.msra.mxu0 0
      %1552 = vmatprep.subr.bf16.mxu0 0
      %1553 = vmatpush1.bf16.msra.mxu0 0
      %1554 = vmatprep.subr.bf16.mxu0 0
      %1555 = vmatpush1.bf16.msra.mxu0 0
      %1556 = vmatprep.subr.bf16.mxu0 0
      %1557 = vmatpush1.bf16.msra.mxu0 0
      %1558 = vmatprep.subr.bf16.mxu0 0
      %1559 = vmatpush1.bf16.msra.mxu0 0
      %1560 = vmatprep.subr.bf16.mxu0 0
      %1561 = vmatpush1.bf16.msra.mxu0 0
      %1562 = vmatprep.subr.bf16.mxu0 0
      %1563 = vmatpush1.bf16.msra.mxu0 0
      %1564 = vmatprep.mubr.bf16.mxu0 0
      %1565 = vmatmul.mubr.bf16.gmra.mrb[0].mxu0 %v1527
      %v1566 = vpop.f32.mrb[0].mxu0
      %v1567 = vadd.f32 0.0, %v1566
      %v1568 = vpop.f32.mrb[0].mxu0
      %v1569 = vpop.f32.mrb[0].mxu0
      %v1570 = vpop.f32.mrb[0].mxu0
      %1571 = vdwg.mxu0
      %1572 = vst.msk [vmem:[#allocation3 + $0x8] sm:$0xff] %vm1008, %v1567
      %1573 = vrot.lane.b32.xlu0 %v1464, 120
      %v1574 = vpop.permute.xlu0 %1573
      %1575 = vrot.lane.b32.xlu0 %v1464, 88
      %v1576 = vpop.permute.xlu0 %1575
      %v1578 = vsel %vm1008, %v1574, 0
      %v1581 = vsel %vm1008, %v1576, 0
      %1583 = vmatprep.subr.bf16.mxu0 0
      %1584 = vmatpush1.bf16.xpose.msra.mxu0 %v1581
      %1585 = vmatprep.subr.bf16.mxu0 0
      %1586 = vmatpush1.bf16.xpose.msra.mxu0 0
      %1587 = vmatprep.subr.bf16.mxu0 0
      %1588 = vmatpush1.bf16.xpose.msra.mxu0 0
      %1589 = vmatprep.subr.bf16.mxu0 0
      %1590 = vmatpush1.bf16.xpose.msra.mxu0 0
      %1591 = vmatprep.subr.bf16.mxu0 0
      %1592 = vmatpush1.bf16.xpose.msra.mxu0 0
      %1593 = vmatprep.subr.bf16.mxu0 0
      %1594 = vmatpush1.bf16.xpose.msra.mxu0 0
      %1595 = vmatprep.subr.bf16.mxu0 0
      %1596 = vmatpush1.bf16.xpose.msra.mxu0 0
      %1597 = vmatprep.subr.bf16.mxu0 0
      %1598 = vmatpush1.bf16.xpose.msra.mxu0 0
      %1599 = vmatprep.subr.bf16.mxu0 0
      %1600 = vmatpush1.bf16.xpose.msra.mxu0 0
      %1601 = vmatprep.subr.bf16.mxu0 0
      %1602 = vmatpush1.bf16.xpose.msra.mxu0 0
      %1603 = vmatprep.subr.bf16.mxu0 0
      %1604 = vmatpush1.bf16.xpose.msra.mxu0 0
      %1605 = vmatprep.subr.bf16.mxu0 0
      %1606 = vmatpush1.bf16.xpose.msra.mxu0 0
      %1607 = vmatprep.subr.bf16.mxu0 0
      %1608 = vmatpush1.bf16.xpose.msra.mxu0 0
      %1609 = vmatprep.subr.bf16.mxu0 0
      %1610 = vmatpush1.bf16.xpose.msra.mxu0 0
      %1611 = vmatprep.subr.bf16.mxu0 0
      %1612 = vmatpush1.bf16.xpose.msra.mxu0 0
      %1613 = vmatprep.subr.bf16.mxu0 0
      %1614 = vmatpush1.bf16.xpose.msra.mxu0 0
      %1615 = vmatprep.mubr.bf16.mxu0 0
      %1616 = vmatmul.mubr.bf16.gmra.mrb[0].mxu0 %v1578
      %v1617 = vpop.f32.mrb[0].mxu0
      %v1618 = vadd.f32 0.0, %v1617
      %v1619 = vpop.f32.mrb[0].mxu0
      %v1620 = vpop.f32.mrb[0].mxu0
      %v1621 = vpop.f32.mrb[0].mxu0
      %1622 = vdwg.mxu0
      %v1623 = vsel %vm1008, %v1618, -inf
      %1624 = vmax.xlane.f32.xlu0 %v1623
      %v1625 = vpop.xlane.xlu0 %1624
      %v1626 = vsub.f32 %v1618, %v1625
      %v1627 = vmul.f32 %v1626, 1.442695
      %v1628 = vpow.pop %v1627
      %v1629 = vsel %vm1008, %v1628, 0.0
      %1630 = vadd.xlane.f32.xlu0 %v1629
      %v1631 = vpop.xlane.xlu0 %1630
      %v1632 = vrcp.pop %v1631
      %v1633 = vmul.f32 %v1628, %v1632
      %v1634 = vpack.c.bf16 %v1633, %v1633
      %1635 = vrot.lane.b32.xlu0 %v1525, 120
      %v1636 = vpop.permute.xlu0 %1635
      %v1638 = vsel %vm1008, %v1634, 0
      %v1641 = vsel %vm1070, %v1636, 0
      %1643 = vmatprep.subr.bf16.mxu0 0
      %1644 = vmatpush1.bf16.msra.mxu0 %v1641
      %1645 = vmatprep.subr.bf16.mxu0 0
      %1646 = vmatpush1.bf16.msra.mxu0 0
      %1647 = vmatprep.subr.bf16.mxu0 0
      %1648 = vmatpush1.bf16.msra.mxu0 0
      %1649 = vmatprep.subr.bf16.mxu0 0
      %1650 = vmatpush1.bf16.msra.mxu0 0
      %1651 = vmatprep.subr.bf16.mxu0 0
      %1652 = vmatpush1.bf16.msra.mxu0 0
      %1653 = vmatprep.subr.bf16.mxu0 0
      %1654 = vmatpush1.bf16.msra.mxu0 0
      %1655 = vmatprep.subr.bf16.mxu0 0
      %1656 = vmatpush1.bf16.msra.mxu0 0
      %1657 = vmatprep.subr.bf16.mxu0 0
      %1658 = vmatpush1.bf16.msra.mxu0 0
      %1659 = vmatprep.subr.bf16.mxu0 0
      %1660 = vmatpush1.bf16.msra.mxu0 0
      %1661 = vmatprep.subr.bf16.mxu0 0
      %1662 = vmatpush1.bf16.msra.mxu0 0
      %1663 = vmatprep.subr.bf16.mxu0 0
      %1664 = vmatpush1.bf16.msra.mxu0 0
      %1665 = vmatprep.subr.bf16.mxu0 0
      %1666 = vmatpush1.bf16.msra.mxu0 0
      %1667 = vmatprep.subr.bf16.mxu0 0
      %1668 = vmatpush1.bf16.msra.mxu0 0
      %1669 = vmatprep.subr.bf16.mxu0 0
      %1670 = vmatpush1.bf16.msra.mxu0 0
      %1671 = vmatprep.subr.bf16.mxu0 0
      %1672 = vmatpush1.bf16.msra.mxu0 0
      %1673 = vmatprep.subr.bf16.mxu0 0
      %1674 = vmatpush1.bf16.msra.mxu0 0
      %1675 = vmatprep.mubr.bf16.mxu0 0
      %1676 = vmatmul.mubr.bf16.gmra.mrb[0].mxu0 %v1638
      %v1677 = vpop.f32.mrb[0].mxu0
      %v1678 = vadd.f32 0.0, %v1677
      %v1679 = vpop.f32.mrb[0].mxu0
      %v1680 = vpop.f32.mrb[0].mxu0
      %v1681 = vpop.f32.mrb[0].mxu0
      %1682 = vdwg.mxu0
      %1684 = vrot.lane.b32.xlu0 %v1678, 8
      %v1685 = vpop.permute.xlu0 %1684
      %1687 = vst.msk [vmem:[#allocation3 + $0x8] sm:$0xff] %vm1230, %v1685
      %1688 = vrot.lane.b32.xlu0 %v1464, 112
      %v1689 = vpop.permute.xlu0 %1688
      %1690 = vrot.lane.b32.xlu0 %v1464, 80
      %v1691 = vpop.permute.xlu0 %1690
      %v1693 = vsel %vm1008, %v1689, 0
      %v1696 = vsel %vm1008, %v1691, 0
      %1698 = vmatprep.subr.bf16.mxu0 0
      %1699 = vmatpush1.bf16.xpose.msra.mxu0 %v1696
      %1700 = vmatprep.subr.bf16.mxu0 0
      %1701 = vmatpush1.bf16.xpose.msra.mxu0 0
      %1702 = vmatprep.subr.bf16.mxu0 0
      %1703 = vmatpush1.bf16.xpose.msra.mxu0 0
      %1704 = vmatprep.subr.bf16.mxu0 0
      %1705 = vmatpush1.bf16.xpose.msra.mxu0 0
      %1706 = vmatprep.subr.bf16.mxu0 0
      %1707 = vmatpush1.bf16.xpose.msra.mxu0 0
      %1708 = vmatprep.subr.bf16.mxu0 0
      %1709 = vmatpush1.bf16.xpose.msra.mxu0 0
      %1710 = vmatprep.subr.bf16.mxu0 0
      %1711 = vmatpush1.bf16.xpose.msra.mxu0 0
      %1712 = vmatprep.subr.bf16.mxu0 0
      %1713 = vmatpush1.bf16.xpose.msra.mxu0 0
      %1714 = vmatprep.subr.bf16.mxu0 0
      %1715 = vmatpush1.bf16.xpose.msra.mxu0 0
      %1716 = vmatprep.subr.bf16.mxu0 0
      %1717 = vmatpush1.bf16.xpose.msra.mxu0 0
      %1718 = vmatprep.subr.bf16.mxu0 0
      %1719 = vmatpush1.bf16.xpose.msra.mxu0 0
      %1720 = vmatprep.subr.bf16.mxu0 0
      %1721 = vmatpush1.bf16.xpose.msra.mxu0 0
      %1722 = vmatprep.subr.bf16.mxu0 0
      %1723 = vmatpush1.bf16.xpose.msra.mxu0 0
      %1724 = vmatprep.subr.bf16.mxu0 0
      %1725 = vmatpush1.bf16.xpose.msra.mxu0 0
      %1726 = vmatprep.subr.bf16.mxu0 0
      %1727 = vmatpush1.bf16.xpose.msra.mxu0 0
      %1728 = vmatprep.subr.bf16.mxu0 0
      %1729 = vmatpush1.bf16.xpose.msra.mxu0 0
      %1730 = vmatprep.mubr.bf16.mxu0 0
      %1731 = vmatmul.mubr.bf16.gmra.mrb[0].mxu0 %v1693
      %v1732 = vpop.f32.mrb[0].mxu0
      %v1733 = vadd.f32 0.0, %v1732
      %v1734 = vpop.f32.mrb[0].mxu0
      %v1735 = vpop.f32.mrb[0].mxu0
      %v1736 = vpop.f32.mrb[0].mxu0
      %1737 = vdwg.mxu0
      %v1738 = vsel %vm1008, %v1733, -inf
      %1739 = vmax.xlane.f32.xlu0 %v1738
      %v1740 = vpop.xlane.xlu0 %1739
      %v1741 = vsub.f32 %v1733, %v1740
      %v1742 = vmul.f32 %v1741, 1.442695
      %v1743 = vpow.pop %v1742
      %v1744 = vsel %vm1008, %v1743, 0.0
      %1745 = vadd.xlane.f32.xlu0 %v1744
      %v1746 = vpop.xlane.xlu0 %1745
      %v1747 = vrcp.pop %v1746
      %v1748 = vmul.f32 %v1743, %v1747
      %v1749 = vpack.c.bf16 %v1748, %v1748
      %1750 = vrot.lane.b32.xlu0 %v1525, 112
      %v1751 = vpop.permute.xlu0 %1750
      %v1753 = vsel %vm1008, %v1749, 0
      %v1756 = vsel %vm1070, %v1751, 0
      %1758 = vmatprep.subr.bf16.mxu0 0
      %1759 = vmatpush1.bf16.msra.mxu0 %v1756
      %1760 = vmatprep.subr.bf16.mxu0 0
      %1761 = vmatpush1.bf16.msra.mxu0 0
      %1762 = vmatprep.subr.bf16.mxu0 0
      %1763 = vmatpush1.bf16.msra.mxu0 0
      %1764 = vmatprep.subr.bf16.mxu0 0
      %1765 = vmatpush1.bf16.msra.mxu0 0
      %1766 = vmatprep.subr.bf16.mxu0 0
      %1767 = vmatpush1.bf16.msra.mxu0 0
      %1768 = vmatprep.subr.bf16.mxu0 0
      %1769 = vmatpush1.bf16.msra.mxu0 0
      %1770 = vmatprep.subr.bf16.mxu0 0
      %1771 = vmatpush1.bf16.msra.mxu0 0
      %1772 = vmatprep.subr.bf16.mxu0 0
      %1773 = vmatpush1.bf16.msra.mxu0 0
      %1774 = vmatprep.subr.bf16.mxu0 0
      %1775 = vmatpush1.bf16.msra.mxu0 0
      %1776 = vmatprep.subr.bf16.mxu0 0
      %1777 = vmatpush1.bf16.msra.mxu0 0
      %1778 = vmatprep.subr.bf16.mxu0 0
      %1779 = vmatpush1.bf16.msra.mxu0 0
      %1780 = vmatprep.subr.bf16.mxu0 0
      %1781 = vmatpush1.bf16.msra.mxu0 0
      %1782 = vmatprep.subr.bf16.mxu0 0
      %1783 = vmatpush1.bf16.msra.mxu0 0
      %1784 = vmatprep.subr.bf16.mxu0 0
      %1785 = vmatpush1.bf16.msra.mxu0 0
      %1786 = vmatprep.subr.bf16.mxu0 0
      %1787 = vmatpush1.bf16.msra.mxu0 0
      %1788 = vmatprep.subr.bf16.mxu0 0
      %1789 = vmatpush1.bf16.msra.mxu0 0
      %1790 = vmatprep.mubr.bf16.mxu0 0
      %1791 = vmatmul.mubr.bf16.gmra.mrb[0].mxu0 %v1753
      %v1792 = vpop.f32.mrb[0].mxu0
      %v1793 = vadd.f32 0.0, %v1792
      %v1794 = vpop.f32.mrb[0].mxu0
      %v1795 = vpop.f32.mrb[0].mxu0
      %v1796 = vpop.f32.mrb[0].mxu0
      %1797 = vdwg.mxu0
      %1799 = vrot.lane.b32.xlu0 %v1793, 16
      %v1800 = vpop.permute.xlu0 %1799
      %1802 = vst.msk [vmem:[#allocation3 + $0x8] sm:$0xff] %vm1346, %v1800
      %1803 = vrot.lane.b32.xlu0 %v1464, 104
      %v1804 = vpop.permute.xlu0 %1803
      %1805 = vrot.lane.b32.xlu0 %v1464, 72
      %v1806 = vpop.permute.xlu0 %1805
      %v1808 = vsel %vm1008, %v1804, 0
      %v1811 = vsel %vm1008, %v1806, 0
      %1813 = vmatprep.subr.bf16.mxu0 0
      %1814 = vmatpush1.bf16.xpose.msra.mxu0 %v1811
      %1815 = vmatprep.subr.bf16.mxu0 0
      %1816 = vmatpush1.bf16.xpose.msra.mxu0 0
      %1817 = vmatprep.subr.bf16.mxu0 0
      %1818 = vmatpush1.bf16.xpose.msra.mxu0 0
      %1819 = vmatprep.subr.bf16.mxu0 0
      %1820 = vmatpush1.bf16.xpose.msra.mxu0 0
      %1821 = vmatprep.subr.bf16.mxu0 0
      %1822 = vmatpush1.bf16.xpose.msra.mxu0 0
      %1823 = vmatprep.subr.bf16.mxu0 0
      %1824 = vmatpush1.bf16.xpose.msra.mxu0 0
      %1825 = vmatprep.subr.bf16.mxu0 0
      %1826 = vmatpush1.bf16.xpose.msra.mxu0 0
      %1827 = vmatprep.subr.bf16.mxu0 0
      %1828 = vmatpush1.bf16.xpose.msra.mxu0 0
      %1829 = vmatprep.subr.bf16.mxu0 0
      %1830 = vmatpush1.bf16.xpose.msra.mxu0 0
      %1831 = vmatprep.subr.bf16.mxu0 0
      %1832 = vmatpush1.bf16.xpose.msra.mxu0 0
      %1833 = vmatprep.subr.bf16.mxu0 0
      %1834 = vmatpush1.bf16.xpose.msra.mxu0 0
      %1835 = vmatprep.subr.bf16.mxu0 0
      %1836 = vmatpush1.bf16.xpose.msra.mxu0 0
      %1837 = vmatprep.subr.bf16.mxu0 0
      %1838 = vmatpush1.bf16.xpose.msra.mxu0 0
      %1839 = vmatprep.subr.bf16.mxu0 0
      %1840 = vmatpush1.bf16.xpose.msra.mxu0 0
      %1841 = vmatprep.subr.bf16.mxu0 0
      %1842 = vmatpush1.bf16.xpose.msra.mxu0 0
      %1843 = vmatprep.subr.bf16.mxu0 0
      %1844 = vmatpush1.bf16.xpose.msra.mxu0 0
      %1845 = vmatprep.mubr.bf16.mxu0 0
      %1846 = vmatmul.mubr.bf16.gmra.mrb[0].mxu0 %v1808
      %v1847 = vpop.f32.mrb[0].mxu0
      %v1848 = vadd.f32 0.0, %v1847
      %v1849 = vpop.f32.mrb[0].mxu0
      %v1850 = vpop.f32.mrb[0].mxu0
      %v1851 = vpop.f32.mrb[0].mxu0
      %1852 = vdwg.mxu0
      %v1853 = vsel %vm1008, %v1848, -inf
      %1854 = vmax.xlane.f32.xlu0 %v1853
      %v1855 = vpop.xlane.xlu0 %1854
      %v1856 = vsub.f32 %v1848, %v1855
      %v1857 = vmul.f32 %v1856, 1.442695
      %v1858 = vpow.pop %v1857
      %v1859 = vsel %vm1008, %v1858, 0.0
      %1860 = vadd.xlane.f32.xlu0 %v1859
      %v1861 = vpop.xlane.xlu0 %1860
      %v1862 = vrcp.pop %v1861
      %v1863 = vmul.f32 %v1858, %v1862
      %v1864 = vpack.c.bf16 %v1863, %v1863
      %1865 = vrot.lane.b32.xlu0 %v1525, 104
      %v1866 = vpop.permute.xlu0 %1865
      %v1868 = vsel %vm1008, %v1864, 0
      %v1871 = vsel %vm1070, %v1866, 0
      %1873 = vmatprep.subr.bf16.mxu0 0
      %1874 = vmatpush1.bf16.msra.mxu0 %v1871
      %1875 = vmatprep.subr.bf16.mxu0 0
      %1876 = vmatpush1.bf16.msra.mxu0 0
      %1877 = vmatprep.subr.bf16.mxu0 0
      %1878 = vmatpush1.bf16.msra.mxu0 0
      %1879 = vmatprep.subr.bf16.mxu0 0
      %1880 = vmatpush1.bf16.msra.mxu0 0
      %1881 = vmatprep.subr.bf16.mxu0 0
      %1882 = vmatpush1.bf16.msra.mxu0 0
      %1883 = vmatprep.subr.bf16.mxu0 0
      %1884 = vmatpush1.bf16.msra.mxu0 0
      %1885 = vmatprep.subr.bf16.mxu0 0
      %1886 = vmatpush1.bf16.msra.mxu0 0
      %1887 = vmatprep.subr.bf16.mxu0 0
      %1888 = vmatpush1.bf16.msra.mxu0 0
      %1889 = vmatprep.subr.bf16.mxu0 0
      %1890 = vmatpush1.bf16.msra.mxu0 0
      %1891 = vmatprep.subr.bf16.mxu0 0
      %1892 = vmatpush1.bf16.msra.mxu0 0
      %1893 = vmatprep.subr.bf16.mxu0 0
      %1894 = vmatpush1.bf16.msra.mxu0 0
      %1895 = vmatprep.subr.bf16.mxu0 0
      %1896 = vmatpush1.bf16.msra.mxu0 0
      %1897 = vmatprep.subr.bf16.mxu0 0
      %1898 = vmatpush1.bf16.msra.mxu0 0
      %1899 = vmatprep.subr.bf16.mxu0 0
      %1900 = vmatpush1.bf16.msra.mxu0 0
      %1901 = vmatprep.subr.bf16.mxu0 0
      %1902 = vmatpush1.bf16.msra.mxu0 0
      %1903 = vmatprep.subr.bf16.mxu0 0
      %1904 = vmatpush1.bf16.msra.mxu0 0
      %1905 = vmatprep.mubr.bf16.mxu0 0
      %1906 = vmatmul.mubr.bf16.gmra.mrb[0].mxu0 %v1868
      %v1907 = vpop.f32.mrb[0].mxu0
      %v1908 = vadd.f32 0.0, %v1907
      %v1909 = vpop.f32.mrb[0].mxu0
      %v1910 = vpop.f32.mrb[0].mxu0
      %v1911 = vpop.f32.mrb[0].mxu0
      %1912 = vdwg.mxu0
      %1914 = vrot.lane.b32.xlu0 %v1908, 24
      %v1915 = vpop.permute.xlu0 %1914
      %1917 = vst.msk [vmem:[#allocation3 + $0x8] sm:$0xff] %vm1462, %v1915
      %v1918 = vld [vmem:[#allocation3] sm:$0xff]
      %v1919 = vld [vmem:[#allocation3 + $0x8] sm:$0xff]
      %v1920 = vpack.c.bf16 %v1919, %v1918
      %v1922 = vlaneseq
      %v1923 = vshrl.u32 %v1922, 7
      %v1924 = vsub.s32 0, %v1923
      %v1925 = vrot.slane %v884, %v1924
      %v1931 = vunpack.c.l.b16 %v880
      %v1932 = vunpack.c.l.b16 %v881
      %v1933 = vunpack.c.l.b16 %v882
      %v1934 = vunpack.c.l.b16 %v883
      %v1935 = vpack.c.b16 %v1932, %v1931
      %v1936 = vpack.c.b16 %v1934, %v1933
      %v1940 = vsel %vm905, %v1920, 0
      %1942 = vmatprep.subr.bf16.mxu0 0
      %1943 = vmatpush1.bf16.msra.mxu0 %v1935
      %1944 = vmatprep.subr.bf16.mxu0 0
      %1945 = vmatpush1.bf16.msra.mxu0 %v1936
      %1946 = vmatprep.subr.bf16.mxu0 0
      %1947 = vmatpush1.bf16.msra.mxu0 0
      %1948 = vmatprep.subr.bf16.mxu0 0
      %1949 = vmatpush1.bf16.msra.mxu0 0
      %1950 = vmatprep.subr.bf16.mxu0 0
      %1951 = vmatpush1.bf16.msra.mxu0 0
      %1952 = vmatprep.subr.bf16.mxu0 0
      %1953 = vmatpush1.bf16.msra.mxu0 0
      %1954 = vmatprep.subr.bf16.mxu0 0
      %1955 = vmatpush1.bf16.msra.mxu0 0
      %1956 = vmatprep.subr.bf16.mxu0 0
      %1957 = vmatpush1.bf16.msra.mxu0 0
      %1958 = vmatprep.subr.bf16.mxu0 0
      %1959 = vmatpush1.bf16.msra.mxu0 0
      %1960 = vmatprep.subr.bf16.mxu0 0
      %1961 = vmatpush1.bf16.msra.mxu0 0
      %1962 = vmatprep.subr.bf16.mxu0 0
      %1963 = vmatpush1.bf16.msra.mxu0 0
      %1964 = vmatprep.subr.bf16.mxu0 0
      %1965 = vmatpush1.bf16.msra.mxu0 0
      %1966 = vmatprep.subr.bf16.mxu0 0
      %1967 = vmatpush1.bf16.msra.mxu0 0
      %1968 = vmatprep.subr.bf16.mxu0 0
      %1969 = vmatpush1.bf16.msra.mxu0 0
      %1970 = vmatprep.subr.bf16.mxu0 0
      %1971 = vmatpush1.bf16.msra.mxu0 0
      %1972 = vmatprep.subr.bf16.mxu0 0
      %1973 = vmatpush1.bf16.msra.mxu0 0
      %1974 = vmatprep.mubr.bf16.mxu0 0
      %1975 = vmatmul.mubr.bf16.gmra.mrb[0].mxu0 %v1940
      %v1976 = vpop.f32.mrb[0].mxu0
      %v1977 = vadd.f32 %v1925, %v1976
      %v1978 = vpop.f32.mrb[0].mxu0
      %v1979 = vpop.f32.mrb[0].mxu0
      %v1980 = vadd.f32 %v1925, %v1979
      %v1981 = vpop.f32.mrb[0].mxu0
      %1982 = vdwg.mxu0
      %v1983 = vadd.f32 %v865, %v1977
      %v1984 = vadd.f32 %v866, %v1980
      %v1985 = vsel %vm905, %v1983, 0.0
      %1986 = vadd.xlane.f32.xlu0 %v1985
      %v1987 = vpop.xlane.xlu0 %1986
      %v1988 = vsel %vm905, %v1984, 0.0
      %1989 = vadd.xlane.f32.xlu0 %v1988
      %v1990 = vpop.xlane.xlu0 %1989
      %v1991 = vrcp.pop 32.0
      %v1992 = vmul.f32 %v1987, %v1991
      %v1993 = vmul.f32 %v1990, %v1991
      %v1994 = vsub.f32 %v1983, %v1992
      %v1995 = vsub.f32 %v1984, %v1993
      %v1996 = vmul.f32 %v1994, %v1994
      %v1997 = vmul.f32 %v1995, %v1995
      %v1998 = vsel %vm905, %v1996, 0.0
      %1999 = vadd.xlane.f32.xlu0 %v1998
      %v2000 = vpop.xlane.xlu0 %1999
      %v2001 = vsel %vm905, %v1997, 0.0
      %2002 = vadd.xlane.f32.xlu0 %v2001
      %v2003 = vpop.xlane.xlu0 %2002
      %v2004 = vmul.f32 %v2000, %v1991
      %v2005 = vmul.f32 %v2003, %v1991
      %v2006 = vadd.f32 %v2004, 1e-05
      %v2007 = vadd.f32 %v2005, 1e-05
      %v2008 = vrsqrt.pop %v2006
      %v2009 = vrsqrt.pop %v2007
      %v2010 = vmul.f32 %v1994, %v2008
      %v2011 = vmul.f32 %v1995, %v2009
      %v2012 = vlaneseq
      %v2013 = vshrl.u32 %v2012, 7
      %v2014 = vsub.s32 0, %v2013
      %v2015 = vrot.slane %v871, %v2014
      %v2016 = vmul.f32 %v2010, %v2015
      %v2017 = vmul.f32 %v2011, %v2015
      %v2018 = vlaneseq
      %v2019 = vshrl.u32 %v2018, 7
      %v2020 = vsub.s32 1, %v2019
      %v2021 = vrot.slane %v871, %v2020
      %v2022 = vadd.f32 %v2016, %v2021
      %v2023 = vadd.f32 %v2017, %v2021
      %v2024 = vadd.f32 %v2022, %v867
      %v2025 = vadd.f32 %v2023, %v868
      %v2026 = vld [vmem:[#allocation4] sm:$0xff]
      %v2027 = vld [vmem:[#allocation4 + $0x8] sm:$0xff]
      %v2028 = vld [vmem:[#allocation4 + $0x10] sm:$0xff]
      %v2029 = vld [vmem:[#allocation4 + $0x18] sm:$0xff]
      %v2030 = vld [vmem:[#allocation4 + $0x20] sm:$0xff]
      %v2031 = vld [vmem:[#allocation4 + $0x28] sm:$0xff]
      %v2032 = vld [vmem:[#allocation4 + $0x30] sm:$0xff]
      %v2033 = vld [vmem:[#allocation4 + $0x38] sm:$0xff]
      %v2034 = vld [vmem:[#allocation5] sm:$0xff]
      %v2035 = vld [vmem:[#allocation5 + $0x8] sm:$0xff]
      %v2036 = vld [vmem:[#allocation5 + $0x10] sm:$0xff]
      %v2037 = vld [vmem:[#allocation5 + $0x18] sm:$0xff]
      %v2038 = vld [vmem:[#allocation5 + $0x20] sm:$0xff]
      %v2039 = vld [vmem:[#allocation5 + $0x28] sm:$0xff]
      %v2040 = vld [vmem:[#allocation5 + $0x30] sm:$0xff]
      %v2041 = vld [vmem:[#allocation5 + $0x38] sm:$0xff]
      %v2042 = vld [vmem:[%s740] sm:$0xf]
      %v2043 = vld [vmem:[%s740 + $0x4] sm:$0xf]
      %v2044 = vld [vmem:[%s740 + $0x8] sm:$0xf]
      %v2045 = vld [vmem:[%s740 + $0xc] sm:$0xf]
      %v2046 = vld [vmem:[%s743] sm:$0x1]
      %v2047 = vld [vmem:[%s748] sm:$0xf]
      %v2048 = vld [vmem:[%s748 + $0x4] sm:$0xf]
      %v2049 = vld [vmem:[%s748 + $0x8] sm:$0xf]
      %v2050 = vld [vmem:[%s748 + $0xc] sm:$0xf]
      %v2051 = vld [vmem:[%s751] sm:$0x1]
      %v2052 = vpack.c.bf16 %v2025, %v2024
      %v2054 = vlaneseq
      %v2055 = vshrl.u32 %v2054, 7
      %v2056 = vsub.s32 0, %v2055
      %v2057 = vrot.slane %v2046, %v2056
      %v2063 = vunpack.c.l.b16 %v2042
      %v2064 = vunpack.c.l.b16 %v2043
      %v2065 = vunpack.c.l.b16 %v2044
      %v2066 = vunpack.c.l.b16 %v2045
      %v2067 = vpack.c.b16 %v2064, %v2063
      %v2068 = vpack.c.b16 %v2066, %v2065
      %v2072 = vsel %vm905, %v2052, 0
      %2074 = vmatprep.subr.bf16.mxu0 0
      %2075 = vmatpush1.bf16.msra.mxu0 %v2067
      %2076 = vmatprep.subr.bf16.mxu0 0
      %2077 = vmatpush1.bf16.msra.mxu0 %v2068
      %2078 = vmatprep.subr.bf16.mxu0 0
      %2079 = vmatpush1.bf16.msra.mxu0 0
      %2080 = vmatprep.subr.bf16.mxu0 0
      %2081 = vmatpush1.bf16.msra.mxu0 0
      %2082 = vmatprep.subr.bf16.mxu0 0
      %2083 = vmatpush1.bf16.msra.mxu0 0
      %2084 = vmatprep.subr.bf16.mxu0 0
      %2085 = vmatpush1.bf16.msra.mxu0 0
      %2086 = vmatprep.subr.bf16.mxu0 0
      %2087 = vmatpush1.bf16.msra.mxu0 0
      %2088 = vmatprep.subr.bf16.mxu0 0
      %2089 = vmatpush1.bf16.msra.mxu0 0
      %2090 = vmatprep.subr.bf16.mxu0 0
      %2091 = vmatpush1.bf16.msra.mxu0 0
      %2092 = vmatprep.subr.bf16.mxu0 0
      %2093 = vmatpush1.bf16.msra.mxu0 0
      %2094 = vmatprep.subr.bf16.mxu0 0
      %2095 = vmatpush1.bf16.msra.mxu0 0
      %2096 = vmatprep.subr.bf16.mxu0 0
      %2097 = vmatpush1.bf16.msra.mxu0 0
      %2098 = vmatprep.subr.bf16.mxu0 0
      %2099 = vmatpush1.bf16.msra.mxu0 0
      %2100 = vmatprep.subr.bf16.mxu0 0
      %2101 = vmatpush1.bf16.msra.mxu0 0
      %2102 = vmatprep.subr.bf16.mxu0 0
      %2103 = vmatpush1.bf16.msra.mxu0 0
      %2104 = vmatprep.subr.bf16.mxu0 0
      %2105 = vmatpush1.bf16.msra.mxu0 0
      %2106 = vmatprep.mubr.bf16.mxu0 0
      %2107 = vmatmul.mubr.bf16.gmra.mrb[0].mxu0 %v2072
      %v2108 = vpop.f32.mrb[0].mxu0
      %v2109 = vadd.f32 %v2057, %v2108
      %v2110 = vpop.f32.mrb[0].mxu0
      %v2111 = vpop.f32.mrb[0].mxu0
      %v2112 = vadd.f32 %v2057, %v2111
      %v2113 = vpop.f32.mrb[0].mxu0
      %2114 = vdwg.mxu0
      %2115 = vrot.lane.b32.xlu0 %v2067, 96
      %v2116 = vpop.permute.xlu0 %2115
      %2117 = vrot.lane.b32.xlu0 %v2068, 96
      %v2118 = vpop.permute.xlu0 %2117
      %2121 = vrot.lane.b32.xlu0 %v2057, 96
      %v2122 = vpop.permute.xlu0 %2121
      %v2125 = vsel %vm905, %v2026, 0
      %v2128 = vsel %vm905, %v2027, 0
      %v2131 = vsel %vm905, %v2028, 0
      %v2134 = vsel %vm905, %v2029, 0
      %v2137 = vsel %vm905, %v2030, 0
      %v2140 = vsel %vm905, %v2031, 0
      %v2143 = vsel %vm905, %v2032, 0
      %v2146 = vsel %vm905, %v2033, 0
      %2148 = vmatprep.subr.bf16.mxu0 0
      %2149 = vmatpush1.bf16.msra.mxu0 %v2116
      %2150 = vmatprep.subr.bf16.mxu0 0
      %2151 = vmatpush1.bf16.msra.mxu0 %v2118
      %2152 = vmatprep.subr.bf16.mxu0 0
      %2153 = vmatpush1.bf16.msra.mxu0 0
      %2154 = vmatprep.subr.bf16.mxu0 0
      %2155 = vmatpush1.bf16.msra.mxu0 0
      %2156 = vmatprep.subr.bf16.mxu0 0
      %2157 = vmatpush1.bf16.msra.mxu0 0
      %2158 = vmatprep.subr.bf16.mxu0 0
      %2159 = vmatpush1.bf16.msra.mxu0 0
      %2160 = vmatprep.subr.bf16.mxu0 0
      %2161 = vmatpush1.bf16.msra.mxu0 0
      %2162 = vmatprep.subr.bf16.mxu0 0
      %2163 = vmatpush1.bf16.msra.mxu0 0
      %2164 = vmatprep.subr.bf16.mxu0 0
      %2165 = vmatpush1.bf16.msra.mxu0 0
      %2166 = vmatprep.subr.bf16.mxu0 0
      %2167 = vmatpush1.bf16.msra.mxu0 0
      %2168 = vmatprep.subr.bf16.mxu0 0
      %2169 = vmatpush1.bf16.msra.mxu0 0
      %2170 = vmatprep.subr.bf16.mxu0 0
      %2171 = vmatpush1.bf16.msra.mxu0 0
      %2172 = vmatprep.subr.bf16.mxu0 0
      %2173 = vmatpush1.bf16.msra.mxu0 0
      %2174 = vmatprep.subr.bf16.mxu0 0
      %2175 = vmatpush1.bf16.msra.mxu0 0
      %2176 = vmatprep.subr.bf16.mxu0 0
      %2177 = vmatpush1.bf16.msra.mxu0 0
      %2178 = vmatprep.subr.bf16.mxu0 0
      %2179 = vmatpush1.bf16.msra.mxu0 0
      %2180 = vmatprep.mubr.bf16.mxu0 0
      %2181 = vmatmul.mubr.bf16.gmra.mrb[0].mxu0 %v2125
      %v2182 = vpop.f32.mrb[0].mxu0
      %v2183 = vadd.f32 %v2122, %v2182
      %v2184 = vpop.f32.mrb[0].mxu0
      %v2185 = vpop.f32.mrb[0].mxu0
      %v2186 = vadd.f32 %v2122, %v2185
      %v2187 = vpop.f32.mrb[0].mxu0
      %2188 = vmatprep.mubr.bf16.mxu0 0
      %2189 = vmatmul.mubr.bf16.gmra.mrb[0].mxu0 %v2128
      %v2190 = vpop.f32.mrb[0].mxu0
      %v2191 = vadd.f32 %v2122, %v2190
      %v2192 = vpop.f32.mrb[0].mxu0
      %v2193 = vpop.f32.mrb[0].mxu0
      %v2194 = vadd.f32 %v2122, %v2193
      %v2195 = vpop.f32.mrb[0].mxu0
      %2196 = vmatprep.mubr.bf16.mxu0 0
      %2197 = vmatmul.mubr.bf16.gmra.mrb[0].mxu0 %v2131
      %v2198 = vpop.f32.mrb[0].mxu0
      %v2199 = vadd.f32 %v2122, %v2198
      %v2200 = vpop.f32.mrb[0].mxu0
      %v2201 = vpop.f32.mrb[0].mxu0
      %v2202 = vadd.f32 %v2122, %v2201
      %v2203 = vpop.f32.mrb[0].mxu0
      %2204 = vmatprep.mubr.bf16.mxu0 0
      %2205 = vmatmul.mubr.bf16.gmra.mrb[0].mxu0 %v2134
      %v2206 = vpop.f32.mrb[0].mxu0
      %v2207 = vadd.f32 %v2122, %v2206
      %v2208 = vpop.f32.mrb[0].mxu0
      %v2209 = vpop.f32.mrb[0].mxu0
      %v2210 = vadd.f32 %v2122, %v2209
      %v2211 = vpop.f32.mrb[0].mxu0
      %2212 = vmatprep.mubr.bf16.mxu0 0
      %2213 = vmatmul.mubr.bf16.gmra.mrb[0].mxu0 %v2137
      %v2214 = vpop.f32.mrb[0].mxu0
      %v2215 = vadd.f32 %v2122, %v2214
      %v2216 = vpop.f32.mrb[0].mxu0
      %v2217 = vpop.f32.mrb[0].mxu0
      %v2218 = vadd.f32 %v2122, %v2217
      %v2219 = vpop.f32.mrb[0].mxu0
      %2220 = vmatprep.mubr.bf16.mxu0 0
      %2221 = vmatmul.mubr.bf16.gmra.mrb[0].mxu0 %v2140
      %v2222 = vpop.f32.mrb[0].mxu0
      %v2223 = vadd.f32 %v2122, %v2222
      %v2224 = vpop.f32.mrb[0].mxu0
      %v2225 = vpop.f32.mrb[0].mxu0
      %v2226 = vadd.f32 %v2122, %v2225
      %v2227 = vpop.f32.mrb[0].mxu0
      %2228 = vmatprep.mubr.bf16.mxu0 0
      %2229 = vmatmul.mubr.bf16.gmra.mrb[0].mxu0 %v2143
      %v2230 = vpop.f32.mrb[0].mxu0
      %v2231 = vadd.f32 %v2122, %v2230
      %v2232 = vpop.f32.mrb[0].mxu0
      %v2233 = vpop.f32.mrb[0].mxu0
      %v2234 = vadd.f32 %v2122, %v2233
      %v2235 = vpop.f32.mrb[0].mxu0
      %2236 = vmatprep.mubr.bf16.mxu0 0
      %2237 = vmatmul.mubr.bf16.gmra.mrb[0].mxu0 %v2146
      %v2238 = vpop.f32.mrb[0].mxu0
      %v2239 = vadd.f32 %v2122, %v2238
      %v2240 = vpop.f32.mrb[0].mxu0
      %v2241 = vpop.f32.mrb[0].mxu0
      %v2242 = vadd.f32 %v2122, %v2241
      %v2243 = vpop.f32.mrb[0].mxu0
      %2244 = vdwg.mxu0
      %2245 = vrot.lane.b32.xlu0 %v2067, 64
      %v2246 = vpop.permute.xlu0 %2245
      %2247 = vrot.lane.b32.xlu0 %v2068, 64
      %v2248 = vpop.permute.xlu0 %2247
      %2251 = vrot.lane.b32.xlu0 %v2057, 64
      %v2252 = vpop.permute.xlu0 %2251
      %v2255 = vsel %vm905, %v2034, 0
      %v2258 = vsel %vm905, %v2035, 0
      %v2261 = vsel %vm905, %v2036, 0
      %v2264 = vsel %vm905, %v2037, 0
      %v2267 = vsel %vm905, %v2038, 0
      %v2270 = vsel %vm905, %v2039, 0
      %v2273 = vsel %vm905, %v2040, 0
      %v2276 = vsel %vm905, %v2041, 0
      %2278 = vmatprep.subr.bf16.mxu0 0
      %2279 = vmatpush1.bf16.msra.mxu0 %v2246
      %2280 = vmatprep.subr.bf16.mxu0 0
      %2281 = vmatpush1.bf16.msra.mxu0 %v2248
      %2282 = vmatprep.subr.bf16.mxu0 0
      %2283 = vmatpush1.bf16.msra.mxu0 0
      %2284 = vmatprep.subr.bf16.mxu0 0
      %2285 = vmatpush1.bf16.msra.mxu0 0
      %2286 = vmatprep.subr.bf16.mxu0 0
      %2287 = vmatpush1.bf16.msra.mxu0 0
      %2288 = vmatprep.subr.bf16.mxu0 0
      %2289 = vmatpush1.bf16.msra.mxu0 0
      %2290 = vmatprep.subr.bf16.mxu0 0
      %2291 = vmatpush1.bf16.msra.mxu0 0
      %2292 = vmatprep.subr.bf16.mxu0 0
      %2293 = vmatpush1.bf16.msra.mxu0 0
      %2294 = vmatprep.subr.bf16.mxu0 0
      %2295 = vmatpush1.bf16.msra.mxu0 0
      %2296 = vmatprep.subr.bf16.mxu0 0
      %2297 = vmatpush1.bf16.msra.mxu0 0
      %2298 = vmatprep.subr.bf16.mxu0 0
      %2299 = vmatpush1.bf16.msra.mxu0 0
      %2300 = vmatprep.subr.bf16.mxu0 0
      %2301 = vmatpush1.bf16.msra.mxu0 0
      %2302 = vmatprep.subr.bf16.mxu0 0
      %2303 = vmatpush1.bf16.msra.mxu0 0
      %2304 = vmatprep.subr.bf16.mxu0 0
      %2305 = vmatpush1.bf16.msra.mxu0 0
      %2306 = vmatprep.subr.bf16.mxu0 0
      %2307 = vmatpush1.bf16.msra.mxu0 0
      %2308 = vmatprep.subr.bf16.mxu0 0
      %2309 = vmatpush1.bf16.msra.mxu0 0
      %2310 = vmatprep.mubr.bf16.mxu0 0
      %2311 = vmatmul.mubr.bf16.gmra.mrb[0].mxu0 %v2255
      %v2312 = vpop.f32.mrb[0].mxu0
      %v2313 = vadd.f32 %v2252, %v2312
      %v2314 = vpop.f32.mrb[0].mxu0
      %v2315 = vpop.f32.mrb[0].mxu0
      %v2316 = vadd.f32 %v2252, %v2315
      %v2317 = vpop.f32.mrb[0].mxu0
      %2318 = vmatprep.mubr.bf16.mxu0 0
      %2319 = vmatmul.mubr.bf16.gmra.mrb[0].mxu0 %v2258
      %v2320 = vpop.f32.mrb[0].mxu0
      %v2321 = vadd.f32 %v2252, %v2320
      %v2322 = vpop.f32.mrb[0].mxu0
      %v2323 = vpop.f32.mrb[0].mxu0
      %v2324 = vadd.f32 %v2252, %v2323
      %v2325 = vpop.f32.mrb[0].mxu0
      %2326 = vmatprep.mubr.bf16.mxu0 0
      %2327 = vmatmul.mubr.bf16.gmra.mrb[0].mxu0 %v2261
      %v2328 = vpop.f32.mrb[0].mxu0
      %v2329 = vadd.f32 %v2252, %v2328
      %v2330 = vpop.f32.mrb[0].mxu0
      %v2331 = vpop.f32.mrb[0].mxu0
      %v2332 = vadd.f32 %v2252, %v2331
      %v2333 = vpop.f32.mrb[0].mxu0
      %2334 = vmatprep.mubr.bf16.mxu0 0
      %2335 = vmatmul.mubr.bf16.gmra.mrb[0].mxu0 %v2264
      %v2336 = vpop.f32.mrb[0].mxu0
      %v2337 = vadd.f32 %v2252, %v2336
      %v2338 = vpop.f32.mrb[0].mxu0
      %v2339 = vpop.f32.mrb[0].mxu0
      %v2340 = vadd.f32 %v2252, %v2339
      %v2341 = vpop.f32.mrb[0].mxu0
      %2342 = vmatprep.mubr.bf16.mxu0 0
      %2343 = vmatmul.mubr.bf16.gmra.mrb[0].mxu0 %v2267
      %v2344 = vpop.f32.mrb[0].mxu0
      %v2345 = vadd.f32 %v2252, %v2344
      %v2346 = vpop.f32.mrb[0].mxu0
      %v2347 = vpop.f32.mrb[0].mxu0
      %v2348 = vadd.f32 %v2252, %v2347
      %v2349 = vpop.f32.mrb[0].mxu0
      %2350 = vmatprep.mubr.bf16.mxu0 0
      %2351 = vmatmul.mubr.bf16.gmra.mrb[0].mxu0 %v2270
      %v2352 = vpop.f32.mrb[0].mxu0
      %v2353 = vadd.f32 %v2252, %v2352
      %v2354 = vpop.f32.mrb[0].mxu0
      %v2355 = vpop.f32.mrb[0].mxu0
      %v2356 = vadd.f32 %v2252, %v2355
      %v2357 = vpop.f32.mrb[0].mxu0
      %2358 = vmatprep.mubr.bf16.mxu0 0
      %2359 = vmatmul.mubr.bf16.gmra.mrb[0].mxu0 %v2273
      %v2360 = vpop.f32.mrb[0].mxu0
      %v2361 = vadd.f32 %v2252, %v2360
      %v2362 = vpop.f32.mrb[0].mxu0
      %v2363 = vpop.f32.mrb[0].mxu0
      %v2364 = vadd.f32 %v2252, %v2363
      %v2365 = vpop.f32.mrb[0].mxu0
      %2366 = vmatprep.mubr.bf16.mxu0 0
      %2367 = vmatmul.mubr.bf16.gmra.mrb[0].mxu0 %v2276
      %v2368 = vpop.f32.mrb[0].mxu0
      %v2369 = vadd.f32 %v2252, %v2368
      %v2370 = vpop.f32.mrb[0].mxu0
      %v2371 = vpop.f32.mrb[0].mxu0
      %v2372 = vadd.f32 %v2252, %v2371
      %v2373 = vpop.f32.mrb[0].mxu0
      %2374 = vdwg.mxu0
      %v2375 = vpack.c.bf16 %v2112, %v2109
      %v2376 = vpack.c.bf16 %v2186, %v2183
      %v2377 = vpack.c.bf16 %v2194, %v2191
      %v2378 = vpack.c.bf16 %v2202, %v2199
      %v2379 = vpack.c.bf16 %v2210, %v2207
      %v2380 = vpack.c.bf16 %v2218, %v2215
      %v2381 = vpack.c.bf16 %v2226, %v2223
      %v2382 = vpack.c.bf16 %v2234, %v2231
      %v2383 = vpack.c.bf16 %v2242, %v2239
      %v2384 = vpack.c.bf16 %v2316, %v2313
      %v2385 = vpack.c.bf16 %v2324, %v2321
      %v2386 = vpack.c.bf16 %v2332, %v2329
      %v2387 = vpack.c.bf16 %v2340, %v2337
      %v2388 = vpack.c.bf16 %v2348, %v2345
      %v2389 = vpack.c.bf16 %v2356, %v2353
      %v2390 = vpack.c.bf16 %v2364, %v2361
      %v2391 = vpack.c.bf16 %v2372, %v2369
      %v2393 = vlaneseq
      %v2394 = vshrl.u32 %v2393, 7
      %v2395 = vsub.s32 0, %v2394
      %v2396 = vrot.slane %v869, %v2395
      %v2399 = vsel %vm1008, %v2375, 0
      %v2402 = vsel %vm1008, %v2376, 0
      %v2405 = vsel %vm1008, %v2377, 0
      %v2408 = vsel %vm1008, %v2378, 0
      %v2411 = vsel %vm1008, %v2379, 0
      %2413 = vmatprep.subr.bf16.mxu0 0
      %2414 = vmatpush1.bf16.xpose.msra.mxu0 %v2402
      %2415 = vmatprep.subr.bf16.mxu0 0
      %2416 = vmatpush1.bf16.xpose.msra.mxu0 %v2405
      %2417 = vmatprep.subr.bf16.mxu0 0
      %2418 = vmatpush1.bf16.xpose.msra.mxu0 %v2408
      %2419 = vmatprep.subr.bf16.mxu0 0
      %2420 = vmatpush1.bf16.xpose.msra.mxu0 %v2411
      %2421 = vmatprep.subr.bf16.mxu0 0
      %2422 = vmatpush1.bf16.xpose.msra.mxu0 0
      %2423 = vmatprep.subr.bf16.mxu0 0
      %2424 = vmatpush1.bf16.xpose.msra.mxu0 0
      %2425 = vmatprep.subr.bf16.mxu0 0
      %2426 = vmatpush1.bf16.xpose.msra.mxu0 0
      %2427 = vmatprep.subr.bf16.mxu0 0
      %2428 = vmatpush1.bf16.xpose.msra.mxu0 0
      %2429 = vmatprep.subr.bf16.mxu0 0
      %2430 = vmatpush1.bf16.xpose.msra.mxu0 0
      %2431 = vmatprep.subr.bf16.mxu0 0
      %2432 = vmatpush1.bf16.xpose.msra.mxu0 0
      %2433 = vmatprep.subr.bf16.mxu0 0
      %2434 = vmatpush1.bf16.xpose.msra.mxu0 0
      %2435 = vmatprep.subr.bf16.mxu0 0
      %2436 = vmatpush1.bf16.xpose.msra.mxu0 0
      %2437 = vmatprep.subr.bf16.mxu0 0
      %2438 = vmatpush1.bf16.xpose.msra.mxu0 0
      %2439 = vmatprep.subr.bf16.mxu0 0
      %2440 = vmatpush1.bf16.xpose.msra.mxu0 0
      %2441 = vmatprep.subr.bf16.mxu0 0
      %2442 = vmatpush1.bf16.xpose.msra.mxu0 0
      %2443 = vmatprep.subr.bf16.mxu0 0
      %2444 = vmatpush1.bf16.xpose.msra.mxu0 0
      %2445 = vmatprep.mubr.bf16.mxu0 0
      %2446 = vmatmul.mubr.bf16.gmra.mrb[0].mxu0 %v2399
      %v2447 = vpop.f32.mrb[0].mxu0
      %v2448 = vadd.f32 %v2396, %v2447
      %v2449 = vpop.f32.mrb[0].mxu0
      %v2450 = vpop.f32.mrb[0].mxu0
      %v2451 = vpop.f32.mrb[0].mxu0
      %2452 = vdwg.mxu0
      %vm2453 = vcmask 523264
      %v2454 = vsel %vm2453, %v2448, -inf
      %2455 = vmax.xlane.f32.xlu0 %v2454
      %v2456 = vpop.xlane.xlu0 %2455
      %v2457 = vsub.f32 %v2448, %v2456
      %v2458 = vmul.f32 %v2457, 1.442695
      %v2459 = vpow.pop %v2458
      %v2460 = vsel %vm2453, %v2459, 0.0
      %2461 = vadd.xlane.f32.xlu0 %v2460
      %v2462 = vpop.xlane.xlu0 %2461
      %v2463 = vrcp.pop %v2462
      %v2464 = vmul.f32 %v2459, %v2463
      %v2465 = vpack.c.bf16 %v2464, %v2464
      %v2467 = vsel %vm2453, %v2465, 0
      %2469 = vmatprep.subr.bf16.mxu0 0
      %2470 = vmatpush1.bf16.msra.mxu0 %v2384
      %2471 = vmatprep.subr.bf16.mxu0 0
      %2472 = vmatpush1.bf16.msra.mxu0 %v2385
      %2473 = vmatprep.subr.bf16.mxu0 0
      %2474 = vmatpush1.bf16.msra.mxu0 %v2386
      %2475 = vmatprep.subr.bf16.mxu0 0
      %2476 = vmatpush1.bf16.msra.mxu0 %v2387
      %2477 = vmatprep.subr.bf16.mxu0 0
      %2478 = vmatpush1.bf16.msra.mxu0 0
      %2479 = vmatprep.subr.bf16.mxu0 0
      %2480 = vmatpush1.bf16.msra.mxu0 0
      %2481 = vmatprep.subr.bf16.mxu0 0
      %2482 = vmatpush1.bf16.msra.mxu0 0
      %2483 = vmatprep.subr.bf16.mxu0 0
      %2484 = vmatpush1.bf16.msra.mxu0 0
      %2485 = vmatprep.subr.bf16.mxu0 0
      %2486 = vmatpush1.bf16.msra.mxu0 0
      %2487 = vmatprep.subr.bf16.mxu0 0
      %2488 = vmatpush1.bf16.msra.mxu0 0
      %2489 = vmatprep.subr.bf16.mxu0 0
      %2490 = vmatpush1.bf16.msra.mxu0 0
      %2491 = vmatprep.subr.bf16.mxu0 0
      %2492 = vmatpush1.bf16.msra.mxu0 0
      %2493 = vmatprep.subr.bf16.mxu0 0
      %2494 = vmatpush1.bf16.msra.mxu0 0
      %2495 = vmatprep.subr.bf16.mxu0 0
      %2496 = vmatpush1.bf16.msra.mxu0 0
      %2497 = vmatprep.subr.bf16.mxu0 0
      %2498 = vmatpush1.bf16.msra.mxu0 0
      %2499 = vmatprep.subr.bf16.mxu0 0
      %2500 = vmatpush1.bf16.msra.mxu0 0
      %2501 = vmatprep.mubr.bf16.mxu0 0
      %2502 = vmatmul.mubr.bf16.gmra.mrb[0].mxu0 %v2467
      %v2503 = vpop.f32.mrb[0].mxu0
      %v2504 = vadd.f32 0.0, %v2503
      %v2505 = vpop.f32.mrb[0].mxu0
      %v2506 = vpop.f32.mrb[0].mxu0
      %v2507 = vpop.f32.mrb[0].mxu0
      %2508 = vdwg.mxu0
      %2509 = vst.msk [vmem:[#allocation3] sm:$0xff] %vm1008, %v2504
      %2511 = vrot.lane.b32.xlu0 %v2375, 120
      %v2512 = vpop.permute.xlu0 %2511
      %2517 = vrot.lane.b32.xlu0 %v2376, 120
      %v2518 = vpop.permute.xlu0 %2517
      %2519 = vrot.lane.b32.xlu0 %v2377, 120
      %v2520 = vpop.permute.xlu0 %2519
      %2521 = vrot.lane.b32.xlu0 %v2378, 120
      %v2522 = vpop.permute.xlu0 %2521
      %2523 = vrot.lane.b32.xlu0 %v2379, 120
      %v2524 = vpop.permute.xlu0 %2523
      %v2526 = vsel %vm1008, %v2512, 0
      %v2529 = vsel %vm1008, %v2518, 0
      %v2532 = vsel %vm1008, %v2520, 0
      %v2535 = vsel %vm1008, %v2522, 0
      %v2538 = vsel %vm1008, %v2524, 0
      %2540 = vmatprep.subr.bf16.mxu0 0
      %2541 = vmatpush1.bf16.xpose.msra.mxu0 %v2529
      %2542 = vmatprep.subr.bf16.mxu0 0
      %2543 = vmatpush1.bf16.xpose.msra.mxu0 %v2532
      %2544 = vmatprep.subr.bf16.mxu0 0
      %2545 = vmatpush1.bf16.xpose.msra.mxu0 %v2535
      %2546 = vmatprep.subr.bf16.mxu0 0
      %2547 = vmatpush1.bf16.xpose.msra.mxu0 %v2538
      %2548 = vmatprep.subr.bf16.mxu0 0
      %2549 = vmatpush1.bf16.xpose.msra.mxu0 0
      %2550 = vmatprep.subr.bf16.mxu0 0
      %2551 = vmatpush1.bf16.xpose.msra.mxu0 0
      %2552 = vmatprep.subr.bf16.mxu0 0
      %2553 = vmatpush1.bf16.xpose.msra.mxu0 0
      %2554 = vmatprep.subr.bf16.mxu0 0
      %2555 = vmatpush1.bf16.xpose.msra.mxu0 0
      %2556 = vmatprep.subr.bf16.mxu0 0
      %2557 = vmatpush1.bf16.xpose.msra.mxu0 0
      %2558 = vmatprep.subr.bf16.mxu0 0
      %2559 = vmatpush1.bf16.xpose.msra.mxu0 0
      %2560 = vmatprep.subr.bf16.mxu0 0
      %2561 = vmatpush1.bf16.xpose.msra.mxu0 0
      %2562 = vmatprep.subr.bf16.mxu0 0
      %2563 = vmatpush1.bf16.xpose.msra.mxu0 0
      %2564 = vmatprep.subr.bf16.mxu0 0
      %2565 = vmatpush1.bf16.xpose.msra.mxu0 0
      %2566 = vmatprep.subr.bf16.mxu0 0
      %2567 = vmatpush1.bf16.xpose.msra.mxu0 0
      %2568 = vmatprep.subr.bf16.mxu0 0
      %2569 = vmatpush1.bf16.xpose.msra.mxu0 0
      %2570 = vmatprep.subr.bf16.mxu0 0
      %2571 = vmatpush1.bf16.xpose.msra.mxu0 0
      %2572 = vmatprep.mubr.bf16.mxu0 0
      %2573 = vmatmul.mubr.bf16.gmra.mrb[0].mxu0 %v2526
      %v2574 = vpop.f32.mrb[0].mxu0
      %v2575 = vadd.f32 %v2396, %v2574
      %v2576 = vpop.f32.mrb[0].mxu0
      %v2577 = vpop.f32.mrb[0].mxu0
      %v2578 = vpop.f32.mrb[0].mxu0
      %2579 = vdwg.mxu0
      %v2580 = vsel %vm2453, %v2575, -inf
      %2581 = vmax.xlane.f32.xlu0 %v2580
      %v2582 = vpop.xlane.xlu0 %2581
      %v2583 = vsub.f32 %v2575, %v2582
      %v2584 = vmul.f32 %v2583, 1.442695
      %v2585 = vpow.pop %v2584
      %v2586 = vsel %vm2453, %v2585, 0.0
      %2587 = vadd.xlane.f32.xlu0 %v2586
      %v2588 = vpop.xlane.xlu0 %2587
      %v2589 = vrcp.pop %v2588
      %v2590 = vmul.f32 %v2585, %v2589
      %v2591 = vpack.c.bf16 %v2590, %v2590
      %2596 = vrot.lane.b32.xlu0 %v2384, 120
      %v2597 = vpop.permute.xlu0 %2596
      %2598 = vrot.lane.b32.xlu0 %v2385, 120
      %v2599 = vpop.permute.xlu0 %2598
      %2600 = vrot.lane.b32.xlu0 %v2386, 120
      %v2601 = vpop.permute.xlu0 %2600
      %2602 = vrot.lane.b32.xlu0 %v2387, 120
      %v2603 = vpop.permute.xlu0 %2602
      %v2609 = vsel %vm2453, %v2591, 0
      %2611 = vmatprep.subr.bf16.mxu0 0
      %2612 = vmatpush1.bf16.msra.mxu0 %v2597
      %2613 = vmatprep.subr.bf16.mxu0 0
      %2614 = vmatpush1.bf16.msra.mxu0 %v2599
      %2615 = vmatprep.subr.bf16.mxu0 0
      %2616 = vmatpush1.bf16.msra.mxu0 %v2601
      %2617 = vmatprep.subr.bf16.mxu0 0
      %2618 = vmatpush1.bf16.msra.mxu0 %v2603
      %2619 = vmatprep.subr.bf16.mxu0 0
      %2620 = vmatpush1.bf16.msra.mxu0 0
      %2621 = vmatprep.subr.bf16.mxu0 0
      %2622 = vmatpush1.bf16.msra.mxu0 0
      %2623 = vmatprep.subr.bf16.mxu0 0
      %2624 = vmatpush1.bf16.msra.mxu0 0
      %2625 = vmatprep.subr.bf16.mxu0 0
      %2626 = vmatpush1.bf16.msra.mxu0 0
      %2627 = vmatprep.subr.bf16.mxu0 0
      %2628 = vmatpush1.bf16.msra.mxu0 0
      %2629 = vmatprep.subr.bf16.mxu0 0
      %2630 = vmatpush1.bf16.msra.mxu0 0
      %2631 = vmatprep.subr.bf16.mxu0 0
      %2632 = vmatpush1.bf16.msra.mxu0 0
      %2633 = vmatprep.subr.bf16.mxu0 0
      %2634 = vmatpush1.bf16.msra.mxu0 0
      %2635 = vmatprep.subr.bf16.mxu0 0
      %2636 = vmatpush1.bf16.msra.mxu0 0
      %2637 = vmatprep.subr.bf16.mxu0 0
      %2638 = vmatpush1.bf16.msra.mxu0 0
      %2639 = vmatprep.subr.bf16.mxu0 0
      %2640 = vmatpush1.bf16.msra.mxu0 0
      %2641 = vmatprep.subr.bf16.mxu0 0
      %2642 = vmatpush1.bf16.msra.mxu0 0
      %2643 = vmatprep.mubr.bf16.mxu0 0
      %2644 = vmatmul.mubr.bf16.gmra.mrb[0].mxu0 %v2609
      %v2645 = vpop.f32.mrb[0].mxu0
      %v2646 = vadd.f32 0.0, %v2645
      %v2647 = vpop.f32.mrb[0].mxu0
      %v2648 = vpop.f32.mrb[0].mxu0
      %v2649 = vpop.f32.mrb[0].mxu0
      %2650 = vdwg.mxu0
      %2652 = vrot.lane.b32.xlu0 %v2646, 8
      %v2653 = vpop.permute.xlu0 %2652
      %2655 = vst.msk [vmem:[#allocation3] sm:$0xff] %vm1230, %v2653
      %2656 = vrot.lane.b32.xlu0 %v2375, 112
      %v2657 = vpop.permute.xlu0 %2656
      %2658 = vrot.lane.b32.xlu0 %v2376, 112
      %v2659 = vpop.permute.xlu0 %2658
      %2660 = vrot.lane.b32.xlu0 %v2377, 112
      %v2661 = vpop.permute.xlu0 %2660
      %2662 = vrot.lane.b32.xlu0 %v2378, 112
      %v2663 = vpop.permute.xlu0 %2662
      %2664 = vrot.lane.b32.xlu0 %v2379, 112
      %v2665 = vpop.permute.xlu0 %2664
      %v2667 = vsel %vm1008, %v2657, 0
      %v2670 = vsel %vm1008, %v2659, 0
      %v2673 = vsel %vm1008, %v2661, 0
      %v2676 = vsel %vm1008, %v2663, 0
      %v2679 = vsel %vm1008, %v2665, 0
      %2681 = vmatprep.subr.bf16.mxu0 0
      %2682 = vmatpush1.bf16.xpose.msra.mxu0 %v2670
      %2683 = vmatprep.subr.bf16.mxu0 0
      %2684 = vmatpush1.bf16.xpose.msra.mxu0 %v2673
      %2685 = vmatprep.subr.bf16.mxu0 0
      %2686 = vmatpush1.bf16.xpose.msra.mxu0 %v2676
      %2687 = vmatprep.subr.bf16.mxu0 0
      %2688 = vmatpush1.bf16.xpose.msra.mxu0 %v2679
      %2689 = vmatprep.subr.bf16.mxu0 0
      %2690 = vmatpush1.bf16.xpose.msra.mxu0 0
      %2691 = vmatprep.subr.bf16.mxu0 0
      %2692 = vmatpush1.bf16.xpose.msra.mxu0 0
      %2693 = vmatprep.subr.bf16.mxu0 0
      %2694 = vmatpush1.bf16.xpose.msra.mxu0 0
      %2695 = vmatprep.subr.bf16.mxu0 0
      %2696 = vmatpush1.bf16.xpose.msra.mxu0 0
      %2697 = vmatprep.subr.bf16.mxu0 0
      %2698 = vmatpush1.bf16.xpose.msra.mxu0 0
      %2699 = vmatprep.subr.bf16.mxu0 0
      %2700 = vmatpush1.bf16.xpose.msra.mxu0 0
      %2701 = vmatprep.subr.bf16.mxu0 0
      %2702 = vmatpush1.bf16.xpose.msra.mxu0 0
      %2703 = vmatprep.subr.bf16.mxu0 0
      %2704 = vmatpush1.bf16.xpose.msra.mxu0 0
      %2705 = vmatprep.subr.bf16.mxu0 0
      %2706 = vmatpush1.bf16.xpose.msra.mxu0 0
      %2707 = vmatprep.subr.bf16.mxu0 0
      %2708 = vmatpush1.bf16.xpose.msra.mxu0 0
      %2709 = vmatprep.subr.bf16.mxu0 0
      %2710 = vmatpush1.bf16.xpose.msra.mxu0 0
      %2711 = vmatprep.subr.bf16.mxu0 0
      %2712 = vmatpush1.bf16.xpose.msra.mxu0 0
      %2713 = vmatprep.mubr.bf16.mxu0 0
      %2714 = vmatmul.mubr.bf16.gmra.mrb[0].mxu0 %v2667
      %v2715 = vpop.f32.mrb[0].mxu0
      %v2716 = vadd.f32 %v2396, %v2715
      %v2717 = vpop.f32.mrb[0].mxu0
      %v2718 = vpop.f32.mrb[0].mxu0
      %v2719 = vpop.f32.mrb[0].mxu0
      %2720 = vdwg.mxu0
      %v2721 = vsel %vm2453, %v2716, -inf
      %2722 = vmax.xlane.f32.xlu0 %v2721
      %v2723 = vpop.xlane.xlu0 %2722
      %v2724 = vsub.f32 %v2716, %v2723
      %v2725 = vmul.f32 %v2724, 1.442695
      %v2726 = vpow.pop %v2725
      %v2727 = vsel %vm2453, %v2726, 0.0
      %2728 = vadd.xlane.f32.xlu0 %v2727
      %v2729 = vpop.xlane.xlu0 %2728
      %v2730 = vrcp.pop %v2729
      %v2731 = vmul.f32 %v2726, %v2730
      %v2732 = vpack.c.bf16 %v2731, %v2731
      %2733 = vrot.lane.b32.xlu0 %v2384, 112
      %v2734 = vpop.permute.xlu0 %2733
      %2735 = vrot.lane.b32.xlu0 %v2385, 112
      %v2736 = vpop.permute.xlu0 %2735
      %2737 = vrot.lane.b32.xlu0 %v2386, 112
      %v2738 = vpop.permute.xlu0 %2737
      %2739 = vrot.lane.b32.xlu0 %v2387, 112
      %v2740 = vpop.permute.xlu0 %2739
      %v2746 = vsel %vm2453, %v2732, 0
      %2748 = vmatprep.subr.bf16.mxu0 0
      %2749 = vmatpush1.bf16.msra.mxu0 %v2734
      %2750 = vmatprep.subr.bf16.mxu0 0
      %2751 = vmatpush1.bf16.msra.mxu0 %v2736
      %2752 = vmatprep.subr.bf16.mxu0 0
      %2753 = vmatpush1.bf16.msra.mxu0 %v2738
      %2754 = vmatprep.subr.bf16.mxu0 0
      %2755 = vmatpush1.bf16.msra.mxu0 %v2740
      %2756 = vmatprep.subr.bf16.mxu0 0
      %2757 = vmatpush1.bf16.msra.mxu0 0
      %2758 = vmatprep.subr.bf16.mxu0 0
      %2759 = vmatpush1.bf16.msra.mxu0 0
      %2760 = vmatprep.subr.bf16.mxu0 0
      %2761 = vmatpush1.bf16.msra.mxu0 0
      %2762 = vmatprep.subr.bf16.mxu0 0
      %2763 = vmatpush1.bf16.msra.mxu0 0
      %2764 = vmatprep.subr.bf16.mxu0 0
      %2765 = vmatpush1.bf16.msra.mxu0 0
      %2766 = vmatprep.subr.bf16.mxu0 0
      %2767 = vmatpush1.bf16.msra.mxu0 0
      %2768 = vmatprep.subr.bf16.mxu0 0
      %2769 = vmatpush1.bf16.msra.mxu0 0
      %2770 = vmatprep.subr.bf16.mxu0 0
      %2771 = vmatpush1.bf16.msra.mxu0 0
      %2772 = vmatprep.subr.bf16.mxu0 0
      %2773 = vmatpush1.bf16.msra.mxu0 0
      %2774 = vmatprep.subr.bf16.mxu0 0
      %2775 = vmatpush1.bf16.msra.mxu0 0
      %2776 = vmatprep.subr.bf16.mxu0 0
      %2777 = vmatpush1.bf16.msra.mxu0 0
      %2778 = vmatprep.subr.bf16.mxu0 0
      %2779 = vmatpush1.bf16.msra.mxu0 0
      %2780 = vmatprep.mubr.bf16.mxu0 0
      %2781 = vmatmul.mubr.bf16.gmra.mrb[0].mxu0 %v2746
      %v2782 = vpop.f32.mrb[0].mxu0
      %v2783 = vadd.f32 0.0, %v2782
      %v2784 = vpop.f32.mrb[0].mxu0
      %v2785 = vpop.f32.mrb[0].mxu0
      %v2786 = vpop.f32.mrb[0].mxu0
      %2787 = vdwg.mxu0
      %2789 = vrot.lane.b32.xlu0 %v2783, 16
      %v2790 = vpop.permute.xlu0 %2789
      %2792 = vst.msk [vmem:[#allocation3] sm:$0xff] %vm1346, %v2790
      %2793 = vrot.lane.b32.xlu0 %v2375, 104
      %v2794 = vpop.permute.xlu0 %2793
      %2795 = vrot.lane.b32.xlu0 %v2376, 104
      %v2796 = vpop.permute.xlu0 %2795
      %2797 = vrot.lane.b32.xlu0 %v2377, 104
      %v2798 = vpop.permute.xlu0 %2797
      %2799 = vrot.lane.b32.xlu0 %v2378, 104
      %v2800 = vpop.permute.xlu0 %2799
      %2801 = vrot.lane.b32.xlu0 %v2379, 104
      %v2802 = vpop.permute.xlu0 %2801
      %v2804 = vsel %vm1008, %v2794, 0
      %v2807 = vsel %vm1008, %v2796, 0
      %v2810 = vsel %vm1008, %v2798, 0
      %v2813 = vsel %vm1008, %v2800, 0
      %v2816 = vsel %vm1008, %v2802, 0
      %2818 = vmatprep.subr.bf16.mxu0 0
      %2819 = vmatpush1.bf16.xpose.msra.mxu0 %v2807
      %2820 = vmatprep.subr.bf16.mxu0 0
      %2821 = vmatpush1.bf16.xpose.msra.mxu0 %v2810
      %2822 = vmatprep.subr.bf16.mxu0 0
      %2823 = vmatpush1.bf16.xpose.msra.mxu0 %v2813
      %2824 = vmatprep.subr.bf16.mxu0 0
      %2825 = vmatpush1.bf16.xpose.msra.mxu0 %v2816
      %2826 = vmatprep.subr.bf16.mxu0 0
      %2827 = vmatpush1.bf16.xpose.msra.mxu0 0
      %2828 = vmatprep.subr.bf16.mxu0 0
      %2829 = vmatpush1.bf16.xpose.msra.mxu0 0
      %2830 = vmatprep.subr.bf16.mxu0 0
      %2831 = vmatpush1.bf16.xpose.msra.mxu0 0
      %2832 = vmatprep.subr.bf16.mxu0 0
      %2833 = vmatpush1.bf16.xpose.msra.mxu0 0
      %2834 = vmatprep.subr.bf16.mxu0 0
      %2835 = vmatpush1.bf16.xpose.msra.mxu0 0
      %2836 = vmatprep.subr.bf16.mxu0 0
      %2837 = vmatpush1.bf16.xpose.msra.mxu0 0
      %2838 = vmatprep.subr.bf16.mxu0 0
      %2839 = vmatpush1.bf16.xpose.msra.mxu0 0
      %2840 = vmatprep.subr.bf16.mxu0 0
      %2841 = vmatpush1.bf16.xpose.msra.mxu0 0
      %2842 = vmatprep.subr.bf16.mxu0 0
      %2843 = vmatpush1.bf16.xpose.msra.mxu0 0
      %2844 = vmatprep.subr.bf16.mxu0 0
      %2845 = vmatpush1.bf16.xpose.msra.mxu0 0
      %2846 = vmatprep.subr.bf16.mxu0 0
      %2847 = vmatpush1.bf16.xpose.msra.mxu0 0
      %2848 = vmatprep.subr.bf16.mxu0 0
      %2849 = vmatpush1.bf16.xpose.msra.mxu0 0
      %2850 = vmatprep.mubr.bf16.mxu0 0
      %2851 = vmatmul.mubr.bf16.gmra.mrb[0].mxu0 %v2804
      %v2852 = vpop.f32.mrb[0].mxu0
      %v2853 = vadd.f32 %v2396, %v2852
      %v2854 = vpop.f32.mrb[0].mxu0
      %v2855 = vpop.f32.mrb[0].mxu0
      %v2856 = vpop.f32.mrb[0].mxu0
      %2857 = vdwg.mxu0
      %v2858 = vsel %vm2453, %v2853, -inf
      %2859 = vmax.xlane.f32.xlu0 %v2858
      %v2860 = vpop.xlane.xlu0 %2859
      %v2861 = vsub.f32 %v2853, %v2860
      %v2862 = vmul.f32 %v2861, 1.442695
      %v2863 = vpow.pop %v2862
      %v2864 = vsel %vm2453, %v2863, 0.0
      %2865 = vadd.xlane.f32.xlu0 %v2864
      %v2866 = vpop.xlane.xlu0 %2865
      %v2867 = vrcp.pop %v2866
      %v2868 = vmul.f32 %v2863, %v2867
      %v2869 = vpack.c.bf16 %v2868, %v2868
      %2870 = vrot.lane.b32.xlu0 %v2384, 104
      %v2871 = vpop.permute.xlu0 %2870
      %2872 = vrot.lane.b32.xlu0 %v2385, 104
      %v2873 = vpop.permute.xlu0 %2872
      %2874 = vrot.lane.b32.xlu0 %v2386, 104
      %v2875 = vpop.permute.xlu0 %2874
      %2876 = vrot.lane.b32.xlu0 %v2387, 104
      %v2877 = vpop.permute.xlu0 %2876
      %v2883 = vsel %vm2453, %v2869, 0
      %2885 = vmatprep.subr.bf16.mxu0 0
      %2886 = vmatpush1.bf16.msra.mxu0 %v2871
      %2887 = vmatprep.subr.bf16.mxu0 0
      %2888 = vmatpush1.bf16.msra.mxu0 %v2873
      %2889 = vmatprep.subr.bf16.mxu0 0
      %2890 = vmatpush1.bf16.msra.mxu0 %v2875
      %2891 = vmatprep.subr.bf16.mxu0 0
      %2892 = vmatpush1.bf16.msra.mxu0 %v2877
      %2893 = vmatprep.subr.bf16.mxu0 0
      %2894 = vmatpush1.bf16.msra.mxu0 0
      %2895 = vmatprep.subr.bf16.mxu0 0
      %2896 = vmatpush1.bf16.msra.mxu0 0
      %2897 = vmatprep.subr.bf16.mxu0 0
      %2898 = vmatpush1.bf16.msra.mxu0 0
      %2899 = vmatprep.subr.bf16.mxu0 0
      %2900 = vmatpush1.bf16.msra.mxu0 0
      %2901 = vmatprep.subr.bf16.mxu0 0
      %2902 = vmatpush1.bf16.msra.mxu0 0
      %2903 = vmatprep.subr.bf16.mxu0 0
      %2904 = vmatpush1.bf16.msra.mxu0 0
      %2905 = vmatprep.subr.bf16.mxu0 0
      %2906 = vmatpush1.bf16.msra.mxu0 0
      %2907 = vmatprep.subr.bf16.mxu0 0
      %2908 = vmatpush1.bf16.msra.mxu0 0
      %2909 = vmatprep.subr.bf16.mxu0 0
      %2910 = vmatpush1.bf16.msra.mxu0 0
      %2911 = vmatprep.subr.bf16.mxu0 0
      %2912 = vmatpush1.bf16.msra.mxu0 0
      %2913 = vmatprep.subr.bf16.mxu0 0
      %2914 = vmatpush1.bf16.msra.mxu0 0
      %2915 = vmatprep.subr.bf16.mxu0 0
      %2916 = vmatpush1.bf16.msra.mxu0 0
      %2917 = vmatprep.mubr.bf16.mxu0 0
      %2918 = vmatmul.mubr.bf16.gmra.mrb[0].mxu0 %v2883
      %v2919 = vpop.f32.mrb[0].mxu0
      %v2920 = vadd.f32 0.0, %v2919
      %v2921 = vpop.f32.mrb[0].mxu0
      %v2922 = vpop.f32.mrb[0].mxu0
      %v2923 = vpop.f32.mrb[0].mxu0
      %2924 = vdwg.mxu0
      %2926 = vrot.lane.b32.xlu0 %v2920, 24
      %v2927 = vpop.permute.xlu0 %2926
      %2929 = vst.msk [vmem:[#allocation3] sm:$0xff] %vm1462, %v2927
      %v2931 = vlaneseq
      %v2932 = vshrl.u32 %v2931, 7
      %v2933 = vsub.s32 0, %v2932
      %v2934 = vrot.slane %v870, %v2933
      %v2936 = vrot.slane %v2375, 4
      %v2938 = vsel %vm1008, %v2936, 0
      %v2941 = vsel %vm1008, %v2380, 0
      %v2944 = vsel %vm1008, %v2381, 0
      %v2947 = vsel %vm1008, %v2382, 0
      %v2950 = vsel %vm1008, %v2383, 0
      %2952 = vmatprep.subr.bf16.mxu0 0
      %2953 = vmatpush1.bf16.xpose.msra.mxu0 %v2941
      %2954 = vmatprep.subr.bf16.mxu0 0
      %2955 = vmatpush1.bf16.xpose.msra.mxu0 %v2944
      %2956 = vmatprep.subr.bf16.mxu0 0
      %2957 = vmatpush1.bf16.xpose.msra.mxu0 %v2947
      %2958 = vmatprep.subr.bf16.mxu0 0
      %2959 = vmatpush1.bf16.xpose.msra.mxu0 %v2950
      %2960 = vmatprep.subr.bf16.mxu0 0
      %2961 = vmatpush1.bf16.xpose.msra.mxu0 0
      %2962 = vmatprep.subr.bf16.mxu0 0
      %2963 = vmatpush1.bf16.xpose.msra.mxu0 0
      %2964 = vmatprep.subr.bf16.mxu0 0
      %2965 = vmatpush1.bf16.xpose.msra.mxu0 0
      %2966 = vmatprep.subr.bf16.mxu0 0
      %2967 = vmatpush1.bf16.xpose.msra.mxu0 0
      %2968 = vmatprep.subr.bf16.mxu0 0
      %2969 = vmatpush1.bf16.xpose.msra.mxu0 0
      %2970 = vmatprep.subr.bf16.mxu0 0
      %2971 = vmatpush1.bf16.xpose.msra.mxu0 0
      %2972 = vmatprep.subr.bf16.mxu0 0
      %2973 = vmatpush1.bf16.xpose.msra.mxu0 0
      %2974 = vmatprep.subr.bf16.mxu0 0
      %2975 = vmatpush1.bf16.xpose.msra.mxu0 0
      %2976 = vmatprep.subr.bf16.mxu0 0
      %2977 = vmatpush1.bf16.xpose.msra.mxu0 0
      %2978 = vmatprep.subr.bf16.mxu0 0
      %2979 = vmatpush1.bf16.xpose.msra.mxu0 0
      %2980 = vmatprep.subr.bf16.mxu0 0
      %2981 = vmatpush1.bf16.xpose.msra.mxu0 0
      %2982 = vmatprep.subr.bf16.mxu0 0
      %2983 = vmatpush1.bf16.xpose.msra.mxu0 0
      %2984 = vmatprep.mubr.bf16.mxu0 0
      %2985 = vmatmul.mubr.bf16.gmra.mrb[0].mxu0 %v2938
      %v2986 = vpop.f32.mrb[0].mxu0
      %v2987 = vadd.f32 %v2934, %v2986
      %v2988 = vpop.f32.mrb[0].mxu0
      %v2989 = vpop.f32.mrb[0].mxu0
      %v2990 = vpop.f32.mrb[0].mxu0
      %2991 = vdwg.mxu0
      %v2992 = vsel %vm2453, %v2987, -inf
      %2993 = vmax.xlane.f32.xlu0 %v2992
      %v2994 = vpop.xlane.xlu0 %2993
      %v2995 = vsub.f32 %v2987, %v2994
      %v2996 = vmul.f32 %v2995, 1.442695
      %v2997 = vpow.pop %v2996
      %v2998 = vsel %vm2453, %v2997, 0.0
      %2999 = vadd.xlane.f32.xlu0 %v2998
      %v3000 = vpop.xlane.xlu0 %2999
      %v3001 = vrcp.pop %v3000
      %v3002 = vmul.f32 %v2997, %v3001
      %v3003 = vpack.c.bf16 %v3002, %v3002
      %v3005 = vsel %vm2453, %v3003, 0
      %3007 = vmatprep.subr.bf16.mxu0 0
      %3008 = vmatpush1.bf16.msra.mxu0 %v2388
      %3009 = vmatprep.subr.bf16.mxu0 0
      %3010 = vmatpush1.bf16.msra.mxu0 %v2389
      %3011 = vmatprep.subr.bf16.mxu0 0
      %3012 = vmatpush1.bf16.msra.mxu0 %v2390
      %3013 = vmatprep.subr.bf16.mxu0 0
      %3014 = vmatpush1.bf16.msra.mxu0 %v2391
      %3015 = vmatprep.subr.bf16.mxu0 0
      %3016 = vmatpush1.bf16.msra.mxu0 0
      %3017 = vmatprep.subr.bf16.mxu0 0
      %3018 = vmatpush1.bf16.msra.mxu0 0
      %3019 = vmatprep.subr.bf16.mxu0 0
      %3020 = vmatpush1.bf16.msra.mxu0 0
      %3021 = vmatprep.subr.bf16.mxu0 0
      %3022 = vmatpush1.bf16.msra.mxu0 0
      %3023 = vmatprep.subr.bf16.mxu0 0
      %3024 = vmatpush1.bf16.msra.mxu0 0
      %3025 = vmatprep.subr.bf16.mxu0 0
      %3026 = vmatpush1.bf16.msra.mxu0 0
      %3027 = vmatprep.subr.bf16.mxu0 0
      %3028 = vmatpush1.bf16.msra.mxu0 0
      %3029 = vmatprep.subr.bf16.mxu0 0
      %3030 = vmatpush1.bf16.msra.mxu0 0
      %3031 = vmatprep.subr.bf16.mxu0 0
      %3032 = vmatpush1.bf16.msra.mxu0 0
      %3033 = vmatprep.subr.bf16.mxu0 0
      %3034 = vmatpush1.bf16.msra.mxu0 0
      %3035 = vmatprep.subr.bf16.mxu0 0
      %3036 = vmatpush1.bf16.msra.mxu0 0
      %3037 = vmatprep.subr.bf16.mxu0 0
      %3038 = vmatpush1.bf16.msra.mxu0 0
      %3039 = vmatprep.mubr.bf16.mxu0 0
      %3040 = vmatmul.mubr.bf16.gmra.mrb[0].mxu0 %v3005
      %v3041 = vpop.f32.mrb[0].mxu0
      %v3042 = vadd.f32 0.0, %v3041
      %v3043 = vpop.f32.mrb[0].mxu0
      %v3044 = vpop.f32.mrb[0].mxu0
      %v3045 = vpop.f32.mrb[0].mxu0
      %3046 = vdwg.mxu0
      %3047 = vst.msk [vmem:[#allocation3 + $0x8] sm:$0xff] %vm1008, %v3042
      %3048 = vrot.lane.b32.xlu0 %v2936, 120
      %v3049 = vpop.permute.xlu0 %3048
      %3054 = vrot.lane.b32.xlu0 %v2380, 120
      %v3055 = vpop.permute.xlu0 %3054
      %3056 = vrot.lane.b32.xlu0 %v2381, 120
      %v3057 = vpop.permute.xlu0 %3056
      %3058 = vrot.lane.b32.xlu0 %v2382, 120
      %v3059 = vpop.permute.xlu0 %3058
      %3060 = vrot.lane.b32.xlu0 %v2383, 120
      %v3061 = vpop.permute.xlu0 %3060
      %v3063 = vsel %vm1008, %v3049, 0
      %v3066 = vsel %vm1008, %v3055, 0
      %v3069 = vsel %vm1008, %v3057, 0
      %v3072 = vsel %vm1008, %v3059, 0
      %v3075 = vsel %vm1008, %v3061, 0
      %3077 = vmatprep.subr.bf16.mxu0 0
      %3078 = vmatpush1.bf16.xpose.msra.mxu0 %v3066
      %3079 = vmatprep.subr.bf16.mxu0 0
      %3080 = vmatpush1.bf16.xpose.msra.mxu0 %v3069
      %3081 = vmatprep.subr.bf16.mxu0 0
      %3082 = vmatpush1.bf16.xpose.msra.mxu0 %v3072
      %3083 = vmatprep.subr.bf16.mxu0 0
      %3084 = vmatpush1.bf16.xpose.msra.mxu0 %v3075
      %3085 = vmatprep.subr.bf16.mxu0 0
      %3086 = vmatpush1.bf16.xpose.msra.mxu0 0
      %3087 = vmatprep.subr.bf16.mxu0 0
      %3088 = vmatpush1.bf16.xpose.msra.mxu0 0
      %3089 = vmatprep.subr.bf16.mxu0 0
      %3090 = vmatpush1.bf16.xpose.msra.mxu0 0
      %3091 = vmatprep.subr.bf16.mxu0 0
      %3092 = vmatpush1.bf16.xpose.msra.mxu0 0
      %3093 = vmatprep.subr.bf16.mxu0 0
      %3094 = vmatpush1.bf16.xpose.msra.mxu0 0
      %3095 = vmatprep.subr.bf16.mxu0 0
      %3096 = vmatpush1.bf16.xpose.msra.mxu0 0
      %3097 = vmatprep.subr.bf16.mxu0 0
      %3098 = vmatpush1.bf16.xpose.msra.mxu0 0
      %3099 = vmatprep.subr.bf16.mxu0 0
      %3100 = vmatpush1.bf16.xpose.msra.mxu0 0
      %3101 = vmatprep.subr.bf16.mxu0 0
      %3102 = vmatpush1.bf16.xpose.msra.mxu0 0
      %3103 = vmatprep.subr.bf16.mxu0 0
      %3104 = vmatpush1.bf16.xpose.msra.mxu0 0
      %3105 = vmatprep.subr.bf16.mxu0 0
      %3106 = vmatpush1.bf16.xpose.msra.mxu0 0
      %3107 = vmatprep.subr.bf16.mxu0 0
      %3108 = vmatpush1.bf16.xpose.msra.mxu0 0
      %3109 = vmatprep.mubr.bf16.mxu0 0
      %3110 = vmatmul.mubr.bf16.gmra.mrb[0].mxu0 %v3063
      %v3111 = vpop.f32.mrb[0].mxu0
      %v3112 = vadd.f32 %v2934, %v3111
      %v3113 = vpop.f32.mrb[0].mxu0
      %v3114 = vpop.f32.mrb[0].mxu0
      %v3115 = vpop.f32.mrb[0].mxu0
      %3116 = vdwg.mxu0
      %v3117 = vsel %vm2453, %v3112, -inf
      %3118 = vmax.xlane.f32.xlu0 %v3117
      %v3119 = vpop.xlane.xlu0 %3118
      %v3120 = vsub.f32 %v3112, %v3119
      %v3121 = vmul.f32 %v3120, 1.442695
      %v3122 = vpow.pop %v3121
      %v3123 = vsel %vm2453, %v3122, 0.0
      %3124 = vadd.xlane.f32.xlu0 %v3123
      %v3125 = vpop.xlane.xlu0 %3124
      %v3126 = vrcp.pop %v3125
      %v3127 = vmul.f32 %v3122, %v3126
      %v3128 = vpack.c.bf16 %v3127, %v3127
      %3133 = vrot.lane.b32.xlu0 %v2388, 120
      %v3134 = vpop.permute.xlu0 %3133
      %3135 = vrot.lane.b32.xlu0 %v2389, 120
      %v3136 = vpop.permute.xlu0 %3135
      %3137 = vrot.lane.b32.xlu0 %v2390, 120
      %v3138 = vpop.permute.xlu0 %3137
      %3139 = vrot.lane.b32.xlu0 %v2391, 120
      %v3140 = vpop.permute.xlu0 %3139
      %v3146 = vsel %vm2453, %v3128, 0
      %3148 = vmatprep.subr.bf16.mxu0 0
      %3149 = vmatpush1.bf16.msra.mxu0 %v3134
      %3150 = vmatprep.subr.bf16.mxu0 0
      %3151 = vmatpush1.bf16.msra.mxu0 %v3136
      %3152 = vmatprep.subr.bf16.mxu0 0
      %3153 = vmatpush1.bf16.msra.mxu0 %v3138
      %3154 = vmatprep.subr.bf16.mxu0 0
      %3155 = vmatpush1.bf16.msra.mxu0 %v3140
      %3156 = vmatprep.subr.bf16.mxu0 0
      %3157 = vmatpush1.bf16.msra.mxu0 0
      %3158 = vmatprep.subr.bf16.mxu0 0
      %3159 = vmatpush1.bf16.msra.mxu0 0
      %3160 = vmatprep.subr.bf16.mxu0 0
      %3161 = vmatpush1.bf16.msra.mxu0 0
      %3162 = vmatprep.subr.bf16.mxu0 0
      %3163 = vmatpush1.bf16.msra.mxu0 0
      %3164 = vmatprep.subr.bf16.mxu0 0
      %3165 = vmatpush1.bf16.msra.mxu0 0
      %3166 = vmatprep.subr.bf16.mxu0 0
      %3167 = vmatpush1.bf16.msra.mxu0 0
      %3168 = vmatprep.subr.bf16.mxu0 0
      %3169 = vmatpush1.bf16.msra.mxu0 0
      %3170 = vmatprep.subr.bf16.mxu0 0
      %3171 = vmatpush1.bf16.msra.mxu0 0
      %3172 = vmatprep.subr.bf16.mxu0 0
      %3173 = vmatpush1.bf16.msra.mxu0 0
      %3174 = vmatprep.subr.bf16.mxu0 0
      %3175 = vmatpush1.bf16.msra.mxu0 0
      %3176 = vmatprep.subr.bf16.mxu0 0
      %3177 = vmatpush1.bf16.msra.mxu0 0
      %3178 = vmatprep.subr.bf16.mxu0 0
      %3179 = vmatpush1.bf16.msra.mxu0 0
      %3180 = vmatprep.mubr.bf16.mxu0 0
      %3181 = vmatmul.mubr.bf16.gmra.mrb[0].mxu0 %v3146
      %v3182 = vpop.f32.mrb[0].mxu0
      %v3183 = vadd.f32 0.0, %v3182
      %v3184 = vpop.f32.mrb[0].mxu0
      %v3185 = vpop.f32.mrb[0].mxu0
      %v3186 = vpop.f32.mrb[0].mxu0
      %3187 = vdwg.mxu0
      %3189 = vrot.lane.b32.xlu0 %v3183, 8
      %v3190 = vpop.permute.xlu0 %3189
      %3192 = vst.msk [vmem:[#allocation3 + $0x8] sm:$0xff] %vm1230, %v3190
      %3193 = vrot.lane.b32.xlu0 %v2936, 112
      %v3194 = vpop.permute.xlu0 %3193
      %3195 = vrot.lane.b32.xlu0 %v2380, 112
      %v3196 = vpop.permute.xlu0 %3195
      %3197 = vrot.lane.b32.xlu0 %v2381, 112
      %v3198 = vpop.permute.xlu0 %3197
      %3199 = vrot.lane.b32.xlu0 %v2382, 112
      %v3200 = vpop.permute.xlu0 %3199
      %3201 = vrot.lane.b32.xlu0 %v2383, 112
      %v3202 = vpop.permute.xlu0 %3201
      %v3204 = vsel %vm1008, %v3194, 0
      %v3207 = vsel %vm1008, %v3196, 0
      %v3210 = vsel %vm1008, %v3198, 0
      %v3213 = vsel %vm1008, %v3200, 0
      %v3216 = vsel %vm1008, %v3202, 0
      %3218 = vmatprep.subr.bf16.mxu0 0
      %3219 = vmatpush1.bf16.xpose.msra.mxu0 %v3207
      %3220 = vmatprep.subr.bf16.mxu0 0
      %3221 = vmatpush1.bf16.xpose.msra.mxu0 %v3210
      %3222 = vmatprep.subr.bf16.mxu0 0
      %3223 = vmatpush1.bf16.xpose.msra.mxu0 %v3213
      %3224 = vmatprep.subr.bf16.mxu0 0
      %3225 = vmatpush1.bf16.xpose.msra.mxu0 %v3216
      %3226 = vmatprep.subr.bf16.mxu0 0
      %3227 = vmatpush1.bf16.xpose.msra.mxu0 0
      %3228 = vmatprep.subr.bf16.mxu0 0
      %3229 = vmatpush1.bf16.xpose.msra.mxu0 0
      %3230 = vmatprep.subr.bf16.mxu0 0
      %3231 = vmatpush1.bf16.xpose.msra.mxu0 0
      %3232 = vmatprep.subr.bf16.mxu0 0
      %3233 = vmatpush1.bf16.xpose.msra.mxu0 0
      %3234 = vmatprep.subr.bf16.mxu0 0
      %3235 = vmatpush1.bf16.xpose.msra.mxu0 0
      %3236 = vmatprep.subr.bf16.mxu0 0
      %3237 = vmatpush1.bf16.xpose.msra.mxu0 0
      %3238 = vmatprep.subr.bf16.mxu0 0
      %3239 = vmatpush1.bf16.xpose.msra.mxu0 0
      %3240 = vmatprep.subr.bf16.mxu0 0
      %3241 = vmatpush1.bf16.xpose.msra.mxu0 0
      %3242 = vmatprep.subr.bf16.mxu0 0
      %3243 = vmatpush1.bf16.xpose.msra.mxu0 0
      %3244 = vmatprep.subr.bf16.mxu0 0
      %3245 = vmatpush1.bf16.xpose.msra.mxu0 0
      %3246 = vmatprep.subr.bf16.mxu0 0
      %3247 = vmatpush1.bf16.xpose.msra.mxu0 0
      %3248 = vmatprep.subr.bf16.mxu0 0
      %3249 = vmatpush1.bf16.xpose.msra.mxu0 0
      %3250 = vmatprep.mubr.bf16.mxu0 0
      %3251 = vmatmul.mubr.bf16.gmra.mrb[0].mxu0 %v3204
      %v3252 = vpop.f32.mrb[0].mxu0
      %v3253 = vadd.f32 %v2934, %v3252
      %v3254 = vpop.f32.mrb[0].mxu0
      %v3255 = vpop.f32.mrb[0].mxu0
      %v3256 = vpop.f32.mrb[0].mxu0
      %3257 = vdwg.mxu0
      %v3258 = vsel %vm2453, %v3253, -inf
      %3259 = vmax.xlane.f32.xlu0 %v3258
      %v3260 = vpop.xlane.xlu0 %3259
      %v3261 = vsub.f32 %v3253, %v3260
      %v3262 = vmul.f32 %v3261, 1.442695
      %v3263 = vpow.pop %v3262
      %v3264 = vsel %vm2453, %v3263, 0.0
      %3265 = vadd.xlane.f32.xlu0 %v3264
      %v3266 = vpop.xlane.xlu0 %3265
      %v3267 = vrcp.pop %v3266
      %v3268 = vmul.f32 %v3263, %v3267
      %v3269 = vpack.c.bf16 %v3268, %v3268
      %3270 = vrot.lane.b32.xlu0 %v2388, 112
      %v3271 = vpop.permute.xlu0 %3270
      %3272 = vrot.lane.b32.xlu0 %v2389, 112
      %v3273 = vpop.permute.xlu0 %3272
      %3274 = vrot.lane.b32.xlu0 %v2390, 112
      %v3275 = vpop.permute.xlu0 %3274
      %3276 = vrot.lane.b32.xlu0 %v2391, 112
      %v3277 = vpop.permute.xlu0 %3276
      %v3283 = vsel %vm2453, %v3269, 0
      %3285 = vmatprep.subr.bf16.mxu0 0
      %3286 = vmatpush1.bf16.msra.mxu0 %v3271
      %3287 = vmatprep.subr.bf16.mxu0 0
      %3288 = vmatpush1.bf16.msra.mxu0 %v3273
      %3289 = vmatprep.subr.bf16.mxu0 0
      %3290 = vmatpush1.bf16.msra.mxu0 %v3275
      %3291 = vmatprep.subr.bf16.mxu0 0
      %3292 = vmatpush1.bf16.msra.mxu0 %v3277
      %3293 = vmatprep.subr.bf16.mxu0 0
      %3294 = vmatpush1.bf16.msra.mxu0 0
      %3295 = vmatprep.subr.bf16.mxu0 0
      %3296 = vmatpush1.bf16.msra.mxu0 0
      %3297 = vmatprep.subr.bf16.mxu0 0
      %3298 = vmatpush1.bf16.msra.mxu0 0
      %3299 = vmatprep.subr.bf16.mxu0 0
      %3300 = vmatpush1.bf16.msra.mxu0 0
      %3301 = vmatprep.subr.bf16.mxu0 0
      %3302 = vmatpush1.bf16.msra.mxu0 0
      %3303 = vmatprep.subr.bf16.mxu0 0
      %3304 = vmatpush1.bf16.msra.mxu0 0
      %3305 = vmatprep.subr.bf16.mxu0 0
      %3306 = vmatpush1.bf16.msra.mxu0 0
      %3307 = vmatprep.subr.bf16.mxu0 0
      %3308 = vmatpush1.bf16.msra.mxu0 0
      %3309 = vmatprep.subr.bf16.mxu0 0
      %3310 = vmatpush1.bf16.msra.mxu0 0
      %3311 = vmatprep.subr.bf16.mxu0 0
      %3312 = vmatpush1.bf16.msra.mxu0 0
      %3313 = vmatprep.subr.bf16.mxu0 0
      %3314 = vmatpush1.bf16.msra.mxu0 0
      %3315 = vmatprep.subr.bf16.mxu0 0
      %3316 = vmatpush1.bf16.msra.mxu0 0
      %3317 = vmatprep.mubr.bf16.mxu0 0
      %3318 = vmatmul.mubr.bf16.gmra.mrb[0].mxu0 %v3283
      %v3319 = vpop.f32.mrb[0].mxu0
      %v3320 = vadd.f32 0.0, %v3319
      %v3321 = vpop.f32.mrb[0].mxu0
      %v3322 = vpop.f32.mrb[0].mxu0
      %v3323 = vpop.f32.mrb[0].mxu0
      %3324 = vdwg.mxu0
      %3326 = vrot.lane.b32.xlu0 %v3320, 16
      %v3327 = vpop.permute.xlu0 %3326
      %3329 = vst.msk [vmem:[#allocation3 + $0x8] sm:$0xff] %vm1346, %v3327
      %3330 = vrot.lane.b32.xlu0 %v2936, 104
      %v3331 = vpop.permute.xlu0 %3330
      %3332 = vrot.lane.b32.xlu0 %v2380, 104
      %v3333 = vpop.permute.xlu0 %3332
      %3334 = vrot.lane.b32.xlu0 %v2381, 104
      %v3335 = vpop.permute.xlu0 %3334
      %3336 = vrot.lane.b32.xlu0 %v2382, 104
      %v3337 = vpop.permute.xlu0 %3336
      %3338 = vrot.lane.b32.xlu0 %v2383, 104
      %v3339 = vpop.permute.xlu0 %3338
      %v3341 = vsel %vm1008, %v3331, 0
      %v3344 = vsel %vm1008, %v3333, 0
      %v3347 = vsel %vm1008, %v3335, 0
      %v3350 = vsel %vm1008, %v3337, 0
      %v3353 = vsel %vm1008, %v3339, 0
      %3355 = vmatprep.subr.bf16.mxu0 0
      %3356 = vmatpush1.bf16.xpose.msra.mxu0 %v3344
      %3357 = vmatprep.subr.bf16.mxu0 0
      %3358 = vmatpush1.bf16.xpose.msra.mxu0 %v3347
      %3359 = vmatprep.subr.bf16.mxu0 0
      %3360 = vmatpush1.bf16.xpose.msra.mxu0 %v3350
      %3361 = vmatprep.subr.bf16.mxu0 0
      %3362 = vmatpush1.bf16.xpose.msra.mxu0 %v3353
      %3363 = vmatprep.subr.bf16.mxu0 0
      %3364 = vmatpush1.bf16.xpose.msra.mxu0 0
      %3365 = vmatprep.subr.bf16.mxu0 0
      %3366 = vmatpush1.bf16.xpose.msra.mxu0 0
      %3367 = vmatprep.subr.bf16.mxu0 0
      %3368 = vmatpush1.bf16.xpose.msra.mxu0 0
      %3369 = vmatprep.subr.bf16.mxu0 0
      %3370 = vmatpush1.bf16.xpose.msra.mxu0 0
      %3371 = vmatprep.subr.bf16.mxu0 0
      %3372 = vmatpush1.bf16.xpose.msra.mxu0 0
      %3373 = vmatprep.subr.bf16.mxu0 0
      %3374 = vmatpush1.bf16.xpose.msra.mxu0 0
      %3375 = vmatprep.subr.bf16.mxu0 0
      %3376 = vmatpush1.bf16.xpose.msra.mxu0 0
      %3377 = vmatprep.subr.bf16.mxu0 0
      %3378 = vmatpush1.bf16.xpose.msra.mxu0 0
      %3379 = vmatprep.subr.bf16.mxu0 0
      %3380 = vmatpush1.bf16.xpose.msra.mxu0 0
      %3381 = vmatprep.subr.bf16.mxu0 0
      %3382 = vmatpush1.bf16.xpose.msra.mxu0 0
      %3383 = vmatprep.subr.bf16.mxu0 0
      %3384 = vmatpush1.bf16.xpose.msra.mxu0 0
      %3385 = vmatprep.subr.bf16.mxu0 0
      %3386 = vmatpush1.bf16.xpose.msra.mxu0 0
      %3387 = vmatprep.mubr.bf16.mxu0 0
      %3388 = vmatmul.mubr.bf16.gmra.mrb[0].mxu0 %v3341
      %v3389 = vpop.f32.mrb[0].mxu0
      %v3390 = vadd.f32 %v2934, %v3389
      %v3391 = vpop.f32.mrb[0].mxu0
      %v3392 = vpop.f32.mrb[0].mxu0
      %v3393 = vpop.f32.mrb[0].mxu0
      %3394 = vdwg.mxu0
      %v3395 = vsel %vm2453, %v3390, -inf
      %3396 = vmax.xlane.f32.xlu0 %v3395
      %v3397 = vpop.xlane.xlu0 %3396
      %v3398 = vsub.f32 %v3390, %v3397
      %v3399 = vmul.f32 %v3398, 1.442695
      %v3400 = vpow.pop %v3399
      %v3401 = vsel %vm2453, %v3400, 0.0
      %3402 = vadd.xlane.f32.xlu0 %v3401
      %v3403 = vpop.xlane.xlu0 %3402
      %v3404 = vrcp.pop %v3403
      %v3405 = vmul.f32 %v3400, %v3404
      %v3406 = vpack.c.bf16 %v3405, %v3405
      %3407 = vrot.lane.b32.xlu0 %v2388, 104
      %v3408 = vpop.permute.xlu0 %3407
      %3409 = vrot.lane.b32.xlu0 %v2389, 104
      %v3410 = vpop.permute.xlu0 %3409
      %3411 = vrot.lane.b32.xlu0 %v2390, 104
      %v3412 = vpop.permute.xlu0 %3411
      %3413 = vrot.lane.b32.xlu0 %v2391, 104
      %v3414 = vpop.permute.xlu0 %3413
      %v3420 = vsel %vm2453, %v3406, 0
      %3422 = vmatprep.subr.bf16.mxu0 0
      %3423 = vmatpush1.bf16.msra.mxu0 %v3408
      %3424 = vmatprep.subr.bf16.mxu0 0
      %3425 = vmatpush1.bf16.msra.mxu0 %v3410
      %3426 = vmatprep.subr.bf16.mxu0 0
      %3427 = vmatpush1.bf16.msra.mxu0 %v3412
      %3428 = vmatprep.subr.bf16.mxu0 0
      %3429 = vmatpush1.bf16.msra.mxu0 %v3414
      %3430 = vmatprep.subr.bf16.mxu0 0
      %3431 = vmatpush1.bf16.msra.mxu0 0
      %3432 = vmatprep.subr.bf16.mxu0 0
      %3433 = vmatpush1.bf16.msra.mxu0 0
      %3434 = vmatprep.subr.bf16.mxu0 0
      %3435 = vmatpush1.bf16.msra.mxu0 0
      %3436 = vmatprep.subr.bf16.mxu0 0
      %3437 = vmatpush1.bf16.msra.mxu0 0
      %3438 = vmatprep.subr.bf16.mxu0 0
      %3439 = vmatpush1.bf16.msra.mxu0 0
      %3440 = vmatprep.subr.bf16.mxu0 0
      %3441 = vmatpush1.bf16.msra.mxu0 0
      %3442 = vmatprep.subr.bf16.mxu0 0
      %3443 = vmatpush1.bf16.msra.mxu0 0
      %3444 = vmatprep.subr.bf16.mxu0 0
      %3445 = vmatpush1.bf16.msra.mxu0 0
      %3446 = vmatprep.subr.bf16.mxu0 0
      %3447 = vmatpush1.bf16.msra.mxu0 0
      %3448 = vmatprep.subr.bf16.mxu0 0
      %3449 = vmatpush1.bf16.msra.mxu0 0
      %3450 = vmatprep.subr.bf16.mxu0 0
      %3451 = vmatpush1.bf16.msra.mxu0 0
      %3452 = vmatprep.subr.bf16.mxu0 0
      %3453 = vmatpush1.bf16.msra.mxu0 0
      %3454 = vmatprep.mubr.bf16.mxu0 0
      %3455 = vmatmul.mubr.bf16.gmra.mrb[0].mxu0 %v3420
      %v3456 = vpop.f32.mrb[0].mxu0
      %v3457 = vadd.f32 0.0, %v3456
      %v3458 = vpop.f32.mrb[0].mxu0
      %v3459 = vpop.f32.mrb[0].mxu0
      %v3460 = vpop.f32.mrb[0].mxu0
      %3461 = vdwg.mxu0
      %3463 = vrot.lane.b32.xlu0 %v3457, 24
      %v3464 = vpop.permute.xlu0 %3463
      %3466 = vst.msk [vmem:[#allocation3 + $0x8] sm:$0xff] %vm1462, %v3464
      %v3467 = vld [vmem:[#allocation3] sm:$0xff]
      %v3468 = vld [vmem:[#allocation3 + $0x8] sm:$0xff]
      %v3469 = vpack.c.bf16 %v3468, %v3467
      %v3471 = vlaneseq
      %v3472 = vshrl.u32 %v3471, 7
      %v3473 = vsub.s32 0, %v3472
      %v3474 = vrot.slane %v2051, %v3473
      %v3480 = vunpack.c.l.b16 %v2047
      %v3481 = vunpack.c.l.b16 %v2048
      %v3482 = vunpack.c.l.b16 %v2049
      %v3483 = vunpack.c.l.b16 %v2050
      %v3484 = vpack.c.b16 %v3481, %v3480
      %v3485 = vpack.c.b16 %v3483, %v3482
      %v3489 = vsel %vm905, %v3469, 0
      %3491 = vmatprep.subr.bf16.mxu0 0
      %3492 = vmatpush1.bf16.msra.mxu0 %v3484
      %3493 = vmatprep.subr.bf16.mxu0 0
      %3494 = vmatpush1.bf16.msra.mxu0 %v3485
      %3495 = vmatprep.subr.bf16.mxu0 0
      %3496 = vmatpush1.bf16.msra.mxu0 0
      %3497 = vmatprep.subr.bf16.mxu0 0
      %3498 = vmatpush1.bf16.msra.mxu0 0
      %3499 = vmatprep.subr.bf16.mxu0 0
      %3500 = vmatpush1.bf16.msra.mxu0 0
      %3501 = vmatprep.subr.bf16.mxu0 0
      %3502 = vmatpush1.bf16.msra.mxu0 0
      %3503 = vmatprep.subr.bf16.mxu0 0
      %3504 = vmatpush1.bf16.msra.mxu0 0
      %3505 = vmatprep.subr.bf16.mxu0 0
      %3506 = vmatpush1.bf16.msra.mxu0 0
      %3507 = vmatprep.subr.bf16.mxu0 0
      %3508 = vmatpush1.bf16.msra.mxu0 0
      %3509 = vmatprep.subr.bf16.mxu0 0
      %3510 = vmatpush1.bf16.msra.mxu0 0
      %3511 = vmatprep.subr.bf16.mxu0 0
      %3512 = vmatpush1.bf16.msra.mxu0 0
      %3513 = vmatprep.subr.bf16.mxu0 0
      %3514 = vmatpush1.bf16.msra.mxu0 0
      %3515 = vmatprep.subr.bf16.mxu0 0
      %3516 = vmatpush1.bf16.msra.mxu0 0
      %3517 = vmatprep.subr.bf16.mxu0 0
      %3518 = vmatpush1.bf16.msra.mxu0 0
      %3519 = vmatprep.subr.bf16.mxu0 0
      %3520 = vmatpush1.bf16.msra.mxu0 0
      %3521 = vmatprep.subr.bf16.mxu0 0
      %3522 = vmatpush1.bf16.msra.mxu0 0
      %3523 = vmatprep.mubr.bf16.mxu0 0
      %3524 = vmatmul.mubr.bf16.gmra.mrb[0].mxu0 %v3489
      %v3525 = vpop.f32.mrb[0].mxu0
      %v3526 = vadd.f32 %v3474, %v3525
      %v3527 = vpop.f32.mrb[0].mxu0
      %v3528 = vpop.f32.mrb[0].mxu0
      %v3529 = vadd.f32 %v3474, %v3528
      %v3530 = vpop.f32.mrb[0].mxu0
      %3531 = vdwg.mxu0
      %v3532 = vadd.f32 %v2022, %v3526
      %v3533 = vadd.f32 %v2023, %v3529
      %v3534 = vsel %vm905, %v3532, 0.0
      %3535 = vadd.xlane.f32.xlu0 %v3534
      %v3536 = vpop.xlane.xlu0 %3535
      %v3537 = vsel %vm905, %v3533, 0.0
      %3538 = vadd.xlane.f32.xlu0 %v3537
      %v3539 = vpop.xlane.xlu0 %3538
      %v3540 = vmul.f32 %v3536, %v1991
      %v3541 = vmul.f32 %v3539, %v1991
      %v3542 = vsub.f32 %v3532, %v3540
      %v3543 = vsub.f32 %v3533, %v3541
      %v3544 = vmul.f32 %v3542, %v3542
      %v3545 = vmul.f32 %v3543, %v3543
      %v3546 = vsel %vm905, %v3544, 0.0
      %3547 = vadd.xlane.f32.xlu0 %v3546
      %v3548 = vpop.xlane.xlu0 %3547
      %v3549 = vsel %vm905, %v3545, 0.0
      %3550 = vadd.xlane.f32.xlu0 %v3549
      %v3551 = vpop.xlane.xlu0 %3550
      %v3552 = vmul.f32 %v3548, %v1991
      %v3553 = vmul.f32 %v3551, %v1991
      %v3554 = vadd.f32 %v3552, 1e-05
      %v3555 = vadd.f32 %v3553, 1e-05
      %v3556 = vrsqrt.pop %v3554
      %v3557 = vrsqrt.pop %v3555
      %v3558 = vmul.f32 %v3542, %v3556
      %v3559 = vmul.f32 %v3543, %v3557
      %v3560 = vlaneseq
      %v3561 = vshrl.u32 %v3560, 7
      %v3562 = vsub.s32 2, %v3561
      %v3563 = vrot.slane %v871, %v3562
      %v3564 = vmul.f32 %v3558, %v3563
      %v3565 = vmul.f32 %v3559, %v3563
      %v3566 = vlaneseq
      %v3567 = vshrl.u32 %v3566, 7
      %v3568 = vsub.s32 3, %v3567
      %v3569 = vrot.slane %v871, %v3568
      %v3570 = vadd.f32 %v3564, %v3569
      %v3571 = vadd.f32 %v3565, %v3569
      %v3572 = vpack.c.bf16 %v3571, %v3570
      %v3573 = vld [vmem:[%s756] sm:$0xf]
      %v3574 = vld [vmem:[%s756 + $0x4] sm:$0xf]
      %v3575 = vld [vmem:[%s756 + $0x8] sm:$0xf]
      %v3576 = vld [vmem:[%s756 + $0xc] sm:$0xf]
      %v3577 = vld [vmem:[%s759] sm:$0x1]
      %v3579 = vlaneseq
      %v3580 = vshrl.u32 %v3579, 7
      %v3581 = vsub.s32 0, %v3580
      %v3582 = vrot.slane %v3577, %v3581
      %v3588 = vunpack.c.l.b16 %v3573
      %v3589 = vunpack.c.l.b16 %v3574
      %v3590 = vunpack.c.l.b16 %v3575
      %v3591 = vunpack.c.l.b16 %v3576
      %v3592 = vpack.c.b16 %v3589, %v3588
      %v3593 = vpack.c.b16 %v3591, %v3590
      %v3597 = vsel %vm905, %v3572, 0
      %3599 = vmatprep.subr.bf16.mxu0 0
      %3600 = vmatpush1.bf16.msra.mxu0 %v3592
      %3601 = vmatprep.subr.bf16.mxu0 0
      %3602 = vmatpush1.bf16.msra.mxu0 %v3593
      %3603 = vmatprep.subr.bf16.mxu0 0
      %3604 = vmatpush1.bf16.msra.mxu0 0
      %3605 = vmatprep.subr.bf16.mxu0 0
      %3606 = vmatpush1.bf16.msra.mxu0 0
      %3607 = vmatprep.subr.bf16.mxu0 0
      %3608 = vmatpush1.bf16.msra.mxu0 0
      %3609 = vmatprep.subr.bf16.mxu0 0
      %3610 = vmatpush1.bf16.msra.mxu0 0
      %3611 = vmatprep.subr.bf16.mxu0 0
      %3612 = vmatpush1.bf16.msra.mxu0 0
      %3613 = vmatprep.subr.bf16.mxu0 0
      %3614 = vmatpush1.bf16.msra.mxu0 0
      %3615 = vmatprep.subr.bf16.mxu0 0
      %3616 = vmatpush1.bf16.msra.mxu0 0
      %3617 = vmatprep.subr.bf16.mxu0 0
      %3618 = vmatpush1.bf16.msra.mxu0 0
      %3619 = vmatprep.subr.bf16.mxu0 0
      %3620 = vmatpush1.bf16.msra.mxu0 0
      %3621 = vmatprep.subr.bf16.mxu0 0
      %3622 = vmatpush1.bf16.msra.mxu0 0
      %3623 = vmatprep.subr.bf16.mxu0 0
      %3624 = vmatpush1.bf16.msra.mxu0 0
      %3625 = vmatprep.subr.bf16.mxu0 0
      %3626 = vmatpush1.bf16.msra.mxu0 0
      %3627 = vmatprep.subr.bf16.mxu0 0
      %3628 = vmatpush1.bf16.msra.mxu0 0
      %3629 = vmatprep.subr.bf16.mxu0 0
      %3630 = vmatpush1.bf16.msra.mxu0 0
      %3631 = vmatprep.mubr.bf16.mxu0 0
      %3632 = vmatmul.mubr.bf16.gmra.mrb[0].mxu0 %v3597
      %v3633 = vpop.f32.mrb[0].mxu0
      %v3634 = vadd.f32 %v3582, %v3633
      %v3635 = vpop.f32.mrb[0].mxu0
      %v3636 = vpop.f32.mrb[0].mxu0
      %v3637 = vadd.f32 %v3582, %v3636
      %v3638 = vpop.f32.mrb[0].mxu0
      %3639 = vdwg.mxu0
      %v3640 = vmax.f32 %v3634, 0.0
      %v3641 = vmax.f32 %v3637, 0.0
      %v3642 = vpack.c.bf16 %v3641, %v3640
      %v3643 = vld [vmem:[%s764] sm:$0xf]
      %v3644 = vld [vmem:[%s764 + $0x4] sm:$0xf]
      %v3645 = vld [vmem:[%s764 + $0x8] sm:$0xf]
      %v3646 = vld [vmem:[%s764 + $0xc] sm:$0xf]
      %v3647 = vld [vmem:[%s764 + $0x10] sm:$0xf]
      %v3648 = vld [vmem:[%s764 + $0x14] sm:$0xf]
      %v3649 = vld [vmem:[%s764 + $0x18] sm:$0xf]
      %v3650 = vld [vmem:[%s764 + $0x1c] sm:$0xf]
      %v3651 = vld [vmem:[%s767] sm:$0x1]
      %v3653 = vlaneseq
      %v3654 = vshrl.u32 %v3653, 7
      %v3655 = vsub.s32 0, %v3654
      %v3656 = vrot.slane %v3651, %v3655
      %v3666 = vunpack.c.l.b16 %v3643
      %v3667 = vunpack.c.l.b16 %v3644
      %v3668 = vunpack.c.l.b16 %v3645
      %v3669 = vunpack.c.l.b16 %v3646
      %v3670 = vunpack.c.l.b16 %v3647
      %v3671 = vunpack.c.l.b16 %v3648
      %v3672 = vunpack.c.l.b16 %v3649
      %v3673 = vunpack.c.l.b16 %v3650
      %v3674 = vpack.c.b16 %v3667, %v3666
      %v3675 = vpack.c.b16 %v3669, %v3668
      %v3676 = vpack.c.b16 %v3671, %v3670
      %v3677 = vpack.c.b16 %v3673, %v3672
      %v3683 = vsel %vm2453, %v3642, 0
      %3685 = vmatprep.subr.bf16.mxu0 0
      %3686 = vmatpush1.bf16.msra.mxu0 %v3674
      %3687 = vmatprep.subr.bf16.mxu0 0
      %3688 = vmatpush1.bf16.msra.mxu0 %v3675
      %3689 = vmatprep.subr.bf16.mxu0 0
      %3690 = vmatpush1.bf16.msra.mxu0 %v3676
      %3691 = vmatprep.subr.bf16.mxu0 0
      %3692 = vmatpush1.bf16.msra.mxu0 %v3677
      %3693 = vmatprep.subr.bf16.mxu0 0
      %3694 = vmatpush1.bf16.msra.mxu0 0
      %3695 = vmatprep.subr.bf16.mxu0 0
      %3696 = vmatpush1.bf16.msra.mxu0 0
      %3697 = vmatprep.subr.bf16.mxu0 0
      %3698 = vmatpush1.bf16.msra.mxu0 0
      %3699 = vmatprep.subr.bf16.mxu0 0
      %3700 = vmatpush1.bf16.msra.mxu0 0
      %3701 = vmatprep.subr.bf16.mxu0 0
      %3702 = vmatpush1.bf16.msra.mxu0 0
      %3703 = vmatprep.subr.bf16.mxu0 0
      %3704 = vmatpush1.bf16.msra.mxu0 0
      %3705 = vmatprep.subr.bf16.mxu0 0
      %3706 = vmatpush1.bf16.msra.mxu0 0
      %3707 = vmatprep.subr.bf16.mxu0 0
      %3708 = vmatpush1.bf16.msra.mxu0 0
      %3709 = vmatprep.subr.bf16.mxu0 0
      %3710 = vmatpush1.bf16.msra.mxu0 0
      %3711 = vmatprep.subr.bf16.mxu0 0
      %3712 = vmatpush1.bf16.msra.mxu0 0
      %3713 = vmatprep.subr.bf16.mxu0 0
      %3714 = vmatpush1.bf16.msra.mxu0 0
      %3715 = vmatprep.subr.bf16.mxu0 0
      %3716 = vmatpush1.bf16.msra.mxu0 0
      %3717 = vmatprep.mubr.bf16.mxu0 0
      %3718 = vmatmul.mubr.bf16.gmra.mrb[0].mxu0 %v3683
      %v3719 = vpop.f32.mrb[0].mxu0
      %v3720 = vadd.f32 %v3656, %v3719
      %v3721 = vpop.f32.mrb[0].mxu0
      %v3722 = vpop.f32.mrb[0].mxu0
      %v3723 = vadd.f32 %v3656, %v3722
      %v3724 = vpop.f32.mrb[0].mxu0
      %3725 = vdwg.mxu0
      %v3726 = vadd.f32 %v3570, %v3720
      %v3727 = vadd.f32 %v3571, %v3723
      %v3728 = vsel %vm905, %v3726, 0.0
      %3729 = vadd.xlane.f32.xlu0 %v3728
      %v3730 = vpop.xlane.xlu0 %3729
      %v3731 = vsel %vm905, %v3727, 0.0
      %3732 = vadd.xlane.f32.xlu0 %v3731
      %v3733 = vpop.xlane.xlu0 %3732
      %v3734 = vmul.f32 %v3730, %v1991
      %v3735 = vmul.f32 %v3733, %v1991
      %v3736 = vsub.f32 %v3726, %v3734
      %v3737 = vsub.f32 %v3727, %v3735
      %v3738 = vmul.f32 %v3736, %v3736
      %v3739 = vmul.f32 %v3737, %v3737
      %v3740 = vsel %vm905, %v3738, 0.0
      %3741 = vadd.xlane.f32.xlu0 %v3740
      %v3742 = vpop.xlane.xlu0 %3741
      %v3743 = vsel %vm905, %v3739, 0.0
      %3744 = vadd.xlane.f32.xlu0 %v3743
      %v3745 = vpop.xlane.xlu0 %3744
      %v3746 = vmul.f32 %v3742, %v1991
      %v3747 = vmul.f32 %v3745, %v1991
      %v3748 = vadd.f32 %v3746, 1e-05
      %v3749 = vadd.f32 %v3747, 1e-05
      %v3750 = vrsqrt.pop %v3748
      %v3751 = vrsqrt.pop %v3749
      %v3752 = vmul.f32 %v3736, %v3750
      %v3753 = vmul.f32 %v3737, %v3751
      %v3754 = vlaneseq
      %v3755 = vshrl.u32 %v3754, 7
      %v3756 = vsub.s32 4, %v3755
      %v3757 = vrot.slane %v871, %v3756
      %v3758 = vmul.f32 %v3752, %v3757
      %v3759 = vmul.f32 %v3753, %v3757
      %v3760 = vlaneseq
      %v3761 = vshrl.u32 %v3760, 7
      %v3762 = vsub.s32 5, %v3761
      %v3763 = vrot.slane %v871, %v3762
      %v3764 = vadd.f32 %v3758, %v3763
      %v3765 = vadd.f32 %v3759, %v3763
      %3766 = vst.msk [vmem:[#allocation2] sm:$0xff] %vm905, %v3764
      %3767 = vst.msk [vmem:[#allocation2 + $0x8] sm:$0xff] %vm905, %v3765
      %v3768 = vsel %vm905, %v3764, 0.0
      %3769 = vadd.xlane.f32.xlu0 %v3768
      %v3770 = vpop.xlane.xlu0 %3769
      %v3771 = vsel %vm905, %v3765, 0.0
      %3772 = vadd.xlane.f32.xlu0 %v3771
      %v3773 = vpop.xlane.xlu0 %3772
      %v3774 = vmul.f32 %v3770, %v1991
      %v3775 = vmul.f32 %v3773, %v1991
      %v3776 = vsub.f32 %v3764, %v3774
      %v3777 = vsub.f32 %v3765, %v3775
      %v3778 = vmul.f32 %v3776, %v3776
      %v3779 = vmul.f32 %v3777, %v3777
      %v3780 = vsel %vm905, %v3778, 0.0
      %3781 = vadd.xlane.f32.xlu0 %v3780
      %v3782 = vpop.xlane.xlu0 %3781
      %v3783 = vsel %vm905, %v3779, 0.0
      %3784 = vadd.xlane.f32.xlu0 %v3783
      %v3785 = vpop.xlane.xlu0 %3784
      %v3786 = vmul.f32 %v3782, %v1991
      %v3787 = vmul.f32 %v3785, %v1991
      %v3788 = vadd.f32 %v3786, 1e-05
      %v3789 = vadd.f32 %v3787, 1e-05
      %v3790 = vrsqrt.pop %v3788
      %v3791 = vrsqrt.pop %v3789
      %v3792 = vmul.f32 %v3776, %v3790
      %v3793 = vmul.f32 %v3777, %v3791
      %v3794 = vlaneseq
      %v3795 = vshrl.u32 %v3794, 7
      %v3796 = vsub.s32 0, %v3795
      %v3797 = vrot.slane %v872, %v3796
      %v3798 = vmul.f32 %v3792, %v3797
      %v3799 = vmul.f32 %v3793, %v3797
      %v3800 = vlaneseq
      %v3801 = vshrl.u32 %v3800, 7
      %v3802 = vsub.s32 1, %v3801
      %v3803 = vrot.slane %v872, %v3802
      %v3804 = vadd.f32 %v3798, %v3803
      %v3805 = vadd.f32 %v3799, %v3803
      %3806 = vst.msk [vmem:[%s776] sm:$0xff] %vm905, %v3804
      %3807 = vst.msk [vmem:[%s776 + $0x8] sm:$0xff] %vm905, %v3805
      %p3808 = scmp.lt.s32.totalorder %s29, 1
      %s3809 = scalar_select %p3808, %s29, 1
      %s3810 = smul.addr %s3809, 2
      %s3811 = smul.addr %s3810, 8
      %s3812 = scalar_lea.vmem %s18, %s3811
      // Predicated region
      $region97: #{conditional_detr_transformer.3} parent=91 // pred_check
        %p3813 = pneg %p490
      $region98: #{conditional_detr_transformer.3} parent=91 // pred_check_branch
        %3815 = sbr.rel (%p3813) target = $region100
      $region99: #{conditional_detr_transformer.3} parent=91 // pred_region
        _
      $region100: #{conditional_detr_transformer.3} parent=91 // pred_fallthru
        _
    $region92: #{conditional_detr_transformer.3} parent=5 // pred_fallthru
      _
    %p3816 = scmp.le.s32.totalorder 2, %s24
    // Predicated region
    $region101: #{conditional_detr_transformer.3} parent=5 // pred_check
      %p3817 = pneg %p3816
    $region102: #{conditional_detr_transformer.3} parent=5 // pred_check_branch
      %3819 = sbr.rel (%p3817) target = $region104
    $region103: #{conditional_detr_transformer.3} parent=5 // pred_region
      %s3820 = ssub.s32 %s24, 2
      // Predicated region
      $region105: #{conditional_detr_transformer.3} parent=103 // pred_check
        %p3821 = pneg %p496
      $region106: #{conditional_detr_transformer.3} parent=103 // pred_check_branch
        %3823 = sbr.rel (%p3821) target = $region108
      $region107: #{conditional_detr_transformer.3} parent=103 // pred_region
        %p3824 = scmp.lt.s32.totalorder %s30, 1
        %s3825 = scalar_select %p3824, %s30, 1
        %s3826 = smul.addr %s3825, 2
        %s3827 = smul.addr %s3826, 8
        %s3828 = scalar_lea.vmem %s18, %s3827
      $region108: #{conditional_detr_transformer.3} parent=103 // pred_fallthru
        _
    $region104: #{conditional_detr_transformer.3} parent=5 // pred_fallthru
      _
  $region6: #{conditional_detr_transformer.3} parent=0 // loop_footer
    %s28 = sadd.s32 1, %s24
  $region7: #{conditional_detr_transformer.3} parent=0 // loop_footer_branch
    %23 = sbr.rel target = $region3
  $region8: #{conditional_detr_transformer.3} parent=0 // loop_exit
    _

</llo_original>
